<compile_context>
chip_gen: v6e
topology: v6e:2x2x1
jax: 0.10.0
libtpu: 0.0.40
codegen_flags: <defaults>
</compile_context>

<pallas_src>
import functools
import math

import jax
import jax.numpy as jnp
from jax import lax
from jax.experimental import pallas as pl
from jax.experimental.pallas import tpu as pltpu

EPS = 1e-8
LANES = 128


# ----------------------------------------------------------------------------
# small helpers
# ----------------------------------------------------------------------------
def _round_up(n, m):
    return ((n + m - 1) // m) * m


def _pad_to(a, axis, size):
    if a.shape[axis] == size:
        return a
    widths = [(0, 0)] * a.ndim
    widths[axis] = (0, size - a.shape[axis])
    return jnp.pad(a, widths)


def _rowvec(v, cp):
    return _pad_to(v.reshape(1, -1).astype(jnp.float32), 1, cp)


def _elu(x):
    # ELU(alpha=1); clamp before exp for numeric safety.
    return jnp.where(x > 0, x, jnp.exp(jnp.minimum(x, 0.0)) - 1.0)


# ----------------------------------------------------------------------------
# Pallas kernels
# ----------------------------------------------------------------------------
def _fused_conv_kernel(x_ref, w_ref, b_ref, g_ref, bt_ref, o_ref, *,
                       batch, act, norm):
    # x_ref: (B, P, Kp) bf16 im2col patches, w_ref: (Kp, Cp) bf16,
    # b/g/bt: (1, Cp) f32, o_ref: (B, P, Cp) f32.
    # Batch is unrolled so InstanceNorm stats stay per-sample.
    w = w_ref[...]
    bias = b_ref[...]
    for b in range(batch):
        y = jnp.dot(x_ref[b], w, preferred_element_type=jnp.float32) + bias
        if act:
            y = _elu(y)
        if norm:
            mean = jnp.mean(y, axis=0, keepdims=True)
            var = jnp.mean(jnp.square(y - mean), axis=0, keepdims=True)
            y = (y - mean) * lax.rsqrt(var + EPS) * g_ref[...] + bt_ref[...]
        o_ref[b] = y


def _tcn_block_kernel(x_ref, g_ref, bt_ref, dw_ref, dwb_ref, pw_ref, pwb_ref,
                      o_ref, pad_ref, *, batch, seq, dilation, ksz):
    # Fused TCN residual block on channels-last layout.
    # x_ref: (B, T, Cp) f32;  dw: (ksz, Cp);  pw: (Cp, Cp) bf16 (Cin, Cout);
    # pad_ref: VMEM scratch (T + 2*d, Cp) used for reflect padding.
    T, d = seq, dilation
    g, bt = g_ref[...], bt_ref[...]
    dw, dwb = dw_ref[...], dwb_ref[...]
    pw, pwb = pw_ref[...], pwb_ref[...]
    for b in range(batch):
        x = x_ref[b]                                          # (T, Cp)
        # GroupNorm(C, C): per-channel stats over time.
        mean = jnp.mean(x, axis=0, keepdims=True)
        var = jnp.mean(jnp.square(x - mean), axis=0, keepdims=True)
        y = _elu((x - mean) * lax.rsqrt(var + EPS) * g + bt)
        # reflect pad along time into VMEM scratch.
        pad_ref[d:d + T, :] = y
        for i in range(1, d + 1):
            pad_ref[d - i:d - i + 1, :] = y[i:i + 1, :]
            pad_ref[d + T - 1 + i:d + T + i, :] = y[T - 1 - i:T - i, :]
        # dilated depthwise conv.
        z = jnp.zeros_like(y)
        for k in range(ksz):
            z = z + dw[k:k + 1, :] * pad_ref[k * d:k * d + T, :]
        z = z + dwb
        # pointwise conv (MXU) + bias + residual.
        out = jnp.dot(z.astype(jnp.bfloat16), pw,
                      preferred_element_type=jnp.float32)
        o_ref[b] = out + pwb + x


# ----------------------------------------------------------------------------
# Conv wrappers (im2col glue in XLA under jit; one fused kernel per conv)
# ----------------------------------------------------------------------------
def fused_conv_mm(patches, wmat, bias, gamma, beta, act, norm):
    B, P, Kp = patches.shape
    Cp = wmat.shape[1]
    kern = functools.partial(_fused_conv_kernel, batch=B, act=act, norm=norm)
    cost = pl.CostEstimate(
        flops=2 * B * P * Kp * Cp,
        transcendentals=(B * P * Cp) if (act or norm) else 0,
        bytes_accessed=2 * (B * P * Kp + Kp * Cp) + 4 * (3 * Cp + B * P * Cp))
    return pl.pallas_call(
        kern,
        out_shape=jax.ShapeDtypeStruct((B, P, Cp), jnp.float32),
        cost_estimate=cost,
    )(patches, wmat, bias, gamma, beta)


def _im2col(x, kh, kw, sh, sw):
    # x already padded: [B, C, H, W] -> patches [B, Ho*Wo, C*kh*kw]
    B, C, H, W = x.shape
    Ho = (H - kh) // sh + 1
    Wo = (W - kw) // sw + 1
    cols = []
    for i in range(kh):
        for j in range(kw):
            cols.append(x[:, :, i:i + sh * (Ho - 1) + 1:sh,
                            j:j + sw * (Wo - 1) + 1:sw])
    patches = jnp.stack(cols, axis=2)                       # [B, C, kh*kw, Ho, Wo]
    patches = patches.transpose(0, 3, 4, 1, 2).reshape(B, Ho * Wo, C * kh * kw)
    return patches, Ho, Wo


def _conv_core(x_padded, w_oihw, b, gamma, beta, stride, act, norm):
    Cout, Cin, kh, kw = w_oihw.shape
    patches, Ho, Wo = _im2col(x_padded, kh, kw, stride[0], stride[1])
    B, P, K = patches.shape
    Kp = _round_up(K, LANES)
    Cp = _round_up(Cout, LANES)
    patches = _pad_to(patches, 2, Kp).astype(jnp.bfloat16)
    wmat = w_oihw.reshape(Cout, K).T
    wmat = _pad_to(_pad_to(wmat, 0, Kp), 1, Cp).astype(jnp.bfloat16)
    y = fused_conv_mm(patches, wmat, _rowvec(b, Cp), _rowvec(gamma, Cp),
                      _rowvec(beta, Cp), act, norm)
    y = y[:, :, :Cout].reshape(B, Ho, Wo, Cout).transpose(0, 3, 1, 2)
    return y


def conv2d_fused(x, w, b, gamma, beta, stride, padding, act, norm):
    # x: [B, Cin, H, W], w: [Cout, Cin, kh, kw]  (PyTorch Conv2d layout),
    # padding_mode='reflect' as in the reference module.
    ph, pw_ = padding
    if ph or pw_:
        x = jnp.pad(x, ((0, 0), (0, 0), (ph, ph), (pw_, pw_)), mode="reflect")
    return _conv_core(x, w, b, gamma, beta, stride, act, norm)


def conv_transpose2d_fused(x, w, b, gamma, beta, stride, padding, act, norm):
    # w: [Cin, Cout, kh, kw]  (PyTorch ConvTranspose2d layout); zero padding.
    Cin, Cout, kh, kw = w.shape
    sh, sw = stride
    ph, pw_ = padding
    B, C, H, W = x.shape
    xd = jnp.zeros((B, C, (H - 1) * sh + 1, (W - 1) * sw + 1), x.dtype)
    xd = xd.at[:, :, ::sh, ::sw].set(x)
    xd = jnp.pad(xd, ((0, 0), (0, 0),
                      (kh - 1 - ph, kh - 1 - ph),
                      (kw - 1 - pw_, kw - 1 - pw_)))
    w_conv = jnp.flip(w, axis=(2, 3)).transpose(1, 0, 2, 3)  # [Cout, Cin, kh, kw]
    return _conv_core(xd, w_conv, b, gamma, beta, (1, 1), act, norm)


def apply_tcn(tcn_params, x1d):
    # x1d: [B, C, T] -> channels-last (B, T, Cp) with Cp = 128-padded channels;
    # padded channels stay zero through every block so chaining is exact.
    B, C, T = x1d.shape
    Cp = _round_up(C, LANES)
    x = _pad_to(x1d.transpose(0, 2, 1), 2, Cp)
    for p in tcn_params:
        d = int(p["dilation"])
        ksz = int(p["dw"].shape[1])
        kern = functools.partial(_tcn_block_kernel, batch=B, seq=T,
                                 dilation=d, ksz=ksz)
        x = pl.pallas_call(
            kern,
            out_shape=jax.ShapeDtypeStruct((B, T, Cp), jnp.float32),
            scratch_shapes=[pltpu.VMEM((T + 2 * d, Cp), jnp.float32)],
        )(x,
          _rowvec(p["gamma"], Cp), _rowvec(p["beta"], Cp),
          _pad_to(p["dw"].T.astype(jnp.float32), 1, Cp),
          _rowvec(p["dwb"], Cp),
          _pad_to(_pad_to(p["pw"].T, 0, Cp), 1, Cp).astype(jnp.bfloat16),
          _rowvec(p["pwb"], Cp))
    return x[:, :, :C].transpose(0, 2, 1)


# ----------------------------------------------------------------------------
# Parameter initialization (deterministic, mirrors the PyTorch module shapes)
# ----------------------------------------------------------------------------
class KeyGen:
    def __init__(self, seed=0):
        self.key = jax.random.PRNGKey(seed)

    def __call__(self):
        self.key, sub = jax.random.split(self.key)
        return sub


def _uniform(kg, shape, scale):
    return jax.random.uniform(kg(), shape, jnp.float32, -scale, scale)


def init_plain_conv2d(kg, cin, cout, ksz):
    kh, kw = ksz
    s = 1.0 / math.sqrt(cin * kh * kw)
    return dict(w=_uniform(kg, (cout, cin, kh, kw), s),
                b=_uniform(kg, (cout,), s),
                gamma=jnp.ones((cout,), jnp.float32),
                beta=jnp.zeros((cout,), jnp.float32))


def init_plain_convT2d(kg, cin, cout, ksz):
    kh, kw = ksz
    s = 1.0 / math.sqrt(cin * kh * kw)
    return dict(w=_uniform(kg, (cin, cout, kh, kw), s),
                b=_uniform(kg, (cout,), s),
                gamma=jnp.ones((cout,), jnp.float32),
                beta=jnp.zeros((cout,), jnp.float32))


def init_conv2dactnorm(kg, cin, cout, ksz=(3, 3), stride=(1, 2), padding=(1, 0),
                       upsample=False):
    kh, kw = ksz
    s = 1.0 / math.sqrt(cin * kh * kw)
    w_shape = (cin, cout, kh, kw) if upsample else (cout, cin, kh, kw)
    return dict(w=_uniform(kg, w_shape, s),
                b=_uniform(kg, (cout,), s),
                gamma=jnp.ones((cout,), jnp.float32),
                beta=jnp.zeros((cout,), jnp.float32),
                stride=stride, padding=padding, upsample=upsample)


def apply_conv2dactnorm(p, x):
    if p["upsample"]:
        return conv_transpose2d_fused(x, p["w"], p["b"], p["gamma"], p["beta"],
                                      p["stride"], p["padding"],
                                      act=True, norm=True)
    return conv2d_fused(x, p["w"], p["b"], p["gamma"], p["beta"],
                        p["stride"], p["padding"], act=True, norm=True)


def init_freqwise(kg, cin, num_freqs, cout):
    return dict(bottleneck=init_conv2dactnorm(kg, cin, cout, (1, 1), (1, 1), (0, 0)),
                freq_proc=init_conv2dactnorm(kg, num_freqs, num_freqs,
                                             (1, 1), (1, 1), (0, 0)))


def apply_freqwise(p, x):
    y = apply_conv2dactnorm(p["bottleneck"], x)   # [B, cout, T, F]
    y = y.transpose(0, 3, 2, 1)                   # [B, F, T, cout]
    y = apply_conv2dactnorm(p["freq_proc"], y)
    return y.transpose(0, 3, 2, 1)                # [B, cout, T, F]


def init_denseblock(kg, cin, cout, num_freqs, pre_blocks=2, freq_proc_blocks=1,
                    post_blocks=2, ksz=(3, 3), hid=16):
    pre, freq, post = [], [], []
    tot = 0
    for _ in range(pre_blocks):
        pre.append(init_conv2dactnorm(kg, cin + hid * tot, hid, ksz, (1, 1), (1, 1)))
        tot += 1
    for _ in range(freq_proc_blocks):
        freq.append(init_freqwise(kg, cin + hid * tot, num_freqs, hid))
        tot += 1
    for _ in range(post_blocks - 1):
        post.append(init_conv2dactnorm(kg, cin + hid * tot, hid, ksz, (1, 1), (1, 1)))
        tot += 1
    post.append(init_conv2dactnorm(kg, cin + hid * tot, cout, ksz, (1, 1), (1, 1)))
    return dict(pre=pre, freq=freq, post=post)


def apply_denseblock(p, x):
    outs = [x]
    for cp in p["pre"]:
        outs.append(apply_conv2dactnorm(cp, jnp.concatenate(outs, axis=1)))
    for cp in p["freq"]:
        outs.append(apply_freqwise(cp, jnp.concatenate(outs, axis=1)))
    c_out = None
    for cp in p["post"]:
        c_out = apply_conv2dactnorm(cp, jnp.concatenate(outs, axis=1))
        outs.append(c_out)
    return c_out


def init_tcnblock(kg, chan, ksz=3, dilation=1):
    s_dw = 1.0 / math.sqrt(ksz)          # depthwise (groups == chan)
    s_pw = 1.0 / math.sqrt(chan)
    return dict(dw=_uniform(kg, (chan, ksz), s_dw),
                dwb=_uniform(kg, (chan,), s_dw),
                pw=_uniform(kg, (chan, chan), s_pw),
                pwb=_uniform(kg, (chan,), s_pw),
                gamma=jnp.ones((chan,), jnp.float32),
                beta=jnp.zeros((chan,), jnp.float32),
                dilation=dilation)


def _get_depth(num_freq):
    freqs = []
    while num_freq > 15:
        num_freq = int(num_freq / 2)
        freqs.append(num_freq)
    return freqs


def init_tcndenseunet(kg, n_spk=1, in_freqs=17, mic_channels=1, hid_chans=8,
                      hid_chans_dense=4, ksz_dense=(3, 3), ksz_tcn=3,
                      tcn_repeats=1, tcn_blocks=2, tcn_channels=32):
    num_freqs = in_freqs - 2
    freq_axis_dims = _get_depth(num_freqs)

    encoder = []
    encoder.append(("first", dict(
        conv=init_plain_conv2d(kg, mic_channels * 2, hid_chans, (3, 3)),
        dense=init_denseblock(kg, hid_chans, hid_chans, num_freqs,
                              ksz=ksz_dense, hid=hid_chans_dense))))
    for fd in freq_axis_dims:
        encoder.append(("down_dense", dict(
            down=init_conv2dactnorm(kg, hid_chans, hid_chans, (3, 3), (1, 2), (1, 0)),
            dense=init_denseblock(kg, hid_chans, hid_chans, fd,
                                  ksz=ksz_dense, hid=hid_chans_dense))))
    encoder.append(("conv", init_conv2dactnorm(kg, hid_chans, hid_chans * 2,
                                               (3, 3), (1, 2), (1, 0))))
    encoder.append(("conv", init_conv2dactnorm(kg, hid_chans * 2, hid_chans * 4,
                                               (3, 3), (1, 2), (1, 0))))
    encoder.append(("conv", init_conv2dactnorm(kg, hid_chans * 4, tcn_channels,
                                               (3, 3), (1, 1), (1, 0))))

    tcn = []
    for _ in range(tcn_repeats):
        for x in range(tcn_blocks):
            tcn.append(init_tcnblock(kg, tcn_channels, ksz_tcn, dilation=2 ** x))

    decoder = []
    decoder.append(("conv", init_conv2dactnorm(kg, tcn_channels * 2, hid_chans * 4,
                                               (3, 3), (1, 1), (1, 0), upsample=True)))
    decoder.append(("conv", init_conv2dactnorm(kg, hid_chans * 8, hid_chans * 2,
                                               (3, 3), (1, 2), (1, 0), upsample=True)))
    decoder.append(("conv", init_conv2dactnorm(kg, hid_chans * 4, hid_chans,
                                               (3, 3), (1, 2), (1, 0), upsample=True)))
    for dec_indx in range(len(freq_axis_dims)):
        c_num_freqs = freq_axis_dims[len(freq_axis_dims) - dec_indx - 1]
        decoder.append(("dense_up", dict(
            dense=init_denseblock(kg, hid_chans * 2, hid_chans * 2, c_num_freqs,
                                  ksz=ksz_dense, hid=hid_chans_dense),
            up=init_conv2dactnorm(kg, hid_chans * 2, hid_chans, (3, 3), (1, 2),
                                  (1, 0), upsample=True))))
    decoder.append(("last", dict(
        dense=init_denseblock(kg, hid_chans * 2, hid_chans * 2, in_freqs - 2,
                              ksz=ksz_dense, hid=hid_chans_dense),
        convT=init_plain_convT2d(kg, hid_chans * 2, 2 * n_spk, (3, 3)))))

    return dict(encoder=encoder, tcn=tcn, decoder=decoder,
                n_spk=n_spk, in_freqs=in_freqs, mic_channels=mic_channels)


# ----------------------------------------------------------------------------
# Full forward (mirrors TCNDenseUNet.forward)
# ----------------------------------------------------------------------------
def tcndenseunet_forward(params, tf_rep):
    """tf_rep: complex tensor [B, mics, frames, freqs].

    (The PyTorch code's permute + `assert mics == self.mic_channels` implies
    this axis convention despite the docstring saying [B, T, C, F].)
    Returns complex [B, n_spk, frames, freqs].
    """
    mic_channels = params["mic_channels"]
    in_freqs = params["in_freqs"]
    n_spk = params["n_spk"]

    x = jnp.transpose(tf_rep, (0, 1, 3, 2))
    bsz, mics, _, frames = x.shape
    assert mics == mic_channels
    inp = jnp.concatenate([jnp.real(x), jnp.imag(x)], axis=1)
    inp = jnp.swapaxes(inp, -1, -2)
    inp = inp.reshape(bsz, mic_channels * 2, frames, in_freqs).astype(jnp.float32)

    enc_out = []
    buf = inp
    for kind, p in params["encoder"]:
        if kind == "first":
            c = p["conv"]
            buf = conv2d_fused(buf, c["w"], c["b"], c["gamma"], c["beta"],
                               (1, 1), (1, 0), act=False, norm=False)
            buf = apply_denseblock(p["dense"], buf)
        elif kind == "down_dense":
            buf = apply_conv2dactnorm(p["down"], buf)
            buf = apply_denseblock(p["dense"], buf)
        else:
            buf = apply_conv2dactnorm(p, buf)
        enc_out.append(buf)
    assert buf.shape[-1] == 1

    x1d = buf[..., 0]                              # [B, tcn_channels, T]
    x1d = apply_tcn(params["tcn"], x1d)
    buf = x1d[..., None]

    for indx, (kind, p) in enumerate(params["decoder"]):
        c_input = jnp.concatenate([buf, enc_out[-(indx + 1)]], axis=1)
        if kind == "conv":
            buf = apply_conv2dactnorm(p, c_input)
        elif kind == "dense_up":
            buf = apply_denseblock(p["dense"], c_input)
            buf = apply_conv2dactnorm(p["up"], buf)
        else:  # "last"
            buf = apply_denseblock(p["dense"], c_input)
            c = p["convT"]
            buf = conv_transpose2d_fused(buf, c["w"], c["b"], c["gamma"],
                                         c["beta"], (1, 1), (1, 0),
                                         act=False, norm=False)

    buf = buf.reshape(bsz, 2, n_spk, -1, in_freqs)
    out = lax.complex(buf[:, 0], buf[:, 1])        # [B, n_spk, T, F] complex64
    return out


# ----------------------------------------------------------------------------
if __name__ == "__main__":
    # Small config consistent with the module structure:
    #   in_freqs=17 -> num_freqs=15 -> encoder bottleneck freq dim == 1.
    B, MICS, T, F = 2, 1, 8, 17

    kg = KeyGen(seed=0)
    params = init_tcndenseunet(kg, n_spk=1, in_freqs=F, mic_channels=MICS,
                               hid_chans=8, hid_chans_dense=4,
                               ksz_dense=(3, 3), ksz_tcn=3,
                               tcn_repeats=1, tcn_blocks=2, tcn_channels=32)

    kr, ki = jax.random.split(jax.random.PRNGKey(0))
    tf_rep = (jax.random.normal(kr, (B, MICS, T, F), jnp.float32)
              + 1j * jax.random.normal(ki, (B, MICS, T, F), jnp.float32)
              ).astype(jnp.complex64)

    # jit with params closed over so all weight reshape/pad glue constant-folds.
    fwd = jax.jit(lambda t: tcndenseunet_forward(params, t))
    out = jax.block_until_ready(fwd(tf_rep))
    assert out.shape == (B, 1, T, F) and out.dtype == jnp.complex64
    assert bool(jnp.all(jnp.isfinite(jnp.abs(out))))
    print("KERNEL_OK")
</pallas_src>

<mosaic_0001>
module attributes {stable_mosaic.version = 11 : i64} {
  func.func @_fused_conv_kernel(%arg0: memref<2x120x128xbf16, #tpu.memory_space<vmem>>, %arg1: memref<128x128xbf16, #tpu.memory_space<vmem>>, %arg2: memref<1x128xf32, #tpu.memory_space<vmem>>, %arg3: memref<1x128xf32, #tpu.memory_space<vmem>>, %arg4: memref<1x128xf32, #tpu.memory_space<vmem>>, %arg5: memref<2x120x128xf32, #tpu.memory_space<vmem>>) attributes {dimension_semantics = [], scalar_prefetch = 0 : i64, scratch_operands = 0 : i64, tpu.core_type = #tpu.core_type<tc>} {
    %c0 = arith.constant 0 : index
    %c0_0 = arith.constant 0 : index
    %0 = vector.load %arg1[%c0, %c0_0] : memref<128x128xbf16, #tpu.memory_space<vmem>>, vector<128x128xbf16>
    %c0_1 = arith.constant 0 : index
    %c0_2 = arith.constant 0 : index
    %1 = vector.load %arg2[%c0_1, %c0_2] : memref<1x128xf32, #tpu.memory_space<vmem>>, vector<1x128xf32>
    %c0_3 = arith.constant 0 : index
    %c0_4 = arith.constant 0 : index
    %c0_5 = arith.constant 0 : index
    %2 = vector.load %arg0[%c0_3, %c0_4, %c0_5] : memref<2x120x128xbf16, #tpu.memory_space<vmem>>, vector<1x120x128xbf16>
    %3 = vector.shape_cast %2 : vector<1x120x128xbf16> to vector<120x128xbf16>
    %cst = arith.constant dense<0.000000e+00> : vector<120x128xf32>
    %4 = tpu.matmul %3, %0, %cst {dimension_numbers = #tpu.dot_dimension_numbers<[1], [0], [0], [1], [0, 0, 1, 1], [], []>} : vector<120x128xbf16>, vector<128x128xbf16>, vector<120x128xf32> -> vector<120x128xf32>
    %5 = vector.broadcast %1 : vector<1x128xf32> to vector<120x128xf32>
    %6 = arith.addf %4, %5 : vector<120x128xf32>
    %c0_6 = arith.constant 0 : index
    %c0_7 = arith.constant 0 : index
    %c0_8 = arith.constant 0 : index
    %7 = vector.load %arg5[%c0_6, %c0_7, %c0_8] : memref<2x120x128xf32, #tpu.memory_space<vmem>>, vector<1x120x128xf32>
    %8 = vector.shape_cast %7 : vector<1x120x128xf32> to vector<120x128xf32>
    %9 = vector.shape_cast %6 : vector<120x128xf32> to vector<1x120x128xf32>
    tpu.vector_store %arg5[%c0_6, %c0_7, %c0_8], %9 {strides = array<i32>} : memref<2x120x128xf32, #tpu.memory_space<vmem>>, vector<1x120x128xf32>,
    %c1 = arith.constant 1 : index
    %c0_9 = arith.constant 0 : index
    %c0_10 = arith.constant 0 : index
    %10 = vector.load %arg0[%c1, %c0_9, %c0_10] : memref<2x120x128xbf16, #tpu.memory_space<vmem>>, vector<1x120x128xbf16>
    %11 = vector.shape_cast %10 : vector<1x120x128xbf16> to vector<120x128xbf16>
    %cst_11 = arith.constant dense<0.000000e+00> : vector<120x128xf32>
    %12 = tpu.matmul %11, %0, %cst_11 {dimension_numbers = #tpu.dot_dimension_numbers<[1], [0], [0], [1], [0, 0, 1, 1], [], []>} : vector<120x128xbf16>, vector<128x128xbf16>, vector<120x128xf32> -> vector<120x128xf32>
    %13 = vector.broadcast %1 : vector<1x128xf32> to vector<120x128xf32>
    %14 = arith.addf %12, %13 : vector<120x128xf32>
    %c1_12 = arith.constant 1 : index
    %c0_13 = arith.constant 0 : index
    %c0_14 = arith.constant 0 : index
    %15 = vector.load %arg5[%c1_12, %c0_13, %c0_14] : memref<2x120x128xf32, #tpu.memory_space<vmem>>, vector<1x120x128xf32>
    %16 = vector.shape_cast %15 : vector<1x120x128xf32> to vector<120x128xf32>
    %17 = vector.shape_cast %14 : vector<120x128xf32> to vector<1x120x128xf32>
    tpu.vector_store %arg5[%c1_12, %c0_13, %c0_14], %17 {strides = array<i32>} : memref<2x120x128xf32, #tpu.memory_space<vmem>>, vector<1x120x128xf32>,
    return
  }
}

module attributes {stable_mosaic.version = 11 : i64} {
  func.func @_fused_conv_kernel(%arg0: memref<2x120x128xbf16, #tpu.memory_space<vmem>>, %arg1: memref<128x128xbf16, #tpu.memory_space<vmem>>, %arg2: memref<1x128xf32, #tpu.memory_space<vmem>>, %arg3: memref<1x128xf32, #tpu.memory_space<vmem>>, %arg4: memref<1x128xf32, #tpu.memory_space<vmem>>, %arg5: memref<2x120x128xf32, #tpu.memory_space<vmem>>) attributes {dimension_semantics = [], scalar_prefetch = 0 : i64, scratch_operands = 0 : i64, tpu.core_type = #tpu.core_type<tc>} {
    %c0 = arith.constant 0 : index
    %c0_0 = arith.constant 0 : index
    %0 = vector.load %arg1[%c0, %c0_0] : memref<128x128xbf16, #tpu.memory_space<vmem>>, vector<128x128xbf16>
    %c0_1 = arith.constant 0 : index
    %c0_2 = arith.constant 0 : index
    %1 = vector.load %arg2[%c0_1, %c0_2] : memref<1x128xf32, #tpu.memory_space<vmem>>, vector<1x128xf32>
    %c0_3 = arith.constant 0 : index
    %c0_4 = arith.constant 0 : index
    %c0_5 = arith.constant 0 : index
    %2 = vector.load %arg0[%c0_3, %c0_4, %c0_5] : memref<2x120x128xbf16, #tpu.memory_space<vmem>>, vector<1x120x128xbf16>
    %3 = vector.shape_cast %2 : vector<1x120x128xbf16> to vector<120x128xbf16>
    %cst = arith.constant dense<0.000000e+00> : vector<120x128xf32>
    %4 = tpu.matmul %3, %0, %cst {dimension_numbers = #tpu.dot_dimension_numbers<[1], [0], [0], [1], [0, 0, 1, 1], [], []>} : vector<120x128xbf16>, vector<128x128xbf16>, vector<120x128xf32> -> vector<120x128xf32>
    %5 = vector.broadcast %1 : vector<1x128xf32> to vector<120x128xf32>
    %6 = arith.addf %4, %5 : vector<120x128xf32>
    %cst_6 = arith.constant 0.000000e+00 : f32
    %7 = vector.broadcast %cst_6 : f32 to vector<120x128xf32>
    %8 = arith.cmpf ogt, %6, %7 : vector<120x128xf32>
    %cst_7 = arith.constant 0.000000e+00 : f32
    %9 = vector.broadcast %cst_7 : f32 to vector<120x128xf32>
    %10 = arith.minimumf %6, %9 : vector<120x128xf32>
    %11 = math.exp %10 : vector<120x128xf32>
    %cst_8 = arith.constant 1.000000e+00 : f32
    %12 = vector.broadcast %cst_8 : f32 to vector<120x128xf32>
    %13 = arith.subf %11, %12 : vector<120x128xf32>
    %14 = arith.select %8, %6, %13 : vector<120x128xi1>, vector<120x128xf32>
    %cst_9 = arith.constant dense<0.000000e+00> : vector<128xf32>
    %15 = vector.multi_reduction <add>, %14, %cst_9 [0] : vector<120x128xf32> to vector<128xf32>
    %16 = vector.shape_cast %15 : vector<128xf32> to vector<1x128xf32>
    %cst_10 = arith.constant 1.200000e+02 : f32
    %17 = vector.broadcast %cst_10 : f32 to vector<1x128xf32>
    %18 = arith.divf %16, %17 : vector<1x128xf32>
    %19 = vector.broadcast %18 : vector<1x128xf32> to vector<120x128xf32>
    %20 = arith.subf %14, %19 : vector<120x128xf32>
    %21 = arith.mulf %20, %20 : vector<120x128xf32>
    %cst_11 = arith.constant dense<0.000000e+00> : vector<128xf32>
    %22 = vector.multi_reduction <add>, %21, %cst_11 [0] : vector<120x128xf32> to vector<128xf32>
    %23 = vector.shape_cast %22 : vector<128xf32> to vector<1x128xf32>
    %cst_12 = arith.constant 1.200000e+02 : f32
    %24 = vector.broadcast %cst_12 : f32 to vector<1x128xf32>
    %25 = arith.divf %23, %24 : vector<1x128xf32>
    %26 = vector.broadcast %18 : vector<1x128xf32> to vector<120x128xf32>
    %27 = arith.subf %14, %26 : vector<120x128xf32>
    %cst_13 = arith.constant 9.99999993E-9 : f32
    %28 = vector.broadcast %cst_13 : f32 to vector<1x128xf32>
    %29 = arith.addf %25, %28 : vector<1x128xf32>
    %30 = math.rsqrt %29 : vector<1x128xf32>
    %31 = vector.broadcast %30 : vector<1x128xf32> to vector<120x128xf32>
    %32 = arith.mulf %27, %31 : vector<120x128xf32>
    %c0_14 = arith.constant 0 : index
    %c0_15 = arith.constant 0 : index
    %33 = vector.load %arg3[%c0_14, %c0_15] : memref<1x128xf32, #tpu.memory_space<vmem>>, vector<1x128xf32>
    %34 = vector.broadcast %33 : vector<1x128xf32> to vector<120x128xf32>
    %35 = arith.mulf %32, %34 : vector<120x128xf32>
    %c0_16 = arith.constant 0 : index
    %c0_17 = arith.constant 0 : index
    %36 = vector.load %arg4[%c0_16, %c0_17] : memref<1x128xf32, #tpu.memory_space<vmem>>, vector<1x128xf32>
    %37 = vector.broadcast %36 : vector<1x128xf32> to vector<120x128xf32>
    %38 = arith.addf %35, %37 : vector<120x128xf32>
    %c0_18 = arith.constant 0 : index
    %c0_19 = arith.constant 0 : index
    %c0_20 = arith.constant 0 : index
    %39 = vector.load %arg5[%c0_18, %c0_19, %c0_20] : memref<2x120x128xf32, #tpu.memory_space<vmem>>, vector<1x120x128xf32>
    %40 = vector.shape_cast %39 : vector<1x120x128xf32> to vector<120x128xf32>
    %41 = vector.shape_cast %38 : vector<120x128xf32> to vector<1x120x128xf32>
    tpu.vector_store %arg5[%c0_18, %c0_19, %c0_20], %41 {strides = array<i32>} : memref<2x120x128xf32, #tpu.memory_space<vmem>>, vector<1x120x128xf32>,
    %c1 = arith.constant 1 : index
    %c0_21 = arith.constant 0 : index
    %c0_22 = arith.constant 0 : index
    %42 = vector.load %arg0[%c1, %c0_21, %c0_22] : memref<2x120x128xbf16, #tpu.memory_space<vmem>>, vector<1x120x128xbf16>
    %43 = vector.shape_cast %42 : vector<1x120x128xbf16> to vector<120x128xbf16>
    %cst_23 = arith.constant dense<0.000000e+00> : vector<120x128xf32>
    %44 = tpu.matmul %43, %0, %cst_23 {dimension_numbers = #tpu.dot_dimension_numbers<[1], [0], [0], [1], [0, 0, 1, 1], [], []>} : vector<120x128xbf16>, vector<128x128xbf16>, vector<120x128xf32> -> vector<120x128xf32>
    %45 = vector.broadcast %1 : vector<1x128xf32> to vector<120x128xf32>
    %46 = arith.addf %44, %45 : vector<120x128xf32>
    %cst_24 = arith.constant 0.000000e+00 : f32
    %47 = vector.broadcast %cst_24 : f32 to vector<120x128xf32>
    %48 = arith.cmpf ogt, %46, %47 : vector<120x128xf32>
    %cst_25 = arith.constant 0.000000e+00 : f32
    %49 = vector.broadcast %cst_25 : f32 to vector<120x128xf32>
    %50 = arith.minimumf %46, %49 : vector<120x128xf32>
    %51 = math.exp %50 : vector<120x128xf32>
    %cst_26 = arith.constant 1.000000e+00 : f32
    %52 = vector.broadcast %cst_26 : f32 to vector<120x128xf32>
    %53 = arith.subf %51, %52 : vector<120x128xf32>
    %54 = arith.select %48, %46, %53 : vector<120x128xi1>, vector<120x128xf32>
    %cst_27 = arith.constant dense<0.000000e+00> : vector<128xf32>
    %55 = vector.multi_reduction <add>, %54, %cst_27 [0] : vector<120x128xf32> to vector<128xf32>
    %56 = vector.shape_cast %55 : vector<128xf32> to vector<1x128xf32>
    %cst_28 = arith.constant 1.200000e+02 : f32
    %57 = vector.broadcast %cst_28 : f32 to vector<1x128xf32>
    %58 = arith.divf %56, %57 : vector<1x128xf32>
    %59 = vector.broadcast %58 : vector<1x128xf32> to vector<120x128xf32>
    %60 = arith.subf %54, %59 : vector<120x128xf32>
    %61 = arith.mulf %60, %60 : vector<120x128xf32>
    %cst_29 = arith.constant dense<0.000000e+00> : vector<128xf32>
    %62 = vector.multi_reduction <add>, %61, %cst_29 [0] : vector<120x128xf32> to vector<128xf32>
    %63 = vector.shape_cast %62 : vector<128xf32> to vector<1x128xf32>
    %cst_30 = arith.constant 1.200000e+02 : f32
    %64 = vector.broadcast %cst_30 : f32 to vector<1x128xf32>
    %65 = arith.divf %63, %64 : vector<1x128xf32>
    %66 = vector.broadcast %58 : vector<1x128xf32> to vector<120x128xf32>
    %67 = arith.subf %54, %66 : vector<120x128xf32>
    %cst_31 = arith.constant 9.99999993E-9 : f32
    %68 = vector.broadcast %cst_31 : f32 to vector<1x128xf32>
    %69 = arith.addf %65, %68 : vector<1x128xf32>
    %70 = math.rsqrt %69 : vector<1x128xf32>
    %71 = vector.broadcast %70 : vector<1x128xf32> to vector<120x128xf32>
    %72 = arith.mulf %67, %71 : vector<120x128xf32>
    %c0_32 = arith.constant 0 : index
    %c0_33 = arith.constant 0 : index
    %73 = vector.load %arg3[%c0_32, %c0_33] : memref<1x128xf32, #tpu.memory_space<vmem>>, vector<1x128xf32>
    %74 = vector.broadcast %73 : vector<1x128xf32> to vector<120x128xf32>
    %75 = arith.mulf %72, %74 : vector<120x128xf32>
    %c0_34 = arith.constant 0 : index
    %c0_35 = arith.constant 0 : index
    %76 = vector.load %arg4[%c0_34, %c0_35] : memref<1x128xf32, #tpu.memory_space<vmem>>, vector<1x128xf32>
    %77 = vector.broadcast %76 : vector<1x128xf32> to vector<120x128xf32>
    %78 = arith.addf %75, %77 : vector<120x128xf32>
    %c1_36 = arith.constant 1 : index
    %c0_37 = arith.constant 0 : index
    %c0_38 = arith.constant 0 : index
    %79 = vector.load %arg5[%c1_36, %c0_37, %c0_38] : memref<2x120x128xf32, #tpu.memory_space<vmem>>, vector<1x120x128xf32>
    %80 = vector.shape_cast %79 : vector<1x120x128xf32> to vector<120x128xf32>
    %81 = vector.shape_cast %78 : vector<120x128xf32> to vector<1x120x128xf32>
    tpu.vector_store %arg5[%c1_36, %c0_37, %c0_38], %81 {strides = array<i32>} : memref<2x120x128xf32, #tpu.memory_space<vmem>>, vector<1x120x128xf32>,
    return
  }
}

module attributes {stable_mosaic.version = 11 : i64} {
  func.func @_fused_conv_kernel(%arg0: memref<2x32x128xbf16, #tpu.memory_space<vmem>>, %arg1: memref<128x128xbf16, #tpu.memory_space<vmem>>, %arg2: memref<1x128xf32, #tpu.memory_space<vmem>>, %arg3: memref<1x128xf32, #tpu.memory_space<vmem>>, %arg4: memref<1x128xf32, #tpu.memory_space<vmem>>, %arg5: memref<2x32x128xf32, #tpu.memory_space<vmem>>) attributes {dimension_semantics = [], scalar_prefetch = 0 : i64, scratch_operands = 0 : i64, tpu.core_type = #tpu.core_type<tc>} {
    %c0 = arith.constant 0 : index
    %c0_0 = arith.constant 0 : index
    %0 = vector.load %arg1[%c0, %c0_0] : memref<128x128xbf16, #tpu.memory_space<vmem>>, vector<128x128xbf16>
    %c0_1 = arith.constant 0 : index
    %c0_2 = arith.constant 0 : index
    %1 = vector.load %arg2[%c0_1, %c0_2] : memref<1x128xf32, #tpu.memory_space<vmem>>, vector<1x128xf32>
    %c0_3 = arith.constant 0 : index
    %c0_4 = arith.constant 0 : index
    %c0_5 = arith.constant 0 : index
    %2 = vector.load %arg0[%c0_3, %c0_4, %c0_5] : memref<2x32x128xbf16, #tpu.memory_space<vmem>>, vector<1x32x128xbf16>
    %3 = vector.shape_cast %2 : vector<1x32x128xbf16> to vector<32x128xbf16>
    %cst = arith.constant dense<0.000000e+00> : vector<32x128xf32>
    %4 = tpu.matmul %3, %0, %cst {dimension_numbers = #tpu.dot_dimension_numbers<[1], [0], [0], [1], [0, 0, 1, 1], [], []>} : vector<32x128xbf16>, vector<128x128xbf16>, vector<32x128xf32> -> vector<32x128xf32>
    %5 = vector.broadcast %1 : vector<1x128xf32> to vector<32x128xf32>
    %6 = arith.addf %4, %5 : vector<32x128xf32>
    %cst_6 = arith.constant 0.000000e+00 : f32
    %7 = vector.broadcast %cst_6 : f32 to vector<32x128xf32>
    %8 = arith.cmpf ogt, %6, %7 : vector<32x128xf32>
    %cst_7 = arith.constant 0.000000e+00 : f32
    %9 = vector.broadcast %cst_7 : f32 to vector<32x128xf32>
    %10 = arith.minimumf %6, %9 : vector<32x128xf32>
    %11 = math.exp %10 : vector<32x128xf32>
    %cst_8 = arith.constant 1.000000e+00 : f32
    %12 = vector.broadcast %cst_8 : f32 to vector<32x128xf32>
    %13 = arith.subf %11, %12 : vector<32x128xf32>
    %14 = arith.select %8, %6, %13 : vector<32x128xi1>, vector<32x128xf32>
    %cst_9 = arith.constant dense<0.000000e+00> : vector<128xf32>
    %15 = vector.multi_reduction <add>, %14, %cst_9 [0] : vector<32x128xf32> to vector<128xf32>
    %16 = vector.shape_cast %15 : vector<128xf32> to vector<1x128xf32>
    %cst_10 = arith.constant 3.200000e+01 : f32
    %17 = vector.broadcast %cst_10 : f32 to vector<1x128xf32>
    %18 = arith.divf %16, %17 : vector<1x128xf32>
    %19 = vector.broadcast %18 : vector<1x128xf32> to vector<32x128xf32>
    %20 = arith.subf %14, %19 : vector<32x128xf32>
    %21 = arith.mulf %20, %20 : vector<32x128xf32>
    %cst_11 = arith.constant dense<0.000000e+00> : vector<128xf32>
    %22 = vector.multi_reduction <add>, %21, %cst_11 [0] : vector<32x128xf32> to vector<128xf32>
    %23 = vector.shape_cast %22 : vector<128xf32> to vector<1x128xf32>
    %cst_12 = arith.constant 3.200000e+01 : f32
    %24 = vector.broadcast %cst_12 : f32 to vector<1x128xf32>
    %25 = arith.divf %23, %24 : vector<1x128xf32>
    %26 = vector.broadcast %18 : vector<1x128xf32> to vector<32x128xf32>
    %27 = arith.subf %14, %26 : vector<32x128xf32>
    %cst_13 = arith.constant 9.99999993E-9 : f32
    %28 = vector.broadcast %cst_13 : f32 to vector<1x128xf32>
    %29 = arith.addf %25, %28 : vector<1x128xf32>
    %30 = math.rsqrt %29 : vector<1x128xf32>
    %31 = vector.broadcast %30 : vector<1x128xf32> to vector<32x128xf32>
    %32 = arith.mulf %27, %31 : vector<32x128xf32>
    %c0_14 = arith.constant 0 : index
    %c0_15 = arith.constant 0 : index
    %33 = vector.load %arg3[%c0_14, %c0_15] : memref<1x128xf32, #tpu.memory_space<vmem>>, vector<1x128xf32>
    %34 = vector.broadcast %33 : vector<1x128xf32> to vector<32x128xf32>
    %35 = arith.mulf %32, %34 : vector<32x128xf32>
    %c0_16 = arith.constant 0 : index
    %c0_17 = arith.constant 0 : index
    %36 = vector.load %arg4[%c0_16, %c0_17] : memref<1x128xf32, #tpu.memory_space<vmem>>, vector<1x128xf32>
    %37 = vector.broadcast %36 : vector<1x128xf32> to vector<32x128xf32>
    %38 = arith.addf %35, %37 : vector<32x128xf32>
    %c0_18 = arith.constant 0 : index
    %c0_19 = arith.constant 0 : index
    %c0_20 = arith.constant 0 : index
    %39 = vector.load %arg5[%c0_18, %c0_19, %c0_20] : memref<2x32x128xf32, #tpu.memory_space<vmem>>, vector<1x32x128xf32>
    %40 = vector.shape_cast %39 : vector<1x32x128xf32> to vector<32x128xf32>
    %41 = vector.shape_cast %38 : vector<32x128xf32> to vector<1x32x128xf32>
    tpu.vector_store %arg5[%c0_18, %c0_19, %c0_20], %41 {strides = array<i32>} : memref<2x32x128xf32, #tpu.memory_space<vmem>>, vector<1x32x128xf32>,
    %c1 = arith.constant 1 : index
    %c0_21 = arith.constant 0 : index
    %c0_22 = arith.constant 0 : index
    %42 = vector.load %arg0[%c1, %c0_21, %c0_22] : memref<2x32x128xbf16, #tpu.memory_space<vmem>>, vector<1x32x128xbf16>
    %43 = vector.shape_cast %42 : vector<1x32x128xbf16> to vector<32x128xbf16>
    %cst_23 = arith.constant dense<0.000000e+00> : vector<32x128xf32>
    %44 = tpu.matmul %43, %0, %cst_23 {dimension_numbers = #tpu.dot_dimension_numbers<[1], [0], [0], [1], [0, 0, 1, 1], [], []>} : vector<32x128xbf16>, vector<128x128xbf16>, vector<32x128xf32> -> vector<32x128xf32>
    %45 = vector.broadcast %1 : vector<1x128xf32> to vector<32x128xf32>
    %46 = arith.addf %44, %45 : vector<32x128xf32>
    %cst_24 = arith.constant 0.000000e+00 : f32
    %47 = vector.broadcast %cst_24 : f32 to vector<32x128xf32>
    %48 = arith.cmpf ogt, %46, %47 : vector<32x128xf32>
    %cst_25 = arith.constant 0.000000e+00 : f32
    %49 = vector.broadcast %cst_25 : f32 to vector<32x128xf32>
    %50 = arith.minimumf %46, %49 : vector<32x128xf32>
    %51 = math.exp %50 : vector<32x128xf32>
    %cst_26 = arith.constant 1.000000e+00 : f32
    %52 = vector.broadcast %cst_26 : f32 to vector<32x128xf32>
    %53 = arith.subf %51, %52 : vector<32x128xf32>
    %54 = arith.select %48, %46, %53 : vector<32x128xi1>, vector<32x128xf32>
    %cst_27 = arith.constant dense<0.000000e+00> : vector<128xf32>
    %55 = vector.multi_reduction <add>, %54, %cst_27 [0] : vector<32x128xf32> to vector<128xf32>
    %56 = vector.shape_cast %55 : vector<128xf32> to vector<1x128xf32>
    %cst_28 = arith.constant 3.200000e+01 : f32
    %57 = vector.broadcast %cst_28 : f32 to vector<1x128xf32>
    %58 = arith.divf %56, %57 : vector<1x128xf32>
    %59 = vector.broadcast %58 : vector<1x128xf32> to vector<32x128xf32>
    %60 = arith.subf %54, %59 : vector<32x128xf32>
    %61 = arith.mulf %60, %60 : vector<32x128xf32>
    %cst_29 = arith.constant dense<0.000000e+00> : vector<128xf32>
    %62 = vector.multi_reduction <add>, %61, %cst_29 [0] : vector<32x128xf32> to vector<128xf32>
    %63 = vector.shape_cast %62 : vector<128xf32> to vector<1x128xf32>
    %cst_30 = arith.constant 3.200000e+01 : f32
    %64 = vector.broadcast %cst_30 : f32 to vector<1x128xf32>
    %65 = arith.divf %63, %64 : vector<1x128xf32>
    %66 = vector.broadcast %58 : vector<1x128xf32> to vector<32x128xf32>
    %67 = arith.subf %54, %66 : vector<32x128xf32>
    %cst_31 = arith.constant 9.99999993E-9 : f32
    %68 = vector.broadcast %cst_31 : f32 to vector<1x128xf32>
    %69 = arith.addf %65, %68 : vector<1x128xf32>
    %70 = math.rsqrt %69 : vector<1x128xf32>
    %71 = vector.broadcast %70 : vector<1x128xf32> to vector<32x128xf32>
    %72 = arith.mulf %67, %71 : vector<32x128xf32>
    %c0_32 = arith.constant 0 : index
    %c0_33 = arith.constant 0 : index
    %73 = vector.load %arg3[%c0_32, %c0_33] : memref<1x128xf32, #tpu.memory_space<vmem>>, vector<1x128xf32>
    %74 = vector.broadcast %73 : vector<1x128xf32> to vector<32x128xf32>
    %75 = arith.mulf %72, %74 : vector<32x128xf32>
    %c0_34 = arith.constant 0 : index
    %c0_35 = arith.constant 0 : index
    %76 = vector.load %arg4[%c0_34, %c0_35] : memref<1x128xf32, #tpu.memory_space<vmem>>, vector<1x128xf32>
    %77 = vector.broadcast %76 : vector<1x128xf32> to vector<32x128xf32>
    %78 = arith.addf %75, %77 : vector<32x128xf32>
    %c1_36 = arith.constant 1 : index
    %c0_37 = arith.constant 0 : index
    %c0_38 = arith.constant 0 : index
    %79 = vector.load %arg5[%c1_36, %c0_37, %c0_38] : memref<2x32x128xf32, #tpu.memory_space<vmem>>, vector<1x32x128xf32>
    %80 = vector.shape_cast %79 : vector<1x32x128xf32> to vector<32x128xf32>
    %81 = vector.shape_cast %78 : vector<32x128xf32> to vector<1x32x128xf32>
    tpu.vector_store %arg5[%c1_36, %c0_37, %c0_38], %81 {strides = array<i32>} : memref<2x32x128xf32, #tpu.memory_space<vmem>>, vector<1x32x128xf32>,
    return
  }
}

module attributes {stable_mosaic.version = 11 : i64} {
  func.func @_fused_conv_kernel(%arg0: memref<2x120x256xbf16, #tpu.memory_space<vmem>>, %arg1: memref<256x128xbf16, #tpu.memory_space<vmem>>, %arg2: memref<1x128xf32, #tpu.memory_space<vmem>>, %arg3: memref<1x128xf32, #tpu.memory_space<vmem>>, %arg4: memref<1x128xf32, #tpu.memory_space<vmem>>, %arg5: memref<2x120x128xf32, #tpu.memory_space<vmem>>) attributes {dimension_semantics = [], scalar_prefetch = 0 : i64, scratch_operands = 0 : i64, tpu.core_type = #tpu.core_type<tc>} {
    %c0 = arith.constant 0 : index
    %c0_0 = arith.constant 0 : index
    %0 = vector.load %arg1[%c0, %c0_0] : memref<256x128xbf16, #tpu.memory_space<vmem>>, vector<256x128xbf16>
    %c0_1 = arith.constant 0 : index
    %c0_2 = arith.constant 0 : index
    %1 = vector.load %arg2[%c0_1, %c0_2] : memref<1x128xf32, #tpu.memory_space<vmem>>, vector<1x128xf32>
    %c0_3 = arith.constant 0 : index
    %c0_4 = arith.constant 0 : index
    %c0_5 = arith.constant 0 : index
    %2 = vector.load %arg0[%c0_3, %c0_4, %c0_5] : memref<2x120x256xbf16, #tpu.memory_space<vmem>>, vector<1x120x256xbf16>
    %3 = vector.shape_cast %2 : vector<1x120x256xbf16> to vector<120x256xbf16>
    %cst = arith.constant dense<0.000000e+00> : vector<120x128xf32>
    %4 = tpu.matmul %3, %0, %cst {dimension_numbers = #tpu.dot_dimension_numbers<[1], [0], [0], [1], [0, 0, 1, 1], [], []>} : vector<120x256xbf16>, vector<256x128xbf16>, vector<120x128xf32> -> vector<120x128xf32>
    %5 = vector.broadcast %1 : vector<1x128xf32> to vector<120x128xf32>
    %6 = arith.addf %4, %5 : vector<120x128xf32>
    %cst_6 = arith.constant 0.000000e+00 : f32
    %7 = vector.broadcast %cst_6 : f32 to vector<120x128xf32>
    %8 = arith.cmpf ogt, %6, %7 : vector<120x128xf32>
    %cst_7 = arith.constant 0.000000e+00 : f32
    %9 = vector.broadcast %cst_7 : f32 to vector<120x128xf32>
    %10 = arith.minimumf %6, %9 : vector<120x128xf32>
    %11 = math.exp %10 : vector<120x128xf32>
    %cst_8 = arith.constant 1.000000e+00 : f32
    %12 = vector.broadcast %cst_8 : f32 to vector<120x128xf32>
    %13 = arith.subf %11, %12 : vector<120x128xf32>
    %14 = arith.select %8, %6, %13 : vector<120x128xi1>, vector<120x128xf32>
    %cst_9 = arith.constant dense<0.000000e+00> : vector<128xf32>
    %15 = vector.multi_reduction <add>, %14, %cst_9 [0] : vector<120x128xf32> to vector<128xf32>
    %16 = vector.shape_cast %15 : vector<128xf32> to vector<1x128xf32>
    %cst_10 = arith.constant 1.200000e+02 : f32
    %17 = vector.broadcast %cst_10 : f32 to vector<1x128xf32>
    %18 = arith.divf %16, %17 : vector<1x128xf32>
    %19 = vector.broadcast %18 : vector<1x128xf32> to vector<120x128xf32>
    %20 = arith.subf %14, %19 : vector<120x128xf32>
    %21 = arith.mulf %20, %20 : vector<120x128xf32>
    %cst_11 = arith.constant dense<0.000000e+00> : vector<128xf32>
    %22 = vector.multi_reduction <add>, %21, %cst_11 [0] : vector<120x128xf32> to vector<128xf32>
    %23 = vector.shape_cast %22 : vector<128xf32> to vector<1x128xf32>
    %cst_12 = arith.constant 1.200000e+02 : f32
    %24 = vector.broadcast %cst_12 : f32 to vector<1x128xf32>
    %25 = arith.divf %23, %24 : vector<1x128xf32>
    %26 = vector.broadcast %18 : vector<1x128xf32> to vector<120x128xf32>
    %27 = arith.subf %14, %26 : vector<120x128xf32>
    %cst_13 = arith.constant 9.99999993E-9 : f32
    %28 = vector.broadcast %cst_13 : f32 to vector<1x128xf32>
    %29 = arith.addf %25, %28 : vector<1x128xf32>
    %30 = math.rsqrt %29 : vector<1x128xf32>
    %31 = vector.broadcast %30 : vector<1x128xf32> to vector<120x128xf32>
    %32 = arith.mulf %27, %31 : vector<120x128xf32>
    %c0_14 = arith.constant 0 : index
    %c0_15 = arith.constant 0 : index
    %33 = vector.load %arg3[%c0_14, %c0_15] : memref<1x128xf32, #tpu.memory_space<vmem>>, vector<1x128xf32>
    %34 = vector.broadcast %33 : vector<1x128xf32> to vector<120x128xf32>
    %35 = arith.mulf %32, %34 : vector<120x128xf32>
    %c0_16 = arith.constant 0 : index
    %c0_17 = arith.constant 0 : index
    %36 = vector.load %arg4[%c0_16, %c0_17] : memref<1x128xf32, #tpu.memory_space<vmem>>, vector<1x128xf32>
    %37 = vector.broadcast %36 : vector<1x128xf32> to vector<120x128xf32>
    %38 = arith.addf %35, %37 : vector<120x128xf32>
    %c0_18 = arith.constant 0 : index
    %c0_19 = arith.constant 0 : index
    %c0_20 = arith.constant 0 : index
    %39 = vector.load %arg5[%c0_18, %c0_19, %c0_20] : memref<2x120x128xf32, #tpu.memory_space<vmem>>, vector<1x120x128xf32>
    %40 = vector.shape_cast %39 : vector<1x120x128xf32> to vector<120x128xf32>
    %41 = vector.shape_cast %38 : vector<120x128xf32> to vector<1x120x128xf32>
    tpu.vector_store %arg5[%c0_18, %c0_19, %c0_20], %41 {strides = array<i32>} : memref<2x120x128xf32, #tpu.memory_space<vmem>>, vector<1x120x128xf32>,
    %c1 = arith.constant 1 : index
    %c0_21 = arith.constant 0 : index
    %c0_22 = arith.constant 0 : index
    %42 = vector.load %arg0[%c1, %c0_21, %c0_22] : memref<2x120x256xbf16, #tpu.memory_space<vmem>>, vector<1x120x256xbf16>
    %43 = vector.shape_cast %42 : vector<1x120x256xbf16> to vector<120x256xbf16>
    %cst_23 = arith.constant dense<0.000000e+00> : vector<120x128xf32>
    %44 = tpu.matmul %43, %0, %cst_23 {dimension_numbers = #tpu.dot_dimension_numbers<[1], [0], [0], [1], [0, 0, 1, 1], [], []>} : vector<120x256xbf16>, vector<256x128xbf16>, vector<120x128xf32> -> vector<120x128xf32>
    %45 = vector.broadcast %1 : vector<1x128xf32> to vector<120x128xf32>
    %46 = arith.addf %44, %45 : vector<120x128xf32>
    %cst_24 = arith.constant 0.000000e+00 : f32
    %47 = vector.broadcast %cst_24 : f32 to vector<120x128xf32>
    %48 = arith.cmpf ogt, %46, %47 : vector<120x128xf32>
    %cst_25 = arith.constant 0.000000e+00 : f32
    %49 = vector.broadcast %cst_25 : f32 to vector<120x128xf32>
    %50 = arith.minimumf %46, %49 : vector<120x128xf32>
    %51 = math.exp %50 : vector<120x128xf32>
    %cst_26 = arith.constant 1.000000e+00 : f32
    %52 = vector.broadcast %cst_26 : f32 to vector<120x128xf32>
    %53 = arith.subf %51, %52 : vector<120x128xf32>
    %54 = arith.select %48, %46, %53 : vector<120x128xi1>, vector<120x128xf32>
    %cst_27 = arith.constant dense<0.000000e+00> : vector<128xf32>
    %55 = vector.multi_reduction <add>, %54, %cst_27 [0] : vector<120x128xf32> to vector<128xf32>
    %56 = vector.shape_cast %55 : vector<128xf32> to vector<1x128xf32>
    %cst_28 = arith.constant 1.200000e+02 : f32
    %57 = vector.broadcast %cst_28 : f32 to vector<1x128xf32>
    %58 = arith.divf %56, %57 : vector<1x128xf32>
    %59 = vector.broadcast %58 : vector<1x128xf32> to vector<120x128xf32>
    %60 = arith.subf %54, %59 : vector<120x128xf32>
    %61 = arith.mulf %60, %60 : vector<120x128xf32>
    %cst_29 = arith.constant dense<0.000000e+00> : vector<128xf32>
    %62 = vector.multi_reduction <add>, %61, %cst_29 [0] : vector<120x128xf32> to vector<128xf32>
    %63 = vector.shape_cast %62 : vector<128xf32> to vector<1x128xf32>
    %cst_30 = arith.constant 1.200000e+02 : f32
    %64 = vector.broadcast %cst_30 : f32 to vector<1x128xf32>
    %65 = arith.divf %63, %64 : vector<1x128xf32>
    %66 = vector.broadcast %58 : vector<1x128xf32> to vector<120x128xf32>
    %67 = arith.subf %54, %66 : vector<120x128xf32>
    %cst_31 = arith.constant 9.99999993E-9 : f32
    %68 = vector.broadcast %cst_31 : f32 to vector<1x128xf32>
    %69 = arith.addf %65, %68 : vector<1x128xf32>
    %70 = math.rsqrt %69 : vector<1x128xf32>
    %71 = vector.broadcast %70 : vector<1x128xf32> to vector<120x128xf32>
    %72 = arith.mulf %67, %71 : vector<120x128xf32>
    %c0_32 = arith.constant 0 : index
    %c0_33 = arith.constant 0 : index
    %73 = vector.load %arg3[%c0_32, %c0_33] : memref<1x128xf32, #tpu.memory_space<vmem>>, vector<1x128xf32>
    %74 = vector.broadcast %73 : vector<1x128xf32> to vector<120x128xf32>
    %75 = arith.mulf %72, %74 : vector<120x128xf32>
    %c0_34 = arith.constant 0 : index
    %c0_35 = arith.constant 0 : index
    %76 = vector.load %arg4[%c0_34, %c0_35] : memref<1x128xf32, #tpu.memory_space<vmem>>, vector<1x128xf32>
    %77 = vector.broadcast %76 : vector<1x128xf32> to vector<120x128xf32>
    %78 = arith.addf %75, %77 : vector<120x128xf32>
    %c1_36 = arith.constant 1 : index
    %c0_37 = arith.constant 0 : index
    %c0_38 = arith.constant 0 : index
    %79 = vector.load %arg5[%c1_36, %c0_37, %c0_38] : memref<2x120x128xf32, #tpu.memory_space<vmem>>, vector<1x120x128xf32>
    %80 = vector.shape_cast %79 : vector<1x120x128xf32> to vector<120x128xf32>
    %81 = vector.shape_cast %78 : vector<120x128xf32> to vector<1x120x128xf32>
    tpu.vector_store %arg5[%c1_36, %c0_37, %c0_38], %81 {strides = array<i32>} : memref<2x120x128xf32, #tpu.memory_space<vmem>>, vector<1x120x128xf32>,
    return
  }
}

module attributes {stable_mosaic.version = 11 : i64} {
  func.func @_fused_conv_kernel(%arg0: memref<2x56x128xbf16, #tpu.memory_space<vmem>>, %arg1: memref<128x128xbf16, #tpu.memory_space<vmem>>, %arg2: memref<1x128xf32, #tpu.memory_space<vmem>>, %arg3: memref<1x128xf32, #tpu.memory_space<vmem>>, %arg4: memref<1x128xf32, #tpu.memory_space<vmem>>, %arg5: memref<2x56x128xf32, #tpu.memory_space<vmem>>) attributes {dimension_semantics = [], scalar_prefetch = 0 : i64, scratch_operands = 0 : i64, tpu.core_type = #tpu.core_type<tc>} {
    %c0 = arith.constant 0 : index
    %c0_0 = arith.constant 0 : index
    %0 = vector.load %arg1[%c0, %c0_0] : memref<128x128xbf16, #tpu.memory_space<vmem>>, vector<128x128xbf16>
    %c0_1 = arith.constant 0 : index
    %c0_2 = arith.constant 0 : index
    %1 = vector.load %arg2[%c0_1, %c0_2] : memref<1x128xf32, #tpu.memory_space<vmem>>, vector<1x128xf32>
    %c0_3 = arith.constant 0 : index
    %c0_4 = arith.constant 0 : index
    %c0_5 = arith.constant 0 : index
    %2 = vector.load %arg0[%c0_3, %c0_4, %c0_5] : memref<2x56x128xbf16, #tpu.memory_space<vmem>>, vector<1x56x128xbf16>
    %3 = vector.shape_cast %2 : vector<1x56x128xbf16> to vector<56x128xbf16>
    %cst = arith.constant dense<0.000000e+00> : vector<56x128xf32>
    %4 = tpu.matmul %3, %0, %cst {dimension_numbers = #tpu.dot_dimension_numbers<[1], [0], [0], [1], [0, 0, 1, 1], [], []>} : vector<56x128xbf16>, vector<128x128xbf16>, vector<56x128xf32> -> vector<56x128xf32>
    %5 = vector.broadcast %1 : vector<1x128xf32> to vector<56x128xf32>
    %6 = arith.addf %4, %5 : vector<56x128xf32>
    %cst_6 = arith.constant 0.000000e+00 : f32
    %7 = vector.broadcast %cst_6 : f32 to vector<56x128xf32>
    %8 = arith.cmpf ogt, %6, %7 : vector<56x128xf32>
    %cst_7 = arith.constant 0.000000e+00 : f32
    %9 = vector.broadcast %cst_7 : f32 to vector<56x128xf32>
    %10 = arith.minimumf %6, %9 : vector<56x128xf32>
    %11 = math.exp %10 : vector<56x128xf32>
    %cst_8 = arith.constant 1.000000e+00 : f32
    %12 = vector.broadcast %cst_8 : f32 to vector<56x128xf32>
    %13 = arith.subf %11, %12 : vector<56x128xf32>
    %14 = arith.select %8, %6, %13 : vector<56x128xi1>, vector<56x128xf32>
    %cst_9 = arith.constant dense<0.000000e+00> : vector<128xf32>
    %15 = vector.multi_reduction <add>, %14, %cst_9 [0] : vector<56x128xf32> to vector<128xf32>
    %16 = vector.shape_cast %15 : vector<128xf32> to vector<1x128xf32>
    %cst_10 = arith.constant 5.600000e+01 : f32
    %17 = vector.broadcast %cst_10 : f32 to vector<1x128xf32>
    %18 = arith.divf %16, %17 : vector<1x128xf32>
    %19 = vector.broadcast %18 : vector<1x128xf32> to vector<56x128xf32>
    %20 = arith.subf %14, %19 : vector<56x128xf32>
    %21 = arith.mulf %20, %20 : vector<56x128xf32>
    %cst_11 = arith.constant dense<0.000000e+00> : vector<128xf32>
    %22 = vector.multi_reduction <add>, %21, %cst_11 [0] : vector<56x128xf32> to vector<128xf32>
    %23 = vector.shape_cast %22 : vector<128xf32> to vector<1x128xf32>
    %cst_12 = arith.constant 5.600000e+01 : f32
    %24 = vector.broadcast %cst_12 : f32 to vector<1x128xf32>
    %25 = arith.divf %23, %24 : vector<1x128xf32>
    %26 = vector.broadcast %18 : vector<1x128xf32> to vector<56x128xf32>
    %27 = arith.subf %14, %26 : vector<56x128xf32>
    %cst_13 = arith.constant 9.99999993E-9 : f32
    %28 = vector.broadcast %cst_13 : f32 to vector<1x128xf32>
    %29 = arith.addf %25, %28 : vector<1x128xf32>
    %30 = math.rsqrt %29 : vector<1x128xf32>
    %31 = vector.broadcast %30 : vector<1x128xf32> to vector<56x128xf32>
    %32 = arith.mulf %27, %31 : vector<56x128xf32>
    %c0_14 = arith.constant 0 : index
    %c0_15 = arith.constant 0 : index
    %33 = vector.load %arg3[%c0_14, %c0_15] : memref<1x128xf32, #tpu.memory_space<vmem>>, vector<1x128xf32>
    %34 = vector.broadcast %33 : vector<1x128xf32> to vector<56x128xf32>
    %35 = arith.mulf %32, %34 : vector<56x128xf32>
    %c0_16 = arith.constant 0 : index
    %c0_17 = arith.constant 0 : index
    %36 = vector.load %arg4[%c0_16, %c0_17] : memref<1x128xf32, #tpu.memory_space<vmem>>, vector<1x128xf32>
    %37 = vector.broadcast %36 : vector<1x128xf32> to vector<56x128xf32>
    %38 = arith.addf %35, %37 : vector<56x128xf32>
    %c0_18 = arith.constant 0 : index
    %c0_19 = arith.constant 0 : index
    %c0_20 = arith.constant 0 : index
    %39 = vector.load %arg5[%c0_18, %c0_19, %c0_20] : memref<2x56x128xf32, #tpu.memory_space<vmem>>, vector<1x56x128xf32>
    %40 = vector.shape_cast %39 : vector<1x56x128xf32> to vector<56x128xf32>
    %41 = vector.shape_cast %38 : vector<56x128xf32> to vector<1x56x128xf32>
    tpu.vector_store %arg5[%c0_18, %c0_19, %c0_20], %41 {strides = array<i32>} : memref<2x56x128xf32, #tpu.memory_space<vmem>>, vector<1x56x128xf32>,
    %c1 = arith.constant 1 : index
    %c0_21 = arith.constant 0 : index
    %c0_22 = arith.constant 0 : index
    %42 = vector.load %arg0[%c1, %c0_21, %c0_22] : memref<2x56x128xbf16, #tpu.memory_space<vmem>>, vector<1x56x128xbf16>
    %43 = vector.shape_cast %42 : vector<1x56x128xbf16> to vector<56x128xbf16>
    %cst_23 = arith.constant dense<0.000000e+00> : vector<56x128xf32>
    %44 = tpu.matmul %43, %0, %cst_23 {dimension_numbers = #tpu.dot_dimension_numbers<[1], [0], [0], [1], [0, 0, 1, 1], [], []>} : vector<56x128xbf16>, vector<128x128xbf16>, vector<56x128xf32> -> vector<56x128xf32>
    %45 = vector.broadcast %1 : vector<1x128xf32> to vector<56x128xf32>
    %46 = arith.addf %44, %45 : vector<56x128xf32>
    %cst_24 = arith.constant 0.000000e+00 : f32
    %47 = vector.broadcast %cst_24 : f32 to vector<56x128xf32>
    %48 = arith.cmpf ogt, %46, %47 : vector<56x128xf32>
    %cst_25 = arith.constant 0.000000e+00 : f32
    %49 = vector.broadcast %cst_25 : f32 to vector<56x128xf32>
    %50 = arith.minimumf %46, %49 : vector<56x128xf32>
    %51 = math.exp %50 : vector<56x128xf32>
    %cst_26 = arith.constant 1.000000e+00 : f32
    %52 = vector.broadcast %cst_26 : f32 to vector<56x128xf32>
    %53 = arith.subf %51, %52 : vector<56x128xf32>
    %54 = arith.select %48, %46, %53 : vector<56x128xi1>, vector<56x128xf32>
    %cst_27 = arith.constant dense<0.000000e+00> : vector<128xf32>
    %55 = vector.multi_reduction <add>, %54, %cst_27 [0] : vector<56x128xf32> to vector<128xf32>
    %56 = vector.shape_cast %55 : vector<128xf32> to vector<1x128xf32>
    %cst_28 = arith.constant 5.600000e+01 : f32
    %57 = vector.broadcast %cst_28 : f32 to vector<1x128xf32>
    %58 = arith.divf %56, %57 : vector<1x128xf32>
    %59 = vector.broadcast %58 : vector<1x128xf32> to vector<56x128xf32>
    %60 = arith.subf %54, %59 : vector<56x128xf32>
    %61 = arith.mulf %60, %60 : vector<56x128xf32>
    %cst_29 = arith.constant dense<0.000000e+00> : vector<128xf32>
    %62 = vector.multi_reduction <add>, %61, %cst_29 [0] : vector<56x128xf32> to vector<128xf32>
    %63 = vector.shape_cast %62 : vector<128xf32> to vector<1x128xf32>
    %cst_30 = arith.constant 5.600000e+01 : f32
    %64 = vector.broadcast %cst_30 : f32 to vector<1x128xf32>
    %65 = arith.divf %63, %64 : vector<1x128xf32>
    %66 = vector.broadcast %58 : vector<1x128xf32> to vector<56x128xf32>
    %67 = arith.subf %54, %66 : vector<56x128xf32>
    %cst_31 = arith.constant 9.99999993E-9 : f32
    %68 = vector.broadcast %cst_31 : f32 to vector<1x128xf32>
    %69 = arith.addf %65, %68 : vector<1x128xf32>
    %70 = math.rsqrt %69 : vector<1x128xf32>
    %71 = vector.broadcast %70 : vector<1x128xf32> to vector<56x128xf32>
    %72 = arith.mulf %67, %71 : vector<56x128xf32>
    %c0_32 = arith.constant 0 : index
    %c0_33 = arith.constant 0 : index
    %73 = vector.load %arg3[%c0_32, %c0_33] : memref<1x128xf32, #tpu.memory_space<vmem>>, vector<1x128xf32>
    %74 = vector.broadcast %73 : vector<1x128xf32> to vector<56x128xf32>
    %75 = arith.mulf %72, %74 : vector<56x128xf32>
    %c0_34 = arith.constant 0 : index
    %c0_35 = arith.constant 0 : index
    %76 = vector.load %arg4[%c0_34, %c0_35] : memref<1x128xf32, #tpu.memory_space<vmem>>, vector<1x128xf32>
    %77 = vector.broadcast %76 : vector<1x128xf32> to vector<56x128xf32>
    %78 = arith.addf %75, %77 : vector<56x128xf32>
    %c1_36 = arith.constant 1 : index
    %c0_37 = arith.constant 0 : index
    %c0_38 = arith.constant 0 : index
    %79 = vector.load %arg5[%c1_36, %c0_37, %c0_38] : memref<2x56x128xf32, #tpu.memory_space<vmem>>, vector<1x56x128xf32>
    %80 = vector.shape_cast %79 : vector<1x56x128xf32> to vector<56x128xf32>
    %81 = vector.shape_cast %78 : vector<56x128xf32> to vector<1x56x128xf32>
    tpu.vector_store %arg5[%c1_36, %c0_37, %c0_38], %81 {strides = array<i32>} : memref<2x56x128xf32, #tpu.memory_space<vmem>>, vector<1x56x128xf32>,
    return
  }
}

module attributes {stable_mosaic.version = 11 : i64} {
  func.func @_fused_conv_kernel(%arg0: memref<2x24x256xbf16, #tpu.memory_space<vmem>>, %arg1: memref<256x128xbf16, #tpu.memory_space<vmem>>, %arg2: memref<1x128xf32, #tpu.memory_space<vmem>>, %arg3: memref<1x128xf32, #tpu.memory_space<vmem>>, %arg4: memref<1x128xf32, #tpu.memory_space<vmem>>, %arg5: memref<2x24x128xf32, #tpu.memory_space<vmem>>) attributes {dimension_semantics = [], scalar_prefetch = 0 : i64, scratch_operands = 0 : i64, tpu.core_type = #tpu.core_type<tc>} {
    %c0 = arith.constant 0 : index
    %c0_0 = arith.constant 0 : index
    %0 = vector.load %arg1[%c0, %c0_0] : memref<256x128xbf16, #tpu.memory_space<vmem>>, vector<256x128xbf16>
    %c0_1 = arith.constant 0 : index
    %c0_2 = arith.constant 0 : index
    %1 = vector.load %arg2[%c0_1, %c0_2] : memref<1x128xf32, #tpu.memory_space<vmem>>, vector<1x128xf32>
    %c0_3 = arith.constant 0 : index
    %c0_4 = arith.constant 0 : index
    %c0_5 = arith.constant 0 : index
    %2 = vector.load %arg0[%c0_3, %c0_4, %c0_5] : memref<2x24x256xbf16, #tpu.memory_space<vmem>>, vector<1x24x256xbf16>
    %3 = vector.shape_cast %2 : vector<1x24x256xbf16> to vector<24x256xbf16>
    %cst = arith.constant dense<0.000000e+00> : vector<24x128xf32>
    %4 = tpu.matmul %3, %0, %cst {dimension_numbers = #tpu.dot_dimension_numbers<[1], [0], [0], [1], [0, 0, 1, 1], [], []>} : vector<24x256xbf16>, vector<256x128xbf16>, vector<24x128xf32> -> vector<24x128xf32>
    %5 = vector.broadcast %1 : vector<1x128xf32> to vector<24x128xf32>
    %6 = arith.addf %4, %5 : vector<24x128xf32>
    %cst_6 = arith.constant 0.000000e+00 : f32
    %7 = vector.broadcast %cst_6 : f32 to vector<24x128xf32>
    %8 = arith.cmpf ogt, %6, %7 : vector<24x128xf32>
    %cst_7 = arith.constant 0.000000e+00 : f32
    %9 = vector.broadcast %cst_7 : f32 to vector<24x128xf32>
    %10 = arith.minimumf %6, %9 : vector<24x128xf32>
    %11 = math.exp %10 : vector<24x128xf32>
    %cst_8 = arith.constant 1.000000e+00 : f32
    %12 = vector.broadcast %cst_8 : f32 to vector<24x128xf32>
    %13 = arith.subf %11, %12 : vector<24x128xf32>
    %14 = arith.select %8, %6, %13 : vector<24x128xi1>, vector<24x128xf32>
    %cst_9 = arith.constant dense<0.000000e+00> : vector<128xf32>
    %15 = vector.multi_reduction <add>, %14, %cst_9 [0] : vector<24x128xf32> to vector<128xf32>
    %16 = vector.shape_cast %15 : vector<128xf32> to vector<1x128xf32>
    %cst_10 = arith.constant 2.400000e+01 : f32
    %17 = vector.broadcast %cst_10 : f32 to vector<1x128xf32>
    %18 = arith.divf %16, %17 : vector<1x128xf32>
    %19 = vector.broadcast %18 : vector<1x128xf32> to vector<24x128xf32>
    %20 = arith.subf %14, %19 : vector<24x128xf32>
    %21 = arith.mulf %20, %20 : vector<24x128xf32>
    %cst_11 = arith.constant dense<0.000000e+00> : vector<128xf32>
    %22 = vector.multi_reduction <add>, %21, %cst_11 [0] : vector<24x128xf32> to vector<128xf32>
    %23 = vector.shape_cast %22 : vector<128xf32> to vector<1x128xf32>
    %cst_12 = arith.constant 2.400000e+01 : f32
    %24 = vector.broadcast %cst_12 : f32 to vector<1x128xf32>
    %25 = arith.divf %23, %24 : vector<1x128xf32>
    %26 = vector.broadcast %18 : vector<1x128xf32> to vector<24x128xf32>
    %27 = arith.subf %14, %26 : vector<24x128xf32>
    %cst_13 = arith.constant 9.99999993E-9 : f32
    %28 = vector.broadcast %cst_13 : f32 to vector<1x128xf32>
    %29 = arith.addf %25, %28 : vector<1x128xf32>
    %30 = math.rsqrt %29 : vector<1x128xf32>
    %31 = vector.broadcast %30 : vector<1x128xf32> to vector<24x128xf32>
    %32 = arith.mulf %27, %31 : vector<24x128xf32>
    %c0_14 = arith.constant 0 : index
    %c0_15 = arith.constant 0 : index
    %33 = vector.load %arg3[%c0_14, %c0_15] : memref<1x128xf32, #tpu.memory_space<vmem>>, vector<1x128xf32>
    %34 = vector.broadcast %33 : vector<1x128xf32> to vector<24x128xf32>
    %35 = arith.mulf %32, %34 : vector<24x128xf32>
    %c0_16 = arith.constant 0 : index
    %c0_17 = arith.constant 0 : index
    %36 = vector.load %arg4[%c0_16, %c0_17] : memref<1x128xf32, #tpu.memory_space<vmem>>, vector<1x128xf32>
    %37 = vector.broadcast %36 : vector<1x128xf32> to vector<24x128xf32>
    %38 = arith.addf %35, %37 : vector<24x128xf32>
    %c0_18 = arith.constant 0 : index
    %c0_19 = arith.constant 0 : index
    %c0_20 = arith.constant 0 : index
    %39 = vector.load %arg5[%c0_18, %c0_19, %c0_20] : memref<2x24x128xf32, #tpu.memory_space<vmem>>, vector<1x24x128xf32>
    %40 = vector.shape_cast %39 : vector<1x24x128xf32> to vector<24x128xf32>
    %41 = vector.shape_cast %38 : vector<24x128xf32> to vector<1x24x128xf32>
    tpu.vector_store %arg5[%c0_18, %c0_19, %c0_20], %41 {strides = array<i32>} : memref<2x24x128xf32, #tpu.memory_space<vmem>>, vector<1x24x128xf32>,
    %c1 = arith.constant 1 : index
    %c0_21 = arith.constant 0 : index
    %c0_22 = arith.constant 0 : index
    %42 = vector.load %arg0[%c1, %c0_21, %c0_22] : memref<2x24x256xbf16, #tpu.memory_space<vmem>>, vector<1x24x256xbf16>
    %43 = vector.shape_cast %42 : vector<1x24x256xbf16> to vector<24x256xbf16>
    %cst_23 = arith.constant dense<0.000000e+00> : vector<24x128xf32>
    %44 = tpu.matmul %43, %0, %cst_23 {dimension_numbers = #tpu.dot_dimension_numbers<[1], [0], [0], [1], [0, 0, 1, 1], [], []>} : vector<24x256xbf16>, vector<256x128xbf16>, vector<24x128xf32> -> vector<24x128xf32>
    %45 = vector.broadcast %1 : vector<1x128xf32> to vector<24x128xf32>
    %46 = arith.addf %44, %45 : vector<24x128xf32>
    %cst_24 = arith.constant 0.000000e+00 : f32
    %47 = vector.broadcast %cst_24 : f32 to vector<24x128xf32>
    %48 = arith.cmpf ogt, %46, %47 : vector<24x128xf32>
    %cst_25 = arith.constant 0.000000e+00 : f32
    %49 = vector.broadcast %cst_25 : f32 to vector<24x128xf32>
    %50 = arith.minimumf %46, %49 : vector<24x128xf32>
    %51 = math.exp %50 : vector<24x128xf32>
    %cst_26 = arith.constant 1.000000e+00 : f32
    %52 = vector.broadcast %cst_26 : f32 to vector<24x128xf32>
    %53 = arith.subf %51, %52 : vector<24x128xf32>
    %54 = arith.select %48, %46, %53 : vector<24x128xi1>, vector<24x128xf32>
    %cst_27 = arith.constant dense<0.000000e+00> : vector<128xf32>
    %55 = vector.multi_reduction <add>, %54, %cst_27 [0] : vector<24x128xf32> to vector<128xf32>
    %56 = vector.shape_cast %55 : vector<128xf32> to vector<1x128xf32>
    %cst_28 = arith.constant 2.400000e+01 : f32
    %57 = vector.broadcast %cst_28 : f32 to vector<1x128xf32>
    %58 = arith.divf %56, %57 : vector<1x128xf32>
    %59 = vector.broadcast %58 : vector<1x128xf32> to vector<24x128xf32>
    %60 = arith.subf %54, %59 : vector<24x128xf32>
    %61 = arith.mulf %60, %60 : vector<24x128xf32>
    %cst_29 = arith.constant dense<0.000000e+00> : vector<128xf32>
    %62 = vector.multi_reduction <add>, %61, %cst_29 [0] : vector<24x128xf32> to vector<128xf32>
    %63 = vector.shape_cast %62 : vector<128xf32> to vector<1x128xf32>
    %cst_30 = arith.constant 2.400000e+01 : f32
    %64 = vector.broadcast %cst_30 : f32 to vector<1x128xf32>
    %65 = arith.divf %63, %64 : vector<1x128xf32>
    %66 = vector.broadcast %58 : vector<1x128xf32> to vector<24x128xf32>
    %67 = arith.subf %54, %66 : vector<24x128xf32>
    %cst_31 = arith.constant 9.99999993E-9 : f32
    %68 = vector.broadcast %cst_31 : f32 to vector<1x128xf32>
    %69 = arith.addf %65, %68 : vector<1x128xf32>
    %70 = math.rsqrt %69 : vector<1x128xf32>
    %71 = vector.broadcast %70 : vector<1x128xf32> to vector<24x128xf32>
    %72 = arith.mulf %67, %71 : vector<24x128xf32>
    %c0_32 = arith.constant 0 : index
    %c0_33 = arith.constant 0 : index
    %73 = vector.load %arg3[%c0_32, %c0_33] : memref<1x128xf32, #tpu.memory_space<vmem>>, vector<1x128xf32>
    %74 = vector.broadcast %73 : vector<1x128xf32> to vector<24x128xf32>
    %75 = arith.mulf %72, %74 : vector<24x128xf32>
    %c0_34 = arith.constant 0 : index
    %c0_35 = arith.constant 0 : index
    %76 = vector.load %arg4[%c0_34, %c0_35] : memref<1x128xf32, #tpu.memory_space<vmem>>, vector<1x128xf32>
    %77 = vector.broadcast %76 : vector<1x128xf32> to vector<24x128xf32>
    %78 = arith.addf %75, %77 : vector<24x128xf32>
    %c1_36 = arith.constant 1 : index
    %c0_37 = arith.constant 0 : index
    %c0_38 = arith.constant 0 : index
    %79 = vector.load %arg5[%c1_36, %c0_37, %c0_38] : memref<2x24x128xf32, #tpu.memory_space<vmem>>, vector<1x24x128xf32>
    %80 = vector.shape_cast %79 : vector<1x24x128xf32> to vector<24x128xf32>
    %81 = vector.shape_cast %78 : vector<24x128xf32> to vector<1x24x128xf32>
    tpu.vector_store %arg5[%c1_36, %c0_37, %c0_38], %81 {strides = array<i32>} : memref<2x24x128xf32, #tpu.memory_space<vmem>>, vector<1x24x128xf32>,
    return
  }
}

module attributes {stable_mosaic.version = 11 : i64} {
  func.func @_fused_conv_kernel(%arg0: memref<2x8x384xbf16, #tpu.memory_space<vmem>>, %arg1: memref<384x128xbf16, #tpu.memory_space<vmem>>, %arg2: memref<1x128xf32, #tpu.memory_space<vmem>>, %arg3: memref<1x128xf32, #tpu.memory_space<vmem>>, %arg4: memref<1x128xf32, #tpu.memory_space<vmem>>, %arg5: memref<2x8x128xf32, #tpu.memory_space<vmem>>) attributes {dimension_semantics = [], scalar_prefetch = 0 : i64, scratch_operands = 0 : i64, tpu.core_type = #tpu.core_type<tc>} {
    %c0 = arith.constant 0 : index
    %c0_0 = arith.constant 0 : index
    %0 = vector.load %arg1[%c0, %c0_0] : memref<384x128xbf16, #tpu.memory_space<vmem>>, vector<384x128xbf16>
    %c0_1 = arith.constant 0 : index
    %c0_2 = arith.constant 0 : index
    %1 = vector.load %arg2[%c0_1, %c0_2] : memref<1x128xf32, #tpu.memory_space<vmem>>, vector<1x128xf32>
    %c0_3 = arith.constant 0 : index
    %c0_4 = arith.constant 0 : index
    %c0_5 = arith.constant 0 : index
    %2 = vector.load %arg0[%c0_3, %c0_4, %c0_5] : memref<2x8x384xbf16, #tpu.memory_space<vmem>>, vector<1x8x384xbf16>
    %3 = vector.shape_cast %2 : vector<1x8x384xbf16> to vector<8x384xbf16>
    %cst = arith.constant dense<0.000000e+00> : vector<8x128xf32>
    %4 = tpu.matmul %3, %0, %cst {dimension_numbers = #tpu.dot_dimension_numbers<[1], [0], [0], [1], [0, 0, 1, 1], [], []>} : vector<8x384xbf16>, vector<384x128xbf16>, vector<8x128xf32> -> vector<8x128xf32>
    %5 = vector.broadcast %1 : vector<1x128xf32> to vector<8x128xf32>
    %6 = arith.addf %4, %5 : vector<8x128xf32>
    %cst_6 = arith.constant 0.000000e+00 : f32
    %7 = vector.broadcast %cst_6 : f32 to vector<8x128xf32>
    %8 = arith.cmpf ogt, %6, %7 : vector<8x128xf32>
    %cst_7 = arith.constant 0.000000e+00 : f32
    %9 = vector.broadcast %cst_7 : f32 to vector<8x128xf32>
    %10 = arith.minimumf %6, %9 : vector<8x128xf32>
    %11 = math.exp %10 : vector<8x128xf32>
    %cst_8 = arith.constant 1.000000e+00 : f32
    %12 = vector.broadcast %cst_8 : f32 to vector<8x128xf32>
    %13 = arith.subf %11, %12 : vector<8x128xf32>
    %14 = arith.select %8, %6, %13 : vector<8x128xi1>, vector<8x128xf32>
    %cst_9 = arith.constant dense<0.000000e+00> : vector<128xf32>
    %15 = vector.multi_reduction <add>, %14, %cst_9 [0] : vector<8x128xf32> to vector<128xf32>
    %16 = vector.shape_cast %15 : vector<128xf32> to vector<1x128xf32>
    %cst_10 = arith.constant 8.000000e+00 : f32
    %17 = vector.broadcast %cst_10 : f32 to vector<1x128xf32>
    %18 = arith.divf %16, %17 : vector<1x128xf32>
    %19 = vector.broadcast %18 : vector<1x128xf32> to vector<8x128xf32>
    %20 = arith.subf %14, %19 : vector<8x128xf32>
    %21 = arith.mulf %20, %20 : vector<8x128xf32>
    %cst_11 = arith.constant dense<0.000000e+00> : vector<128xf32>
    %22 = vector.multi_reduction <add>, %21, %cst_11 [0] : vector<8x128xf32> to vector<128xf32>
    %23 = vector.shape_cast %22 : vector<128xf32> to vector<1x128xf32>
    %cst_12 = arith.constant 8.000000e+00 : f32
    %24 = vector.broadcast %cst_12 : f32 to vector<1x128xf32>
    %25 = arith.divf %23, %24 : vector<1x128xf32>
    %26 = vector.broadcast %18 : vector<1x128xf32> to vector<8x128xf32>
    %27 = arith.subf %14, %26 : vector<8x128xf32>
    %cst_13 = arith.constant 9.99999993E-9 : f32
    %28 = vector.broadcast %cst_13 : f32 to vector<1x128xf32>
    %29 = arith.addf %25, %28 : vector<1x128xf32>
    %30 = math.rsqrt %29 : vector<1x128xf32>
    %31 = vector.broadcast %30 : vector<1x128xf32> to vector<8x128xf32>
    %32 = arith.mulf %27, %31 : vector<8x128xf32>
    %c0_14 = arith.constant 0 : index
    %c0_15 = arith.constant 0 : index
    %33 = vector.load %arg3[%c0_14, %c0_15] : memref<1x128xf32, #tpu.memory_space<vmem>>, vector<1x128xf32>
    %34 = vector.broadcast %33 : vector<1x128xf32> to vector<8x128xf32>
    %35 = arith.mulf %32, %34 : vector<8x128xf32>
    %c0_16 = arith.constant 0 : index
    %c0_17 = arith.constant 0 : index
    %36 = vector.load %arg4[%c0_16, %c0_17] : memref<1x128xf32, #tpu.memory_space<vmem>>, vector<1x128xf32>
    %37 = vector.broadcast %36 : vector<1x128xf32> to vector<8x128xf32>
    %38 = arith.addf %35, %37 : vector<8x128xf32>
    %c0_18 = arith.constant 0 : index
    %c0_19 = arith.constant 0 : index
    %c0_20 = arith.constant 0 : index
    %39 = vector.load %arg5[%c0_18, %c0_19, %c0_20] : memref<2x8x128xf32, #tpu.memory_space<vmem>>, vector<1x8x128xf32>
    %40 = vector.shape_cast %39 : vector<1x8x128xf32> to vector<8x128xf32>
    %41 = vector.shape_cast %38 : vector<8x128xf32> to vector<1x8x128xf32>
    tpu.vector_store %arg5[%c0_18, %c0_19, %c0_20], %41 {strides = array<i32>} : memref<2x8x128xf32, #tpu.memory_space<vmem>>, vector<1x8x128xf32>,
    %c1 = arith.constant 1 : index
    %c0_21 = arith.constant 0 : index
    %c0_22 = arith.constant 0 : index
    %42 = vector.load %arg0[%c1, %c0_21, %c0_22] : memref<2x8x384xbf16, #tpu.memory_space<vmem>>, vector<1x8x384xbf16>
    %43 = vector.shape_cast %42 : vector<1x8x384xbf16> to vector<8x384xbf16>
    %cst_23 = arith.constant dense<0.000000e+00> : vector<8x128xf32>
    %44 = tpu.matmul %43, %0, %cst_23 {dimension_numbers = #tpu.dot_dimension_numbers<[1], [0], [0], [1], [0, 0, 1, 1], [], []>} : vector<8x384xbf16>, vector<384x128xbf16>, vector<8x128xf32> -> vector<8x128xf32>
    %45 = vector.broadcast %1 : vector<1x128xf32> to vector<8x128xf32>
    %46 = arith.addf %44, %45 : vector<8x128xf32>
    %cst_24 = arith.constant 0.000000e+00 : f32
    %47 = vector.broadcast %cst_24 : f32 to vector<8x128xf32>
    %48 = arith.cmpf ogt, %46, %47 : vector<8x128xf32>
    %cst_25 = arith.constant 0.000000e+00 : f32
    %49 = vector.broadcast %cst_25 : f32 to vector<8x128xf32>
    %50 = arith.minimumf %46, %49 : vector<8x128xf32>
    %51 = math.exp %50 : vector<8x128xf32>
    %cst_26 = arith.constant 1.000000e+00 : f32
    %52 = vector.broadcast %cst_26 : f32 to vector<8x128xf32>
    %53 = arith.subf %51, %52 : vector<8x128xf32>
    %54 = arith.select %48, %46, %53 : vector<8x128xi1>, vector<8x128xf32>
    %cst_27 = arith.constant dense<0.000000e+00> : vector<128xf32>
    %55 = vector.multi_reduction <add>, %54, %cst_27 [0] : vector<8x128xf32> to vector<128xf32>
    %56 = vector.shape_cast %55 : vector<128xf32> to vector<1x128xf32>
    %cst_28 = arith.constant 8.000000e+00 : f32
    %57 = vector.broadcast %cst_28 : f32 to vector<1x128xf32>
    %58 = arith.divf %56, %57 : vector<1x128xf32>
    %59 = vector.broadcast %58 : vector<1x128xf32> to vector<8x128xf32>
    %60 = arith.subf %54, %59 : vector<8x128xf32>
    %61 = arith.mulf %60, %60 : vector<8x128xf32>
    %cst_29 = arith.constant dense<0.000000e+00> : vector<128xf32>
    %62 = vector.multi_reduction <add>, %61, %cst_29 [0] : vector<8x128xf32> to vector<128xf32>
    %63 = vector.shape_cast %62 : vector<128xf32> to vector<1x128xf32>
    %cst_30 = arith.constant 8.000000e+00 : f32
    %64 = vector.broadcast %cst_30 : f32 to vector<1x128xf32>
    %65 = arith.divf %63, %64 : vector<1x128xf32>
    %66 = vector.broadcast %58 : vector<1x128xf32> to vector<8x128xf32>
    %67 = arith.subf %54, %66 : vector<8x128xf32>
    %cst_31 = arith.constant 9.99999993E-9 : f32
    %68 = vector.broadcast %cst_31 : f32 to vector<1x128xf32>
    %69 = arith.addf %65, %68 : vector<1x128xf32>
    %70 = math.rsqrt %69 : vector<1x128xf32>
    %71 = vector.broadcast %70 : vector<1x128xf32> to vector<8x128xf32>
    %72 = arith.mulf %67, %71 : vector<8x128xf32>
    %c0_32 = arith.constant 0 : index
    %c0_33 = arith.constant 0 : index
    %73 = vector.load %arg3[%c0_32, %c0_33] : memref<1x128xf32, #tpu.memory_space<vmem>>, vector<1x128xf32>
    %74 = vector.broadcast %73 : vector<1x128xf32> to vector<8x128xf32>
    %75 = arith.mulf %72, %74 : vector<8x128xf32>
    %c0_34 = arith.constant 0 : index
    %c0_35 = arith.constant 0 : index
    %76 = vector.load %arg4[%c0_34, %c0_35] : memref<1x128xf32, #tpu.memory_space<vmem>>, vector<1x128xf32>
    %77 = vector.broadcast %76 : vector<1x128xf32> to vector<8x128xf32>
    %78 = arith.addf %75, %77 : vector<8x128xf32>
    %c1_36 = arith.constant 1 : index
    %c0_37 = arith.constant 0 : index
    %c0_38 = arith.constant 0 : index
    %79 = vector.load %arg5[%c1_36, %c0_37, %c0_38] : memref<2x8x128xf32, #tpu.memory_space<vmem>>, vector<1x8x128xf32>
    %80 = vector.shape_cast %79 : vector<1x8x128xf32> to vector<8x128xf32>
    %81 = vector.shape_cast %78 : vector<8x128xf32> to vector<1x8x128xf32>
    tpu.vector_store %arg5[%c1_36, %c0_37, %c0_38], %81 {strides = array<i32>} : memref<2x8x128xf32, #tpu.memory_space<vmem>>, vector<1x8x128xf32>,
    return
  }
}

module attributes {stable_mosaic.version = 11 : i64} {
  func.func @_tcn_block_kernel(%arg0: memref<2x8x128xf32, #tpu.memory_space<vmem>>, %arg1: memref<1x128xf32, #tpu.memory_space<vmem>>, %arg2: memref<1x128xf32, #tpu.memory_space<vmem>>, %arg3: memref<3x128xf32, #tpu.memory_space<vmem>>, %arg4: memref<1x128xf32, #tpu.memory_space<vmem>>, %arg5: memref<128x128xbf16, #tpu.memory_space<vmem>>, %arg6: memref<1x128xf32, #tpu.memory_space<vmem>>, %arg7: memref<2x8x128xf32, #tpu.memory_space<vmem>>, %arg8: memref<10x128xf32, #tpu.memory_space<vmem>>) attributes {dimension_semantics = [], scalar_prefetch = 0 : i64, scratch_operands = 1 : i64, tpu.core_type = #tpu.core_type<tc>} {
    %c0 = arith.constant 0 : index
    %c0_0 = arith.constant 0 : index
    %0 = vector.load %arg1[%c0, %c0_0] : memref<1x128xf32, #tpu.memory_space<vmem>>, vector<1x128xf32>
    %c0_1 = arith.constant 0 : index
    %c0_2 = arith.constant 0 : index
    %1 = vector.load %arg2[%c0_1, %c0_2] : memref<1x128xf32, #tpu.memory_space<vmem>>, vector<1x128xf32>
    %c0_3 = arith.constant 0 : index
    %c0_4 = arith.constant 0 : index
    %2 = vector.load %arg3[%c0_3, %c0_4] : memref<3x128xf32, #tpu.memory_space<vmem>>, vector<3x128xf32>
    %c0_5 = arith.constant 0 : index
    %c0_6 = arith.constant 0 : index
    %3 = vector.load %arg4[%c0_5, %c0_6] : memref<1x128xf32, #tpu.memory_space<vmem>>, vector<1x128xf32>
    %c0_7 = arith.constant 0 : index
    %c0_8 = arith.constant 0 : index
    %4 = vector.load %arg5[%c0_7, %c0_8] : memref<128x128xbf16, #tpu.memory_space<vmem>>, vector<128x128xbf16>
    %c0_9 = arith.constant 0 : index
    %c0_10 = arith.constant 0 : index
    %5 = vector.load %arg6[%c0_9, %c0_10] : memref<1x128xf32, #tpu.memory_space<vmem>>, vector<1x128xf32>
    %c0_11 = arith.constant 0 : index
    %c0_12 = arith.constant 0 : index
    %c0_13 = arith.constant 0 : index
    %6 = vector.load %arg0[%c0_11, %c0_12, %c0_13] : memref<2x8x128xf32, #tpu.memory_space<vmem>>, vector<1x8x128xf32>
    %7 = vector.shape_cast %6 : vector<1x8x128xf32> to vector<8x128xf32>
    %cst = arith.constant dense<0.000000e+00> : vector<128xf32>
    %8 = vector.multi_reduction <add>, %7, %cst [0] : vector<8x128xf32> to vector<128xf32>
    %9 = vector.shape_cast %8 : vector<128xf32> to vector<1x128xf32>
    %cst_14 = arith.constant 8.000000e+00 : f32
    %10 = vector.broadcast %cst_14 : f32 to vector<1x128xf32>
    %11 = arith.divf %9, %10 : vector<1x128xf32>
    %12 = vector.broadcast %11 : vector<1x128xf32> to vector<8x128xf32>
    %13 = arith.subf %7, %12 : vector<8x128xf32>
    %14 = arith.mulf %13, %13 : vector<8x128xf32>
    %cst_15 = arith.constant dense<0.000000e+00> : vector<128xf32>
    %15 = vector.multi_reduction <add>, %14, %cst_15 [0] : vector<8x128xf32> to vector<128xf32>
    %16 = vector.shape_cast %15 : vector<128xf32> to vector<1x128xf32>
    %cst_16 = arith.constant 8.000000e+00 : f32
    %17 = vector.broadcast %cst_16 : f32 to vector<1x128xf32>
    %18 = arith.divf %16, %17 : vector<1x128xf32>
    %19 = vector.broadcast %11 : vector<1x128xf32> to vector<8x128xf32>
    %20 = arith.subf %7, %19 : vector<8x128xf32>
    %cst_17 = arith.constant 9.99999993E-9 : f32
    %21 = vector.broadcast %cst_17 : f32 to vector<1x128xf32>
    %22 = arith.addf %18, %21 : vector<1x128xf32>
    %23 = math.rsqrt %22 : vector<1x128xf32>
    %24 = vector.broadcast %23 : vector<1x128xf32> to vector<8x128xf32>
    %25 = arith.mulf %20, %24 : vector<8x128xf32>
    %26 = vector.broadcast %0 : vector<1x128xf32> to vector<8x128xf32>
    %27 = arith.mulf %25, %26 : vector<8x128xf32>
    %28 = vector.broadcast %1 : vector<1x128xf32> to vector<8x128xf32>
    %29 = arith.addf %27, %28 : vector<8x128xf32>
    %cst_18 = arith.constant 0.000000e+00 : f32
    %30 = vector.broadcast %cst_18 : f32 to vector<8x128xf32>
    %31 = arith.cmpf ogt, %29, %30 : vector<8x128xf32>
    %cst_19 = arith.constant 0.000000e+00 : f32
    %32 = vector.broadcast %cst_19 : f32 to vector<8x128xf32>
    %33 = arith.minimumf %29, %32 : vector<8x128xf32>
    %34 = math.exp %33 : vector<8x128xf32>
    %cst_20 = arith.constant 1.000000e+00 : f32
    %35 = vector.broadcast %cst_20 : f32 to vector<8x128xf32>
    %36 = arith.subf %34, %35 : vector<8x128xf32>
    %37 = arith.select %31, %29, %36 : vector<8x128xi1>, vector<8x128xf32>
    %c1 = arith.constant 1 : index
    %c0_21 = arith.constant 0 : index
    %38 = vector.load %arg8[%c1, %c0_21] : memref<10x128xf32, #tpu.memory_space<vmem>>, vector<8x128xf32>
    tpu.vector_store %arg8[%c1, %c0_21], %37 {strides = array<i32>} : memref<10x128xf32, #tpu.memory_space<vmem>>, vector<8x128xf32>,
    %39 = vector.extract_strided_slice %37 {offsets = [1, 0], sizes = [1, 128], strides = [1, 1]} : vector<8x128xf32> to vector<1x128xf32>
    %c0_22 = arith.constant 0 : index
    %c0_23 = arith.constant 0 : index
    %40 = vector.load %arg8[%c0_22, %c0_23] : memref<10x128xf32, #tpu.memory_space<vmem>>, vector<1x128xf32>
    tpu.vector_store %arg8[%c0_22, %c0_23], %39 {strides = array<i32>} : memref<10x128xf32, #tpu.memory_space<vmem>>, vector<1x128xf32>,
    %41 = vector.extract_strided_slice %37 {offsets = [6, 0], sizes = [1, 128], strides = [1, 1]} : vector<8x128xf32> to vector<1x128xf32>
    %c9 = arith.constant 9 : index
    %c0_24 = arith.constant 0 : index
    %42 = vector.load %arg8[%c9, %c0_24] : memref<10x128xf32, #tpu.memory_space<vmem>>, vector<1x128xf32>
    tpu.vector_store %arg8[%c9, %c0_24], %41 {strides = array<i32>} : memref<10x128xf32, #tpu.memory_space<vmem>>, vector<1x128xf32>,
    %cst_25 = arith.constant 0.000000e+00 : f32
    %43 = vector.broadcast %cst_25 : f32 to vector<8x128xf32>
    %44 = vector.extract_strided_slice %2 {offsets = [0, 0], sizes = [1, 128], strides = [1, 1]} : vector<3x128xf32> to vector<1x128xf32>
    %c0_26 = arith.constant 0 : index
    %c0_27 = arith.constant 0 : index
    %45 = vector.load %arg8[%c0_26, %c0_27] : memref<10x128xf32, #tpu.memory_space<vmem>>, vector<8x128xf32>
    %46 = vector.broadcast %44 : vector<1x128xf32> to vector<8x128xf32>
    %47 = arith.mulf %46, %45 : vector<8x128xf32>
    %48 = arith.addf %43, %47 : vector<8x128xf32>
    %49 = vector.extract_strided_slice %2 {offsets = [1, 0], sizes = [1, 128], strides = [1, 1]} : vector<3x128xf32> to vector<1x128xf32>
    %c1_28 = arith.constant 1 : index
    %c0_29 = arith.constant 0 : index
    %50 = vector.load %arg8[%c1_28, %c0_29] : memref<10x128xf32, #tpu.memory_space<vmem>>, vector<8x128xf32>
    %51 = vector.broadcast %49 : vector<1x128xf32> to vector<8x128xf32>
    %52 = arith.mulf %51, %50 : vector<8x128xf32>
    %53 = arith.addf %48, %52 : vector<8x128xf32>
    %54 = vector.extract_strided_slice %2 {offsets = [2, 0], sizes = [1, 128], strides = [1, 1]} : vector<3x128xf32> to vector<1x128xf32>
    %c2 = arith.constant 2 : index
    %c0_30 = arith.constant 0 : index
    %55 = vector.load %arg8[%c2, %c0_30] : memref<10x128xf32, #tpu.memory_space<vmem>>, vector<8x128xf32>
    %56 = vector.broadcast %54 : vector<1x128xf32> to vector<8x128xf32>
    %57 = arith.mulf %56, %55 : vector<8x128xf32>
    %58 = arith.addf %53, %57 : vector<8x128xf32>
    %59 = vector.broadcast %3 : vector<1x128xf32> to vector<8x128xf32>
    %60 = arith.addf %58, %59 : vector<8x128xf32>
    %61 = arith.truncf %60 : vector<8x128xf32> to vector<8x128xbf16>
    %cst_31 = arith.constant dense<0.000000e+00> : vector<8x128xf32>
    %62 = tpu.matmul %61, %4, %cst_31 {dimension_numbers = #tpu.dot_dimension_numbers<[1], [0], [0], [1], [0, 0, 1, 1], [], []>} : vector<8x128xbf16>, vector<128x128xbf16>, vector<8x128xf32> -> vector<8x128xf32>
    %63 = vector.broadcast %5 : vector<1x128xf32> to vector<8x128xf32>
    %64 = arith.addf %62, %63 : vector<8x128xf32>
    %65 = arith.addf %64, %7 : vector<8x128xf32>
    %c0_32 = arith.constant 0 : index
    %c0_33 = arith.constant 0 : index
    %c0_34 = arith.constant 0 : index
    %66 = vector.load %arg7[%c0_32, %c0_33, %c0_34] : memref<2x8x128xf32, #tpu.memory_space<vmem>>, vector<1x8x128xf32>
    %67 = vector.shape_cast %66 : vector<1x8x128xf32> to vector<8x128xf32>
    %68 = vector.shape_cast %65 : vector<8x128xf32> to vector<1x8x128xf32>
    tpu.vector_store %arg7[%c0_32, %c0_33, %c0_34], %68 {strides = array<i32>} : memref<2x8x128xf32, #tpu.memory_space<vmem>>, vector<1x8x128xf32>,
    %c1_35 = arith.constant 1 : index
    %c0_36 = arith.constant 0 : index
    %c0_37 = arith.constant 0 : index
    %69 = vector.load %arg0[%c1_35, %c0_36, %c0_37] : memref<2x8x128xf32, #tpu.memory_space<vmem>>, vector<1x8x128xf32>
    %70 = vector.shape_cast %69 : vector<1x8x128xf32> to vector<8x128xf32>
    %cst_38 = arith.constant dense<0.000000e+00> : vector<128xf32>
    %71 = vector.multi_reduction <add>, %70, %cst_38 [0] : vector<8x128xf32> to vector<128xf32>
    %72 = vector.shape_cast %71 : vector<128xf32> to vector<1x128xf32>
    %cst_39 = arith.constant 8.000000e+00 : f32
    %73 = vector.broadcast %cst_39 : f32 to vector<1x128xf32>
    %74 = arith.divf %72, %73 : vector<1x128xf32>
    %75 = vector.broadcast %74 : vector<1x128xf32> to vector<8x128xf32>
    %76 = arith.subf %70, %75 : vector<8x128xf32>
    %77 = arith.mulf %76, %76 : vector<8x128xf32>
    %cst_40 = arith.constant dense<0.000000e+00> : vector<128xf32>
    %78 = vector.multi_reduction <add>, %77, %cst_40 [0] : vector<8x128xf32> to vector<128xf32>
    %79 = vector.shape_cast %78 : vector<128xf32> to vector<1x128xf32>
    %cst_41 = arith.constant 8.000000e+00 : f32
    %80 = vector.broadcast %cst_41 : f32 to vector<1x128xf32>
    %81 = arith.divf %79, %80 : vector<1x128xf32>
    %82 = vector.broadcast %74 : vector<1x128xf32> to vector<8x128xf32>
    %83 = arith.subf %70, %82 : vector<8x128xf32>
    %cst_42 = arith.constant 9.99999993E-9 : f32
    %84 = vector.broadcast %cst_42 : f32 to vector<1x128xf32>
    %85 = arith.addf %81, %84 : vector<1x128xf32>
    %86 = math.rsqrt %85 : vector<1x128xf32>
    %87 = vector.broadcast %86 : vector<1x128xf32> to vector<8x128xf32>
    %88 = arith.mulf %83, %87 : vector<8x128xf32>
    %89 = vector.broadcast %0 : vector<1x128xf32> to vector<8x128xf32>
    %90 = arith.mulf %88, %89 : vector<8x128xf32>
    %91 = vector.broadcast %1 : vector<1x128xf32> to vector<8x128xf32>
    %92 = arith.addf %90, %91 : vector<8x128xf32>
    %cst_43 = arith.constant 0.000000e+00 : f32
    %93 = vector.broadcast %cst_43 : f32 to vector<8x128xf32>
    %94 = arith.cmpf ogt, %92, %93 : vector<8x128xf32>
    %cst_44 = arith.constant 0.000000e+00 : f32
    %95 = vector.broadcast %cst_44 : f32 to vector<8x128xf32>
    %96 = arith.minimumf %92, %95 : vector<8x128xf32>
    %97 = math.exp %96 : vector<8x128xf32>
    %cst_45 = arith.constant 1.000000e+00 : f32
    %98 = vector.broadcast %cst_45 : f32 to vector<8x128xf32>
    %99 = arith.subf %97, %98 : vector<8x128xf32>
    %100 = arith.select %94, %92, %99 : vector<8x128xi1>, vector<8x128xf32>
    %c1_46 = arith.constant 1 : index
    %c0_47 = arith.constant 0 : index
    %101 = vector.load %arg8[%c1_46, %c0_47] : memref<10x128xf32, #tpu.memory_space<vmem>>, vector<8x128xf32>
    tpu.vector_store %arg8[%c1_46, %c0_47], %100 {strides = array<i32>} : memref<10x128xf32, #tpu.memory_space<vmem>>, vector<8x128xf32>,
    %102 = vector.extract_strided_slice %100 {offsets = [1, 0], sizes = [1, 128], strides = [1, 1]} : vector<8x128xf32> to vector<1x128xf32>
    %c0_48 = arith.constant 0 : index
    %c0_49 = arith.constant 0 : index
    %103 = vector.load %arg8[%c0_48, %c0_49] : memref<10x128xf32, #tpu.memory_space<vmem>>, vector<1x128xf32>
    tpu.vector_store %arg8[%c0_48, %c0_49], %102 {strides = array<i32>} : memref<10x128xf32, #tpu.memory_space<vmem>>, vector<1x128xf32>,
    %104 = vector.extract_strided_slice %100 {offsets = [6, 0], sizes = [1, 128], strides = [1, 1]} : vector<8x128xf32> to vector<1x128xf32>
    %c9_50 = arith.constant 9 : index
    %c0_51 = arith.constant 0 : index
    %105 = vector.load %arg8[%c9_50, %c0_51] : memref<10x128xf32, #tpu.memory_space<vmem>>, vector<1x128xf32>
    tpu.vector_store %arg8[%c9_50, %c0_51], %104 {strides = array<i32>} : memref<10x128xf32, #tpu.memory_space<vmem>>, vector<1x128xf32>,
    %cst_52 = arith.constant 0.000000e+00 : f32
    %106 = vector.broadcast %cst_52 : f32 to vector<8x128xf32>
    %107 = vector.extract_strided_slice %2 {offsets = [0, 0], sizes = [1, 128], strides = [1, 1]} : vector<3x128xf32> to vector<1x128xf32>
    %c0_53 = arith.constant 0 : index
    %c0_54 = arith.constant 0 : index
    %108 = vector.load %arg8[%c0_53, %c0_54] : memref<10x128xf32, #tpu.memory_space<vmem>>, vector<8x128xf32>
    %109 = vector.broadcast %107 : vector<1x128xf32> to vector<8x128xf32>
    %110 = arith.mulf %109, %108 : vector<8x128xf32>
    %111 = arith.addf %106, %110 : vector<8x128xf32>
    %112 = vector.extract_strided_slice %2 {offsets = [1, 0], sizes = [1, 128], strides = [1, 1]} : vector<3x128xf32> to vector<1x128xf32>
    %c1_55 = arith.constant 1 : index
    %c0_56 = arith.constant 0 : index
    %113 = vector.load %arg8[%c1_55, %c0_56] : memref<10x128xf32, #tpu.memory_space<vmem>>, vector<8x128xf32>
    %114 = vector.broadcast %112 : vector<1x128xf32> to vector<8x128xf32>
    %115 = arith.mulf %114, %113 : vector<8x128xf32>
    %116 = arith.addf %111, %115 : vector<8x128xf32>
    %117 = vector.extract_strided_slice %2 {offsets = [2, 0], sizes = [1, 128], strides = [1, 1]} : vector<3x128xf32> to vector<1x128xf32>
    %c2_57 = arith.constant 2 : index
    %c0_58 = arith.constant 0 : index
    %118 = vector.load %arg8[%c2_57, %c0_58] : memref<10x128xf32, #tpu.memory_space<vmem>>, vector<8x128xf32>
    %119 = vector.broadcast %117 : vector<1x128xf32> to vector<8x128xf32>
    %120 = arith.mulf %119, %118 : vector<8x128xf32>
    %121 = arith.addf %116, %120 : vector<8x128xf32>
    %122 = vector.broadcast %3 : vector<1x128xf32> to vector<8x128xf32>
    %123 = arith.addf %121, %122 : vector<8x128xf32>
    %124 = arith.truncf %123 : vector<8x128xf32> to vector<8x128xbf16>
    %cst_59 = arith.constant dense<0.000000e+00> : vector<8x128xf32>
    %125 = tpu.matmul %124, %4, %cst_59 {dimension_numbers = #tpu.dot_dimension_numbers<[1], [0], [0], [1], [0, 0, 1, 1], [], []>} : vector<8x128xbf16>, vector<128x128xbf16>, vector<8x128xf32> -> vector<8x128xf32>
    %126 = vector.broadcast %5 : vector<1x128xf32> to vector<8x128xf32>
    %127 = arith.addf %125, %126 : vector<8x128xf32>
    %128 = arith.addf %127, %70 : vector<8x128xf32>
    %c1_60 = arith.constant 1 : index
    %c0_61 = arith.constant 0 : index
    %c0_62 = arith.constant 0 : index
    %129 = vector.load %arg7[%c1_60, %c0_61, %c0_62] : memref<2x8x128xf32, #tpu.memory_space<vmem>>, vector<1x8x128xf32>
    %130 = vector.shape_cast %129 : vector<1x8x128xf32> to vector<8x128xf32>
    %131 = vector.shape_cast %128 : vector<8x128xf32> to vector<1x8x128xf32>
    tpu.vector_store %arg7[%c1_60, %c0_61, %c0_62], %131 {strides = array<i32>} : memref<2x8x128xf32, #tpu.memory_space<vmem>>, vector<1x8x128xf32>,
    return
  }
}

module attributes {stable_mosaic.version = 11 : i64} {
  func.func @_tcn_block_kernel(%arg0: memref<2x8x128xf32, #tpu.memory_space<vmem>>, %arg1: memref<1x128xf32, #tpu.memory_space<vmem>>, %arg2: memref<1x128xf32, #tpu.memory_space<vmem>>, %arg3: memref<3x128xf32, #tpu.memory_space<vmem>>, %arg4: memref<1x128xf32, #tpu.memory_space<vmem>>, %arg5: memref<128x128xbf16, #tpu.memory_space<vmem>>, %arg6: memref<1x128xf32, #tpu.memory_space<vmem>>, %arg7: memref<2x8x128xf32, #tpu.memory_space<vmem>>, %arg8: memref<12x128xf32, #tpu.memory_space<vmem>>) attributes {dimension_semantics = [], scalar_prefetch = 0 : i64, scratch_operands = 1 : i64, tpu.core_type = #tpu.core_type<tc>} {
    %c0 = arith.constant 0 : index
    %c0_0 = arith.constant 0 : index
    %0 = vector.load %arg1[%c0, %c0_0] : memref<1x128xf32, #tpu.memory_space<vmem>>, vector<1x128xf32>
    %c0_1 = arith.constant 0 : index
    %c0_2 = arith.constant 0 : index
    %1 = vector.load %arg2[%c0_1, %c0_2] : memref<1x128xf32, #tpu.memory_space<vmem>>, vector<1x128xf32>
    %c0_3 = arith.constant 0 : index
    %c0_4 = arith.constant 0 : index
    %2 = vector.load %arg3[%c0_3, %c0_4] : memref<3x128xf32, #tpu.memory_space<vmem>>, vector<3x128xf32>
    %c0_5 = arith.constant 0 : index
    %c0_6 = arith.constant 0 : index
    %3 = vector.load %arg4[%c0_5, %c0_6] : memref<1x128xf32, #tpu.memory_space<vmem>>, vector<1x128xf32>
    %c0_7 = arith.constant 0 : index
    %c0_8 = arith.constant 0 : index
    %4 = vector.load %arg5[%c0_7, %c0_8] : memref<128x128xbf16, #tpu.memory_space<vmem>>, vector<128x128xbf16>
    %c0_9 = arith.constant 0 : index
    %c0_10 = arith.constant 0 : index
    %5 = vector.load %arg6[%c0_9, %c0_10] : memref<1x128xf32, #tpu.memory_space<vmem>>, vector<1x128xf32>
    %c0_11 = arith.constant 0 : index
    %c0_12 = arith.constant 0 : index
    %c0_13 = arith.constant 0 : index
    %6 = vector.load %arg0[%c0_11, %c0_12, %c0_13] : memref<2x8x128xf32, #tpu.memory_space<vmem>>, vector<1x8x128xf32>
    %7 = vector.shape_cast %6 : vector<1x8x128xf32> to vector<8x128xf32>
    %cst = arith.constant dense<0.000000e+00> : vector<128xf32>
    %8 = vector.multi_reduction <add>, %7, %cst [0] : vector<8x128xf32> to vector<128xf32>
    %9 = vector.shape_cast %8 : vector<128xf32> to vector<1x128xf32>
    %cst_14 = arith.constant 8.000000e+00 : f32
    %10 = vector.broadcast %cst_14 : f32 to vector<1x128xf32>
    %11 = arith.divf %9, %10 : vector<1x128xf32>
    %12 = vector.broadcast %11 : vector<1x128xf32> to vector<8x128xf32>
    %13 = arith.subf %7, %12 : vector<8x128xf32>
    %14 = arith.mulf %13, %13 : vector<8x128xf32>
    %cst_15 = arith.constant dense<0.000000e+00> : vector<128xf32>
    %15 = vector.multi_reduction <add>, %14, %cst_15 [0] : vector<8x128xf32> to vector<128xf32>
    %16 = vector.shape_cast %15 : vector<128xf32> to vector<1x128xf32>
    %cst_16 = arith.constant 8.000000e+00 : f32
    %17 = vector.broadcast %cst_16 : f32 to vector<1x128xf32>
    %18 = arith.divf %16, %17 : vector<1x128xf32>
    %19 = vector.broadcast %11 : vector<1x128xf32> to vector<8x128xf32>
    %20 = arith.subf %7, %19 : vector<8x128xf32>
    %cst_17 = arith.constant 9.99999993E-9 : f32
    %21 = vector.broadcast %cst_17 : f32 to vector<1x128xf32>
    %22 = arith.addf %18, %21 : vector<1x128xf32>
    %23 = math.rsqrt %22 : vector<1x128xf32>
    %24 = vector.broadcast %23 : vector<1x128xf32> to vector<8x128xf32>
    %25 = arith.mulf %20, %24 : vector<8x128xf32>
    %26 = vector.broadcast %0 : vector<1x128xf32> to vector<8x128xf32>
    %27 = arith.mulf %25, %26 : vector<8x128xf32>
    %28 = vector.broadcast %1 : vector<1x128xf32> to vector<8x128xf32>
    %29 = arith.addf %27, %28 : vector<8x128xf32>
    %cst_18 = arith.constant 0.000000e+00 : f32
    %30 = vector.broadcast %cst_18 : f32 to vector<8x128xf32>
    %31 = arith.cmpf ogt, %29, %30 : vector<8x128xf32>
    %cst_19 = arith.constant 0.000000e+00 : f32
    %32 = vector.broadcast %cst_19 : f32 to vector<8x128xf32>
    %33 = arith.minimumf %29, %32 : vector<8x128xf32>
    %34 = math.exp %33 : vector<8x128xf32>
    %cst_20 = arith.constant 1.000000e+00 : f32
    %35 = vector.broadcast %cst_20 : f32 to vector<8x128xf32>
    %36 = arith.subf %34, %35 : vector<8x128xf32>
    %37 = arith.select %31, %29, %36 : vector<8x128xi1>, vector<8x128xf32>
    %c2 = arith.constant 2 : index
    %c0_21 = arith.constant 0 : index
    %38 = vector.load %arg8[%c2, %c0_21] : memref<12x128xf32, #tpu.memory_space<vmem>>, vector<8x128xf32>
    tpu.vector_store %arg8[%c2, %c0_21], %37 {strides = array<i32>} : memref<12x128xf32, #tpu.memory_space<vmem>>, vector<8x128xf32>,
    %39 = vector.extract_strided_slice %37 {offsets = [1, 0], sizes = [1, 128], strides = [1, 1]} : vector<8x128xf32> to vector<1x128xf32>
    %c1 = arith.constant 1 : index
    %c0_22 = arith.constant 0 : index
    %40 = vector.load %arg8[%c1, %c0_22] : memref<12x128xf32, #tpu.memory_space<vmem>>, vector<1x128xf32>
    tpu.vector_store %arg8[%c1, %c0_22], %39 {strides = array<i32>} : memref<12x128xf32, #tpu.memory_space<vmem>>, vector<1x128xf32>,
    %41 = vector.extract_strided_slice %37 {offsets = [6, 0], sizes = [1, 128], strides = [1, 1]} : vector<8x128xf32> to vector<1x128xf32>
    %c10 = arith.constant 10 : index
    %c0_23 = arith.constant 0 : index
    %42 = vector.load %arg8[%c10, %c0_23] : memref<12x128xf32, #tpu.memory_space<vmem>>, vector<1x128xf32>
    tpu.vector_store %arg8[%c10, %c0_23], %41 {strides = array<i32>} : memref<12x128xf32, #tpu.memory_space<vmem>>, vector<1x128xf32>,
    %43 = vector.extract_strided_slice %37 {offsets = [2, 0], sizes = [1, 128], strides = [1, 1]} : vector<8x128xf32> to vector<1x128xf32>
    %c0_24 = arith.constant 0 : index
    %c0_25 = arith.constant 0 : index
    %44 = vector.load %arg8[%c0_24, %c0_25] : memref<12x128xf32, #tpu.memory_space<vmem>>, vector<1x128xf32>
    tpu.vector_store %arg8[%c0_24, %c0_25], %43 {strides = array<i32>} : memref<12x128xf32, #tpu.memory_space<vmem>>, vector<1x128xf32>,
    %45 = vector.extract_strided_slice %37 {offsets = [5, 0], sizes = [1, 128], strides = [1, 1]} : vector<8x128xf32> to vector<1x128xf32>
    %c11 = arith.constant 11 : index
    %c0_26 = arith.constant 0 : index
    %46 = vector.load %arg8[%c11, %c0_26] : memref<12x128xf32, #tpu.memory_space<vmem>>, vector<1x128xf32>
    tpu.vector_store %arg8[%c11, %c0_26], %45 {strides = array<i32>} : memref<12x128xf32, #tpu.memory_space<vmem>>, vector<1x128xf32>,
    %cst_27 = arith.constant 0.000000e+00 : f32
    %47 = vector.broadcast %cst_27 : f32 to vector<8x128xf32>
    %48 = vector.extract_strided_slice %2 {offsets = [0, 0], sizes = [1, 128], strides = [1, 1]} : vector<3x128xf32> to vector<1x128xf32>
    %c0_28 = arith.constant 0 : index
    %c0_29 = arith.constant 0 : index
    %49 = vector.load %arg8[%c0_28, %c0_29] : memref<12x128xf32, #tpu.memory_space<vmem>>, vector<8x128xf32>
    %50 = vector.broadcast %48 : vector<1x128xf32> to vector<8x128xf32>
    %51 = arith.mulf %50, %49 : vector<8x128xf32>
    %52 = arith.addf %47, %51 : vector<8x128xf32>
    %53 = vector.extract_strided_slice %2 {offsets = [1, 0], sizes = [1, 128], strides = [1, 1]} : vector<3x128xf32> to vector<1x128xf32>
    %c2_30 = arith.constant 2 : index
    %c0_31 = arith.constant 0 : index
    %54 = vector.load %arg8[%c2_30, %c0_31] : memref<12x128xf32, #tpu.memory_space<vmem>>, vector<8x128xf32>
    %55 = vector.broadcast %53 : vector<1x128xf32> to vector<8x128xf32>
    %56 = arith.mulf %55, %54 : vector<8x128xf32>
    %57 = arith.addf %52, %56 : vector<8x128xf32>
    %58 = vector.extract_strided_slice %2 {offsets = [2, 0], sizes = [1, 128], strides = [1, 1]} : vector<3x128xf32> to vector<1x128xf32>
    %c4 = arith.constant 4 : index
    %c0_32 = arith.constant 0 : index
    %59 = vector.load %arg8[%c4, %c0_32] : memref<12x128xf32, #tpu.memory_space<vmem>>, vector<8x128xf32>
    %60 = vector.broadcast %58 : vector<1x128xf32> to vector<8x128xf32>
    %61 = arith.mulf %60, %59 : vector<8x128xf32>
    %62 = arith.addf %57, %61 : vector<8x128xf32>
    %63 = vector.broadcast %3 : vector<1x128xf32> to vector<8x128xf32>
    %64 = arith.addf %62, %63 : vector<8x128xf32>
    %65 = arith.truncf %64 : vector<8x128xf32> to vector<8x128xbf16>
    %cst_33 = arith.constant dense<0.000000e+00> : vector<8x128xf32>
    %66 = tpu.matmul %65, %4, %cst_33 {dimension_numbers = #tpu.dot_dimension_numbers<[1], [0], [0], [1], [0, 0, 1, 1], [], []>} : vector<8x128xbf16>, vector<128x128xbf16>, vector<8x128xf32> -> vector<8x128xf32>
    %67 = vector.broadcast %5 : vector<1x128xf32> to vector<8x128xf32>
    %68 = arith.addf %66, %67 : vector<8x128xf32>
    %69 = arith.addf %68, %7 : vector<8x128xf32>
    %c0_34 = arith.constant 0 : index
    %c0_35 = arith.constant 0 : index
    %c0_36 = arith.constant 0 : index
    %70 = vector.load %arg7[%c0_34, %c0_35, %c0_36] : memref<2x8x128xf32, #tpu.memory_space<vmem>>, vector<1x8x128xf32>
    %71 = vector.shape_cast %70 : vector<1x8x128xf32> to vector<8x128xf32>
    %72 = vector.shape_cast %69 : vector<8x128xf32> to vector<1x8x128xf32>
    tpu.vector_store %arg7[%c0_34, %c0_35, %c0_36], %72 {strides = array<i32>} : memref<2x8x128xf32, #tpu.memory_space<vmem>>, vector<1x8x128xf32>,
    %c1_37 = arith.constant 1 : index
    %c0_38 = arith.constant 0 : index
    %c0_39 = arith.constant 0 : index
    %73 = vector.load %arg0[%c1_37, %c0_38, %c0_39] : memref<2x8x128xf32, #tpu.memory_space<vmem>>, vector<1x8x128xf32>
    %74 = vector.shape_cast %73 : vector<1x8x128xf32> to vector<8x128xf32>
    %cst_40 = arith.constant dense<0.000000e+00> : vector<128xf32>
    %75 = vector.multi_reduction <add>, %74, %cst_40 [0] : vector<8x128xf32> to vector<128xf32>
    %76 = vector.shape_cast %75 : vector<128xf32> to vector<1x128xf32>
    %cst_41 = arith.constant 8.000000e+00 : f32
    %77 = vector.broadcast %cst_41 : f32 to vector<1x128xf32>
    %78 = arith.divf %76, %77 : vector<1x128xf32>
    %79 = vector.broadcast %78 : vector<1x128xf32> to vector<8x128xf32>
    %80 = arith.subf %74, %79 : vector<8x128xf32>
    %81 = arith.mulf %80, %80 : vector<8x128xf32>
    %cst_42 = arith.constant dense<0.000000e+00> : vector<128xf32>
    %82 = vector.multi_reduction <add>, %81, %cst_42 [0] : vector<8x128xf32> to vector<128xf32>
    %83 = vector.shape_cast %82 : vector<128xf32> to vector<1x128xf32>
    %cst_43 = arith.constant 8.000000e+00 : f32
    %84 = vector.broadcast %cst_43 : f32 to vector<1x128xf32>
    %85 = arith.divf %83, %84 : vector<1x128xf32>
    %86 = vector.broadcast %78 : vector<1x128xf32> to vector<8x128xf32>
    %87 = arith.subf %74, %86 : vector<8x128xf32>
    %cst_44 = arith.constant 9.99999993E-9 : f32
    %88 = vector.broadcast %cst_44 : f32 to vector<1x128xf32>
    %89 = arith.addf %85, %88 : vector<1x128xf32>
    %90 = math.rsqrt %89 : vector<1x128xf32>
    %91 = vector.broadcast %90 : vector<1x128xf32> to vector<8x128xf32>
    %92 = arith.mulf %87, %91 : vector<8x128xf32>
    %93 = vector.broadcast %0 : vector<1x128xf32> to vector<8x128xf32>
    %94 = arith.mulf %92, %93 : vector<8x128xf32>
    %95 = vector.broadcast %1 : vector<1x128xf32> to vector<8x128xf32>
    %96 = arith.addf %94, %95 : vector<8x128xf32>
    %cst_45 = arith.constant 0.000000e+00 : f32
    %97 = vector.broadcast %cst_45 : f32 to vector<8x128xf32>
    %98 = arith.cmpf ogt, %96, %97 : vector<8x128xf32>
    %cst_46 = arith.constant 0.000000e+00 : f32
    %99 = vector.broadcast %cst_46 : f32 to vector<8x128xf32>
    %100 = arith.minimumf %96, %99 : vector<8x128xf32>
    %101 = math.exp %100 : vector<8x128xf32>
    %cst_47 = arith.constant 1.000000e+00 : f32
    %102 = vector.broadcast %cst_47 : f32 to vector<8x128xf32>
    %103 = arith.subf %101, %102 : vector<8x128xf32>
    %104 = arith.select %98, %96, %103 : vector<8x128xi1>, vector<8x128xf32>
    %c2_48 = arith.constant 2 : index
    %c0_49 = arith.constant 0 : index
    %105 = vector.load %arg8[%c2_48, %c0_49] : memref<12x128xf32, #tpu.memory_space<vmem>>, vector<8x128xf32>
    tpu.vector_store %arg8[%c2_48, %c0_49], %104 {strides = array<i32>} : memref<12x128xf32, #tpu.memory_space<vmem>>, vector<8x128xf32>,
    %106 = vector.extract_strided_slice %104 {offsets = [1, 0], sizes = [1, 128], strides = [1, 1]} : vector<8x128xf32> to vector<1x128xf32>
    %c1_50 = arith.constant 1 : index
    %c0_51 = arith.constant 0 : index
    %107 = vector.load %arg8[%c1_50, %c0_51] : memref<12x128xf32, #tpu.memory_space<vmem>>, vector<1x128xf32>
    tpu.vector_store %arg8[%c1_50, %c0_51], %106 {strides = array<i32>} : memref<12x128xf32, #tpu.memory_space<vmem>>, vector<1x128xf32>,
    %108 = vector.extract_strided_slice %104 {offsets = [6, 0], sizes = [1, 128], strides = [1, 1]} : vector<8x128xf32> to vector<1x128xf32>
    %c10_52 = arith.constant 10 : index
    %c0_53 = arith.constant 0 : index
    %109 = vector.load %arg8[%c10_52, %c0_53] : memref<12x128xf32, #tpu.memory_space<vmem>>, vector<1x128xf32>
    tpu.vector_store %arg8[%c10_52, %c0_53], %108 {strides = array<i32>} : memref<12x128xf32, #tpu.memory_space<vmem>>, vector<1x128xf32>,
    %110 = vector.extract_strided_slice %104 {offsets = [2, 0], sizes = [1, 128], strides = [1, 1]} : vector<8x128xf32> to vector<1x128xf32>
    %c0_54 = arith.constant 0 : index
    %c0_55 = arith.constant 0 : index
    %111 = vector.load %arg8[%c0_54, %c0_55] : memref<12x128xf32, #tpu.memory_space<vmem>>, vector<1x128xf32>
    tpu.vector_store %arg8[%c0_54, %c0_55], %110 {strides = array<i32>} : memref<12x128xf32, #tpu.memory_space<vmem>>, vector<1x128xf32>,
    %112 = vector.extract_strided_slice %104 {offsets = [5, 0], sizes = [1, 128], strides = [1, 1]} : vector<8x128xf32> to vector<1x128xf32>
    %c11_56 = arith.constant 11 : index
    %c0_57 = arith.constant 0 : index
    %113 = vector.load %arg8[%c11_56, %c0_57] : memref<12x128xf32, #tpu.memory_space<vmem>>, vector<1x128xf32>
    tpu.vector_store %arg8[%c11_56, %c0_57], %112 {strides = array<i32>} : memref<12x128xf32, #tpu.memory_space<vmem>>, vector<1x128xf32>,
    %cst_58 = arith.constant 0.000000e+00 : f32
    %114 = vector.broadcast %cst_58 : f32 to vector<8x128xf32>
    %115 = vector.extract_strided_slice %2 {offsets = [0, 0], sizes = [1, 128], strides = [1, 1]} : vector<3x128xf32> to vector<1x128xf32>
    %c0_59 = arith.constant 0 : index
    %c0_60 = arith.constant 0 : index
    %116 = vector.load %arg8[%c0_59, %c0_60] : memref<12x128xf32, #tpu.memory_space<vmem>>, vector<8x128xf32>
    %117 = vector.broadcast %115 : vector<1x128xf32> to vector<8x128xf32>
    %118 = arith.mulf %117, %116 : vector<8x128xf32>
    %119 = arith.addf %114, %118 : vector<8x128xf32>
    %120 = vector.extract_strided_slice %2 {offsets = [1, 0], sizes = [1, 128], strides = [1, 1]} : vector<3x128xf32> to vector<1x128xf32>
    %c2_61 = arith.constant 2 : index
    %c0_62 = arith.constant 0 : index
    %121 = vector.load %arg8[%c2_61, %c0_62] : memref<12x128xf32, #tpu.memory_space<vmem>>, vector<8x128xf32>
    %122 = vector.broadcast %120 : vector<1x128xf32> to vector<8x128xf32>
    %123 = arith.mulf %122, %121 : vector<8x128xf32>
    %124 = arith.addf %119, %123 : vector<8x128xf32>
    %125 = vector.extract_strided_slice %2 {offsets = [2, 0], sizes = [1, 128], strides = [1, 1]} : vector<3x128xf32> to vector<1x128xf32>
    %c4_63 = arith.constant 4 : index
    %c0_64 = arith.constant 0 : index
    %126 = vector.load %arg8[%c4_63, %c0_64] : memref<12x128xf32, #tpu.memory_space<vmem>>, vector<8x128xf32>
    %127 = vector.broadcast %125 : vector<1x128xf32> to vector<8x128xf32>
    %128 = arith.mulf %127, %126 : vector<8x128xf32>
    %129 = arith.addf %124, %128 : vector<8x128xf32>
    %130 = vector.broadcast %3 : vector<1x128xf32> to vector<8x128xf32>
    %131 = arith.addf %129, %130 : vector<8x128xf32>
    %132 = arith.truncf %131 : vector<8x128xf32> to vector<8x128xbf16>
    %cst_65 = arith.constant dense<0.000000e+00> : vector<8x128xf32>
    %133 = tpu.matmul %132, %4, %cst_65 {dimension_numbers = #tpu.dot_dimension_numbers<[1], [0], [0], [1], [0, 0, 1, 1], [], []>} : vector<8x128xbf16>, vector<128x128xbf16>, vector<8x128xf32> -> vector<8x128xf32>
    %134 = vector.broadcast %5 : vector<1x128xf32> to vector<8x128xf32>
    %135 = arith.addf %133, %134 : vector<8x128xf32>
    %136 = arith.addf %135, %74 : vector<8x128xf32>
    %c1_66 = arith.constant 1 : index
    %c0_67 = arith.constant 0 : index
    %c0_68 = arith.constant 0 : index
    %137 = vector.load %arg7[%c1_66, %c0_67, %c0_68] : memref<2x8x128xf32, #tpu.memory_space<vmem>>, vector<1x8x128xf32>
    %138 = vector.shape_cast %137 : vector<1x8x128xf32> to vector<8x128xf32>
    %139 = vector.shape_cast %136 : vector<8x128xf32> to vector<1x8x128xf32>
    tpu.vector_store %arg7[%c1_66, %c0_67, %c0_68], %139 {strides = array<i32>} : memref<2x8x128xf32, #tpu.memory_space<vmem>>, vector<1x8x128xf32>,
    return
  }
}

module attributes {stable_mosaic.version = 11 : i64} {
  func.func @_fused_conv_kernel(%arg0: memref<2x24x640xbf16, #tpu.memory_space<vmem>>, %arg1: memref<640x128xbf16, #tpu.memory_space<vmem>>, %arg2: memref<1x128xf32, #tpu.memory_space<vmem>>, %arg3: memref<1x128xf32, #tpu.memory_space<vmem>>, %arg4: memref<1x128xf32, #tpu.memory_space<vmem>>, %arg5: memref<2x24x128xf32, #tpu.memory_space<vmem>>) attributes {dimension_semantics = [], scalar_prefetch = 0 : i64, scratch_operands = 0 : i64, tpu.core_type = #tpu.core_type<tc>} {
    %c0 = arith.constant 0 : index
    %c0_0 = arith.constant 0 : index
    %0 = vector.load %arg1[%c0, %c0_0] : memref<640x128xbf16, #tpu.memory_space<vmem>>, vector<640x128xbf16>
    %c0_1 = arith.constant 0 : index
    %c0_2 = arith.constant 0 : index
    %1 = vector.load %arg2[%c0_1, %c0_2] : memref<1x128xf32, #tpu.memory_space<vmem>>, vector<1x128xf32>
    %c0_3 = arith.constant 0 : index
    %c0_4 = arith.constant 0 : index
    %c0_5 = arith.constant 0 : index
    %2 = vector.load %arg0[%c0_3, %c0_4, %c0_5] : memref<2x24x640xbf16, #tpu.memory_space<vmem>>, vector<1x24x640xbf16>
    %3 = vector.shape_cast %2 : vector<1x24x640xbf16> to vector<24x640xbf16>
    %cst = arith.constant dense<0.000000e+00> : vector<24x128xf32>
    %4 = tpu.matmul %3, %0, %cst {dimension_numbers = #tpu.dot_dimension_numbers<[1], [0], [0], [1], [0, 0, 1, 1], [], []>} : vector<24x640xbf16>, vector<640x128xbf16>, vector<24x128xf32> -> vector<24x128xf32>
    %5 = vector.broadcast %1 : vector<1x128xf32> to vector<24x128xf32>
    %6 = arith.addf %4, %5 : vector<24x128xf32>
    %cst_6 = arith.constant 0.000000e+00 : f32
    %7 = vector.broadcast %cst_6 : f32 to vector<24x128xf32>
    %8 = arith.cmpf ogt, %6, %7 : vector<24x128xf32>
    %cst_7 = arith.constant 0.000000e+00 : f32
    %9 = vector.broadcast %cst_7 : f32 to vector<24x128xf32>
    %10 = arith.minimumf %6, %9 : vector<24x128xf32>
    %11 = math.exp %10 : vector<24x128xf32>
    %cst_8 = arith.constant 1.000000e+00 : f32
    %12 = vector.broadcast %cst_8 : f32 to vector<24x128xf32>
    %13 = arith.subf %11, %12 : vector<24x128xf32>
    %14 = arith.select %8, %6, %13 : vector<24x128xi1>, vector<24x128xf32>
    %cst_9 = arith.constant dense<0.000000e+00> : vector<128xf32>
    %15 = vector.multi_reduction <add>, %14, %cst_9 [0] : vector<24x128xf32> to vector<128xf32>
    %16 = vector.shape_cast %15 : vector<128xf32> to vector<1x128xf32>
    %cst_10 = arith.constant 2.400000e+01 : f32
    %17 = vector.broadcast %cst_10 : f32 to vector<1x128xf32>
    %18 = arith.divf %16, %17 : vector<1x128xf32>
    %19 = vector.broadcast %18 : vector<1x128xf32> to vector<24x128xf32>
    %20 = arith.subf %14, %19 : vector<24x128xf32>
    %21 = arith.mulf %20, %20 : vector<24x128xf32>
    %cst_11 = arith.constant dense<0.000000e+00> : vector<128xf32>
    %22 = vector.multi_reduction <add>, %21, %cst_11 [0] : vector<24x128xf32> to vector<128xf32>
    %23 = vector.shape_cast %22 : vector<128xf32> to vector<1x128xf32>
    %cst_12 = arith.constant 2.400000e+01 : f32
    %24 = vector.broadcast %cst_12 : f32 to vector<1x128xf32>
    %25 = arith.divf %23, %24 : vector<1x128xf32>
    %26 = vector.broadcast %18 : vector<1x128xf32> to vector<24x128xf32>
    %27 = arith.subf %14, %26 : vector<24x128xf32>
    %cst_13 = arith.constant 9.99999993E-9 : f32
    %28 = vector.broadcast %cst_13 : f32 to vector<1x128xf32>
    %29 = arith.addf %25, %28 : vector<1x128xf32>
    %30 = math.rsqrt %29 : vector<1x128xf32>
    %31 = vector.broadcast %30 : vector<1x128xf32> to vector<24x128xf32>
    %32 = arith.mulf %27, %31 : vector<24x128xf32>
    %c0_14 = arith.constant 0 : index
    %c0_15 = arith.constant 0 : index
    %33 = vector.load %arg3[%c0_14, %c0_15] : memref<1x128xf32, #tpu.memory_space<vmem>>, vector<1x128xf32>
    %34 = vector.broadcast %33 : vector<1x128xf32> to vector<24x128xf32>
    %35 = arith.mulf %32, %34 : vector<24x128xf32>
    %c0_16 = arith.constant 0 : index
    %c0_17 = arith.constant 0 : index
    %36 = vector.load %arg4[%c0_16, %c0_17] : memref<1x128xf32, #tpu.memory_space<vmem>>, vector<1x128xf32>
    %37 = vector.broadcast %36 : vector<1x128xf32> to vector<24x128xf32>
    %38 = arith.addf %35, %37 : vector<24x128xf32>
    %c0_18 = arith.constant 0 : index
    %c0_19 = arith.constant 0 : index
    %c0_20 = arith.constant 0 : index
    %39 = vector.load %arg5[%c0_18, %c0_19, %c0_20] : memref<2x24x128xf32, #tpu.memory_space<vmem>>, vector<1x24x128xf32>
    %40 = vector.shape_cast %39 : vector<1x24x128xf32> to vector<24x128xf32>
    %41 = vector.shape_cast %38 : vector<24x128xf32> to vector<1x24x128xf32>
    tpu.vector_store %arg5[%c0_18, %c0_19, %c0_20], %41 {strides = array<i32>} : memref<2x24x128xf32, #tpu.memory_space<vmem>>, vector<1x24x128xf32>,
    %c1 = arith.constant 1 : index
    %c0_21 = arith.constant 0 : index
    %c0_22 = arith.constant 0 : index
    %42 = vector.load %arg0[%c1, %c0_21, %c0_22] : memref<2x24x640xbf16, #tpu.memory_space<vmem>>, vector<1x24x640xbf16>
    %43 = vector.shape_cast %42 : vector<1x24x640xbf16> to vector<24x640xbf16>
    %cst_23 = arith.constant dense<0.000000e+00> : vector<24x128xf32>
    %44 = tpu.matmul %43, %0, %cst_23 {dimension_numbers = #tpu.dot_dimension_numbers<[1], [0], [0], [1], [0, 0, 1, 1], [], []>} : vector<24x640xbf16>, vector<640x128xbf16>, vector<24x128xf32> -> vector<24x128xf32>
    %45 = vector.broadcast %1 : vector<1x128xf32> to vector<24x128xf32>
    %46 = arith.addf %44, %45 : vector<24x128xf32>
    %cst_24 = arith.constant 0.000000e+00 : f32
    %47 = vector.broadcast %cst_24 : f32 to vector<24x128xf32>
    %48 = arith.cmpf ogt, %46, %47 : vector<24x128xf32>
    %cst_25 = arith.constant 0.000000e+00 : f32
    %49 = vector.broadcast %cst_25 : f32 to vector<24x128xf32>
    %50 = arith.minimumf %46, %49 : vector<24x128xf32>
    %51 = math.exp %50 : vector<24x128xf32>
    %cst_26 = arith.constant 1.000000e+00 : f32
    %52 = vector.broadcast %cst_26 : f32 to vector<24x128xf32>
    %53 = arith.subf %51, %52 : vector<24x128xf32>
    %54 = arith.select %48, %46, %53 : vector<24x128xi1>, vector<24x128xf32>
    %cst_27 = arith.constant dense<0.000000e+00> : vector<128xf32>
    %55 = vector.multi_reduction <add>, %54, %cst_27 [0] : vector<24x128xf32> to vector<128xf32>
    %56 = vector.shape_cast %55 : vector<128xf32> to vector<1x128xf32>
    %cst_28 = arith.constant 2.400000e+01 : f32
    %57 = vector.broadcast %cst_28 : f32 to vector<1x128xf32>
    %58 = arith.divf %56, %57 : vector<1x128xf32>
    %59 = vector.broadcast %58 : vector<1x128xf32> to vector<24x128xf32>
    %60 = arith.subf %54, %59 : vector<24x128xf32>
    %61 = arith.mulf %60, %60 : vector<24x128xf32>
    %cst_29 = arith.constant dense<0.000000e+00> : vector<128xf32>
    %62 = vector.multi_reduction <add>, %61, %cst_29 [0] : vector<24x128xf32> to vector<128xf32>
    %63 = vector.shape_cast %62 : vector<128xf32> to vector<1x128xf32>
    %cst_30 = arith.constant 2.400000e+01 : f32
    %64 = vector.broadcast %cst_30 : f32 to vector<1x128xf32>
    %65 = arith.divf %63, %64 : vector<1x128xf32>
    %66 = vector.broadcast %58 : vector<1x128xf32> to vector<24x128xf32>
    %67 = arith.subf %54, %66 : vector<24x128xf32>
    %cst_31 = arith.constant 9.99999993E-9 : f32
    %68 = vector.broadcast %cst_31 : f32 to vector<1x128xf32>
    %69 = arith.addf %65, %68 : vector<1x128xf32>
    %70 = math.rsqrt %69 : vector<1x128xf32>
    %71 = vector.broadcast %70 : vector<1x128xf32> to vector<24x128xf32>
    %72 = arith.mulf %67, %71 : vector<24x128xf32>
    %c0_32 = arith.constant 0 : index
    %c0_33 = arith.constant 0 : index
    %73 = vector.load %arg3[%c0_32, %c0_33] : memref<1x128xf32, #tpu.memory_space<vmem>>, vector<1x128xf32>
    %74 = vector.broadcast %73 : vector<1x128xf32> to vector<24x128xf32>
    %75 = arith.mulf %72, %74 : vector<24x128xf32>
    %c0_34 = arith.constant 0 : index
    %c0_35 = arith.constant 0 : index
    %76 = vector.load %arg4[%c0_34, %c0_35] : memref<1x128xf32, #tpu.memory_space<vmem>>, vector<1x128xf32>
    %77 = vector.broadcast %76 : vector<1x128xf32> to vector<24x128xf32>
    %78 = arith.addf %75, %77 : vector<24x128xf32>
    %c1_36 = arith.constant 1 : index
    %c0_37 = arith.constant 0 : index
    %c0_38 = arith.constant 0 : index
    %79 = vector.load %arg5[%c1_36, %c0_37, %c0_38] : memref<2x24x128xf32, #tpu.memory_space<vmem>>, vector<1x24x128xf32>
    %80 = vector.shape_cast %79 : vector<1x24x128xf32> to vector<24x128xf32>
    %81 = vector.shape_cast %78 : vector<24x128xf32> to vector<1x24x128xf32>
    tpu.vector_store %arg5[%c1_36, %c0_37, %c0_38], %81 {strides = array<i32>} : memref<2x24x128xf32, #tpu.memory_space<vmem>>, vector<1x24x128xf32>,
    return
  }
}

module attributes {stable_mosaic.version = 11 : i64} {
  func.func @_fused_conv_kernel(%arg0: memref<2x56x640xbf16, #tpu.memory_space<vmem>>, %arg1: memref<640x128xbf16, #tpu.memory_space<vmem>>, %arg2: memref<1x128xf32, #tpu.memory_space<vmem>>, %arg3: memref<1x128xf32, #tpu.memory_space<vmem>>, %arg4: memref<1x128xf32, #tpu.memory_space<vmem>>, %arg5: memref<2x56x128xf32, #tpu.memory_space<vmem>>) attributes {dimension_semantics = [], scalar_prefetch = 0 : i64, scratch_operands = 0 : i64, tpu.core_type = #tpu.core_type<tc>} {
    %c0 = arith.constant 0 : index
    %c0_0 = arith.constant 0 : index
    %0 = vector.load %arg1[%c0, %c0_0] : memref<640x128xbf16, #tpu.memory_space<vmem>>, vector<640x128xbf16>
    %c0_1 = arith.constant 0 : index
    %c0_2 = arith.constant 0 : index
    %1 = vector.load %arg2[%c0_1, %c0_2] : memref<1x128xf32, #tpu.memory_space<vmem>>, vector<1x128xf32>
    %c0_3 = arith.constant 0 : index
    %c0_4 = arith.constant 0 : index
    %c0_5 = arith.constant 0 : index
    %2 = vector.load %arg0[%c0_3, %c0_4, %c0_5] : memref<2x56x640xbf16, #tpu.memory_space<vmem>>, vector<1x56x640xbf16>
    %3 = vector.shape_cast %2 : vector<1x56x640xbf16> to vector<56x640xbf16>
    %cst = arith.constant dense<0.000000e+00> : vector<56x128xf32>
    %4 = tpu.matmul %3, %0, %cst {dimension_numbers = #tpu.dot_dimension_numbers<[1], [0], [0], [1], [0, 0, 1, 1], [], []>} : vector<56x640xbf16>, vector<640x128xbf16>, vector<56x128xf32> -> vector<56x128xf32>
    %5 = vector.broadcast %1 : vector<1x128xf32> to vector<56x128xf32>
    %6 = arith.addf %4, %5 : vector<56x128xf32>
    %cst_6 = arith.constant 0.000000e+00 : f32
    %7 = vector.broadcast %cst_6 : f32 to vector<56x128xf32>
    %8 = arith.cmpf ogt, %6, %7 : vector<56x128xf32>
    %cst_7 = arith.constant 0.000000e+00 : f32
    %9 = vector.broadcast %cst_7 : f32 to vector<56x128xf32>
    %10 = arith.minimumf %6, %9 : vector<56x128xf32>
    %11 = math.exp %10 : vector<56x128xf32>
    %cst_8 = arith.constant 1.000000e+00 : f32
    %12 = vector.broadcast %cst_8 : f32 to vector<56x128xf32>
    %13 = arith.subf %11, %12 : vector<56x128xf32>
    %14 = arith.select %8, %6, %13 : vector<56x128xi1>, vector<56x128xf32>
    %cst_9 = arith.constant dense<0.000000e+00> : vector<128xf32>
    %15 = vector.multi_reduction <add>, %14, %cst_9 [0] : vector<56x128xf32> to vector<128xf32>
    %16 = vector.shape_cast %15 : vector<128xf32> to vector<1x128xf32>
    %cst_10 = arith.constant 5.600000e+01 : f32
    %17 = vector.broadcast %cst_10 : f32 to vector<1x128xf32>
    %18 = arith.divf %16, %17 : vector<1x128xf32>
    %19 = vector.broadcast %18 : vector<1x128xf32> to vector<56x128xf32>
    %20 = arith.subf %14, %19 : vector<56x128xf32>
    %21 = arith.mulf %20, %20 : vector<56x128xf32>
    %cst_11 = arith.constant dense<0.000000e+00> : vector<128xf32>
    %22 = vector.multi_reduction <add>, %21, %cst_11 [0] : vector<56x128xf32> to vector<128xf32>
    %23 = vector.shape_cast %22 : vector<128xf32> to vector<1x128xf32>
    %cst_12 = arith.constant 5.600000e+01 : f32
    %24 = vector.broadcast %cst_12 : f32 to vector<1x128xf32>
    %25 = arith.divf %23, %24 : vector<1x128xf32>
    %26 = vector.broadcast %18 : vector<1x128xf32> to vector<56x128xf32>
    %27 = arith.subf %14, %26 : vector<56x128xf32>
    %cst_13 = arith.constant 9.99999993E-9 : f32
    %28 = vector.broadcast %cst_13 : f32 to vector<1x128xf32>
    %29 = arith.addf %25, %28 : vector<1x128xf32>
    %30 = math.rsqrt %29 : vector<1x128xf32>
    %31 = vector.broadcast %30 : vector<1x128xf32> to vector<56x128xf32>
    %32 = arith.mulf %27, %31 : vector<56x128xf32>
    %c0_14 = arith.constant 0 : index
    %c0_15 = arith.constant 0 : index
    %33 = vector.load %arg3[%c0_14, %c0_15] : memref<1x128xf32, #tpu.memory_space<vmem>>, vector<1x128xf32>
    %34 = vector.broadcast %33 : vector<1x128xf32> to vector<56x128xf32>
    %35 = arith.mulf %32, %34 : vector<56x128xf32>
    %c0_16 = arith.constant 0 : index
    %c0_17 = arith.constant 0 : index
    %36 = vector.load %arg4[%c0_16, %c0_17] : memref<1x128xf32, #tpu.memory_space<vmem>>, vector<1x128xf32>
    %37 = vector.broadcast %36 : vector<1x128xf32> to vector<56x128xf32>
    %38 = arith.addf %35, %37 : vector<56x128xf32>
    %c0_18 = arith.constant 0 : index
    %c0_19 = arith.constant 0 : index
    %c0_20 = arith.constant 0 : index
    %39 = vector.load %arg5[%c0_18, %c0_19, %c0_20] : memref<2x56x128xf32, #tpu.memory_space<vmem>>, vector<1x56x128xf32>
    %40 = vector.shape_cast %39 : vector<1x56x128xf32> to vector<56x128xf32>
    %41 = vector.shape_cast %38 : vector<56x128xf32> to vector<1x56x128xf32>
    tpu.vector_store %arg5[%c0_18, %c0_19, %c0_20], %41 {strides = array<i32>} : memref<2x56x128xf32, #tpu.memory_space<vmem>>, vector<1x56x128xf32>,
    %c1 = arith.constant 1 : index
    %c0_21 = arith.constant 0 : index
    %c0_22 = arith.constant 0 : index
    %42 = vector.load %arg0[%c1, %c0_21, %c0_22] : memref<2x56x640xbf16, #tpu.memory_space<vmem>>, vector<1x56x640xbf16>
    %43 = vector.shape_cast %42 : vector<1x56x640xbf16> to vector<56x640xbf16>
    %cst_23 = arith.constant dense<0.000000e+00> : vector<56x128xf32>
    %44 = tpu.matmul %43, %0, %cst_23 {dimension_numbers = #tpu.dot_dimension_numbers<[1], [0], [0], [1], [0, 0, 1, 1], [], []>} : vector<56x640xbf16>, vector<640x128xbf16>, vector<56x128xf32> -> vector<56x128xf32>
    %45 = vector.broadcast %1 : vector<1x128xf32> to vector<56x128xf32>
    %46 = arith.addf %44, %45 : vector<56x128xf32>
    %cst_24 = arith.constant 0.000000e+00 : f32
    %47 = vector.broadcast %cst_24 : f32 to vector<56x128xf32>
    %48 = arith.cmpf ogt, %46, %47 : vector<56x128xf32>
    %cst_25 = arith.constant 0.000000e+00 : f32
    %49 = vector.broadcast %cst_25 : f32 to vector<56x128xf32>
    %50 = arith.minimumf %46, %49 : vector<56x128xf32>
    %51 = math.exp %50 : vector<56x128xf32>
    %cst_26 = arith.constant 1.000000e+00 : f32
    %52 = vector.broadcast %cst_26 : f32 to vector<56x128xf32>
    %53 = arith.subf %51, %52 : vector<56x128xf32>
    %54 = arith.select %48, %46, %53 : vector<56x128xi1>, vector<56x128xf32>
    %cst_27 = arith.constant dense<0.000000e+00> : vector<128xf32>
    %55 = vector.multi_reduction <add>, %54, %cst_27 [0] : vector<56x128xf32> to vector<128xf32>
    %56 = vector.shape_cast %55 : vector<128xf32> to vector<1x128xf32>
    %cst_28 = arith.constant 5.600000e+01 : f32
    %57 = vector.broadcast %cst_28 : f32 to vector<1x128xf32>
    %58 = arith.divf %56, %57 : vector<1x128xf32>
    %59 = vector.broadcast %58 : vector<1x128xf32> to vector<56x128xf32>
    %60 = arith.subf %54, %59 : vector<56x128xf32>
    %61 = arith.mulf %60, %60 : vector<56x128xf32>
    %cst_29 = arith.constant dense<0.000000e+00> : vector<128xf32>
    %62 = vector.multi_reduction <add>, %61, %cst_29 [0] : vector<56x128xf32> to vector<128xf32>
    %63 = vector.shape_cast %62 : vector<128xf32> to vector<1x128xf32>
    %cst_30 = arith.constant 5.600000e+01 : f32
    %64 = vector.broadcast %cst_30 : f32 to vector<1x128xf32>
    %65 = arith.divf %63, %64 : vector<1x128xf32>
    %66 = vector.broadcast %58 : vector<1x128xf32> to vector<56x128xf32>
    %67 = arith.subf %54, %66 : vector<56x128xf32>
    %cst_31 = arith.constant 9.99999993E-9 : f32
    %68 = vector.broadcast %cst_31 : f32 to vector<1x128xf32>
    %69 = arith.addf %65, %68 : vector<1x128xf32>
    %70 = math.rsqrt %69 : vector<1x128xf32>
    %71 = vector.broadcast %70 : vector<1x128xf32> to vector<56x128xf32>
    %72 = arith.mulf %67, %71 : vector<56x128xf32>
    %c0_32 = arith.constant 0 : index
    %c0_33 = arith.constant 0 : index
    %73 = vector.load %arg3[%c0_32, %c0_33] : memref<1x128xf32, #tpu.memory_space<vmem>>, vector<1x128xf32>
    %74 = vector.broadcast %73 : vector<1x128xf32> to vector<56x128xf32>
    %75 = arith.mulf %72, %74 : vector<56x128xf32>
    %c0_34 = arith.constant 0 : index
    %c0_35 = arith.constant 0 : index
    %76 = vector.load %arg4[%c0_34, %c0_35] : memref<1x128xf32, #tpu.memory_space<vmem>>, vector<1x128xf32>
    %77 = vector.broadcast %76 : vector<1x128xf32> to vector<56x128xf32>
    %78 = arith.addf %75, %77 : vector<56x128xf32>
    %c1_36 = arith.constant 1 : index
    %c0_37 = arith.constant 0 : index
    %c0_38 = arith.constant 0 : index
    %79 = vector.load %arg5[%c1_36, %c0_37, %c0_38] : memref<2x56x128xf32, #tpu.memory_space<vmem>>, vector<1x56x128xf32>
    %80 = vector.shape_cast %79 : vector<1x56x128xf32> to vector<56x128xf32>
    %81 = vector.shape_cast %78 : vector<56x128xf32> to vector<1x56x128xf32>
    tpu.vector_store %arg5[%c1_36, %c0_37, %c0_38], %81 {strides = array<i32>} : memref<2x56x128xf32, #tpu.memory_space<vmem>>, vector<1x56x128xf32>,
    return
  }
}

module attributes {stable_mosaic.version = 11 : i64} {
  func.func @_fused_conv_kernel(%arg0: memref<2x120x384xbf16, #tpu.memory_space<vmem>>, %arg1: memref<384x128xbf16, #tpu.memory_space<vmem>>, %arg2: memref<1x128xf32, #tpu.memory_space<vmem>>, %arg3: memref<1x128xf32, #tpu.memory_space<vmem>>, %arg4: memref<1x128xf32, #tpu.memory_space<vmem>>, %arg5: memref<2x120x128xf32, #tpu.memory_space<vmem>>) attributes {dimension_semantics = [], scalar_prefetch = 0 : i64, scratch_operands = 0 : i64, tpu.core_type = #tpu.core_type<tc>} {
    %c0 = arith.constant 0 : index
    %c0_0 = arith.constant 0 : index
    %0 = vector.load %arg1[%c0, %c0_0] : memref<384x128xbf16, #tpu.memory_space<vmem>>, vector<384x128xbf16>
    %c0_1 = arith.constant 0 : index
    %c0_2 = arith.constant 0 : index
    %1 = vector.load %arg2[%c0_1, %c0_2] : memref<1x128xf32, #tpu.memory_space<vmem>>, vector<1x128xf32>
    %c0_3 = arith.constant 0 : index
    %c0_4 = arith.constant 0 : index
    %c0_5 = arith.constant 0 : index
    %2 = vector.load %arg0[%c0_3, %c0_4, %c0_5] : memref<2x120x384xbf16, #tpu.memory_space<vmem>>, vector<1x120x384xbf16>
    %3 = vector.shape_cast %2 : vector<1x120x384xbf16> to vector<120x384xbf16>
    %cst = arith.constant dense<0.000000e+00> : vector<120x128xf32>
    %4 = tpu.matmul %3, %0, %cst {dimension_numbers = #tpu.dot_dimension_numbers<[1], [0], [0], [1], [0, 0, 1, 1], [], []>} : vector<120x384xbf16>, vector<384x128xbf16>, vector<120x128xf32> -> vector<120x128xf32>
    %5 = vector.broadcast %1 : vector<1x128xf32> to vector<120x128xf32>
    %6 = arith.addf %4, %5 : vector<120x128xf32>
    %cst_6 = arith.constant 0.000000e+00 : f32
    %7 = vector.broadcast %cst_6 : f32 to vector<120x128xf32>
    %8 = arith.cmpf ogt, %6, %7 : vector<120x128xf32>
    %cst_7 = arith.constant 0.000000e+00 : f32
    %9 = vector.broadcast %cst_7 : f32 to vector<120x128xf32>
    %10 = arith.minimumf %6, %9 : vector<120x128xf32>
    %11 = math.exp %10 : vector<120x128xf32>
    %cst_8 = arith.constant 1.000000e+00 : f32
    %12 = vector.broadcast %cst_8 : f32 to vector<120x128xf32>
    %13 = arith.subf %11, %12 : vector<120x128xf32>
    %14 = arith.select %8, %6, %13 : vector<120x128xi1>, vector<120x128xf32>
    %cst_9 = arith.constant dense<0.000000e+00> : vector<128xf32>
    %15 = vector.multi_reduction <add>, %14, %cst_9 [0] : vector<120x128xf32> to vector<128xf32>
    %16 = vector.shape_cast %15 : vector<128xf32> to vector<1x128xf32>
    %cst_10 = arith.constant 1.200000e+02 : f32
    %17 = vector.broadcast %cst_10 : f32 to vector<1x128xf32>
    %18 = arith.divf %16, %17 : vector<1x128xf32>
    %19 = vector.broadcast %18 : vector<1x128xf32> to vector<120x128xf32>
    %20 = arith.subf %14, %19 : vector<120x128xf32>
    %21 = arith.mulf %20, %20 : vector<120x128xf32>
    %cst_11 = arith.constant dense<0.000000e+00> : vector<128xf32>
    %22 = vector.multi_reduction <add>, %21, %cst_11 [0] : vector<120x128xf32> to vector<128xf32>
    %23 = vector.shape_cast %22 : vector<128xf32> to vector<1x128xf32>
    %cst_12 = arith.constant 1.200000e+02 : f32
    %24 = vector.broadcast %cst_12 : f32 to vector<1x128xf32>
    %25 = arith.divf %23, %24 : vector<1x128xf32>
    %26 = vector.broadcast %18 : vector<1x128xf32> to vector<120x128xf32>
    %27 = arith.subf %14, %26 : vector<120x128xf32>
    %cst_13 = arith.constant 9.99999993E-9 : f32
    %28 = vector.broadcast %cst_13 : f32 to vector<1x128xf32>
    %29 = arith.addf %25, %28 : vector<1x128xf32>
    %30 = math.rsqrt %29 : vector<1x128xf32>
    %31 = vector.broadcast %30 : vector<1x128xf32> to vector<120x128xf32>
    %32 = arith.mulf %27, %31 : vector<120x128xf32>
    %c0_14 = arith.constant 0 : index
    %c0_15 = arith.constant 0 : index
    %33 = vector.load %arg3[%c0_14, %c0_15] : memref<1x128xf32, #tpu.memory_space<vmem>>, vector<1x128xf32>
    %34 = vector.broadcast %33 : vector<1x128xf32> to vector<120x128xf32>
    %35 = arith.mulf %32, %34 : vector<120x128xf32>
    %c0_16 = arith.constant 0 : index
    %c0_17 = arith.constant 0 : index
    %36 = vector.load %arg4[%c0_16, %c0_17] : memref<1x128xf32, #tpu.memory_space<vmem>>, vector<1x128xf32>
    %37 = vector.broadcast %36 : vector<1x128xf32> to vector<120x128xf32>
    %38 = arith.addf %35, %37 : vector<120x128xf32>
    %c0_18 = arith.constant 0 : index
    %c0_19 = arith.constant 0 : index
    %c0_20 = arith.constant 0 : index
    %39 = vector.load %arg5[%c0_18, %c0_19, %c0_20] : memref<2x120x128xf32, #tpu.memory_space<vmem>>, vector<1x120x128xf32>
    %40 = vector.shape_cast %39 : vector<1x120x128xf32> to vector<120x128xf32>
    %41 = vector.shape_cast %38 : vector<120x128xf32> to vector<1x120x128xf32>
    tpu.vector_store %arg5[%c0_18, %c0_19, %c0_20], %41 {strides = array<i32>} : memref<2x120x128xf32, #tpu.memory_space<vmem>>, vector<1x120x128xf32>,
    %c1 = arith.constant 1 : index
    %c0_21 = arith.constant 0 : index
    %c0_22 = arith.constant 0 : index
    %42 = vector.load %arg0[%c1, %c0_21, %c0_22] : memref<2x120x384xbf16, #tpu.memory_space<vmem>>, vector<1x120x384xbf16>
    %43 = vector.shape_cast %42 : vector<1x120x384xbf16> to vector<120x384xbf16>
    %cst_23 = arith.constant dense<0.000000e+00> : vector<120x128xf32>
    %44 = tpu.matmul %43, %0, %cst_23 {dimension_numbers = #tpu.dot_dimension_numbers<[1], [0], [0], [1], [0, 0, 1, 1], [], []>} : vector<120x384xbf16>, vector<384x128xbf16>, vector<120x128xf32> -> vector<120x128xf32>
    %45 = vector.broadcast %1 : vector<1x128xf32> to vector<120x128xf32>
    %46 = arith.addf %44, %45 : vector<120x128xf32>
    %cst_24 = arith.constant 0.000000e+00 : f32
    %47 = vector.broadcast %cst_24 : f32 to vector<120x128xf32>
    %48 = arith.cmpf ogt, %46, %47 : vector<120x128xf32>
    %cst_25 = arith.constant 0.000000e+00 : f32
    %49 = vector.broadcast %cst_25 : f32 to vector<120x128xf32>
    %50 = arith.minimumf %46, %49 : vector<120x128xf32>
    %51 = math.exp %50 : vector<120x128xf32>
    %cst_26 = arith.constant 1.000000e+00 : f32
    %52 = vector.broadcast %cst_26 : f32 to vector<120x128xf32>
    %53 = arith.subf %51, %52 : vector<120x128xf32>
    %54 = arith.select %48, %46, %53 : vector<120x128xi1>, vector<120x128xf32>
    %cst_27 = arith.constant dense<0.000000e+00> : vector<128xf32>
    %55 = vector.multi_reduction <add>, %54, %cst_27 [0] : vector<120x128xf32> to vector<128xf32>
    %56 = vector.shape_cast %55 : vector<128xf32> to vector<1x128xf32>
    %cst_28 = arith.constant 1.200000e+02 : f32
    %57 = vector.broadcast %cst_28 : f32 to vector<1x128xf32>
    %58 = arith.divf %56, %57 : vector<1x128xf32>
    %59 = vector.broadcast %58 : vector<1x128xf32> to vector<120x128xf32>
    %60 = arith.subf %54, %59 : vector<120x128xf32>
    %61 = arith.mulf %60, %60 : vector<120x128xf32>
    %cst_29 = arith.constant dense<0.000000e+00> : vector<128xf32>
    %62 = vector.multi_reduction <add>, %61, %cst_29 [0] : vector<120x128xf32> to vector<128xf32>
    %63 = vector.shape_cast %62 : vector<128xf32> to vector<1x128xf32>
    %cst_30 = arith.constant 1.200000e+02 : f32
    %64 = vector.broadcast %cst_30 : f32 to vector<1x128xf32>
    %65 = arith.divf %63, %64 : vector<1x128xf32>
    %66 = vector.broadcast %58 : vector<1x128xf32> to vector<120x128xf32>
    %67 = arith.subf %54, %66 : vector<120x128xf32>
    %cst_31 = arith.constant 9.99999993E-9 : f32
    %68 = vector.broadcast %cst_31 : f32 to vector<1x128xf32>
    %69 = arith.addf %65, %68 : vector<1x128xf32>
    %70 = math.rsqrt %69 : vector<1x128xf32>
    %71 = vector.broadcast %70 : vector<1x128xf32> to vector<120x128xf32>
    %72 = arith.mulf %67, %71 : vector<120x128xf32>
    %c0_32 = arith.constant 0 : index
    %c0_33 = arith.constant 0 : index
    %73 = vector.load %arg3[%c0_32, %c0_33] : memref<1x128xf32, #tpu.memory_space<vmem>>, vector<1x128xf32>
    %74 = vector.broadcast %73 : vector<1x128xf32> to vector<120x128xf32>
    %75 = arith.mulf %72, %74 : vector<120x128xf32>
    %c0_34 = arith.constant 0 : index
    %c0_35 = arith.constant 0 : index
    %76 = vector.load %arg4[%c0_34, %c0_35] : memref<1x128xf32, #tpu.memory_space<vmem>>, vector<1x128xf32>
    %77 = vector.broadcast %76 : vector<1x128xf32> to vector<120x128xf32>
    %78 = arith.addf %75, %77 : vector<120x128xf32>
    %c1_36 = arith.constant 1 : index
    %c0_37 = arith.constant 0 : index
    %c0_38 = arith.constant 0 : index
    %79 = vector.load %arg5[%c1_36, %c0_37, %c0_38] : memref<2x120x128xf32, #tpu.memory_space<vmem>>, vector<1x120x128xf32>
    %80 = vector.shape_cast %79 : vector<1x120x128xf32> to vector<120x128xf32>
    %81 = vector.shape_cast %78 : vector<120x128xf32> to vector<1x120x128xf32>
    tpu.vector_store %arg5[%c1_36, %c0_37, %c0_38], %81 {strides = array<i32>} : memref<2x120x128xf32, #tpu.memory_space<vmem>>, vector<1x120x128xf32>,
    return
  }
}

module attributes {stable_mosaic.version = 11 : i64} {
  func.func @_fused_conv_kernel(%arg0: memref<2x136x256xbf16, #tpu.memory_space<vmem>>, %arg1: memref<256x128xbf16, #tpu.memory_space<vmem>>, %arg2: memref<1x128xf32, #tpu.memory_space<vmem>>, %arg3: memref<1x128xf32, #tpu.memory_space<vmem>>, %arg4: memref<1x128xf32, #tpu.memory_space<vmem>>, %arg5: memref<2x136x128xf32, #tpu.memory_space<vmem>>) attributes {dimension_semantics = [], scalar_prefetch = 0 : i64, scratch_operands = 0 : i64, tpu.core_type = #tpu.core_type<tc>} {
    %c0 = arith.constant 0 : index
    %c0_0 = arith.constant 0 : index
    %0 = vector.load %arg1[%c0, %c0_0] : memref<256x128xbf16, #tpu.memory_space<vmem>>, vector<256x128xbf16>
    %c0_1 = arith.constant 0 : index
    %c0_2 = arith.constant 0 : index
    %1 = vector.load %arg2[%c0_1, %c0_2] : memref<1x128xf32, #tpu.memory_space<vmem>>, vector<1x128xf32>
    %c0_3 = arith.constant 0 : index
    %c0_4 = arith.constant 0 : index
    %c0_5 = arith.constant 0 : index
    %2 = vector.load %arg0[%c0_3, %c0_4, %c0_5] : memref<2x136x256xbf16, #tpu.memory_space<vmem>>, vector<1x136x256xbf16>
    %3 = vector.shape_cast %2 : vector<1x136x256xbf16> to vector<136x256xbf16>
    %cst = arith.constant dense<0.000000e+00> : vector<136x128xf32>
    %4 = tpu.matmul %3, %0, %cst {dimension_numbers = #tpu.dot_dimension_numbers<[1], [0], [0], [1], [0, 0, 1, 1], [], []>} : vector<136x256xbf16>, vector<256x128xbf16>, vector<136x128xf32> -> vector<136x128xf32>
    %5 = vector.broadcast %1 : vector<1x128xf32> to vector<136x128xf32>
    %6 = arith.addf %4, %5 : vector<136x128xf32>
    %c0_6 = arith.constant 0 : index
    %c0_7 = arith.constant 0 : index
    %c0_8 = arith.constant 0 : index
    %7 = vector.load %arg5[%c0_6, %c0_7, %c0_8] : memref<2x136x128xf32, #tpu.memory_space<vmem>>, vector<1x136x128xf32>
    %8 = vector.shape_cast %7 : vector<1x136x128xf32> to vector<136x128xf32>
    %9 = vector.shape_cast %6 : vector<136x128xf32> to vector<1x136x128xf32>
    tpu.vector_store %arg5[%c0_6, %c0_7, %c0_8], %9 {strides = array<i32>} : memref<2x136x128xf32, #tpu.memory_space<vmem>>, vector<1x136x128xf32>,
    %c1 = arith.constant 1 : index
    %c0_9 = arith.constant 0 : index
    %c0_10 = arith.constant 0 : index
    %10 = vector.load %arg0[%c1, %c0_9, %c0_10] : memref<2x136x256xbf16, #tpu.memory_space<vmem>>, vector<1x136x256xbf16>
    %11 = vector.shape_cast %10 : vector<1x136x256xbf16> to vector<136x256xbf16>
    %cst_11 = arith.constant dense<0.000000e+00> : vector<136x128xf32>
    %12 = tpu.matmul %11, %0, %cst_11 {dimension_numbers = #tpu.dot_dimension_numbers<[1], [0], [0], [1], [0, 0, 1, 1], [], []>} : vector<136x256xbf16>, vector<256x128xbf16>, vector<136x128xf32> -> vector<136x128xf32>
    %13 = vector.broadcast %1 : vector<1x128xf32> to vector<136x128xf32>
    %14 = arith.addf %12, %13 : vector<136x128xf32>
    %c1_12 = arith.constant 1 : index
    %c0_13 = arith.constant 0 : index
    %c0_14 = arith.constant 0 : index
    %15 = vector.load %arg5[%c1_12, %c0_13, %c0_14] : memref<2x136x128xf32, #tpu.memory_space<vmem>>, vector<1x136x128xf32>
    %16 = vector.shape_cast %15 : vector<1x136x128xf32> to vector<136x128xf32>
    %17 = vector.shape_cast %14 : vector<136x128xf32> to vector<1x136x128xf32>
    tpu.vector_store %arg5[%c1_12, %c0_13, %c0_14], %17 {strides = array<i32>} : memref<2x136x128xf32, #tpu.memory_space<vmem>>, vector<1x136x128xf32>,
    return
  }
}

</mosaic_0001>

<llo_original>
// kernel: custom-call
$region0: #{custom-call}
  %s0 = inlined_call_operand.hbm [shape: c64[2,1,8,17], index: 0, kind: input, shape index: {}]
  %s1 = inlined_call_operand.vmem [shape: f32[2,1,8,17], index: 1, kind: output, shape index: {}]
  $region1: #{custom-call} parent=0
    #allocation0 [shape = 's32[1]{0}', space=sflag, size = 0x4, scoped, tag = 'scoped memory for custom-call']
    %2 = vsyncpa [#allocation0], 0
    %s3 = sshll.u32 %s1, 4
    %s4 = int_to_ptr.vmem [resolvable:$true] %s3
    %6 = dma.hbm_to_vmem [thread:$0]  %s0, 256, %s4, [#allocation0]
    %7 = dma.done [#allocation0], 256
    %8 = vsyncpa [#allocation0], 1

// kernel: custom-call.1
$region0: #{custom-call.1}
  %s0 = inlined_call_operand.hbm [shape: c64[2,1,8,17], index: 0, kind: input, shape index: {}]
  %s1 = inlined_call_operand.vmem [shape: f32[2,1,8,17], index: 1, kind: output, shape index: {}]
  %s2 = scalar_lea.hbm %s0, 256
  $region1: #{custom-call.1} parent=0
    #allocation0 [shape = 's32[1]{0}', space=sflag, size = 0x4, scoped, tag = 'scoped memory for custom-call.1']
    %3 = vsyncpa [#allocation0], 0
    %s4 = sshll.u32 %s1, 4
    %s5 = int_to_ptr.vmem [resolvable:$true] %s4
    %7 = dma.hbm_to_vmem [thread:$0]  %s2, 256, %s5, [#allocation0]
    %8 = dma.done [#allocation0], 256
    %9 = vsyncpa [#allocation0], 1

// kernel: _lambda_.22
$region0: #{_lambda_.22}
  #allocation0 [shape = 'u32[]', space=smem, size = 0x4, offset = 0x4, fixed_abs, tag = 'smem constant byte address 0x4 - core index']
  #allocation1 [shape = 'u32[144,128]{1,0:T(1,128)}', space=vmem, size = 0x12000, scoped, tag = 'internal scratch']
  %s0 = inlined_call_operand.vmem [shape: bf16[2,120,128], index: 0, kind: input, shape index: {}]
  %s1 = inlined_call_operand.hbm [shape: bf16[128,128], index: 1, kind: input, shape index: {}]
  %s2 = inlined_call_operand.hbm [shape: f32[1,128], index: 2, kind: input, shape index: {}]
  %s3 = inlined_call_operand.vmem [shape: f32[1,128], index: 3, kind: input, shape index: {}]
  %s4 = inlined_call_operand.vmem [shape: f32[1,128], index: 4, kind: input, shape index: {}]
  %s5 = inlined_call_operand.vmem [shape: f32[2,120,128], index: 5, kind: output, shape index: {}]
  %s6 = sld [smem:[#allocation0]]
  $region38: #{_lambda_.22} parent=0
    _
  %s8 = ssub.s32 1, %s6
  %s9 = scalar_select 0, %s8, %s6
  $region1: #{_lambda_.22} parent=0
    #allocation2 [shape = 'u8[32768]{0}', space=vmem, size = 0x8000, scoped, tag = 'input window, operand 1, single buffered']
    #allocation3 [shape = 's32[1]{0}', space=sflag, size = 0x4, scoped, tag = 'scoped memory for _lambda_.22']
    #allocation4 [shape = 'u8[512]{0}', space=vmem, size = 0x400, scoped, tag = 'input window, operand 2, single buffered']
    #allocation5 [shape = 's32[1]{0}', space=sflag, size = 0x4, scoped, tag = 'scoped memory for _lambda_.22']
    %10 = vsyncpa [#allocation3], 0
    %11 = vsyncpa [#allocation5], 0
    // Predicated region
    $region2: #{_lambda_.22} parent=1 // pred_check
      _
    $region3: #{_lambda_.22} parent=1 // pred_check_branch
      %13 = sbr.rel (0) target = $region5
    $region4: #{_lambda_.22} parent=1 // pred_region
      _
    $region5: #{_lambda_.22} parent=1 // pred_fallthru
      _
    // Predicated region
    $region6: #{_lambda_.22} parent=1 // pred_check
      _
    $region7: #{_lambda_.22} parent=1 // pred_check_branch
      %15 = sbr.rel (0) target = $region9
    $region8: #{_lambda_.22} parent=1 // pred_region
      %s17 = ssub.s32 1024, 1024
      %18 = vsyncadd [#allocation3], %s17
      %s19 = sshll.u32 [#allocation2], 4
      %s20 = int_to_ptr.vmem [resolvable:$true] %s19
      %25 = dma.hbm_to_vmem [thread:$0]  %s1, 1024, %s20, [#allocation3], 64, 64, 4
    $region9: #{_lambda_.22} parent=1 // pred_fallthru
      _
    // Predicated region
    $region10: #{_lambda_.22} parent=1 // pred_check
      _
    $region11: #{_lambda_.22} parent=1 // pred_check_branch
      %27 = sbr.rel (0) target = $region13
    $region12: #{_lambda_.22} parent=1 // pred_region
      %s29 = ssub.s32 16, 16
      %30 = vsyncadd [#allocation5], %s29
      %s32 = sshll.u32 [#allocation4], 4
      %s33 = int_to_ptr.vmem [resolvable:$true] %s32
      %35 = dma.hbm_to_vmem [thread:$0]  %s2, 16, %s33, [#allocation5]
    $region13: #{_lambda_.22} parent=1 // pred_fallthru
      _
    // Predicated region
    $region14: #{_lambda_.22} parent=1 // pred_check
      _
    $region15: #{_lambda_.22} parent=1 // pred_check_branch
      %37 = sbr.rel (0) target = $region17
    $region16: #{_lambda_.22} parent=1 // pred_region
      _
    $region17: #{_lambda_.22} parent=1 // pred_fallthru
      _
    // Predicated region
    $region18: #{_lambda_.22} parent=1 // pred_check
      _
    $region19: #{_lambda_.22} parent=1 // pred_check_branch
      %39 = sbr.rel (0) target = $region21
    $region20: #{_lambda_.22} parent=1 // pred_region
      _
    $region21: #{_lambda_.22} parent=1 // pred_fallthru
      _
    // Predicated region
    $region22: #{_lambda_.22} parent=1 // pred_check
      _
    $region23: #{_lambda_.22} parent=1 // pred_check_branch
      %41 = sbr.rel (0) target = $region25
    $region24: #{_lambda_.22} parent=1 // pred_region
      %42 = dma.done [#allocation3], 1024
    $region25: #{_lambda_.22} parent=1 // pred_fallthru
      _
    // Predicated region
    $region26: #{_lambda_.22} parent=1 // pred_check
      _
    $region27: #{_lambda_.22} parent=1 // pred_check_branch
      %44 = sbr.rel (0) target = $region29
    $region28: #{_lambda_.22} parent=1 // pred_region
      %45 = dma.done [#allocation5], 16
    $region29: #{_lambda_.22} parent=1 // pred_fallthru
      _
    %v47 = vld [vmem:[#allocation2] sm:$0xf]
    %v48 = vld [vmem:[#allocation2 + $0x4] sm:$0xf]
    %v49 = vld [vmem:[#allocation2 + $0x8] sm:$0xf]
    %v50 = vld [vmem:[#allocation2 + $0xc] sm:$0xf]
    %v51 = vld [vmem:[#allocation2 + $0x10] sm:$0xf]
    %v52 = vld [vmem:[#allocation2 + $0x14] sm:$0xf]
    %v53 = vld [vmem:[#allocation2 + $0x18] sm:$0xf]
    %v54 = vld [vmem:[#allocation2 + $0x1c] sm:$0xf]
    %v55 = vld [vmem:[#allocation2 + $0x20] sm:$0xf]
    %v56 = vld [vmem:[#allocation2 + $0x24] sm:$0xf]
    %v57 = vld [vmem:[#allocation2 + $0x28] sm:$0xf]
    %v58 = vld [vmem:[#allocation2 + $0x2c] sm:$0xf]
    %v59 = vld [vmem:[#allocation2 + $0x30] sm:$0xf]
    %v60 = vld [vmem:[#allocation2 + $0x34] sm:$0xf]
    %v61 = vld [vmem:[#allocation2 + $0x38] sm:$0xf]
    %v62 = vld [vmem:[#allocation2 + $0x3c] sm:$0xf]
    %v63 = vld [vmem:[#allocation4] sm:$0x1]
    %v64 = vld [vmem:[%s0] sm:$0xf]
    %v65 = vld [vmem:[%s0 + $0x4] sm:$0xf]
    %v66 = vld [vmem:[%s0 + $0x8] sm:$0xf]
    %v67 = vld [vmem:[%s0 + $0xc] sm:$0xf]
    %v68 = vld [vmem:[%s0 + $0x10] sm:$0xf]
    %v69 = vld [vmem:[%s0 + $0x14] sm:$0xf]
    %v70 = vld [vmem:[%s0 + $0x18] sm:$0xf]
    %v71 = vld [vmem:[%s0 + $0x1c] sm:$0xf]
    %v72 = vld [vmem:[%s0 + $0x20] sm:$0xf]
    %v73 = vld [vmem:[%s0 + $0x24] sm:$0xf]
    %v74 = vld [vmem:[%s0 + $0x28] sm:$0xf]
    %v75 = vld [vmem:[%s0 + $0x2c] sm:$0xf]
    %v76 = vld [vmem:[%s0 + $0x30] sm:$0xf]
    %v77 = vld [vmem:[%s0 + $0x34] sm:$0xf]
    %v78 = vld [vmem:[%s0 + $0x38] sm:$0xf]
    %v80 = vlaneseq
    %v81 = vshrl.u32 %v80, 7
    %v82 = vsub.s32 0, %v81
    %v83 = vrot.slane %v63, %v82
    %v100 = vunpack.c.l.b16 %v64
    %v101 = vunpack.c.l.b16 %v65
    %v102 = vunpack.c.l.b16 %v66
    %v103 = vunpack.c.l.b16 %v67
    %v104 = vunpack.c.l.b16 %v68
    %v105 = vunpack.c.l.b16 %v69
    %v106 = vunpack.c.l.b16 %v70
    %v107 = vunpack.c.l.b16 %v71
    %v108 = vunpack.c.l.b16 %v72
    %v109 = vunpack.c.l.b16 %v73
    %v110 = vunpack.c.l.b16 %v74
    %v111 = vunpack.c.l.b16 %v75
    %v112 = vunpack.c.l.b16 %v76
    %v113 = vunpack.c.l.b16 %v77
    %v114 = vunpack.c.l.b16 %v78
    %v115 = vpack.c.b16 %v101, %v100
    %v116 = vpack.c.b16 %v103, %v102
    %v117 = vpack.c.b16 %v105, %v104
    %v118 = vpack.c.b16 %v107, %v106
    %v119 = vpack.c.b16 %v109, %v108
    %v120 = vpack.c.b16 %v111, %v110
    %v121 = vpack.c.b16 %v113, %v112
    %v122 = vpack.c.b16 %v114, %v114
    %v147 = vunpack.c.l.b16 %v47
    %v148 = vunpack.c.l.b16 %v48
    %v149 = vunpack.c.l.b16 %v49
    %v150 = vunpack.c.l.b16 %v50
    %v151 = vunpack.c.l.b16 %v51
    %v152 = vunpack.c.l.b16 %v52
    %v153 = vunpack.c.l.b16 %v53
    %v154 = vunpack.c.l.b16 %v54
    %v155 = vunpack.c.l.b16 %v55
    %v156 = vunpack.c.l.b16 %v56
    %v157 = vunpack.c.l.b16 %v57
    %v158 = vunpack.c.l.b16 %v58
    %v159 = vunpack.c.l.b16 %v59
    %v160 = vunpack.c.l.b16 %v60
    %v161 = vunpack.c.l.b16 %v61
    %v162 = vunpack.c.l.b16 %v62
    %v163 = vpack.c.b16 %v148, %v147
    %v164 = vpack.c.b16 %v150, %v149
    %v165 = vpack.c.b16 %v152, %v151
    %v166 = vpack.c.b16 %v154, %v153
    %v167 = vpack.c.b16 %v156, %v155
    %v168 = vpack.c.b16 %v158, %v157
    %v169 = vpack.c.b16 %v160, %v159
    %v170 = vpack.c.b16 %v162, %v161
    %179 = vmatprep.subr.bf16.mxu0 0
    %180 = vmatpush1.bf16.msra.mxu0 %v170
    %181 = vmatprep.subr.bf16.mxu0 0
    %182 = vmatpush1.bf16.msra.mxu0 %v169
    %183 = vmatprep.subr.bf16.mxu0 0
    %184 = vmatpush1.bf16.msra.mxu0 %v168
    %185 = vmatprep.subr.bf16.mxu0 0
    %186 = vmatpush1.bf16.msra.mxu0 %v167
    %187 = vmatprep.subr.bf16.mxu0 0
    %188 = vmatpush1.bf16.msra.mxu0 %v166
    %189 = vmatprep.subr.bf16.mxu0 0
    %190 = vmatpush1.bf16.msra.mxu0 %v165
    %191 = vmatprep.subr.bf16.mxu0 0
    %192 = vmatpush1.bf16.msra.mxu0 %v164
    %193 = vmatprep.subr.bf16.mxu0 0
    %194 = vmatpush1.bf16.msra.mxu0 %v163
    %195 = vmatprep.subr.bf16.mxu0 0
    %196 = vmatpush2.bf16.msra.mxu0 0
    %197 = vmatprep.subr.bf16.mxu0 0
    %198 = vmatpush2.bf16.msra.mxu0 0
    %199 = vmatprep.subr.bf16.mxu0 0
    %200 = vmatpush2.bf16.msra.mxu0 0
    %201 = vmatprep.subr.bf16.mxu0 0
    %202 = vmatpush2.bf16.msra.mxu0 0
    %203 = vmatprep.subr.bf16.mxu0 0
    %204 = vmatpush2.bf16.msra.mxu0 0
    %205 = vmatprep.subr.bf16.mxu0 0
    %206 = vmatpush2.bf16.msra.mxu0 0
    %207 = vmatprep.subr.bf16.mxu0 0
    %208 = vmatpush2.bf16.msra.mxu0 0
    %209 = vmatprep.subr.bf16.mxu0 0
    %210 = vmatpush2.bf16.msra.mxu0 0
    %211 = vmatprep.mubr.bf16.mxu0 0
    %212 = vmatmul.mubr.bf16.gmra.mxu0 %v115
    %v213 = vpop.f32.mrf.mxu0
    %v214 = vadd.f32 %v83, %v213
    %v215 = vpop.f32.mrf.mxu0
    %v216 = vpop.f32.mrf.mxu0
    %v217 = vadd.f32 %v83, %v216
    %v218 = vpop.f32.mrf.mxu0
    %219 = vmatprep.mubr.bf16.mxu0 0
    %220 = vmatmul.mubr.bf16.gmra.mxu0 %v116
    %v221 = vpop.f32.mrf.mxu0
    %v222 = vadd.f32 %v83, %v221
    %v223 = vpop.f32.mrf.mxu0
    %v224 = vpop.f32.mrf.mxu0
    %v225 = vadd.f32 %v83, %v224
    %v226 = vpop.f32.mrf.mxu0
    %227 = vmatprep.mubr.bf16.mxu0 0
    %228 = vmatmul.mubr.bf16.gmra.mxu0 %v117
    %v229 = vpop.f32.mrf.mxu0
    %v230 = vadd.f32 %v83, %v229
    %v231 = vpop.f32.mrf.mxu0
    %v232 = vpop.f32.mrf.mxu0
    %v233 = vadd.f32 %v83, %v232
    %v234 = vpop.f32.mrf.mxu0
    %235 = vmatprep.mubr.bf16.mxu0 0
    %236 = vmatmul.mubr.bf16.gmra.mxu0 %v118
    %v237 = vpop.f32.mrf.mxu0
    %v238 = vadd.f32 %v83, %v237
    %v239 = vpop.f32.mrf.mxu0
    %v240 = vpop.f32.mrf.mxu0
    %v241 = vadd.f32 %v83, %v240
    %v242 = vpop.f32.mrf.mxu0
    %243 = vmatprep.mubr.bf16.mxu0 0
    %244 = vmatmul.mubr.bf16.gmra.mxu0 %v119
    %v245 = vpop.f32.mrf.mxu0
    %v246 = vadd.f32 %v83, %v245
    %v247 = vpop.f32.mrf.mxu0
    %v248 = vpop.f32.mrf.mxu0
    %v249 = vadd.f32 %v83, %v248
    %v250 = vpop.f32.mrf.mxu0
    %251 = vmatprep.mubr.bf16.mxu0 0
    %252 = vmatmul.mubr.bf16.gmra.mxu0 %v120
    %v253 = vpop.f32.mrf.mxu0
    %v254 = vadd.f32 %v83, %v253
    %v255 = vpop.f32.mrf.mxu0
    %v256 = vpop.f32.mrf.mxu0
    %v257 = vadd.f32 %v83, %v256
    %v258 = vpop.f32.mrf.mxu0
    %259 = vmatprep.mubr.bf16.mxu0 0
    %260 = vmatmul.mubr.bf16.gmra.mxu0 %v121
    %v261 = vpop.f32.mrf.mxu0
    %v262 = vadd.f32 %v83, %v261
    %v263 = vpop.f32.mrf.mxu0
    %v264 = vpop.f32.mrf.mxu0
    %v265 = vadd.f32 %v83, %v264
    %v266 = vpop.f32.mrf.mxu0
    %267 = vmatprep.mubr.bf16.mxu0 0
    %268 = vmatmul.mubr.bf16.gmra.mxu0 %v122
    %v269 = vpop.f32.mrf.mxu0
    %v270 = vadd.f32 %v83, %v269
    %v271 = vpop.f32.mrf.mxu0
    %v272 = vpop.f32.mrf.mxu0
    %v273 = vpop.f32.mrf.mxu0
    %274 = vdwg.mxu0
    %275 = vst [vmem:[%s5] sm:$0xff] %v214
    %276 = vst [vmem:[%s5 + $0x8] sm:$0xff] %v217
    %277 = vst [vmem:[%s5 + $0x10] sm:$0xff] %v222
    %278 = vst [vmem:[%s5 + $0x18] sm:$0xff] %v225
    %279 = vst [vmem:[%s5 + $0x20] sm:$0xff] %v230
    %280 = vst [vmem:[%s5 + $0x28] sm:$0xff] %v233
    %281 = vst [vmem:[%s5 + $0x30] sm:$0xff] %v238
    %282 = vst [vmem:[%s5 + $0x38] sm:$0xff] %v241
    %283 = vst [vmem:[%s5 + $0x40] sm:$0xff] %v246
    %284 = vst [vmem:[%s5 + $0x48] sm:$0xff] %v249
    %285 = vst [vmem:[%s5 + $0x50] sm:$0xff] %v254
    %286 = vst [vmem:[%s5 + $0x58] sm:$0xff] %v257
    %287 = vst [vmem:[%s5 + $0x60] sm:$0xff] %v262
    %288 = vst [vmem:[%s5 + $0x68] sm:$0xff] %v265
    %289 = vst [vmem:[%s5 + $0x70] sm:$0xff] %v270
    %s290 = scalar_lea.vmem %s0, 60
    %v291 = vld [vmem:[%s290] sm:$0xf]
    %v292 = vld [vmem:[%s290 + $0x4] sm:$0xf]
    %v293 = vld [vmem:[%s290 + $0x8] sm:$0xf]
    %v294 = vld [vmem:[%s290 + $0xc] sm:$0xf]
    %v295 = vld [vmem:[%s290 + $0x10] sm:$0xf]
    %v296 = vld [vmem:[%s290 + $0x14] sm:$0xf]
    %v297 = vld [vmem:[%s290 + $0x18] sm:$0xf]
    %v298 = vld [vmem:[%s290 + $0x1c] sm:$0xf]
    %v299 = vld [vmem:[%s290 + $0x20] sm:$0xf]
    %v300 = vld [vmem:[%s290 + $0x24] sm:$0xf]
    %v301 = vld [vmem:[%s290 + $0x28] sm:$0xf]
    %v302 = vld [vmem:[%s290 + $0x2c] sm:$0xf]
    %v303 = vld [vmem:[%s290 + $0x30] sm:$0xf]
    %v304 = vld [vmem:[%s290 + $0x34] sm:$0xf]
    %v305 = vld [vmem:[%s290 + $0x38] sm:$0xf]
    %v321 = vunpack.c.l.b16 %v291
    %v322 = vunpack.c.l.b16 %v292
    %v323 = vunpack.c.l.b16 %v293
    %v324 = vunpack.c.l.b16 %v294
    %v325 = vunpack.c.l.b16 %v295
    %v326 = vunpack.c.l.b16 %v296
    %v327 = vunpack.c.l.b16 %v297
    %v328 = vunpack.c.l.b16 %v298
    %v329 = vunpack.c.l.b16 %v299
    %v330 = vunpack.c.l.b16 %v300
    %v331 = vunpack.c.l.b16 %v301
    %v332 = vunpack.c.l.b16 %v302
    %v333 = vunpack.c.l.b16 %v303
    %v334 = vunpack.c.l.b16 %v304
    %v335 = vunpack.c.l.b16 %v305
    %v336 = vpack.c.b16 %v322, %v321
    %v337 = vpack.c.b16 %v324, %v323
    %v338 = vpack.c.b16 %v326, %v325
    %v339 = vpack.c.b16 %v328, %v327
    %v340 = vpack.c.b16 %v330, %v329
    %v341 = vpack.c.b16 %v332, %v331
    %v342 = vpack.c.b16 %v334, %v333
    %v343 = vpack.c.b16 %v335, %v335
    %352 = vmatprep.subr.bf16.mxu0 0
    %353 = vmatpush1.bf16.msra.mxu0 %v170
    %354 = vmatprep.subr.bf16.mxu0 0
    %355 = vmatpush1.bf16.msra.mxu0 %v169
    %356 = vmatprep.subr.bf16.mxu0 0
    %357 = vmatpush1.bf16.msra.mxu0 %v168
    %358 = vmatprep.subr.bf16.mxu0 0
    %359 = vmatpush1.bf16.msra.mxu0 %v167
    %360 = vmatprep.subr.bf16.mxu0 0
    %361 = vmatpush1.bf16.msra.mxu0 %v166
    %362 = vmatprep.subr.bf16.mxu0 0
    %363 = vmatpush1.bf16.msra.mxu0 %v165
    %364 = vmatprep.subr.bf16.mxu0 0
    %365 = vmatpush1.bf16.msra.mxu0 %v164
    %366 = vmatprep.subr.bf16.mxu0 0
    %367 = vmatpush1.bf16.msra.mxu0 %v163
    %368 = vmatprep.subr.bf16.mxu0 0
    %369 = vmatpush2.bf16.msra.mxu0 0
    %370 = vmatprep.subr.bf16.mxu0 0
    %371 = vmatpush2.bf16.msra.mxu0 0
    %372 = vmatprep.subr.bf16.mxu0 0
    %373 = vmatpush2.bf16.msra.mxu0 0
    %374 = vmatprep.subr.bf16.mxu0 0
    %375 = vmatpush2.bf16.msra.mxu0 0
    %376 = vmatprep.subr.bf16.mxu0 0
    %377 = vmatpush2.bf16.msra.mxu0 0
    %378 = vmatprep.subr.bf16.mxu0 0
    %379 = vmatpush2.bf16.msra.mxu0 0
    %380 = vmatprep.subr.bf16.mxu0 0
    %381 = vmatpush2.bf16.msra.mxu0 0
    %382 = vmatprep.subr.bf16.mxu0 0
    %383 = vmatpush2.bf16.msra.mxu0 0
    %384 = vmatprep.mubr.bf16.mxu0 0
    %385 = vmatmul.mubr.bf16.gmra.mxu0 %v336
    %v386 = vpop.f32.mrf.mxu0
    %v387 = vadd.f32 %v83, %v386
    %v388 = vpop.f32.mrf.mxu0
    %v389 = vpop.f32.mrf.mxu0
    %v390 = vadd.f32 %v83, %v389
    %v391 = vpop.f32.mrf.mxu0
    %392 = vmatprep.mubr.bf16.mxu0 0
    %393 = vmatmul.mubr.bf16.gmra.mxu0 %v337
    %v394 = vpop.f32.mrf.mxu0
    %v395 = vadd.f32 %v83, %v394
    %v396 = vpop.f32.mrf.mxu0
    %v397 = vpop.f32.mrf.mxu0
    %v398 = vadd.f32 %v83, %v397
    %v399 = vpop.f32.mrf.mxu0
    %400 = vmatprep.mubr.bf16.mxu0 0
    %401 = vmatmul.mubr.bf16.gmra.mxu0 %v338
    %v402 = vpop.f32.mrf.mxu0
    %v403 = vadd.f32 %v83, %v402
    %v404 = vpop.f32.mrf.mxu0
    %v405 = vpop.f32.mrf.mxu0
    %v406 = vadd.f32 %v83, %v405
    %v407 = vpop.f32.mrf.mxu0
    %408 = vmatprep.mubr.bf16.mxu0 0
    %409 = vmatmul.mubr.bf16.gmra.mxu0 %v339
    %v410 = vpop.f32.mrf.mxu0
    %v411 = vadd.f32 %v83, %v410
    %v412 = vpop.f32.mrf.mxu0
    %v413 = vpop.f32.mrf.mxu0
    %v414 = vadd.f32 %v83, %v413
    %v415 = vpop.f32.mrf.mxu0
    %416 = vmatprep.mubr.bf16.mxu0 0
    %417 = vmatmul.mubr.bf16.gmra.mxu0 %v340
    %v418 = vpop.f32.mrf.mxu0
    %v419 = vadd.f32 %v83, %v418
    %v420 = vpop.f32.mrf.mxu0
    %v421 = vpop.f32.mrf.mxu0
    %v422 = vadd.f32 %v83, %v421
    %v423 = vpop.f32.mrf.mxu0
    %424 = vmatprep.mubr.bf16.mxu0 0
    %425 = vmatmul.mubr.bf16.gmra.mxu0 %v341
    %v426 = vpop.f32.mrf.mxu0
    %v427 = vadd.f32 %v83, %v426
    %v428 = vpop.f32.mrf.mxu0
    %v429 = vpop.f32.mrf.mxu0
    %v430 = vadd.f32 %v83, %v429
    %v431 = vpop.f32.mrf.mxu0
    %432 = vmatprep.mubr.bf16.mxu0 0
    %433 = vmatmul.mubr.bf16.gmra.mxu0 %v342
    %v434 = vpop.f32.mrf.mxu0
    %v435 = vadd.f32 %v83, %v434
    %v436 = vpop.f32.mrf.mxu0
    %v437 = vpop.f32.mrf.mxu0
    %v438 = vadd.f32 %v83, %v437
    %v439 = vpop.f32.mrf.mxu0
    %440 = vmatprep.mubr.bf16.mxu0 0
    %441 = vmatmul.mubr.bf16.gmra.mxu0 %v343
    %v442 = vpop.f32.mrf.mxu0
    %v443 = vadd.f32 %v83, %v442
    %v444 = vpop.f32.mrf.mxu0
    %v445 = vpop.f32.mrf.mxu0
    %v446 = vpop.f32.mrf.mxu0
    %447 = vdwg.mxu0
    %s448 = scalar_lea.vmem %s5, 120
    %449 = vst [vmem:[%s448] sm:$0xff] %v387
    %450 = vst [vmem:[%s448 + $0x8] sm:$0xff] %v390
    %451 = vst [vmem:[%s448 + $0x10] sm:$0xff] %v395
    %452 = vst [vmem:[%s448 + $0x18] sm:$0xff] %v398
    %453 = vst [vmem:[%s448 + $0x20] sm:$0xff] %v403
    %454 = vst [vmem:[%s448 + $0x28] sm:$0xff] %v406
    %455 = vst [vmem:[%s448 + $0x30] sm:$0xff] %v411
    %456 = vst [vmem:[%s448 + $0x38] sm:$0xff] %v414
    %457 = vst [vmem:[%s448 + $0x40] sm:$0xff] %v419
    %458 = vst [vmem:[%s448 + $0x48] sm:$0xff] %v422
    %459 = vst [vmem:[%s448 + $0x50] sm:$0xff] %v427
    %460 = vst [vmem:[%s448 + $0x58] sm:$0xff] %v430
    %461 = vst [vmem:[%s448 + $0x60] sm:$0xff] %v435
    %462 = vst [vmem:[%s448 + $0x68] sm:$0xff] %v438
    %463 = vst [vmem:[%s448 + $0x70] sm:$0xff] %v443
    // Predicated region
    $region30: #{_lambda_.22} parent=1 // pred_check
      _
    $region31: #{_lambda_.22} parent=1 // pred_check_branch
      %465 = sbr.rel (0) target = $region33
    $region32: #{_lambda_.22} parent=1 // pred_region
      _
    $region33: #{_lambda_.22} parent=1 // pred_fallthru
      _
    // Predicated region
    $region34: #{_lambda_.22} parent=1 // pred_check
      _
    $region35: #{_lambda_.22} parent=1 // pred_check_branch
      %467 = sbr.rel (0) target = $region37
    $region36: #{_lambda_.22} parent=1 // pred_region
      _
    $region37: #{_lambda_.22} parent=1 // pred_fallthru
      _
    %468 = vsyncpa [#allocation3], 1
    %469 = vsyncpa [#allocation5], 1

// kernel: _lambda_.23
$region0: #{_lambda_.23}
  #allocation0 [shape = 'u32[]', space=smem, size = 0x4, offset = 0x4, fixed_abs, tag = 'smem constant byte address 0x4 - core index']
  #allocation1 [shape = 'u32[144,128]{1,0:T(1,128)}', space=vmem, size = 0x12000, scoped, tag = 'internal scratch']
  %s0 = inlined_call_operand.vmem [shape: bf16[2,120,128], index: 0, kind: input, shape index: {}]
  %s1 = inlined_call_operand.vmem [shape: bf16[128,128], index: 1, kind: input, shape index: {}]
  %s2 = inlined_call_operand.vmem [shape: f32[1,128], index: 2, kind: input, shape index: {}]
  %s3 = inlined_call_operand.vmem [shape: f32[1,128], index: 3, kind: input, shape index: {}]
  %s4 = inlined_call_operand.vmem [shape: f32[1,128], index: 4, kind: input, shape index: {}]
  %s5 = inlined_call_operand.vmem [shape: f32[2,120,128], index: 5, kind: output, shape index: {}]
  %s6 = sld [smem:[#allocation0]]
  $region30: #{_lambda_.23} parent=0
    _
  %s8 = ssub.s32 1, %s6
  %s9 = scalar_select 0, %s8, %s6
  // Predicated region
  $region2: #{_lambda_.23} parent=0 // pred_check
    _
  $region3: #{_lambda_.23} parent=0 // pred_check_branch
    %11 = sbr.rel (0) target = $region5
  $region4: #{_lambda_.23} parent=0 // pred_region
    _
  $region5: #{_lambda_.23} parent=0 // pred_fallthru
    _
  // Predicated region
  $region6: #{_lambda_.23} parent=0 // pred_check
    _
  $region7: #{_lambda_.23} parent=0 // pred_check_branch
    %13 = sbr.rel (0) target = $region9
  $region8: #{_lambda_.23} parent=0 // pred_region
    _
  $region9: #{_lambda_.23} parent=0 // pred_fallthru
    _
  // Predicated region
  $region10: #{_lambda_.23} parent=0 // pred_check
    _
  $region11: #{_lambda_.23} parent=0 // pred_check_branch
    %15 = sbr.rel (0) target = $region13
  $region12: #{_lambda_.23} parent=0 // pred_region
    _
  $region13: #{_lambda_.23} parent=0 // pred_fallthru
    _
  // Predicated region
  $region14: #{_lambda_.23} parent=0 // pred_check
    _
  $region15: #{_lambda_.23} parent=0 // pred_check_branch
    %17 = sbr.rel (0) target = $region17
  $region16: #{_lambda_.23} parent=0 // pred_region
    _
  $region17: #{_lambda_.23} parent=0 // pred_fallthru
    _
  // Predicated region
  $region18: #{_lambda_.23} parent=0 // pred_check
    _
  $region19: #{_lambda_.23} parent=0 // pred_check_branch
    %19 = sbr.rel (0) target = $region21
  $region20: #{_lambda_.23} parent=0 // pred_region
    _
  $region21: #{_lambda_.23} parent=0 // pred_fallthru
    _
  %v21 = vld [vmem:[%s1] sm:$0xf]
  %v22 = vld [vmem:[%s1 + $0x4] sm:$0xf]
  %v23 = vld [vmem:[%s1 + $0x8] sm:$0xf]
  %v24 = vld [vmem:[%s1 + $0xc] sm:$0xf]
  %v25 = vld [vmem:[%s1 + $0x10] sm:$0xf]
  %v26 = vld [vmem:[%s1 + $0x14] sm:$0xf]
  %v27 = vld [vmem:[%s1 + $0x18] sm:$0xf]
  %v28 = vld [vmem:[%s1 + $0x1c] sm:$0xf]
  %v29 = vld [vmem:[%s1 + $0x20] sm:$0xf]
  %v30 = vld [vmem:[%s1 + $0x24] sm:$0xf]
  %v31 = vld [vmem:[%s1 + $0x28] sm:$0xf]
  %v32 = vld [vmem:[%s1 + $0x2c] sm:$0xf]
  %v33 = vld [vmem:[%s1 + $0x30] sm:$0xf]
  %v34 = vld [vmem:[%s1 + $0x34] sm:$0xf]
  %v35 = vld [vmem:[%s1 + $0x38] sm:$0xf]
  %v36 = vld [vmem:[%s1 + $0x3c] sm:$0xf]
  %v37 = vld [vmem:[%s2] sm:$0x1]
  %v38 = vld [vmem:[%s0] sm:$0xf]
  %v39 = vld [vmem:[%s0 + $0x4] sm:$0xf]
  %v40 = vld [vmem:[%s0 + $0x8] sm:$0xf]
  %v41 = vld [vmem:[%s0 + $0xc] sm:$0xf]
  %v42 = vld [vmem:[%s0 + $0x10] sm:$0xf]
  %v43 = vld [vmem:[%s0 + $0x14] sm:$0xf]
  %v44 = vld [vmem:[%s0 + $0x18] sm:$0xf]
  %v45 = vld [vmem:[%s0 + $0x1c] sm:$0xf]
  %v46 = vld [vmem:[%s0 + $0x20] sm:$0xf]
  %v47 = vld [vmem:[%s0 + $0x24] sm:$0xf]
  %v48 = vld [vmem:[%s0 + $0x28] sm:$0xf]
  %v49 = vld [vmem:[%s0 + $0x2c] sm:$0xf]
  %v50 = vld [vmem:[%s0 + $0x30] sm:$0xf]
  %v51 = vld [vmem:[%s0 + $0x34] sm:$0xf]
  %v52 = vld [vmem:[%s0 + $0x38] sm:$0xf]
  %v54 = vlaneseq
  %v55 = vshrl.u32 %v54, 7
  %v56 = vsub.s32 0, %v55
  %v57 = vrot.slane %v37, %v56
  %v74 = vunpack.c.l.b16 %v38
  %v75 = vunpack.c.l.b16 %v39
  %v76 = vunpack.c.l.b16 %v40
  %v77 = vunpack.c.l.b16 %v41
  %v78 = vunpack.c.l.b16 %v42
  %v79 = vunpack.c.l.b16 %v43
  %v80 = vunpack.c.l.b16 %v44
  %v81 = vunpack.c.l.b16 %v45
  %v82 = vunpack.c.l.b16 %v46
  %v83 = vunpack.c.l.b16 %v47
  %v84 = vunpack.c.l.b16 %v48
  %v85 = vunpack.c.l.b16 %v49
  %v86 = vunpack.c.l.b16 %v50
  %v87 = vunpack.c.l.b16 %v51
  %v88 = vunpack.c.l.b16 %v52
  %v89 = vpack.c.b16 %v75, %v74
  %v90 = vpack.c.b16 %v77, %v76
  %v91 = vpack.c.b16 %v79, %v78
  %v92 = vpack.c.b16 %v81, %v80
  %v93 = vpack.c.b16 %v83, %v82
  %v94 = vpack.c.b16 %v85, %v84
  %v95 = vpack.c.b16 %v87, %v86
  %v96 = vpack.c.b16 %v88, %v88
  %v121 = vunpack.c.l.b16 %v21
  %v122 = vunpack.c.l.b16 %v22
  %v123 = vunpack.c.l.b16 %v23
  %v124 = vunpack.c.l.b16 %v24
  %v125 = vunpack.c.l.b16 %v25
  %v126 = vunpack.c.l.b16 %v26
  %v127 = vunpack.c.l.b16 %v27
  %v128 = vunpack.c.l.b16 %v28
  %v129 = vunpack.c.l.b16 %v29
  %v130 = vunpack.c.l.b16 %v30
  %v131 = vunpack.c.l.b16 %v31
  %v132 = vunpack.c.l.b16 %v32
  %v133 = vunpack.c.l.b16 %v33
  %v134 = vunpack.c.l.b16 %v34
  %v135 = vunpack.c.l.b16 %v35
  %v136 = vunpack.c.l.b16 %v36
  %v137 = vpack.c.b16 %v122, %v121
  %v138 = vpack.c.b16 %v124, %v123
  %v139 = vpack.c.b16 %v126, %v125
  %v140 = vpack.c.b16 %v128, %v127
  %v141 = vpack.c.b16 %v130, %v129
  %v142 = vpack.c.b16 %v132, %v131
  %v143 = vpack.c.b16 %v134, %v133
  %v144 = vpack.c.b16 %v136, %v135
  %153 = vmatprep.subr.bf16.mxu0 0
  %154 = vmatpush1.bf16.msra.mxu0 %v144
  %155 = vmatprep.subr.bf16.mxu0 0
  %156 = vmatpush1.bf16.msra.mxu0 %v143
  %157 = vmatprep.subr.bf16.mxu0 0
  %158 = vmatpush1.bf16.msra.mxu0 %v142
  %159 = vmatprep.subr.bf16.mxu0 0
  %160 = vmatpush1.bf16.msra.mxu0 %v141
  %161 = vmatprep.subr.bf16.mxu0 0
  %162 = vmatpush1.bf16.msra.mxu0 %v140
  %163 = vmatprep.subr.bf16.mxu0 0
  %164 = vmatpush1.bf16.msra.mxu0 %v139
  %165 = vmatprep.subr.bf16.mxu0 0
  %166 = vmatpush1.bf16.msra.mxu0 %v138
  %167 = vmatprep.subr.bf16.mxu0 0
  %168 = vmatpush1.bf16.msra.mxu0 %v137
  %169 = vmatprep.subr.bf16.mxu0 0
  %170 = vmatpush2.bf16.msra.mxu0 0
  %171 = vmatprep.subr.bf16.mxu0 0
  %172 = vmatpush2.bf16.msra.mxu0 0
  %173 = vmatprep.subr.bf16.mxu0 0
  %174 = vmatpush2.bf16.msra.mxu0 0
  %175 = vmatprep.subr.bf16.mxu0 0
  %176 = vmatpush2.bf16.msra.mxu0 0
  %177 = vmatprep.subr.bf16.mxu0 0
  %178 = vmatpush2.bf16.msra.mxu0 0
  %179 = vmatprep.subr.bf16.mxu0 0
  %180 = vmatpush2.bf16.msra.mxu0 0
  %181 = vmatprep.subr.bf16.mxu0 0
  %182 = vmatpush2.bf16.msra.mxu0 0
  %183 = vmatprep.subr.bf16.mxu0 0
  %184 = vmatpush2.bf16.msra.mxu0 0
  %185 = vmatprep.mubr.bf16.mxu0 0
  %186 = vmatmul.mubr.bf16.gmra.mxu0 %v89
  %v187 = vpop.f32.mrf.mxu0
  %v188 = vadd.f32 %v57, %v187
  %v189 = vpop.f32.mrf.mxu0
  %v190 = vpop.f32.mrf.mxu0
  %v191 = vadd.f32 %v57, %v190
  %v192 = vpop.f32.mrf.mxu0
  %193 = vmatprep.mubr.bf16.mxu0 0
  %194 = vmatmul.mubr.bf16.gmra.mxu0 %v90
  %v195 = vpop.f32.mrf.mxu0
  %v196 = vadd.f32 %v57, %v195
  %v197 = vpop.f32.mrf.mxu0
  %v198 = vpop.f32.mrf.mxu0
  %v199 = vadd.f32 %v57, %v198
  %v200 = vpop.f32.mrf.mxu0
  %201 = vmatprep.mubr.bf16.mxu0 0
  %202 = vmatmul.mubr.bf16.gmra.mxu0 %v91
  %v203 = vpop.f32.mrf.mxu0
  %v204 = vadd.f32 %v57, %v203
  %v205 = vpop.f32.mrf.mxu0
  %v206 = vpop.f32.mrf.mxu0
  %v207 = vadd.f32 %v57, %v206
  %v208 = vpop.f32.mrf.mxu0
  %209 = vmatprep.mubr.bf16.mxu0 0
  %210 = vmatmul.mubr.bf16.gmra.mxu0 %v92
  %v211 = vpop.f32.mrf.mxu0
  %v212 = vadd.f32 %v57, %v211
  %v213 = vpop.f32.mrf.mxu0
  %v214 = vpop.f32.mrf.mxu0
  %v215 = vadd.f32 %v57, %v214
  %v216 = vpop.f32.mrf.mxu0
  %217 = vmatprep.mubr.bf16.mxu0 0
  %218 = vmatmul.mubr.bf16.gmra.mxu0 %v93
  %v219 = vpop.f32.mrf.mxu0
  %v220 = vadd.f32 %v57, %v219
  %v221 = vpop.f32.mrf.mxu0
  %v222 = vpop.f32.mrf.mxu0
  %v223 = vadd.f32 %v57, %v222
  %v224 = vpop.f32.mrf.mxu0
  %225 = vmatprep.mubr.bf16.mxu0 0
  %226 = vmatmul.mubr.bf16.gmra.mxu0 %v94
  %v227 = vpop.f32.mrf.mxu0
  %v228 = vadd.f32 %v57, %v227
  %v229 = vpop.f32.mrf.mxu0
  %v230 = vpop.f32.mrf.mxu0
  %v231 = vadd.f32 %v57, %v230
  %v232 = vpop.f32.mrf.mxu0
  %233 = vmatprep.mubr.bf16.mxu0 0
  %234 = vmatmul.mubr.bf16.gmra.mxu0 %v95
  %v235 = vpop.f32.mrf.mxu0
  %v236 = vadd.f32 %v57, %v235
  %v237 = vpop.f32.mrf.mxu0
  %v238 = vpop.f32.mrf.mxu0
  %v239 = vadd.f32 %v57, %v238
  %v240 = vpop.f32.mrf.mxu0
  %241 = vmatprep.mubr.bf16.mxu0 0
  %242 = vmatmul.mubr.bf16.gmra.mxu0 %v96
  %v243 = vpop.f32.mrf.mxu0
  %v244 = vadd.f32 %v57, %v243
  %v245 = vpop.f32.mrf.mxu0
  %v246 = vpop.f32.mrf.mxu0
  %v247 = vpop.f32.mrf.mxu0
  %248 = vdwg.mxu0
  %vm249 = vcmp.gt.f32.partialorder %v188, 0.0
  %vm250 = vcmp.gt.f32.partialorder %v191, 0.0
  %vm251 = vcmp.gt.f32.partialorder %v196, 0.0
  %vm252 = vcmp.gt.f32.partialorder %v199, 0.0
  %vm253 = vcmp.gt.f32.partialorder %v204, 0.0
  %vm254 = vcmp.gt.f32.partialorder %v207, 0.0
  %vm255 = vcmp.gt.f32.partialorder %v212, 0.0
  %vm256 = vcmp.gt.f32.partialorder %v215, 0.0
  %vm257 = vcmp.gt.f32.partialorder %v220, 0.0
  %vm258 = vcmp.gt.f32.partialorder %v223, 0.0
  %vm259 = vcmp.gt.f32.partialorder %v228, 0.0
  %vm260 = vcmp.gt.f32.partialorder %v231, 0.0
  %vm261 = vcmp.gt.f32.partialorder %v236, 0.0
  %vm262 = vcmp.gt.f32.partialorder %v239, 0.0
  %vm263 = vcmp.gt.f32.partialorder %v244, 0.0
  %v264 = vmin.f32 %v188, 0.0
  %v265 = vmin.f32 %v191, 0.0
  %v266 = vmin.f32 %v196, 0.0
  %v267 = vmin.f32 %v199, 0.0
  %v268 = vmin.f32 %v204, 0.0
  %v269 = vmin.f32 %v207, 0.0
  %v270 = vmin.f32 %v212, 0.0
  %v271 = vmin.f32 %v215, 0.0
  %v272 = vmin.f32 %v220, 0.0
  %v273 = vmin.f32 %v223, 0.0
  %v274 = vmin.f32 %v228, 0.0
  %v275 = vmin.f32 %v231, 0.0
  %v276 = vmin.f32 %v236, 0.0
  %v277 = vmin.f32 %v239, 0.0
  %v278 = vmin.f32 %v244, 0.0
  %v279 = vmul.f32 %v264, 1.442695
  %v280 = vpow.pop %v279
  %v281 = vmul.f32 %v265, 1.442695
  %v282 = vpow.pop %v281
  %v283 = vmul.f32 %v266, 1.442695
  %v284 = vpow.pop %v283
  %v285 = vmul.f32 %v267, 1.442695
  %v286 = vpow.pop %v285
  %v287 = vmul.f32 %v268, 1.442695
  %v288 = vpow.pop %v287
  %v289 = vmul.f32 %v269, 1.442695
  %v290 = vpow.pop %v289
  %v291 = vmul.f32 %v270, 1.442695
  %v292 = vpow.pop %v291
  %v293 = vmul.f32 %v271, 1.442695
  %v294 = vpow.pop %v293
  %v295 = vmul.f32 %v272, 1.442695
  %v296 = vpow.pop %v295
  %v297 = vmul.f32 %v273, 1.442695
  %v298 = vpow.pop %v297
  %v299 = vmul.f32 %v274, 1.442695
  %v300 = vpow.pop %v299
  %v301 = vmul.f32 %v275, 1.442695
  %v302 = vpow.pop %v301
  %v303 = vmul.f32 %v276, 1.442695
  %v304 = vpow.pop %v303
  %v305 = vmul.f32 %v277, 1.442695
  %v306 = vpow.pop %v305
  %v307 = vmul.f32 %v278, 1.442695
  %v308 = vpow.pop %v307
  %v309 = vsub.f32 %v280, 1.0
  %v310 = vsub.f32 %v282, 1.0
  %v311 = vsub.f32 %v284, 1.0
  %v312 = vsub.f32 %v286, 1.0
  %v313 = vsub.f32 %v288, 1.0
  %v314 = vsub.f32 %v290, 1.0
  %v315 = vsub.f32 %v292, 1.0
  %v316 = vsub.f32 %v294, 1.0
  %v317 = vsub.f32 %v296, 1.0
  %v318 = vsub.f32 %v298, 1.0
  %v319 = vsub.f32 %v300, 1.0
  %v320 = vsub.f32 %v302, 1.0
  %v321 = vsub.f32 %v304, 1.0
  %v322 = vsub.f32 %v306, 1.0
  %v323 = vsub.f32 %v308, 1.0
  %v324 = vsel %vm249, %v188, %v309
  %v325 = vsel %vm250, %v191, %v310
  %v326 = vsel %vm251, %v196, %v311
  %v327 = vsel %vm252, %v199, %v312
  %v328 = vsel %vm253, %v204, %v313
  %v329 = vsel %vm254, %v207, %v314
  %v330 = vsel %vm255, %v212, %v315
  %v331 = vsel %vm256, %v215, %v316
  %v332 = vsel %vm257, %v220, %v317
  %v333 = vsel %vm258, %v223, %v318
  %v334 = vsel %vm259, %v228, %v319
  %v335 = vsel %vm260, %v231, %v320
  %v336 = vsel %vm261, %v236, %v321
  %v337 = vsel %vm262, %v239, %v322
  %v338 = vsel %vm263, %v244, %v323
  %v339 = vadd.f32 %v324, %v325
  %v340 = vadd.f32 %v339, %v326
  %v341 = vadd.f32 %v340, %v327
  %v342 = vadd.f32 %v341, %v328
  %v343 = vadd.f32 %v342, %v329
  %v344 = vadd.f32 %v343, %v330
  %v345 = vadd.f32 %v344, %v331
  %v346 = vadd.f32 %v345, %v332
  %v347 = vadd.f32 %v346, %v333
  %v348 = vadd.f32 %v347, %v334
  %v349 = vadd.f32 %v348, %v335
  %v350 = vadd.f32 %v349, %v336
  %v351 = vadd.f32 %v350, %v337
  %v352 = vadd.f32 %v351, %v338
  %v353 = vrot.slane %v352, 4
  %v354 = vadd.f32 %v352, %v353
  %v355 = vrot.slane %v354, 2
  %v356 = vadd.f32 %v354, %v355
  %v357 = vrot.slane %v356, 1
  %v358 = vadd.f32 %v356, %v357
  %v359 = vrcp.pop 120.0
  %v360 = vmul.f32 %v358, %v359
  %v361 = vsub.f32 %v324, %v360
  %v362 = vsub.f32 %v325, %v360
  %v363 = vsub.f32 %v326, %v360
  %v364 = vsub.f32 %v327, %v360
  %v365 = vsub.f32 %v328, %v360
  %v366 = vsub.f32 %v329, %v360
  %v367 = vsub.f32 %v330, %v360
  %v368 = vsub.f32 %v331, %v360
  %v369 = vsub.f32 %v332, %v360
  %v370 = vsub.f32 %v333, %v360
  %v371 = vsub.f32 %v334, %v360
  %v372 = vsub.f32 %v335, %v360
  %v373 = vsub.f32 %v336, %v360
  %v374 = vsub.f32 %v337, %v360
  %v375 = vsub.f32 %v338, %v360
  %v376 = vmul.f32 %v361, %v361
  %v377 = vmul.f32 %v362, %v362
  %v378 = vmul.f32 %v363, %v363
  %v379 = vmul.f32 %v364, %v364
  %v380 = vmul.f32 %v365, %v365
  %v381 = vmul.f32 %v366, %v366
  %v382 = vmul.f32 %v367, %v367
  %v383 = vmul.f32 %v368, %v368
  %v384 = vmul.f32 %v369, %v369
  %v385 = vmul.f32 %v370, %v370
  %v386 = vmul.f32 %v371, %v371
  %v387 = vmul.f32 %v372, %v372
  %v388 = vmul.f32 %v373, %v373
  %v389 = vmul.f32 %v374, %v374
  %v390 = vmul.f32 %v375, %v375
  %v391 = vadd.f32 %v376, %v377
  %v392 = vadd.f32 %v391, %v378
  %v393 = vadd.f32 %v392, %v379
  %v394 = vadd.f32 %v393, %v380
  %v395 = vadd.f32 %v394, %v381
  %v396 = vadd.f32 %v395, %v382
  %v397 = vadd.f32 %v396, %v383
  %v398 = vadd.f32 %v397, %v384
  %v399 = vadd.f32 %v398, %v385
  %v400 = vadd.f32 %v399, %v386
  %v401 = vadd.f32 %v400, %v387
  %v402 = vadd.f32 %v401, %v388
  %v403 = vadd.f32 %v402, %v389
  %v404 = vadd.f32 %v403, %v390
  %v405 = vrot.slane %v404, 4
  %v406 = vadd.f32 %v404, %v405
  %v407 = vrot.slane %v406, 2
  %v408 = vadd.f32 %v406, %v407
  %v409 = vrot.slane %v408, 1
  %v410 = vadd.f32 %v408, %v409
  %v411 = vmul.f32 %v410, %v359
  %v412 = vadd.f32 %v411, 1e-08
  %v413 = vrsqrt.pop %v412
  %v414 = vmul.f32 %v361, %v413
  %v415 = vmul.f32 %v362, %v413
  %v416 = vmul.f32 %v363, %v413
  %v417 = vmul.f32 %v364, %v413
  %v418 = vmul.f32 %v365, %v413
  %v419 = vmul.f32 %v366, %v413
  %v420 = vmul.f32 %v367, %v413
  %v421 = vmul.f32 %v368, %v413
  %v422 = vmul.f32 %v369, %v413
  %v423 = vmul.f32 %v370, %v413
  %v424 = vmul.f32 %v371, %v413
  %v425 = vmul.f32 %v372, %v413
  %v426 = vmul.f32 %v373, %v413
  %v427 = vmul.f32 %v374, %v413
  %v428 = vmul.f32 %v375, %v413
  %v429 = vld [vmem:[%s3] sm:$0x1]
  %v431 = vlaneseq
  %v432 = vshrl.u32 %v431, 7
  %v433 = vsub.s32 0, %v432
  %v434 = vrot.slane %v429, %v433
  %v436 = vmul.f32 %v414, %v434
  %v437 = vmul.f32 %v415, %v434
  %v438 = vmul.f32 %v416, %v434
  %v439 = vmul.f32 %v417, %v434
  %v440 = vmul.f32 %v418, %v434
  %v441 = vmul.f32 %v419, %v434
  %v442 = vmul.f32 %v420, %v434
  %v443 = vmul.f32 %v421, %v434
  %v444 = vmul.f32 %v422, %v434
  %v445 = vmul.f32 %v423, %v434
  %v446 = vmul.f32 %v424, %v434
  %v447 = vmul.f32 %v425, %v434
  %v448 = vmul.f32 %v426, %v434
  %v449 = vmul.f32 %v427, %v434
  %v450 = vmul.f32 %v428, %v434
  %v451 = vld [vmem:[%s4] sm:$0x1]
  %v453 = vlaneseq
  %v454 = vshrl.u32 %v453, 7
  %v455 = vsub.s32 0, %v454
  %v456 = vrot.slane %v451, %v455
  %v458 = vadd.f32 %v436, %v456
  %v459 = vadd.f32 %v437, %v456
  %v460 = vadd.f32 %v438, %v456
  %v461 = vadd.f32 %v439, %v456
  %v462 = vadd.f32 %v440, %v456
  %v463 = vadd.f32 %v441, %v456
  %v464 = vadd.f32 %v442, %v456
  %v465 = vadd.f32 %v443, %v456
  %v466 = vadd.f32 %v444, %v456
  %v467 = vadd.f32 %v445, %v456
  %v468 = vadd.f32 %v446, %v456
  %v469 = vadd.f32 %v447, %v456
  %v470 = vadd.f32 %v448, %v456
  %v471 = vadd.f32 %v449, %v456
  %v472 = vadd.f32 %v450, %v456
  %473 = vst [vmem:[%s5] sm:$0xff] %v458
  %474 = vst [vmem:[%s5 + $0x8] sm:$0xff] %v459
  %475 = vst [vmem:[%s5 + $0x10] sm:$0xff] %v460
  %476 = vst [vmem:[%s5 + $0x18] sm:$0xff] %v461
  %477 = vst [vmem:[%s5 + $0x20] sm:$0xff] %v462
  %478 = vst [vmem:[%s5 + $0x28] sm:$0xff] %v463
  %479 = vst [vmem:[%s5 + $0x30] sm:$0xff] %v464
  %480 = vst [vmem:[%s5 + $0x38] sm:$0xff] %v465
  %481 = vst [vmem:[%s5 + $0x40] sm:$0xff] %v466
  %482 = vst [vmem:[%s5 + $0x48] sm:$0xff] %v467
  %483 = vst [vmem:[%s5 + $0x50] sm:$0xff] %v468
  %484 = vst [vmem:[%s5 + $0x58] sm:$0xff] %v469
  %485 = vst [vmem:[%s5 + $0x60] sm:$0xff] %v470
  %486 = vst [vmem:[%s5 + $0x68] sm:$0xff] %v471
  %487 = vst [vmem:[%s5 + $0x70] sm:$0xff] %v472
  %s488 = scalar_lea.vmem %s0, 60
  %v489 = vld [vmem:[%s488] sm:$0xf]
  %v490 = vld [vmem:[%s488 + $0x4] sm:$0xf]
  %v491 = vld [vmem:[%s488 + $0x8] sm:$0xf]
  %v492 = vld [vmem:[%s488 + $0xc] sm:$0xf]
  %v493 = vld [vmem:[%s488 + $0x10] sm:$0xf]
  %v494 = vld [vmem:[%s488 + $0x14] sm:$0xf]
  %v495 = vld [vmem:[%s488 + $0x18] sm:$0xf]
  %v496 = vld [vmem:[%s488 + $0x1c] sm:$0xf]
  %v497 = vld [vmem:[%s488 + $0x20] sm:$0xf]
  %v498 = vld [vmem:[%s488 + $0x24] sm:$0xf]
  %v499 = vld [vmem:[%s488 + $0x28] sm:$0xf]
  %v500 = vld [vmem:[%s488 + $0x2c] sm:$0xf]
  %v501 = vld [vmem:[%s488 + $0x30] sm:$0xf]
  %v502 = vld [vmem:[%s488 + $0x34] sm:$0xf]
  %v503 = vld [vmem:[%s488 + $0x38] sm:$0xf]
  %v519 = vunpack.c.l.b16 %v489
  %v520 = vunpack.c.l.b16 %v490
  %v521 = vunpack.c.l.b16 %v491
  %v522 = vunpack.c.l.b16 %v492
  %v523 = vunpack.c.l.b16 %v493
  %v524 = vunpack.c.l.b16 %v494
  %v525 = vunpack.c.l.b16 %v495
  %v526 = vunpack.c.l.b16 %v496
  %v527 = vunpack.c.l.b16 %v497
  %v528 = vunpack.c.l.b16 %v498
  %v529 = vunpack.c.l.b16 %v499
  %v530 = vunpack.c.l.b16 %v500
  %v531 = vunpack.c.l.b16 %v501
  %v532 = vunpack.c.l.b16 %v502
  %v533 = vunpack.c.l.b16 %v503
  %v534 = vpack.c.b16 %v520, %v519
  %v535 = vpack.c.b16 %v522, %v521
  %v536 = vpack.c.b16 %v524, %v523
  %v537 = vpack.c.b16 %v526, %v525
  %v538 = vpack.c.b16 %v528, %v527
  %v539 = vpack.c.b16 %v530, %v529
  %v540 = vpack.c.b16 %v532, %v531
  %v541 = vpack.c.b16 %v533, %v533
  %550 = vmatprep.subr.bf16.mxu0 0
  %551 = vmatpush1.bf16.msra.mxu0 %v144
  %552 = vmatprep.subr.bf16.mxu0 0
  %553 = vmatpush1.bf16.msra.mxu0 %v143
  %554 = vmatprep.subr.bf16.mxu0 0
  %555 = vmatpush1.bf16.msra.mxu0 %v142
  %556 = vmatprep.subr.bf16.mxu0 0
  %557 = vmatpush1.bf16.msra.mxu0 %v141
  %558 = vmatprep.subr.bf16.mxu0 0
  %559 = vmatpush1.bf16.msra.mxu0 %v140
  %560 = vmatprep.subr.bf16.mxu0 0
  %561 = vmatpush1.bf16.msra.mxu0 %v139
  %562 = vmatprep.subr.bf16.mxu0 0
  %563 = vmatpush1.bf16.msra.mxu0 %v138
  %564 = vmatprep.subr.bf16.mxu0 0
  %565 = vmatpush1.bf16.msra.mxu0 %v137
  %566 = vmatprep.subr.bf16.mxu0 0
  %567 = vmatpush2.bf16.msra.mxu0 0
  %568 = vmatprep.subr.bf16.mxu0 0
  %569 = vmatpush2.bf16.msra.mxu0 0
  %570 = vmatprep.subr.bf16.mxu0 0
  %571 = vmatpush2.bf16.msra.mxu0 0
  %572 = vmatprep.subr.bf16.mxu0 0
  %573 = vmatpush2.bf16.msra.mxu0 0
  %574 = vmatprep.subr.bf16.mxu0 0
  %575 = vmatpush2.bf16.msra.mxu0 0
  %576 = vmatprep.subr.bf16.mxu0 0
  %577 = vmatpush2.bf16.msra.mxu0 0
  %578 = vmatprep.subr.bf16.mxu0 0
  %579 = vmatpush2.bf16.msra.mxu0 0
  %580 = vmatprep.subr.bf16.mxu0 0
  %581 = vmatpush2.bf16.msra.mxu0 0
  %582 = vmatprep.mubr.bf16.mxu0 0
  %583 = vmatmul.mubr.bf16.gmra.mxu0 %v534
  %v584 = vpop.f32.mrf.mxu0
  %v585 = vadd.f32 %v57, %v584
  %v586 = vpop.f32.mrf.mxu0
  %v587 = vpop.f32.mrf.mxu0
  %v588 = vadd.f32 %v57, %v587
  %v589 = vpop.f32.mrf.mxu0
  %590 = vmatprep.mubr.bf16.mxu0 0
  %591 = vmatmul.mubr.bf16.gmra.mxu0 %v535
  %v592 = vpop.f32.mrf.mxu0
  %v593 = vadd.f32 %v57, %v592
  %v594 = vpop.f32.mrf.mxu0
  %v595 = vpop.f32.mrf.mxu0
  %v596 = vadd.f32 %v57, %v595
  %v597 = vpop.f32.mrf.mxu0
  %598 = vmatprep.mubr.bf16.mxu0 0
  %599 = vmatmul.mubr.bf16.gmra.mxu0 %v536
  %v600 = vpop.f32.mrf.mxu0
  %v601 = vadd.f32 %v57, %v600
  %v602 = vpop.f32.mrf.mxu0
  %v603 = vpop.f32.mrf.mxu0
  %v604 = vadd.f32 %v57, %v603
  %v605 = vpop.f32.mrf.mxu0
  %606 = vmatprep.mubr.bf16.mxu0 0
  %607 = vmatmul.mubr.bf16.gmra.mxu0 %v537
  %v608 = vpop.f32.mrf.mxu0
  %v609 = vadd.f32 %v57, %v608
  %v610 = vpop.f32.mrf.mxu0
  %v611 = vpop.f32.mrf.mxu0
  %v612 = vadd.f32 %v57, %v611
  %v613 = vpop.f32.mrf.mxu0
  %614 = vmatprep.mubr.bf16.mxu0 0
  %615 = vmatmul.mubr.bf16.gmra.mxu0 %v538
  %v616 = vpop.f32.mrf.mxu0
  %v617 = vadd.f32 %v57, %v616
  %v618 = vpop.f32.mrf.mxu0
  %v619 = vpop.f32.mrf.mxu0
  %v620 = vadd.f32 %v57, %v619
  %v621 = vpop.f32.mrf.mxu0
  %622 = vmatprep.mubr.bf16.mxu0 0
  %623 = vmatmul.mubr.bf16.gmra.mxu0 %v539
  %v624 = vpop.f32.mrf.mxu0
  %v625 = vadd.f32 %v57, %v624
  %v626 = vpop.f32.mrf.mxu0
  %v627 = vpop.f32.mrf.mxu0
  %v628 = vadd.f32 %v57, %v627
  %v629 = vpop.f32.mrf.mxu0
  %630 = vmatprep.mubr.bf16.mxu0 0
  %631 = vmatmul.mubr.bf16.gmra.mxu0 %v540
  %v632 = vpop.f32.mrf.mxu0
  %v633 = vadd.f32 %v57, %v632
  %v634 = vpop.f32.mrf.mxu0
  %v635 = vpop.f32.mrf.mxu0
  %v636 = vadd.f32 %v57, %v635
  %v637 = vpop.f32.mrf.mxu0
  %638 = vmatprep.mubr.bf16.mxu0 0
  %639 = vmatmul.mubr.bf16.gmra.mxu0 %v541
  %v640 = vpop.f32.mrf.mxu0
  %v641 = vadd.f32 %v57, %v640
  %v642 = vpop.f32.mrf.mxu0
  %v643 = vpop.f32.mrf.mxu0
  %v644 = vpop.f32.mrf.mxu0
  %645 = vdwg.mxu0
  %vm646 = vcmp.gt.f32.partialorder %v585, 0.0
  %vm647 = vcmp.gt.f32.partialorder %v588, 0.0
  %vm648 = vcmp.gt.f32.partialorder %v593, 0.0
  %vm649 = vcmp.gt.f32.partialorder %v596, 0.0
  %vm650 = vcmp.gt.f32.partialorder %v601, 0.0
  %vm651 = vcmp.gt.f32.partialorder %v604, 0.0
  %vm652 = vcmp.gt.f32.partialorder %v609, 0.0
  %vm653 = vcmp.gt.f32.partialorder %v612, 0.0
  %vm654 = vcmp.gt.f32.partialorder %v617, 0.0
  %vm655 = vcmp.gt.f32.partialorder %v620, 0.0
  %vm656 = vcmp.gt.f32.partialorder %v625, 0.0
  %vm657 = vcmp.gt.f32.partialorder %v628, 0.0
  %vm658 = vcmp.gt.f32.partialorder %v633, 0.0
  %vm659 = vcmp.gt.f32.partialorder %v636, 0.0
  %vm660 = vcmp.gt.f32.partialorder %v641, 0.0
  %v661 = vmin.f32 %v585, 0.0
  %v662 = vmin.f32 %v588, 0.0
  %v663 = vmin.f32 %v593, 0.0
  %v664 = vmin.f32 %v596, 0.0
  %v665 = vmin.f32 %v601, 0.0
  %v666 = vmin.f32 %v604, 0.0
  %v667 = vmin.f32 %v609, 0.0
  %v668 = vmin.f32 %v612, 0.0
  %v669 = vmin.f32 %v617, 0.0
  %v670 = vmin.f32 %v620, 0.0
  %v671 = vmin.f32 %v625, 0.0
  %v672 = vmin.f32 %v628, 0.0
  %v673 = vmin.f32 %v633, 0.0
  %v674 = vmin.f32 %v636, 0.0
  %v675 = vmin.f32 %v641, 0.0
  %v676 = vmul.f32 %v661, 1.442695
  %v677 = vpow.pop %v676
  %v678 = vmul.f32 %v662, 1.442695
  %v679 = vpow.pop %v678
  %v680 = vmul.f32 %v663, 1.442695
  %v681 = vpow.pop %v680
  %v682 = vmul.f32 %v664, 1.442695
  %v683 = vpow.pop %v682
  %v684 = vmul.f32 %v665, 1.442695
  %v685 = vpow.pop %v684
  %v686 = vmul.f32 %v666, 1.442695
  %v687 = vpow.pop %v686
  %v688 = vmul.f32 %v667, 1.442695
  %v689 = vpow.pop %v688
  %v690 = vmul.f32 %v668, 1.442695
  %v691 = vpow.pop %v690
  %v692 = vmul.f32 %v669, 1.442695
  %v693 = vpow.pop %v692
  %v694 = vmul.f32 %v670, 1.442695
  %v695 = vpow.pop %v694
  %v696 = vmul.f32 %v671, 1.442695
  %v697 = vpow.pop %v696
  %v698 = vmul.f32 %v672, 1.442695
  %v699 = vpow.pop %v698
  %v700 = vmul.f32 %v673, 1.442695
  %v701 = vpow.pop %v700
  %v702 = vmul.f32 %v674, 1.442695
  %v703 = vpow.pop %v702
  %v704 = vmul.f32 %v675, 1.442695
  %v705 = vpow.pop %v704
  %v706 = vsub.f32 %v677, 1.0
  %v707 = vsub.f32 %v679, 1.0
  %v708 = vsub.f32 %v681, 1.0
  %v709 = vsub.f32 %v683, 1.0
  %v710 = vsub.f32 %v685, 1.0
  %v711 = vsub.f32 %v687, 1.0
  %v712 = vsub.f32 %v689, 1.0
  %v713 = vsub.f32 %v691, 1.0
  %v714 = vsub.f32 %v693, 1.0
  %v715 = vsub.f32 %v695, 1.0
  %v716 = vsub.f32 %v697, 1.0
  %v717 = vsub.f32 %v699, 1.0
  %v718 = vsub.f32 %v701, 1.0
  %v719 = vsub.f32 %v703, 1.0
  %v720 = vsub.f32 %v705, 1.0
  %v721 = vsel %vm646, %v585, %v706
  %v722 = vsel %vm647, %v588, %v707
  %v723 = vsel %vm648, %v593, %v708
  %v724 = vsel %vm649, %v596, %v709
  %v725 = vsel %vm650, %v601, %v710
  %v726 = vsel %vm651, %v604, %v711
  %v727 = vsel %vm652, %v609, %v712
  %v728 = vsel %vm653, %v612, %v713
  %v729 = vsel %vm654, %v617, %v714
  %v730 = vsel %vm655, %v620, %v715
  %v731 = vsel %vm656, %v625, %v716
  %v732 = vsel %vm657, %v628, %v717
  %v733 = vsel %vm658, %v633, %v718
  %v734 = vsel %vm659, %v636, %v719
  %v735 = vsel %vm660, %v641, %v720
  %v736 = vadd.f32 %v721, %v722
  %v737 = vadd.f32 %v736, %v723
  %v738 = vadd.f32 %v737, %v724
  %v739 = vadd.f32 %v738, %v725
  %v740 = vadd.f32 %v739, %v726
  %v741 = vadd.f32 %v740, %v727
  %v742 = vadd.f32 %v741, %v728
  %v743 = vadd.f32 %v742, %v729
  %v744 = vadd.f32 %v743, %v730
  %v745 = vadd.f32 %v744, %v731
  %v746 = vadd.f32 %v745, %v732
  %v747 = vadd.f32 %v746, %v733
  %v748 = vadd.f32 %v747, %v734
  %v749 = vadd.f32 %v748, %v735
  %v750 = vrot.slane %v749, 4
  %v751 = vadd.f32 %v749, %v750
  %v752 = vrot.slane %v751, 2
  %v753 = vadd.f32 %v751, %v752
  %v754 = vrot.slane %v753, 1
  %v755 = vadd.f32 %v753, %v754
  %v756 = vmul.f32 %v755, %v359
  %v757 = vsub.f32 %v721, %v756
  %v758 = vsub.f32 %v722, %v756
  %v759 = vsub.f32 %v723, %v756
  %v760 = vsub.f32 %v724, %v756
  %v761 = vsub.f32 %v725, %v756
  %v762 = vsub.f32 %v726, %v756
  %v763 = vsub.f32 %v727, %v756
  %v764 = vsub.f32 %v728, %v756
  %v765 = vsub.f32 %v729, %v756
  %v766 = vsub.f32 %v730, %v756
  %v767 = vsub.f32 %v731, %v756
  %v768 = vsub.f32 %v732, %v756
  %v769 = vsub.f32 %v733, %v756
  %v770 = vsub.f32 %v734, %v756
  %v771 = vsub.f32 %v735, %v756
  %v772 = vmul.f32 %v757, %v757
  %v773 = vmul.f32 %v758, %v758
  %v774 = vmul.f32 %v759, %v759
  %v775 = vmul.f32 %v760, %v760
  %v776 = vmul.f32 %v761, %v761
  %v777 = vmul.f32 %v762, %v762
  %v778 = vmul.f32 %v763, %v763
  %v779 = vmul.f32 %v764, %v764
  %v780 = vmul.f32 %v765, %v765
  %v781 = vmul.f32 %v766, %v766
  %v782 = vmul.f32 %v767, %v767
  %v783 = vmul.f32 %v768, %v768
  %v784 = vmul.f32 %v769, %v769
  %v785 = vmul.f32 %v770, %v770
  %v786 = vmul.f32 %v771, %v771
  %v787 = vadd.f32 %v772, %v773
  %v788 = vadd.f32 %v787, %v774
  %v789 = vadd.f32 %v788, %v775
  %v790 = vadd.f32 %v789, %v776
  %v791 = vadd.f32 %v790, %v777
  %v792 = vadd.f32 %v791, %v778
  %v793 = vadd.f32 %v792, %v779
  %v794 = vadd.f32 %v793, %v780
  %v795 = vadd.f32 %v794, %v781
  %v796 = vadd.f32 %v795, %v782
  %v797 = vadd.f32 %v796, %v783
  %v798 = vadd.f32 %v797, %v784
  %v799 = vadd.f32 %v798, %v785
  %v800 = vadd.f32 %v799, %v786
  %v801 = vrot.slane %v800, 4
  %v802 = vadd.f32 %v800, %v801
  %v803 = vrot.slane %v802, 2
  %v804 = vadd.f32 %v802, %v803
  %v805 = vrot.slane %v804, 1
  %v806 = vadd.f32 %v804, %v805
  %v807 = vmul.f32 %v806, %v359
  %v808 = vadd.f32 %v807, 1e-08
  %v809 = vrsqrt.pop %v808
  %v810 = vmul.f32 %v757, %v809
  %v811 = vmul.f32 %v758, %v809
  %v812 = vmul.f32 %v759, %v809
  %v813 = vmul.f32 %v760, %v809
  %v814 = vmul.f32 %v761, %v809
  %v815 = vmul.f32 %v762, %v809
  %v816 = vmul.f32 %v763, %v809
  %v817 = vmul.f32 %v764, %v809
  %v818 = vmul.f32 %v765, %v809
  %v819 = vmul.f32 %v766, %v809
  %v820 = vmul.f32 %v767, %v809
  %v821 = vmul.f32 %v768, %v809
  %v822 = vmul.f32 %v769, %v809
  %v823 = vmul.f32 %v770, %v809
  %v824 = vmul.f32 %v771, %v809
  %v825 = vld [vmem:[%s3] sm:$0x1]
  %v827 = vlaneseq
  %v828 = vshrl.u32 %v827, 7
  %v829 = vsub.s32 0, %v828
  %v830 = vrot.slane %v825, %v829
  %v832 = vmul.f32 %v810, %v830
  %v833 = vmul.f32 %v811, %v830
  %v834 = vmul.f32 %v812, %v830
  %v835 = vmul.f32 %v813, %v830
  %v836 = vmul.f32 %v814, %v830
  %v837 = vmul.f32 %v815, %v830
  %v838 = vmul.f32 %v816, %v830
  %v839 = vmul.f32 %v817, %v830
  %v840 = vmul.f32 %v818, %v830
  %v841 = vmul.f32 %v819, %v830
  %v842 = vmul.f32 %v820, %v830
  %v843 = vmul.f32 %v821, %v830
  %v844 = vmul.f32 %v822, %v830
  %v845 = vmul.f32 %v823, %v830
  %v846 = vmul.f32 %v824, %v830
  %v847 = vld [vmem:[%s4] sm:$0x1]
  %v849 = vlaneseq
  %v850 = vshrl.u32 %v849, 7
  %v851 = vsub.s32 0, %v850
  %v852 = vrot.slane %v847, %v851
  %v854 = vadd.f32 %v832, %v852
  %v855 = vadd.f32 %v833, %v852
  %v856 = vadd.f32 %v834, %v852
  %v857 = vadd.f32 %v835, %v852
  %v858 = vadd.f32 %v836, %v852
  %v859 = vadd.f32 %v837, %v852
  %v860 = vadd.f32 %v838, %v852
  %v861 = vadd.f32 %v839, %v852
  %v862 = vadd.f32 %v840, %v852
  %v863 = vadd.f32 %v841, %v852
  %v864 = vadd.f32 %v842, %v852
  %v865 = vadd.f32 %v843, %v852
  %v866 = vadd.f32 %v844, %v852
  %v867 = vadd.f32 %v845, %v852
  %v868 = vadd.f32 %v846, %v852
  %s869 = scalar_lea.vmem %s5, 120
  %870 = vst [vmem:[%s869] sm:$0xff] %v854
  %871 = vst [vmem:[%s869 + $0x8] sm:$0xff] %v855
  %872 = vst [vmem:[%s869 + $0x10] sm:$0xff] %v856
  %873 = vst [vmem:[%s869 + $0x18] sm:$0xff] %v857
  %874 = vst [vmem:[%s869 + $0x20] sm:$0xff] %v858
  %875 = vst [vmem:[%s869 + $0x28] sm:$0xff] %v859
  %876 = vst [vmem:[%s869 + $0x30] sm:$0xff] %v860
  %877 = vst [vmem:[%s869 + $0x38] sm:$0xff] %v861
  %878 = vst [vmem:[%s869 + $0x40] sm:$0xff] %v862
  %879 = vst [vmem:[%s869 + $0x48] sm:$0xff] %v863
  %880 = vst [vmem:[%s869 + $0x50] sm:$0xff] %v864
  %881 = vst [vmem:[%s869 + $0x58] sm:$0xff] %v865
  %882 = vst [vmem:[%s869 + $0x60] sm:$0xff] %v866
  %883 = vst [vmem:[%s869 + $0x68] sm:$0xff] %v867
  %884 = vst [vmem:[%s869 + $0x70] sm:$0xff] %v868
  // Predicated region
  $region22: #{_lambda_.23} parent=0 // pred_check
    _
  $region23: #{_lambda_.23} parent=0 // pred_check_branch
    %886 = sbr.rel (0) target = $region25
  $region24: #{_lambda_.23} parent=0 // pred_region
    _
  $region25: #{_lambda_.23} parent=0 // pred_fallthru
    _
  // Predicated region
  $region26: #{_lambda_.23} parent=0 // pred_check
    _
  $region27: #{_lambda_.23} parent=0 // pred_check_branch
    %888 = sbr.rel (0) target = $region29
  $region28: #{_lambda_.23} parent=0 // pred_region
    _
  $region29: #{_lambda_.23} parent=0 // pred_fallthru
    _

// kernel: _lambda_.26
$region0: #{_lambda_.26}
  #allocation0 [shape = 'u32[]', space=smem, size = 0x4, offset = 0x4, fixed_abs, tag = 'smem constant byte address 0x4 - core index']
  #allocation1 [shape = 'u32[144,128]{1,0:T(1,128)}', space=vmem, size = 0x12000, scoped, tag = 'internal scratch']
  %s0 = inlined_call_operand.vmem [shape: bf16[2,32,128], index: 0, kind: input, shape index: {}]
  %s1 = inlined_call_operand.vmem [shape: bf16[128,128], index: 1, kind: input, shape index: {}]
  %s2 = inlined_call_operand.vmem [shape: f32[1,128], index: 2, kind: input, shape index: {}]
  %s3 = inlined_call_operand.vmem [shape: f32[1,128], index: 3, kind: input, shape index: {}]
  %s4 = inlined_call_operand.vmem [shape: f32[1,128], index: 4, kind: input, shape index: {}]
  %s5 = inlined_call_operand.vmem [shape: f32[2,32,128], index: 5, kind: output, shape index: {}]
  %s6 = sld [smem:[#allocation0]]
  $region30: #{_lambda_.26} parent=0
    _
  %s8 = ssub.s32 1, %s6
  %s9 = scalar_select 0, %s8, %s6
  // Predicated region
  $region2: #{_lambda_.26} parent=0 // pred_check
    _
  $region3: #{_lambda_.26} parent=0 // pred_check_branch
    %11 = sbr.rel (0) target = $region5
  $region4: #{_lambda_.26} parent=0 // pred_region
    _
  $region5: #{_lambda_.26} parent=0 // pred_fallthru
    _
  // Predicated region
  $region6: #{_lambda_.26} parent=0 // pred_check
    _
  $region7: #{_lambda_.26} parent=0 // pred_check_branch
    %13 = sbr.rel (0) target = $region9
  $region8: #{_lambda_.26} parent=0 // pred_region
    _
  $region9: #{_lambda_.26} parent=0 // pred_fallthru
    _
  // Predicated region
  $region10: #{_lambda_.26} parent=0 // pred_check
    _
  $region11: #{_lambda_.26} parent=0 // pred_check_branch
    %15 = sbr.rel (0) target = $region13
  $region12: #{_lambda_.26} parent=0 // pred_region
    _
  $region13: #{_lambda_.26} parent=0 // pred_fallthru
    _
  // Predicated region
  $region14: #{_lambda_.26} parent=0 // pred_check
    _
  $region15: #{_lambda_.26} parent=0 // pred_check_branch
    %17 = sbr.rel (0) target = $region17
  $region16: #{_lambda_.26} parent=0 // pred_region
    _
  $region17: #{_lambda_.26} parent=0 // pred_fallthru
    _
  // Predicated region
  $region18: #{_lambda_.26} parent=0 // pred_check
    _
  $region19: #{_lambda_.26} parent=0 // pred_check_branch
    %19 = sbr.rel (0) target = $region21
  $region20: #{_lambda_.26} parent=0 // pred_region
    _
  $region21: #{_lambda_.26} parent=0 // pred_fallthru
    _
  %v21 = vld [vmem:[%s1] sm:$0xf]
  %v22 = vld [vmem:[%s1 + $0x4] sm:$0xf]
  %v23 = vld [vmem:[%s1 + $0x8] sm:$0xf]
  %v24 = vld [vmem:[%s1 + $0xc] sm:$0xf]
  %v25 = vld [vmem:[%s1 + $0x10] sm:$0xf]
  %v26 = vld [vmem:[%s1 + $0x14] sm:$0xf]
  %v27 = vld [vmem:[%s1 + $0x18] sm:$0xf]
  %v28 = vld [vmem:[%s1 + $0x1c] sm:$0xf]
  %v29 = vld [vmem:[%s1 + $0x20] sm:$0xf]
  %v30 = vld [vmem:[%s1 + $0x24] sm:$0xf]
  %v31 = vld [vmem:[%s1 + $0x28] sm:$0xf]
  %v32 = vld [vmem:[%s1 + $0x2c] sm:$0xf]
  %v33 = vld [vmem:[%s1 + $0x30] sm:$0xf]
  %v34 = vld [vmem:[%s1 + $0x34] sm:$0xf]
  %v35 = vld [vmem:[%s1 + $0x38] sm:$0xf]
  %v36 = vld [vmem:[%s1 + $0x3c] sm:$0xf]
  %v37 = vld [vmem:[%s2] sm:$0x1]
  %v38 = vld [vmem:[%s0] sm:$0xf]
  %v39 = vld [vmem:[%s0 + $0x4] sm:$0xf]
  %v40 = vld [vmem:[%s0 + $0x8] sm:$0xf]
  %v41 = vld [vmem:[%s0 + $0xc] sm:$0xf]
  %v43 = vlaneseq
  %v44 = vshrl.u32 %v43, 7
  %v45 = vsub.s32 0, %v44
  %v46 = vrot.slane %v37, %v45
  %v52 = vunpack.c.l.b16 %v38
  %v53 = vunpack.c.l.b16 %v39
  %v54 = vunpack.c.l.b16 %v40
  %v55 = vunpack.c.l.b16 %v41
  %v56 = vpack.c.b16 %v53, %v52
  %v57 = vpack.c.b16 %v55, %v54
  %v76 = vunpack.c.l.b16 %v21
  %v77 = vunpack.c.l.b16 %v22
  %v78 = vunpack.c.l.b16 %v23
  %v79 = vunpack.c.l.b16 %v24
  %v80 = vunpack.c.l.b16 %v25
  %v81 = vunpack.c.l.b16 %v26
  %v82 = vunpack.c.l.b16 %v27
  %v83 = vunpack.c.l.b16 %v28
  %v84 = vunpack.c.l.b16 %v29
  %v85 = vunpack.c.l.b16 %v30
  %v86 = vunpack.c.l.b16 %v31
  %v87 = vunpack.c.l.b16 %v32
  %v88 = vunpack.c.l.b16 %v33
  %v89 = vunpack.c.l.b16 %v34
  %v90 = vunpack.c.l.b16 %v35
  %v91 = vunpack.c.l.b16 %v36
  %v92 = vpack.c.b16 %v77, %v76
  %v93 = vpack.c.b16 %v79, %v78
  %v94 = vpack.c.b16 %v81, %v80
  %v95 = vpack.c.b16 %v83, %v82
  %v96 = vpack.c.b16 %v85, %v84
  %v97 = vpack.c.b16 %v87, %v86
  %v98 = vpack.c.b16 %v89, %v88
  %v99 = vpack.c.b16 %v91, %v90
  %108 = vmatprep.subr.bf16.mxu0 0
  %109 = vmatpush1.bf16.msra.mxu0 %v99
  %110 = vmatprep.subr.bf16.mxu0 0
  %111 = vmatpush1.bf16.msra.mxu0 %v98
  %112 = vmatprep.subr.bf16.mxu0 0
  %113 = vmatpush1.bf16.msra.mxu0 %v97
  %114 = vmatprep.subr.bf16.mxu0 0
  %115 = vmatpush1.bf16.msra.mxu0 %v96
  %116 = vmatprep.subr.bf16.mxu0 0
  %117 = vmatpush1.bf16.msra.mxu0 %v95
  %118 = vmatprep.subr.bf16.mxu0 0
  %119 = vmatpush1.bf16.msra.mxu0 %v94
  %120 = vmatprep.subr.bf16.mxu0 0
  %121 = vmatpush1.bf16.msra.mxu0 %v93
  %122 = vmatprep.subr.bf16.mxu0 0
  %123 = vmatpush1.bf16.msra.mxu0 %v92
  %124 = vmatprep.subr.bf16.mxu0 0
  %125 = vmatpush2.bf16.msra.mxu0 0
  %126 = vmatprep.subr.bf16.mxu0 0
  %127 = vmatpush2.bf16.msra.mxu0 0
  %128 = vmatprep.subr.bf16.mxu0 0
  %129 = vmatpush2.bf16.msra.mxu0 0
  %130 = vmatprep.subr.bf16.mxu0 0
  %131 = vmatpush2.bf16.msra.mxu0 0
  %132 = vmatprep.subr.bf16.mxu0 0
  %133 = vmatpush2.bf16.msra.mxu0 0
  %134 = vmatprep.subr.bf16.mxu0 0
  %135 = vmatpush2.bf16.msra.mxu0 0
  %136 = vmatprep.subr.bf16.mxu0 0
  %137 = vmatpush2.bf16.msra.mxu0 0
  %138 = vmatprep.subr.bf16.mxu0 0
  %139 = vmatpush2.bf16.msra.mxu0 0
  %140 = vmatprep.mubr.bf16.mxu0 0
  %141 = vmatmul.mubr.bf16.gmra.mxu0 %v56
  %v142 = vpop.f32.mrf.mxu0
  %v143 = vadd.f32 %v46, %v142
  %v144 = vpop.f32.mrf.mxu0
  %v145 = vpop.f32.mrf.mxu0
  %v146 = vadd.f32 %v46, %v145
  %v147 = vpop.f32.mrf.mxu0
  %148 = vmatprep.mubr.bf16.mxu0 0
  %149 = vmatmul.mubr.bf16.gmra.mxu0 %v57
  %v150 = vpop.f32.mrf.mxu0
  %v151 = vadd.f32 %v46, %v150
  %v152 = vpop.f32.mrf.mxu0
  %v153 = vpop.f32.mrf.mxu0
  %v154 = vadd.f32 %v46, %v153
  %v155 = vpop.f32.mrf.mxu0
  %156 = vdwg.mxu0
  %vm157 = vcmp.gt.f32.partialorder %v143, 0.0
  %vm158 = vcmp.gt.f32.partialorder %v146, 0.0
  %vm159 = vcmp.gt.f32.partialorder %v151, 0.0
  %vm160 = vcmp.gt.f32.partialorder %v154, 0.0
  %v161 = vmin.f32 %v143, 0.0
  %v162 = vmin.f32 %v146, 0.0
  %v163 = vmin.f32 %v151, 0.0
  %v164 = vmin.f32 %v154, 0.0
  %v165 = vmul.f32 %v161, 1.442695
  %v166 = vpow.pop %v165
  %v167 = vmul.f32 %v162, 1.442695
  %v168 = vpow.pop %v167
  %v169 = vmul.f32 %v163, 1.442695
  %v170 = vpow.pop %v169
  %v171 = vmul.f32 %v164, 1.442695
  %v172 = vpow.pop %v171
  %v173 = vsub.f32 %v166, 1.0
  %v174 = vsub.f32 %v168, 1.0
  %v175 = vsub.f32 %v170, 1.0
  %v176 = vsub.f32 %v172, 1.0
  %v177 = vsel %vm157, %v143, %v173
  %v178 = vsel %vm158, %v146, %v174
  %v179 = vsel %vm159, %v151, %v175
  %v180 = vsel %vm160, %v154, %v176
  %v181 = vadd.f32 %v177, %v178
  %v182 = vadd.f32 %v181, %v179
  %v183 = vadd.f32 %v182, %v180
  %v184 = vrot.slane %v183, 4
  %v185 = vadd.f32 %v183, %v184
  %v186 = vrot.slane %v185, 2
  %v187 = vadd.f32 %v185, %v186
  %v188 = vrot.slane %v187, 1
  %v189 = vadd.f32 %v187, %v188
  %v190 = vrcp.pop 32.0
  %v191 = vmul.f32 %v189, %v190
  %v192 = vsub.f32 %v177, %v191
  %v193 = vsub.f32 %v178, %v191
  %v194 = vsub.f32 %v179, %v191
  %v195 = vsub.f32 %v180, %v191
  %v196 = vmul.f32 %v192, %v192
  %v197 = vmul.f32 %v193, %v193
  %v198 = vmul.f32 %v194, %v194
  %v199 = vmul.f32 %v195, %v195
  %v200 = vadd.f32 %v196, %v197
  %v201 = vadd.f32 %v200, %v198
  %v202 = vadd.f32 %v201, %v199
  %v203 = vrot.slane %v202, 4
  %v204 = vadd.f32 %v202, %v203
  %v205 = vrot.slane %v204, 2
  %v206 = vadd.f32 %v204, %v205
  %v207 = vrot.slane %v206, 1
  %v208 = vadd.f32 %v206, %v207
  %v209 = vmul.f32 %v208, %v190
  %v210 = vadd.f32 %v209, 1e-08
  %v211 = vrsqrt.pop %v210
  %v212 = vmul.f32 %v192, %v211
  %v213 = vmul.f32 %v193, %v211
  %v214 = vmul.f32 %v194, %v211
  %v215 = vmul.f32 %v195, %v211
  %v216 = vld [vmem:[%s3] sm:$0x1]
  %v218 = vlaneseq
  %v219 = vshrl.u32 %v218, 7
  %v220 = vsub.s32 0, %v219
  %v221 = vrot.slane %v216, %v220
  %v223 = vmul.f32 %v212, %v221
  %v224 = vmul.f32 %v213, %v221
  %v225 = vmul.f32 %v214, %v221
  %v226 = vmul.f32 %v215, %v221
  %v227 = vld [vmem:[%s4] sm:$0x1]
  %v229 = vlaneseq
  %v230 = vshrl.u32 %v229, 7
  %v231 = vsub.s32 0, %v230
  %v232 = vrot.slane %v227, %v231
  %v234 = vadd.f32 %v223, %v232
  %v235 = vadd.f32 %v224, %v232
  %v236 = vadd.f32 %v225, %v232
  %v237 = vadd.f32 %v226, %v232
  %238 = vst [vmem:[%s5] sm:$0xff] %v234
  %239 = vst [vmem:[%s5 + $0x8] sm:$0xff] %v235
  %240 = vst [vmem:[%s5 + $0x10] sm:$0xff] %v236
  %241 = vst [vmem:[%s5 + $0x18] sm:$0xff] %v237
  %s242 = scalar_lea.vmem %s0, 16
  %v243 = vld [vmem:[%s242] sm:$0xf]
  %v244 = vld [vmem:[%s242 + $0x4] sm:$0xf]
  %v245 = vld [vmem:[%s242 + $0x8] sm:$0xf]
  %v246 = vld [vmem:[%s242 + $0xc] sm:$0xf]
  %v251 = vunpack.c.l.b16 %v243
  %v252 = vunpack.c.l.b16 %v244
  %v253 = vunpack.c.l.b16 %v245
  %v254 = vunpack.c.l.b16 %v246
  %v255 = vpack.c.b16 %v252, %v251
  %v256 = vpack.c.b16 %v254, %v253
  %259 = vmatprep.subr.bf16.mxu0 0
  %260 = vmatpush1.bf16.msra.mxu0 %v99
  %261 = vmatprep.subr.bf16.mxu0 0
  %262 = vmatpush1.bf16.msra.mxu0 %v98
  %263 = vmatprep.subr.bf16.mxu0 0
  %264 = vmatpush1.bf16.msra.mxu0 %v97
  %265 = vmatprep.subr.bf16.mxu0 0
  %266 = vmatpush1.bf16.msra.mxu0 %v96
  %267 = vmatprep.subr.bf16.mxu0 0
  %268 = vmatpush1.bf16.msra.mxu0 %v95
  %269 = vmatprep.subr.bf16.mxu0 0
  %270 = vmatpush1.bf16.msra.mxu0 %v94
  %271 = vmatprep.subr.bf16.mxu0 0
  %272 = vmatpush1.bf16.msra.mxu0 %v93
  %273 = vmatprep.subr.bf16.mxu0 0
  %274 = vmatpush1.bf16.msra.mxu0 %v92
  %275 = vmatprep.subr.bf16.mxu0 0
  %276 = vmatpush2.bf16.msra.mxu0 0
  %277 = vmatprep.subr.bf16.mxu0 0
  %278 = vmatpush2.bf16.msra.mxu0 0
  %279 = vmatprep.subr.bf16.mxu0 0
  %280 = vmatpush2.bf16.msra.mxu0 0
  %281 = vmatprep.subr.bf16.mxu0 0
  %282 = vmatpush2.bf16.msra.mxu0 0
  %283 = vmatprep.subr.bf16.mxu0 0
  %284 = vmatpush2.bf16.msra.mxu0 0
  %285 = vmatprep.subr.bf16.mxu0 0
  %286 = vmatpush2.bf16.msra.mxu0 0
  %287 = vmatprep.subr.bf16.mxu0 0
  %288 = vmatpush2.bf16.msra.mxu0 0
  %289 = vmatprep.subr.bf16.mxu0 0
  %290 = vmatpush2.bf16.msra.mxu0 0
  %291 = vmatprep.mubr.bf16.mxu0 0
  %292 = vmatmul.mubr.bf16.gmra.mxu0 %v255
  %v293 = vpop.f32.mrf.mxu0
  %v294 = vadd.f32 %v46, %v293
  %v295 = vpop.f32.mrf.mxu0
  %v296 = vpop.f32.mrf.mxu0
  %v297 = vadd.f32 %v46, %v296
  %v298 = vpop.f32.mrf.mxu0
  %299 = vmatprep.mubr.bf16.mxu0 0
  %300 = vmatmul.mubr.bf16.gmra.mxu0 %v256
  %v301 = vpop.f32.mrf.mxu0
  %v302 = vadd.f32 %v46, %v301
  %v303 = vpop.f32.mrf.mxu0
  %v304 = vpop.f32.mrf.mxu0
  %v305 = vadd.f32 %v46, %v304
  %v306 = vpop.f32.mrf.mxu0
  %307 = vdwg.mxu0
  %vm308 = vcmp.gt.f32.partialorder %v294, 0.0
  %vm309 = vcmp.gt.f32.partialorder %v297, 0.0
  %vm310 = vcmp.gt.f32.partialorder %v302, 0.0
  %vm311 = vcmp.gt.f32.partialorder %v305, 0.0
  %v312 = vmin.f32 %v294, 0.0
  %v313 = vmin.f32 %v297, 0.0
  %v314 = vmin.f32 %v302, 0.0
  %v315 = vmin.f32 %v305, 0.0
  %v316 = vmul.f32 %v312, 1.442695
  %v317 = vpow.pop %v316
  %v318 = vmul.f32 %v313, 1.442695
  %v319 = vpow.pop %v318
  %v320 = vmul.f32 %v314, 1.442695
  %v321 = vpow.pop %v320
  %v322 = vmul.f32 %v315, 1.442695
  %v323 = vpow.pop %v322
  %v324 = vsub.f32 %v317, 1.0
  %v325 = vsub.f32 %v319, 1.0
  %v326 = vsub.f32 %v321, 1.0
  %v327 = vsub.f32 %v323, 1.0
  %v328 = vsel %vm308, %v294, %v324
  %v329 = vsel %vm309, %v297, %v325
  %v330 = vsel %vm310, %v302, %v326
  %v331 = vsel %vm311, %v305, %v327
  %v332 = vadd.f32 %v328, %v329
  %v333 = vadd.f32 %v332, %v330
  %v334 = vadd.f32 %v333, %v331
  %v335 = vrot.slane %v334, 4
  %v336 = vadd.f32 %v334, %v335
  %v337 = vrot.slane %v336, 2
  %v338 = vadd.f32 %v336, %v337
  %v339 = vrot.slane %v338, 1
  %v340 = vadd.f32 %v338, %v339
  %v341 = vmul.f32 %v340, %v190
  %v342 = vsub.f32 %v328, %v341
  %v343 = vsub.f32 %v329, %v341
  %v344 = vsub.f32 %v330, %v341
  %v345 = vsub.f32 %v331, %v341
  %v346 = vmul.f32 %v342, %v342
  %v347 = vmul.f32 %v343, %v343
  %v348 = vmul.f32 %v344, %v344
  %v349 = vmul.f32 %v345, %v345
  %v350 = vadd.f32 %v346, %v347
  %v351 = vadd.f32 %v350, %v348
  %v352 = vadd.f32 %v351, %v349
  %v353 = vrot.slane %v352, 4
  %v354 = vadd.f32 %v352, %v353
  %v355 = vrot.slane %v354, 2
  %v356 = vadd.f32 %v354, %v355
  %v357 = vrot.slane %v356, 1
  %v358 = vadd.f32 %v356, %v357
  %v359 = vmul.f32 %v358, %v190
  %v360 = vadd.f32 %v359, 1e-08
  %v361 = vrsqrt.pop %v360
  %v362 = vmul.f32 %v342, %v361
  %v363 = vmul.f32 %v343, %v361
  %v364 = vmul.f32 %v344, %v361
  %v365 = vmul.f32 %v345, %v361
  %v366 = vld [vmem:[%s3] sm:$0x1]
  %v368 = vlaneseq
  %v369 = vshrl.u32 %v368, 7
  %v370 = vsub.s32 0, %v369
  %v371 = vrot.slane %v366, %v370
  %v373 = vmul.f32 %v362, %v371
  %v374 = vmul.f32 %v363, %v371
  %v375 = vmul.f32 %v364, %v371
  %v376 = vmul.f32 %v365, %v371
  %v377 = vld [vmem:[%s4] sm:$0x1]
  %v379 = vlaneseq
  %v380 = vshrl.u32 %v379, 7
  %v381 = vsub.s32 0, %v380
  %v382 = vrot.slane %v377, %v381
  %v384 = vadd.f32 %v373, %v382
  %v385 = vadd.f32 %v374, %v382
  %v386 = vadd.f32 %v375, %v382
  %v387 = vadd.f32 %v376, %v382
  %s388 = scalar_lea.vmem %s5, 32
  %389 = vst [vmem:[%s388] sm:$0xff] %v384
  %390 = vst [vmem:[%s388 + $0x8] sm:$0xff] %v385
  %391 = vst [vmem:[%s388 + $0x10] sm:$0xff] %v386
  %392 = vst [vmem:[%s388 + $0x18] sm:$0xff] %v387
  // Predicated region
  $region22: #{_lambda_.26} parent=0 // pred_check
    _
  $region23: #{_lambda_.26} parent=0 // pred_check_branch
    %394 = sbr.rel (0) target = $region25
  $region24: #{_lambda_.26} parent=0 // pred_region
    _
  $region25: #{_lambda_.26} parent=0 // pred_fallthru
    _
  // Predicated region
  $region26: #{_lambda_.26} parent=0 // pred_check
    _
  $region27: #{_lambda_.26} parent=0 // pred_check_branch
    %396 = sbr.rel (0) target = $region29
  $region28: #{_lambda_.26} parent=0 // pred_region
    _
  $region29: #{_lambda_.26} parent=0 // pred_fallthru
    _

// kernel: _lambda_.27
$region0: #{_lambda_.27}
  #allocation0 [shape = 'u32[]', space=smem, size = 0x4, offset = 0x4, fixed_abs, tag = 'smem constant byte address 0x4 - core index']
  #allocation1 [shape = 'u32[144,128]{1,0:T(1,128)}', space=vmem, size = 0x12000, scoped, tag = 'internal scratch']
  %s0 = inlined_call_operand.vmem [shape: bf16[2,120,256], index: 0, kind: input, shape index: {}]
  %s1 = inlined_call_operand.vmem [shape: bf16[256,128], index: 1, kind: input, shape index: {}]
  %s2 = inlined_call_operand.vmem [shape: f32[1,128], index: 2, kind: input, shape index: {}]
  %s3 = inlined_call_operand.vmem [shape: f32[1,128], index: 3, kind: input, shape index: {}]
  %s4 = inlined_call_operand.vmem [shape: f32[1,128], index: 4, kind: input, shape index: {}]
  %s5 = inlined_call_operand.vmem [shape: f32[2,120,128], index: 5, kind: output, shape index: {}]
  %s6 = sld [smem:[#allocation0]]
  $region30: #{_lambda_.27} parent=0
    _
  %s8 = ssub.s32 1, %s6
  %s9 = scalar_select 0, %s8, %s6
  // Predicated region
  $region2: #{_lambda_.27} parent=0 // pred_check
    _
  $region3: #{_lambda_.27} parent=0 // pred_check_branch
    %11 = sbr.rel (0) target = $region5
  $region4: #{_lambda_.27} parent=0 // pred_region
    _
  $region5: #{_lambda_.27} parent=0 // pred_fallthru
    _
  // Predicated region
  $region6: #{_lambda_.27} parent=0 // pred_check
    _
  $region7: #{_lambda_.27} parent=0 // pred_check_branch
    %13 = sbr.rel (0) target = $region9
  $region8: #{_lambda_.27} parent=0 // pred_region
    _
  $region9: #{_lambda_.27} parent=0 // pred_fallthru
    _
  // Predicated region
  $region10: #{_lambda_.27} parent=0 // pred_check
    _
  $region11: #{_lambda_.27} parent=0 // pred_check_branch
    %15 = sbr.rel (0) target = $region13
  $region12: #{_lambda_.27} parent=0 // pred_region
    _
  $region13: #{_lambda_.27} parent=0 // pred_fallthru
    _
  // Predicated region
  $region14: #{_lambda_.27} parent=0 // pred_check
    _
  $region15: #{_lambda_.27} parent=0 // pred_check_branch
    %17 = sbr.rel (0) target = $region17
  $region16: #{_lambda_.27} parent=0 // pred_region
    _
  $region17: #{_lambda_.27} parent=0 // pred_fallthru
    _
  // Predicated region
  $region18: #{_lambda_.27} parent=0 // pred_check
    _
  $region19: #{_lambda_.27} parent=0 // pred_check_branch
    %19 = sbr.rel (0) target = $region21
  $region20: #{_lambda_.27} parent=0 // pred_region
    _
  $region21: #{_lambda_.27} parent=0 // pred_fallthru
    _
  %v21 = vld [vmem:[%s1] sm:$0xf]
  %v22 = vld [vmem:[%s1 + $0x4] sm:$0xf]
  %v23 = vld [vmem:[%s1 + $0x8] sm:$0xf]
  %v24 = vld [vmem:[%s1 + $0xc] sm:$0xf]
  %v25 = vld [vmem:[%s1 + $0x10] sm:$0xf]
  %v26 = vld [vmem:[%s1 + $0x14] sm:$0xf]
  %v27 = vld [vmem:[%s1 + $0x18] sm:$0xf]
  %v28 = vld [vmem:[%s1 + $0x1c] sm:$0xf]
  %v29 = vld [vmem:[%s1 + $0x20] sm:$0xf]
  %v30 = vld [vmem:[%s1 + $0x24] sm:$0xf]
  %v31 = vld [vmem:[%s1 + $0x28] sm:$0xf]
  %v32 = vld [vmem:[%s1 + $0x2c] sm:$0xf]
  %v33 = vld [vmem:[%s1 + $0x30] sm:$0xf]
  %v34 = vld [vmem:[%s1 + $0x34] sm:$0xf]
  %v35 = vld [vmem:[%s1 + $0x38] sm:$0xf]
  %v36 = vld [vmem:[%s1 + $0x3c] sm:$0xf]
  %v37 = vld [vmem:[%s1 + $0x40] sm:$0xf]
  %v38 = vld [vmem:[%s1 + $0x44] sm:$0xf]
  %v39 = vld [vmem:[%s1 + $0x48] sm:$0xf]
  %v40 = vld [vmem:[%s1 + $0x4c] sm:$0xf]
  %v41 = vld [vmem:[%s1 + $0x50] sm:$0xf]
  %v42 = vld [vmem:[%s1 + $0x54] sm:$0xf]
  %v43 = vld [vmem:[%s1 + $0x58] sm:$0xf]
  %v44 = vld [vmem:[%s1 + $0x5c] sm:$0xf]
  %v45 = vld [vmem:[%s1 + $0x60] sm:$0xf]
  %v46 = vld [vmem:[%s1 + $0x64] sm:$0xf]
  %v47 = vld [vmem:[%s1 + $0x68] sm:$0xf]
  %v48 = vld [vmem:[%s1 + $0x6c] sm:$0xf]
  %v49 = vld [vmem:[%s1 + $0x70] sm:$0xf]
  %v50 = vld [vmem:[%s1 + $0x74] sm:$0xf]
  %v51 = vld [vmem:[%s1 + $0x78] sm:$0xf]
  %v52 = vld [vmem:[%s1 + $0x7c] sm:$0xf]
  %v53 = vld [vmem:[%s2] sm:$0x1]
  %v54 = vld [vmem:[%s0] sm:$0xff]
  %v55 = vld [vmem:[%s0 + $0x8] sm:$0xff]
  %v56 = vld [vmem:[%s0 + $0x10] sm:$0xff]
  %v57 = vld [vmem:[%s0 + $0x18] sm:$0xff]
  %v58 = vld [vmem:[%s0 + $0x20] sm:$0xff]
  %v59 = vld [vmem:[%s0 + $0x28] sm:$0xff]
  %v60 = vld [vmem:[%s0 + $0x30] sm:$0xff]
  %v61 = vld [vmem:[%s0 + $0x38] sm:$0xff]
  %v62 = vld [vmem:[%s0 + $0x40] sm:$0xff]
  %v63 = vld [vmem:[%s0 + $0x48] sm:$0xff]
  %v64 = vld [vmem:[%s0 + $0x50] sm:$0xff]
  %v65 = vld [vmem:[%s0 + $0x58] sm:$0xff]
  %v66 = vld [vmem:[%s0 + $0x60] sm:$0xff]
  %v67 = vld [vmem:[%s0 + $0x68] sm:$0xff]
  %v68 = vld [vmem:[%s0 + $0x70] sm:$0xff]
  %v70 = vlaneseq
  %v71 = vshrl.u32 %v70, 7
  %v72 = vsub.s32 0, %v71
  %v73 = vrot.slane %v53, %v72
  %v90 = vunpack.c.l.b16 %v54
  %v91 = vunpack.c.h.b16 %v54
  %v92 = vunpack.c.l.b16 %v55
  %v93 = vunpack.c.h.b16 %v55
  %v94 = vunpack.c.l.b16 %v56
  %v95 = vunpack.c.h.b16 %v56
  %v96 = vunpack.c.l.b16 %v57
  %v97 = vunpack.c.h.b16 %v57
  %v98 = vunpack.c.l.b16 %v58
  %v99 = vunpack.c.h.b16 %v58
  %v100 = vunpack.c.l.b16 %v59
  %v101 = vunpack.c.h.b16 %v59
  %v102 = vunpack.c.l.b16 %v60
  %v103 = vunpack.c.h.b16 %v60
  %v104 = vunpack.c.l.b16 %v61
  %v105 = vunpack.c.h.b16 %v61
  %v106 = vunpack.c.l.b16 %v62
  %v107 = vunpack.c.h.b16 %v62
  %v108 = vunpack.c.l.b16 %v63
  %v109 = vunpack.c.h.b16 %v63
  %v110 = vunpack.c.l.b16 %v64
  %v111 = vunpack.c.h.b16 %v64
  %v112 = vunpack.c.l.b16 %v65
  %v113 = vunpack.c.h.b16 %v65
  %v114 = vunpack.c.l.b16 %v66
  %v115 = vunpack.c.h.b16 %v66
  %v116 = vunpack.c.l.b16 %v67
  %v117 = vunpack.c.h.b16 %v67
  %v118 = vunpack.c.l.b16 %v68
  %v119 = vunpack.c.h.b16 %v68
  %v120 = vpack.c.b16 %v92, %v90
  %v121 = vpack.c.b16 %v93, %v91
  %v122 = vpack.c.b16 %v96, %v94
  %v123 = vpack.c.b16 %v97, %v95
  %v124 = vpack.c.b16 %v100, %v98
  %v125 = vpack.c.b16 %v101, %v99
  %v126 = vpack.c.b16 %v104, %v102
  %v127 = vpack.c.b16 %v105, %v103
  %v128 = vpack.c.b16 %v108, %v106
  %v129 = vpack.c.b16 %v109, %v107
  %v130 = vpack.c.b16 %v112, %v110
  %v131 = vpack.c.b16 %v113, %v111
  %v132 = vpack.c.b16 %v116, %v114
  %v133 = vpack.c.b16 %v117, %v115
  %v134 = vpack.c.b16 %v118, %v118
  %v135 = vpack.c.b16 %v119, %v119
  %v184 = vunpack.c.l.b16 %v21
  %v185 = vunpack.c.l.b16 %v22
  %v186 = vunpack.c.l.b16 %v23
  %v187 = vunpack.c.l.b16 %v24
  %v188 = vunpack.c.l.b16 %v25
  %v189 = vunpack.c.l.b16 %v26
  %v190 = vunpack.c.l.b16 %v27
  %v191 = vunpack.c.l.b16 %v28
  %v192 = vunpack.c.l.b16 %v29
  %v193 = vunpack.c.l.b16 %v30
  %v194 = vunpack.c.l.b16 %v31
  %v195 = vunpack.c.l.b16 %v32
  %v196 = vunpack.c.l.b16 %v33
  %v197 = vunpack.c.l.b16 %v34
  %v198 = vunpack.c.l.b16 %v35
  %v199 = vunpack.c.l.b16 %v36
  %v200 = vunpack.c.l.b16 %v37
  %v201 = vunpack.c.l.b16 %v38
  %v202 = vunpack.c.l.b16 %v39
  %v203 = vunpack.c.l.b16 %v40
  %v204 = vunpack.c.l.b16 %v41
  %v205 = vunpack.c.l.b16 %v42
  %v206 = vunpack.c.l.b16 %v43
  %v207 = vunpack.c.l.b16 %v44
  %v208 = vunpack.c.l.b16 %v45
  %v209 = vunpack.c.l.b16 %v46
  %v210 = vunpack.c.l.b16 %v47
  %v211 = vunpack.c.l.b16 %v48
  %v212 = vunpack.c.l.b16 %v49
  %v213 = vunpack.c.l.b16 %v50
  %v214 = vunpack.c.l.b16 %v51
  %v215 = vunpack.c.l.b16 %v52
  %v216 = vpack.c.b16 %v185, %v184
  %v217 = vpack.c.b16 %v187, %v186
  %v218 = vpack.c.b16 %v189, %v188
  %v219 = vpack.c.b16 %v191, %v190
  %v220 = vpack.c.b16 %v193, %v192
  %v221 = vpack.c.b16 %v195, %v194
  %v222 = vpack.c.b16 %v197, %v196
  %v223 = vpack.c.b16 %v199, %v198
  %v224 = vpack.c.b16 %v201, %v200
  %v225 = vpack.c.b16 %v203, %v202
  %v226 = vpack.c.b16 %v205, %v204
  %v227 = vpack.c.b16 %v207, %v206
  %v228 = vpack.c.b16 %v209, %v208
  %v229 = vpack.c.b16 %v211, %v210
  %v230 = vpack.c.b16 %v213, %v212
  %v231 = vpack.c.b16 %v215, %v214
  %248 = vmatprep.subr.bf16.mxu0 0
  %249 = vmatpush1.bf16.msra.mxu0 %v223
  %250 = vmatprep.subr.bf16.mxu0 0
  %251 = vmatpush1.bf16.msra.mxu0 %v222
  %252 = vmatprep.subr.bf16.mxu0 0
  %253 = vmatpush1.bf16.msra.mxu0 %v221
  %254 = vmatprep.subr.bf16.mxu0 0
  %255 = vmatpush1.bf16.msra.mxu0 %v220
  %256 = vmatprep.subr.bf16.mxu0 0
  %257 = vmatpush1.bf16.msra.mxu0 %v219
  %258 = vmatprep.subr.bf16.mxu0 0
  %259 = vmatpush1.bf16.msra.mxu0 %v218
  %260 = vmatprep.subr.bf16.mxu0 0
  %261 = vmatpush1.bf16.msra.mxu0 %v217
  %262 = vmatprep.subr.bf16.mxu0 0
  %263 = vmatpush1.bf16.msra.mxu0 %v216
  %264 = vmatprep.subr.bf16.mxu0 0
  %265 = vmatpush2.bf16.msra.mxu0 %v231
  %266 = vmatprep.subr.bf16.mxu0 0
  %267 = vmatpush2.bf16.msra.mxu0 %v230
  %268 = vmatprep.subr.bf16.mxu0 0
  %269 = vmatpush2.bf16.msra.mxu0 %v229
  %270 = vmatprep.subr.bf16.mxu0 0
  %271 = vmatpush2.bf16.msra.mxu0 %v228
  %272 = vmatprep.subr.bf16.mxu0 0
  %273 = vmatpush2.bf16.msra.mxu0 %v227
  %274 = vmatprep.subr.bf16.mxu0 0
  %275 = vmatpush2.bf16.msra.mxu0 %v226
  %276 = vmatprep.subr.bf16.mxu0 0
  %277 = vmatpush2.bf16.msra.mxu0 %v225
  %278 = vmatprep.subr.bf16.mxu0 0
  %279 = vmatpush2.bf16.msra.mxu0 %v224
  %280 = vmatprep.mubr.bf16.mxu0 %v121
  %281 = vmatmul.mubr.bf16.gmra.mxu0 %v120
  %v282 = vpop.f32.mrf.mxu0
  %v283 = vadd.f32 %v73, %v282
  %v284 = vpop.f32.mrf.mxu0
  %v285 = vpop.f32.mrf.mxu0
  %v286 = vadd.f32 %v73, %v285
  %v287 = vpop.f32.mrf.mxu0
  %288 = vmatprep.mubr.bf16.mxu0 %v123
  %289 = vmatmul.mubr.bf16.gmra.mxu0 %v122
  %v290 = vpop.f32.mrf.mxu0
  %v291 = vadd.f32 %v73, %v290
  %v292 = vpop.f32.mrf.mxu0
  %v293 = vpop.f32.mrf.mxu0
  %v294 = vadd.f32 %v73, %v293
  %v295 = vpop.f32.mrf.mxu0
  %296 = vmatprep.mubr.bf16.mxu0 %v125
  %297 = vmatmul.mubr.bf16.gmra.mxu0 %v124
  %v298 = vpop.f32.mrf.mxu0
  %v299 = vadd.f32 %v73, %v298
  %v300 = vpop.f32.mrf.mxu0
  %v301 = vpop.f32.mrf.mxu0
  %v302 = vadd.f32 %v73, %v301
  %v303 = vpop.f32.mrf.mxu0
  %304 = vmatprep.mubr.bf16.mxu0 %v127
  %305 = vmatmul.mubr.bf16.gmra.mxu0 %v126
  %v306 = vpop.f32.mrf.mxu0
  %v307 = vadd.f32 %v73, %v306
  %v308 = vpop.f32.mrf.mxu0
  %v309 = vpop.f32.mrf.mxu0
  %v310 = vadd.f32 %v73, %v309
  %v311 = vpop.f32.mrf.mxu0
  %312 = vmatprep.mubr.bf16.mxu0 %v129
  %313 = vmatmul.mubr.bf16.gmra.mxu0 %v128
  %v314 = vpop.f32.mrf.mxu0
  %v315 = vadd.f32 %v73, %v314
  %v316 = vpop.f32.mrf.mxu0
  %v317 = vpop.f32.mrf.mxu0
  %v318 = vadd.f32 %v73, %v317
  %v319 = vpop.f32.mrf.mxu0
  %320 = vmatprep.mubr.bf16.mxu0 %v131
  %321 = vmatmul.mubr.bf16.gmra.mxu0 %v130
  %v322 = vpop.f32.mrf.mxu0
  %v323 = vadd.f32 %v73, %v322
  %v324 = vpop.f32.mrf.mxu0
  %v325 = vpop.f32.mrf.mxu0
  %v326 = vadd.f32 %v73, %v325
  %v327 = vpop.f32.mrf.mxu0
  %328 = vmatprep.mubr.bf16.mxu0 %v133
  %329 = vmatmul.mubr.bf16.gmra.mxu0 %v132
  %v330 = vpop.f32.mrf.mxu0
  %v331 = vadd.f32 %v73, %v330
  %v332 = vpop.f32.mrf.mxu0
  %v333 = vpop.f32.mrf.mxu0
  %v334 = vadd.f32 %v73, %v333
  %v335 = vpop.f32.mrf.mxu0
  %336 = vmatprep.mubr.bf16.mxu0 %v135
  %337 = vmatmul.mubr.bf16.gmra.mxu0 %v134
  %v338 = vpop.f32.mrf.mxu0
  %v339 = vadd.f32 %v73, %v338
  %v340 = vpop.f32.mrf.mxu0
  %v341 = vpop.f32.mrf.mxu0
  %v342 = vpop.f32.mrf.mxu0
  %343 = vdwg.mxu0
  %vm344 = vcmp.gt.f32.partialorder %v283, 0.0
  %vm345 = vcmp.gt.f32.partialorder %v286, 0.0
  %vm346 = vcmp.gt.f32.partialorder %v291, 0.0
  %vm347 = vcmp.gt.f32.partialorder %v294, 0.0
  %vm348 = vcmp.gt.f32.partialorder %v299, 0.0
  %vm349 = vcmp.gt.f32.partialorder %v302, 0.0
  %vm350 = vcmp.gt.f32.partialorder %v307, 0.0
  %vm351 = vcmp.gt.f32.partialorder %v310, 0.0
  %vm352 = vcmp.gt.f32.partialorder %v315, 0.0
  %vm353 = vcmp.gt.f32.partialorder %v318, 0.0
  %vm354 = vcmp.gt.f32.partialorder %v323, 0.0
  %vm355 = vcmp.gt.f32.partialorder %v326, 0.0
  %vm356 = vcmp.gt.f32.partialorder %v331, 0.0
  %vm357 = vcmp.gt.f32.partialorder %v334, 0.0
  %vm358 = vcmp.gt.f32.partialorder %v339, 0.0
  %v359 = vmin.f32 %v283, 0.0
  %v360 = vmin.f32 %v286, 0.0
  %v361 = vmin.f32 %v291, 0.0
  %v362 = vmin.f32 %v294, 0.0
  %v363 = vmin.f32 %v299, 0.0
  %v364 = vmin.f32 %v302, 0.0
  %v365 = vmin.f32 %v307, 0.0
  %v366 = vmin.f32 %v310, 0.0
  %v367 = vmin.f32 %v315, 0.0
  %v368 = vmin.f32 %v318, 0.0
  %v369 = vmin.f32 %v323, 0.0
  %v370 = vmin.f32 %v326, 0.0
  %v371 = vmin.f32 %v331, 0.0
  %v372 = vmin.f32 %v334, 0.0
  %v373 = vmin.f32 %v339, 0.0
  %v374 = vmul.f32 %v359, 1.442695
  %v375 = vpow.pop %v374
  %v376 = vmul.f32 %v360, 1.442695
  %v377 = vpow.pop %v376
  %v378 = vmul.f32 %v361, 1.442695
  %v379 = vpow.pop %v378
  %v380 = vmul.f32 %v362, 1.442695
  %v381 = vpow.pop %v380
  %v382 = vmul.f32 %v363, 1.442695
  %v383 = vpow.pop %v382
  %v384 = vmul.f32 %v364, 1.442695
  %v385 = vpow.pop %v384
  %v386 = vmul.f32 %v365, 1.442695
  %v387 = vpow.pop %v386
  %v388 = vmul.f32 %v366, 1.442695
  %v389 = vpow.pop %v388
  %v390 = vmul.f32 %v367, 1.442695
  %v391 = vpow.pop %v390
  %v392 = vmul.f32 %v368, 1.442695
  %v393 = vpow.pop %v392
  %v394 = vmul.f32 %v369, 1.442695
  %v395 = vpow.pop %v394
  %v396 = vmul.f32 %v370, 1.442695
  %v397 = vpow.pop %v396
  %v398 = vmul.f32 %v371, 1.442695
  %v399 = vpow.pop %v398
  %v400 = vmul.f32 %v372, 1.442695
  %v401 = vpow.pop %v400
  %v402 = vmul.f32 %v373, 1.442695
  %v403 = vpow.pop %v402
  %v404 = vsub.f32 %v375, 1.0
  %v405 = vsub.f32 %v377, 1.0
  %v406 = vsub.f32 %v379, 1.0
  %v407 = vsub.f32 %v381, 1.0
  %v408 = vsub.f32 %v383, 1.0
  %v409 = vsub.f32 %v385, 1.0
  %v410 = vsub.f32 %v387, 1.0
  %v411 = vsub.f32 %v389, 1.0
  %v412 = vsub.f32 %v391, 1.0
  %v413 = vsub.f32 %v393, 1.0
  %v414 = vsub.f32 %v395, 1.0
  %v415 = vsub.f32 %v397, 1.0
  %v416 = vsub.f32 %v399, 1.0
  %v417 = vsub.f32 %v401, 1.0
  %v418 = vsub.f32 %v403, 1.0
  %v419 = vsel %vm344, %v283, %v404
  %v420 = vsel %vm345, %v286, %v405
  %v421 = vsel %vm346, %v291, %v406
  %v422 = vsel %vm347, %v294, %v407
  %v423 = vsel %vm348, %v299, %v408
  %v424 = vsel %vm349, %v302, %v409
  %v425 = vsel %vm350, %v307, %v410
  %v426 = vsel %vm351, %v310, %v411
  %v427 = vsel %vm352, %v315, %v412
  %v428 = vsel %vm353, %v318, %v413
  %v429 = vsel %vm354, %v323, %v414
  %v430 = vsel %vm355, %v326, %v415
  %v431 = vsel %vm356, %v331, %v416
  %v432 = vsel %vm357, %v334, %v417
  %v433 = vsel %vm358, %v339, %v418
  %v434 = vadd.f32 %v419, %v420
  %v435 = vadd.f32 %v434, %v421
  %v436 = vadd.f32 %v435, %v422
  %v437 = vadd.f32 %v436, %v423
  %v438 = vadd.f32 %v437, %v424
  %v439 = vadd.f32 %v438, %v425
  %v440 = vadd.f32 %v439, %v426
  %v441 = vadd.f32 %v440, %v427
  %v442 = vadd.f32 %v441, %v428
  %v443 = vadd.f32 %v442, %v429
  %v444 = vadd.f32 %v443, %v430
  %v445 = vadd.f32 %v444, %v431
  %v446 = vadd.f32 %v445, %v432
  %v447 = vadd.f32 %v446, %v433
  %v448 = vrot.slane %v447, 4
  %v449 = vadd.f32 %v447, %v448
  %v450 = vrot.slane %v449, 2
  %v451 = vadd.f32 %v449, %v450
  %v452 = vrot.slane %v451, 1
  %v453 = vadd.f32 %v451, %v452
  %v454 = vrcp.pop 120.0
  %v455 = vmul.f32 %v453, %v454
  %v456 = vsub.f32 %v419, %v455
  %v457 = vsub.f32 %v420, %v455
  %v458 = vsub.f32 %v421, %v455
  %v459 = vsub.f32 %v422, %v455
  %v460 = vsub.f32 %v423, %v455
  %v461 = vsub.f32 %v424, %v455
  %v462 = vsub.f32 %v425, %v455
  %v463 = vsub.f32 %v426, %v455
  %v464 = vsub.f32 %v427, %v455
  %v465 = vsub.f32 %v428, %v455
  %v466 = vsub.f32 %v429, %v455
  %v467 = vsub.f32 %v430, %v455
  %v468 = vsub.f32 %v431, %v455
  %v469 = vsub.f32 %v432, %v455
  %v470 = vsub.f32 %v433, %v455
  %v471 = vmul.f32 %v456, %v456
  %v472 = vmul.f32 %v457, %v457
  %v473 = vmul.f32 %v458, %v458
  %v474 = vmul.f32 %v459, %v459
  %v475 = vmul.f32 %v460, %v460
  %v476 = vmul.f32 %v461, %v461
  %v477 = vmul.f32 %v462, %v462
  %v478 = vmul.f32 %v463, %v463
  %v479 = vmul.f32 %v464, %v464
  %v480 = vmul.f32 %v465, %v465
  %v481 = vmul.f32 %v466, %v466
  %v482 = vmul.f32 %v467, %v467
  %v483 = vmul.f32 %v468, %v468
  %v484 = vmul.f32 %v469, %v469
  %v485 = vmul.f32 %v470, %v470
  %v486 = vadd.f32 %v471, %v472
  %v487 = vadd.f32 %v486, %v473
  %v488 = vadd.f32 %v487, %v474
  %v489 = vadd.f32 %v488, %v475
  %v490 = vadd.f32 %v489, %v476
  %v491 = vadd.f32 %v490, %v477
  %v492 = vadd.f32 %v491, %v478
  %v493 = vadd.f32 %v492, %v479
  %v494 = vadd.f32 %v493, %v480
  %v495 = vadd.f32 %v494, %v481
  %v496 = vadd.f32 %v495, %v482
  %v497 = vadd.f32 %v496, %v483
  %v498 = vadd.f32 %v497, %v484
  %v499 = vadd.f32 %v498, %v485
  %v500 = vrot.slane %v499, 4
  %v501 = vadd.f32 %v499, %v500
  %v502 = vrot.slane %v501, 2
  %v503 = vadd.f32 %v501, %v502
  %v504 = vrot.slane %v503, 1
  %v505 = vadd.f32 %v503, %v504
  %v506 = vmul.f32 %v505, %v454
  %v507 = vadd.f32 %v506, 1e-08
  %v508 = vrsqrt.pop %v507
  %v509 = vmul.f32 %v456, %v508
  %v510 = vmul.f32 %v457, %v508
  %v511 = vmul.f32 %v458, %v508
  %v512 = vmul.f32 %v459, %v508
  %v513 = vmul.f32 %v460, %v508
  %v514 = vmul.f32 %v461, %v508
  %v515 = vmul.f32 %v462, %v508
  %v516 = vmul.f32 %v463, %v508
  %v517 = vmul.f32 %v464, %v508
  %v518 = vmul.f32 %v465, %v508
  %v519 = vmul.f32 %v466, %v508
  %v520 = vmul.f32 %v467, %v508
  %v521 = vmul.f32 %v468, %v508
  %v522 = vmul.f32 %v469, %v508
  %v523 = vmul.f32 %v470, %v508
  %v524 = vld [vmem:[%s3] sm:$0x1]
  %v526 = vlaneseq
  %v527 = vshrl.u32 %v526, 7
  %v528 = vsub.s32 0, %v527
  %v529 = vrot.slane %v524, %v528
  %v531 = vmul.f32 %v509, %v529
  %v532 = vmul.f32 %v510, %v529
  %v533 = vmul.f32 %v511, %v529
  %v534 = vmul.f32 %v512, %v529
  %v535 = vmul.f32 %v513, %v529
  %v536 = vmul.f32 %v514, %v529
  %v537 = vmul.f32 %v515, %v529
  %v538 = vmul.f32 %v516, %v529
  %v539 = vmul.f32 %v517, %v529
  %v540 = vmul.f32 %v518, %v529
  %v541 = vmul.f32 %v519, %v529
  %v542 = vmul.f32 %v520, %v529
  %v543 = vmul.f32 %v521, %v529
  %v544 = vmul.f32 %v522, %v529
  %v545 = vmul.f32 %v523, %v529
  %v546 = vld [vmem:[%s4] sm:$0x1]
  %v548 = vlaneseq
  %v549 = vshrl.u32 %v548, 7
  %v550 = vsub.s32 0, %v549
  %v551 = vrot.slane %v546, %v550
  %v553 = vadd.f32 %v531, %v551
  %v554 = vadd.f32 %v532, %v551
  %v555 = vadd.f32 %v533, %v551
  %v556 = vadd.f32 %v534, %v551
  %v557 = vadd.f32 %v535, %v551
  %v558 = vadd.f32 %v536, %v551
  %v559 = vadd.f32 %v537, %v551
  %v560 = vadd.f32 %v538, %v551
  %v561 = vadd.f32 %v539, %v551
  %v562 = vadd.f32 %v540, %v551
  %v563 = vadd.f32 %v541, %v551
  %v564 = vadd.f32 %v542, %v551
  %v565 = vadd.f32 %v543, %v551
  %v566 = vadd.f32 %v544, %v551
  %v567 = vadd.f32 %v545, %v551
  %568 = vst [vmem:[%s5] sm:$0xff] %v553
  %569 = vst [vmem:[%s5 + $0x8] sm:$0xff] %v554
  %570 = vst [vmem:[%s5 + $0x10] sm:$0xff] %v555
  %571 = vst [vmem:[%s5 + $0x18] sm:$0xff] %v556
  %572 = vst [vmem:[%s5 + $0x20] sm:$0xff] %v557
  %573 = vst [vmem:[%s5 + $0x28] sm:$0xff] %v558
  %574 = vst [vmem:[%s5 + $0x30] sm:$0xff] %v559
  %575 = vst [vmem:[%s5 + $0x38] sm:$0xff] %v560
  %576 = vst [vmem:[%s5 + $0x40] sm:$0xff] %v561
  %577 = vst [vmem:[%s5 + $0x48] sm:$0xff] %v562
  %578 = vst [vmem:[%s5 + $0x50] sm:$0xff] %v563
  %579 = vst [vmem:[%s5 + $0x58] sm:$0xff] %v564
  %580 = vst [vmem:[%s5 + $0x60] sm:$0xff] %v565
  %581 = vst [vmem:[%s5 + $0x68] sm:$0xff] %v566
  %582 = vst [vmem:[%s5 + $0x70] sm:$0xff] %v567
  %s583 = scalar_lea.vmem %s0, 120
  %v584 = vld [vmem:[%s583] sm:$0xff]
  %v585 = vld [vmem:[%s583 + $0x8] sm:$0xff]
  %v586 = vld [vmem:[%s583 + $0x10] sm:$0xff]
  %v587 = vld [vmem:[%s583 + $0x18] sm:$0xff]
  %v588 = vld [vmem:[%s583 + $0x20] sm:$0xff]
  %v589 = vld [vmem:[%s583 + $0x28] sm:$0xff]
  %v590 = vld [vmem:[%s583 + $0x30] sm:$0xff]
  %v591 = vld [vmem:[%s583 + $0x38] sm:$0xff]
  %v592 = vld [vmem:[%s583 + $0x40] sm:$0xff]
  %v593 = vld [vmem:[%s583 + $0x48] sm:$0xff]
  %v594 = vld [vmem:[%s583 + $0x50] sm:$0xff]
  %v595 = vld [vmem:[%s583 + $0x58] sm:$0xff]
  %v596 = vld [vmem:[%s583 + $0x60] sm:$0xff]
  %v597 = vld [vmem:[%s583 + $0x68] sm:$0xff]
  %v598 = vld [vmem:[%s583 + $0x70] sm:$0xff]
  %v614 = vunpack.c.l.b16 %v584
  %v615 = vunpack.c.h.b16 %v584
  %v616 = vunpack.c.l.b16 %v585
  %v617 = vunpack.c.h.b16 %v585
  %v618 = vunpack.c.l.b16 %v586
  %v619 = vunpack.c.h.b16 %v586
  %v620 = vunpack.c.l.b16 %v587
  %v621 = vunpack.c.h.b16 %v587
  %v622 = vunpack.c.l.b16 %v588
  %v623 = vunpack.c.h.b16 %v588
  %v624 = vunpack.c.l.b16 %v589
  %v625 = vunpack.c.h.b16 %v589
  %v626 = vunpack.c.l.b16 %v590
  %v627 = vunpack.c.h.b16 %v590
  %v628 = vunpack.c.l.b16 %v591
  %v629 = vunpack.c.h.b16 %v591
  %v630 = vunpack.c.l.b16 %v592
  %v631 = vunpack.c.h.b16 %v592
  %v632 = vunpack.c.l.b16 %v593
  %v633 = vunpack.c.h.b16 %v593
  %v634 = vunpack.c.l.b16 %v594
  %v635 = vunpack.c.h.b16 %v594
  %v636 = vunpack.c.l.b16 %v595
  %v637 = vunpack.c.h.b16 %v595
  %v638 = vunpack.c.l.b16 %v596
  %v639 = vunpack.c.h.b16 %v596
  %v640 = vunpack.c.l.b16 %v597
  %v641 = vunpack.c.h.b16 %v597
  %v642 = vunpack.c.l.b16 %v598
  %v643 = vunpack.c.h.b16 %v598
  %v644 = vpack.c.b16 %v616, %v614
  %v645 = vpack.c.b16 %v617, %v615
  %v646 = vpack.c.b16 %v620, %v618
  %v647 = vpack.c.b16 %v621, %v619
  %v648 = vpack.c.b16 %v624, %v622
  %v649 = vpack.c.b16 %v625, %v623
  %v650 = vpack.c.b16 %v628, %v626
  %v651 = vpack.c.b16 %v629, %v627
  %v652 = vpack.c.b16 %v632, %v630
  %v653 = vpack.c.b16 %v633, %v631
  %v654 = vpack.c.b16 %v636, %v634
  %v655 = vpack.c.b16 %v637, %v635
  %v656 = vpack.c.b16 %v640, %v638
  %v657 = vpack.c.b16 %v641, %v639
  %v658 = vpack.c.b16 %v642, %v642
  %v659 = vpack.c.b16 %v643, %v643
  %676 = vmatprep.subr.bf16.mxu0 0
  %677 = vmatpush1.bf16.msra.mxu0 %v223
  %678 = vmatprep.subr.bf16.mxu0 0
  %679 = vmatpush1.bf16.msra.mxu0 %v222
  %680 = vmatprep.subr.bf16.mxu0 0
  %681 = vmatpush1.bf16.msra.mxu0 %v221
  %682 = vmatprep.subr.bf16.mxu0 0
  %683 = vmatpush1.bf16.msra.mxu0 %v220
  %684 = vmatprep.subr.bf16.mxu0 0
  %685 = vmatpush1.bf16.msra.mxu0 %v219
  %686 = vmatprep.subr.bf16.mxu0 0
  %687 = vmatpush1.bf16.msra.mxu0 %v218
  %688 = vmatprep.subr.bf16.mxu0 0
  %689 = vmatpush1.bf16.msra.mxu0 %v217
  %690 = vmatprep.subr.bf16.mxu0 0
  %691 = vmatpush1.bf16.msra.mxu0 %v216
  %692 = vmatprep.subr.bf16.mxu0 0
  %693 = vmatpush2.bf16.msra.mxu0 %v231
  %694 = vmatprep.subr.bf16.mxu0 0
  %695 = vmatpush2.bf16.msra.mxu0 %v230
  %696 = vmatprep.subr.bf16.mxu0 0
  %697 = vmatpush2.bf16.msra.mxu0 %v229
  %698 = vmatprep.subr.bf16.mxu0 0
  %699 = vmatpush2.bf16.msra.mxu0 %v228
  %700 = vmatprep.subr.bf16.mxu0 0
  %701 = vmatpush2.bf16.msra.mxu0 %v227
  %702 = vmatprep.subr.bf16.mxu0 0
  %703 = vmatpush2.bf16.msra.mxu0 %v226
  %704 = vmatprep.subr.bf16.mxu0 0
  %705 = vmatpush2.bf16.msra.mxu0 %v225
  %706 = vmatprep.subr.bf16.mxu0 0
  %707 = vmatpush2.bf16.msra.mxu0 %v224
  %708 = vmatprep.mubr.bf16.mxu0 %v645
  %709 = vmatmul.mubr.bf16.gmra.mxu0 %v644
  %v710 = vpop.f32.mrf.mxu0
  %v711 = vadd.f32 %v73, %v710
  %v712 = vpop.f32.mrf.mxu0
  %v713 = vpop.f32.mrf.mxu0
  %v714 = vadd.f32 %v73, %v713
  %v715 = vpop.f32.mrf.mxu0
  %716 = vmatprep.mubr.bf16.mxu0 %v647
  %717 = vmatmul.mubr.bf16.gmra.mxu0 %v646
  %v718 = vpop.f32.mrf.mxu0
  %v719 = vadd.f32 %v73, %v718
  %v720 = vpop.f32.mrf.mxu0
  %v721 = vpop.f32.mrf.mxu0
  %v722 = vadd.f32 %v73, %v721
  %v723 = vpop.f32.mrf.mxu0
  %724 = vmatprep.mubr.bf16.mxu0 %v649
  %725 = vmatmul.mubr.bf16.gmra.mxu0 %v648
  %v726 = vpop.f32.mrf.mxu0
  %v727 = vadd.f32 %v73, %v726
  %v728 = vpop.f32.mrf.mxu0
  %v729 = vpop.f32.mrf.mxu0
  %v730 = vadd.f32 %v73, %v729
  %v731 = vpop.f32.mrf.mxu0
  %732 = vmatprep.mubr.bf16.mxu0 %v651
  %733 = vmatmul.mubr.bf16.gmra.mxu0 %v650
  %v734 = vpop.f32.mrf.mxu0
  %v735 = vadd.f32 %v73, %v734
  %v736 = vpop.f32.mrf.mxu0
  %v737 = vpop.f32.mrf.mxu0
  %v738 = vadd.f32 %v73, %v737
  %v739 = vpop.f32.mrf.mxu0
  %740 = vmatprep.mubr.bf16.mxu0 %v653
  %741 = vmatmul.mubr.bf16.gmra.mxu0 %v652
  %v742 = vpop.f32.mrf.mxu0
  %v743 = vadd.f32 %v73, %v742
  %v744 = vpop.f32.mrf.mxu0
  %v745 = vpop.f32.mrf.mxu0
  %v746 = vadd.f32 %v73, %v745
  %v747 = vpop.f32.mrf.mxu0
  %748 = vmatprep.mubr.bf16.mxu0 %v655
  %749 = vmatmul.mubr.bf16.gmra.mxu0 %v654
  %v750 = vpop.f32.mrf.mxu0
  %v751 = vadd.f32 %v73, %v750
  %v752 = vpop.f32.mrf.mxu0
  %v753 = vpop.f32.mrf.mxu0
  %v754 = vadd.f32 %v73, %v753
  %v755 = vpop.f32.mrf.mxu0
  %756 = vmatprep.mubr.bf16.mxu0 %v657
  %757 = vmatmul.mubr.bf16.gmra.mxu0 %v656
  %v758 = vpop.f32.mrf.mxu0
  %v759 = vadd.f32 %v73, %v758
  %v760 = vpop.f32.mrf.mxu0
  %v761 = vpop.f32.mrf.mxu0
  %v762 = vadd.f32 %v73, %v761
  %v763 = vpop.f32.mrf.mxu0
  %764 = vmatprep.mubr.bf16.mxu0 %v659
  %765 = vmatmul.mubr.bf16.gmra.mxu0 %v658
  %v766 = vpop.f32.mrf.mxu0
  %v767 = vadd.f32 %v73, %v766
  %v768 = vpop.f32.mrf.mxu0
  %v769 = vpop.f32.mrf.mxu0
  %v770 = vpop.f32.mrf.mxu0
  %771 = vdwg.mxu0
  %vm772 = vcmp.gt.f32.partialorder %v711, 0.0
  %vm773 = vcmp.gt.f32.partialorder %v714, 0.0
  %vm774 = vcmp.gt.f32.partialorder %v719, 0.0
  %vm775 = vcmp.gt.f32.partialorder %v722, 0.0
  %vm776 = vcmp.gt.f32.partialorder %v727, 0.0
  %vm777 = vcmp.gt.f32.partialorder %v730, 0.0
  %vm778 = vcmp.gt.f32.partialorder %v735, 0.0
  %vm779 = vcmp.gt.f32.partialorder %v738, 0.0
  %vm780 = vcmp.gt.f32.partialorder %v743, 0.0
  %vm781 = vcmp.gt.f32.partialorder %v746, 0.0
  %vm782 = vcmp.gt.f32.partialorder %v751, 0.0
  %vm783 = vcmp.gt.f32.partialorder %v754, 0.0
  %vm784 = vcmp.gt.f32.partialorder %v759, 0.0
  %vm785 = vcmp.gt.f32.partialorder %v762, 0.0
  %vm786 = vcmp.gt.f32.partialorder %v767, 0.0
  %v787 = vmin.f32 %v711, 0.0
  %v788 = vmin.f32 %v714, 0.0
  %v789 = vmin.f32 %v719, 0.0
  %v790 = vmin.f32 %v722, 0.0
  %v791 = vmin.f32 %v727, 0.0
  %v792 = vmin.f32 %v730, 0.0
  %v793 = vmin.f32 %v735, 0.0
  %v794 = vmin.f32 %v738, 0.0
  %v795 = vmin.f32 %v743, 0.0
  %v796 = vmin.f32 %v746, 0.0
  %v797 = vmin.f32 %v751, 0.0
  %v798 = vmin.f32 %v754, 0.0
  %v799 = vmin.f32 %v759, 0.0
  %v800 = vmin.f32 %v762, 0.0
  %v801 = vmin.f32 %v767, 0.0
  %v802 = vmul.f32 %v787, 1.442695
  %v803 = vpow.pop %v802
  %v804 = vmul.f32 %v788, 1.442695
  %v805 = vpow.pop %v804
  %v806 = vmul.f32 %v789, 1.442695
  %v807 = vpow.pop %v806
  %v808 = vmul.f32 %v790, 1.442695
  %v809 = vpow.pop %v808
  %v810 = vmul.f32 %v791, 1.442695
  %v811 = vpow.pop %v810
  %v812 = vmul.f32 %v792, 1.442695
  %v813 = vpow.pop %v812
  %v814 = vmul.f32 %v793, 1.442695
  %v815 = vpow.pop %v814
  %v816 = vmul.f32 %v794, 1.442695
  %v817 = vpow.pop %v816
  %v818 = vmul.f32 %v795, 1.442695
  %v819 = vpow.pop %v818
  %v820 = vmul.f32 %v796, 1.442695
  %v821 = vpow.pop %v820
  %v822 = vmul.f32 %v797, 1.442695
  %v823 = vpow.pop %v822
  %v824 = vmul.f32 %v798, 1.442695
  %v825 = vpow.pop %v824
  %v826 = vmul.f32 %v799, 1.442695
  %v827 = vpow.pop %v826
  %v828 = vmul.f32 %v800, 1.442695
  %v829 = vpow.pop %v828
  %v830 = vmul.f32 %v801, 1.442695
  %v831 = vpow.pop %v830
  %v832 = vsub.f32 %v803, 1.0
  %v833 = vsub.f32 %v805, 1.0
  %v834 = vsub.f32 %v807, 1.0
  %v835 = vsub.f32 %v809, 1.0
  %v836 = vsub.f32 %v811, 1.0
  %v837 = vsub.f32 %v813, 1.0
  %v838 = vsub.f32 %v815, 1.0
  %v839 = vsub.f32 %v817, 1.0
  %v840 = vsub.f32 %v819, 1.0
  %v841 = vsub.f32 %v821, 1.0
  %v842 = vsub.f32 %v823, 1.0
  %v843 = vsub.f32 %v825, 1.0
  %v844 = vsub.f32 %v827, 1.0
  %v845 = vsub.f32 %v829, 1.0
  %v846 = vsub.f32 %v831, 1.0
  %v847 = vsel %vm772, %v711, %v832
  %v848 = vsel %vm773, %v714, %v833
  %v849 = vsel %vm774, %v719, %v834
  %v850 = vsel %vm775, %v722, %v835
  %v851 = vsel %vm776, %v727, %v836
  %v852 = vsel %vm777, %v730, %v837
  %v853 = vsel %vm778, %v735, %v838
  %v854 = vsel %vm779, %v738, %v839
  %v855 = vsel %vm780, %v743, %v840
  %v856 = vsel %vm781, %v746, %v841
  %v857 = vsel %vm782, %v751, %v842
  %v858 = vsel %vm783, %v754, %v843
  %v859 = vsel %vm784, %v759, %v844
  %v860 = vsel %vm785, %v762, %v845
  %v861 = vsel %vm786, %v767, %v846
  %v862 = vadd.f32 %v847, %v848
  %v863 = vadd.f32 %v862, %v849
  %v864 = vadd.f32 %v863, %v850
  %v865 = vadd.f32 %v864, %v851
  %v866 = vadd.f32 %v865, %v852
  %v867 = vadd.f32 %v866, %v853
  %v868 = vadd.f32 %v867, %v854
  %v869 = vadd.f32 %v868, %v855
  %v870 = vadd.f32 %v869, %v856
  %v871 = vadd.f32 %v870, %v857
  %v872 = vadd.f32 %v871, %v858
  %v873 = vadd.f32 %v872, %v859
  %v874 = vadd.f32 %v873, %v860
  %v875 = vadd.f32 %v874, %v861
  %v876 = vrot.slane %v875, 4
  %v877 = vadd.f32 %v875, %v876
  %v878 = vrot.slane %v877, 2
  %v879 = vadd.f32 %v877, %v878
  %v880 = vrot.slane %v879, 1
  %v881 = vadd.f32 %v879, %v880
  %v882 = vmul.f32 %v881, %v454
  %v883 = vsub.f32 %v847, %v882
  %v884 = vsub.f32 %v848, %v882
  %v885 = vsub.f32 %v849, %v882
  %v886 = vsub.f32 %v850, %v882
  %v887 = vsub.f32 %v851, %v882
  %v888 = vsub.f32 %v852, %v882
  %v889 = vsub.f32 %v853, %v882
  %v890 = vsub.f32 %v854, %v882
  %v891 = vsub.f32 %v855, %v882
  %v892 = vsub.f32 %v856, %v882
  %v893 = vsub.f32 %v857, %v882
  %v894 = vsub.f32 %v858, %v882
  %v895 = vsub.f32 %v859, %v882
  %v896 = vsub.f32 %v860, %v882
  %v897 = vsub.f32 %v861, %v882
  %v898 = vmul.f32 %v883, %v883
  %v899 = vmul.f32 %v884, %v884
  %v900 = vmul.f32 %v885, %v885
  %v901 = vmul.f32 %v886, %v886
  %v902 = vmul.f32 %v887, %v887
  %v903 = vmul.f32 %v888, %v888
  %v904 = vmul.f32 %v889, %v889
  %v905 = vmul.f32 %v890, %v890
  %v906 = vmul.f32 %v891, %v891
  %v907 = vmul.f32 %v892, %v892
  %v908 = vmul.f32 %v893, %v893
  %v909 = vmul.f32 %v894, %v894
  %v910 = vmul.f32 %v895, %v895
  %v911 = vmul.f32 %v896, %v896
  %v912 = vmul.f32 %v897, %v897
  %v913 = vadd.f32 %v898, %v899
  %v914 = vadd.f32 %v913, %v900
  %v915 = vadd.f32 %v914, %v901
  %v916 = vadd.f32 %v915, %v902
  %v917 = vadd.f32 %v916, %v903
  %v918 = vadd.f32 %v917, %v904
  %v919 = vadd.f32 %v918, %v905
  %v920 = vadd.f32 %v919, %v906
  %v921 = vadd.f32 %v920, %v907
  %v922 = vadd.f32 %v921, %v908
  %v923 = vadd.f32 %v922, %v909
  %v924 = vadd.f32 %v923, %v910
  %v925 = vadd.f32 %v924, %v911
  %v926 = vadd.f32 %v925, %v912
  %v927 = vrot.slane %v926, 4
  %v928 = vadd.f32 %v926, %v927
  %v929 = vrot.slane %v928, 2
  %v930 = vadd.f32 %v928, %v929
  %v931 = vrot.slane %v930, 1
  %v932 = vadd.f32 %v930, %v931
  %v933 = vmul.f32 %v932, %v454
  %v934 = vadd.f32 %v933, 1e-08
  %v935 = vrsqrt.pop %v934
  %v936 = vmul.f32 %v883, %v935
  %v937 = vmul.f32 %v884, %v935
  %v938 = vmul.f32 %v885, %v935
  %v939 = vmul.f32 %v886, %v935
  %v940 = vmul.f32 %v887, %v935
  %v941 = vmul.f32 %v888, %v935
  %v942 = vmul.f32 %v889, %v935
  %v943 = vmul.f32 %v890, %v935
  %v944 = vmul.f32 %v891, %v935
  %v945 = vmul.f32 %v892, %v935
  %v946 = vmul.f32 %v893, %v935
  %v947 = vmul.f32 %v894, %v935
  %v948 = vmul.f32 %v895, %v935
  %v949 = vmul.f32 %v896, %v935
  %v950 = vmul.f32 %v897, %v935
  %v951 = vld [vmem:[%s3] sm:$0x1]
  %v953 = vlaneseq
  %v954 = vshrl.u32 %v953, 7
  %v955 = vsub.s32 0, %v954
  %v956 = vrot.slane %v951, %v955
  %v958 = vmul.f32 %v936, %v956
  %v959 = vmul.f32 %v937, %v956
  %v960 = vmul.f32 %v938, %v956
  %v961 = vmul.f32 %v939, %v956
  %v962 = vmul.f32 %v940, %v956
  %v963 = vmul.f32 %v941, %v956
  %v964 = vmul.f32 %v942, %v956
  %v965 = vmul.f32 %v943, %v956
  %v966 = vmul.f32 %v944, %v956
  %v967 = vmul.f32 %v945, %v956
  %v968 = vmul.f32 %v946, %v956
  %v969 = vmul.f32 %v947, %v956
  %v970 = vmul.f32 %v948, %v956
  %v971 = vmul.f32 %v949, %v956
  %v972 = vmul.f32 %v950, %v956
  %v973 = vld [vmem:[%s4] sm:$0x1]
  %v975 = vlaneseq
  %v976 = vshrl.u32 %v975, 7
  %v977 = vsub.s32 0, %v976
  %v978 = vrot.slane %v973, %v977
  %v980 = vadd.f32 %v958, %v978
  %v981 = vadd.f32 %v959, %v978
  %v982 = vadd.f32 %v960, %v978
  %v983 = vadd.f32 %v961, %v978
  %v984 = vadd.f32 %v962, %v978
  %v985 = vadd.f32 %v963, %v978
  %v986 = vadd.f32 %v964, %v978
  %v987 = vadd.f32 %v965, %v978
  %v988 = vadd.f32 %v966, %v978
  %v989 = vadd.f32 %v967, %v978
  %v990 = vadd.f32 %v968, %v978
  %v991 = vadd.f32 %v969, %v978
  %v992 = vadd.f32 %v970, %v978
  %v993 = vadd.f32 %v971, %v978
  %v994 = vadd.f32 %v972, %v978
  %s995 = scalar_lea.vmem %s5, 120
  %996 = vst [vmem:[%s995] sm:$0xff] %v980
  %997 = vst [vmem:[%s995 + $0x8] sm:$0xff] %v981
  %998 = vst [vmem:[%s995 + $0x10] sm:$0xff] %v982
  %999 = vst [vmem:[%s995 + $0x18] sm:$0xff] %v983
  %1000 = vst [vmem:[%s995 + $0x20] sm:$0xff] %v984
  %1001 = vst [vmem:[%s995 + $0x28] sm:$0xff] %v985
  %1002 = vst [vmem:[%s995 + $0x30] sm:$0xff] %v986
  %1003 = vst [vmem:[%s995 + $0x38] sm:$0xff] %v987
  %1004 = vst [vmem:[%s995 + $0x40] sm:$0xff] %v988
  %1005 = vst [vmem:[%s995 + $0x48] sm:$0xff] %v989
  %1006 = vst [vmem:[%s995 + $0x50] sm:$0xff] %v990
  %1007 = vst [vmem:[%s995 + $0x58] sm:$0xff] %v991
  %1008 = vst [vmem:[%s995 + $0x60] sm:$0xff] %v992
  %1009 = vst [vmem:[%s995 + $0x68] sm:$0xff] %v993
  %1010 = vst [vmem:[%s995 + $0x70] sm:$0xff] %v994
  // Predicated region
  $region22: #{_lambda_.27} parent=0 // pred_check
    _
  $region23: #{_lambda_.27} parent=0 // pred_check_branch
    %1012 = sbr.rel (0) target = $region25
  $region24: #{_lambda_.27} parent=0 // pred_region
    _
  $region25: #{_lambda_.27} parent=0 // pred_fallthru
    _
  // Predicated region
  $region26: #{_lambda_.27} parent=0 // pred_check
    _
  $region27: #{_lambda_.27} parent=0 // pred_check_branch
    %1014 = sbr.rel (0) target = $region29
  $region28: #{_lambda_.27} parent=0 // pred_region
    _
  $region29: #{_lambda_.27} parent=0 // pred_fallthru
    _

// kernel: _lambda_.29
$region0: #{_lambda_.29}
  #allocation0 [shape = 'u32[]', space=smem, size = 0x4, offset = 0x4, fixed_abs, tag = 'smem constant byte address 0x4 - core index']
  #allocation1 [shape = 'u32[144,128]{1,0:T(1,128)}', space=vmem, size = 0x12000, scoped, tag = 'internal scratch']
  %s0 = inlined_call_operand.vmem [shape: bf16[2,56,128], index: 0, kind: input, shape index: {}]
  %s1 = inlined_call_operand.vmem [shape: bf16[128,128], index: 1, kind: input, shape index: {}]
  %s2 = inlined_call_operand.vmem [shape: f32[1,128], index: 2, kind: input, shape index: {}]
  %s3 = inlined_call_operand.vmem [shape: f32[1,128], index: 3, kind: input, shape index: {}]
  %s4 = inlined_call_operand.vmem [shape: f32[1,128], index: 4, kind: input, shape index: {}]
  %s5 = inlined_call_operand.vmem [shape: f32[2,56,128], index: 5, kind: output, shape index: {}]
  %s6 = sld [smem:[#allocation0]]
  $region30: #{_lambda_.29} parent=0
    _
  %s8 = ssub.s32 1, %s6
  %s9 = scalar_select 0, %s8, %s6
  // Predicated region
  $region2: #{_lambda_.29} parent=0 // pred_check
    _
  $region3: #{_lambda_.29} parent=0 // pred_check_branch
    %11 = sbr.rel (0) target = $region5
  $region4: #{_lambda_.29} parent=0 // pred_region
    _
  $region5: #{_lambda_.29} parent=0 // pred_fallthru
    _
  // Predicated region
  $region6: #{_lambda_.29} parent=0 // pred_check
    _
  $region7: #{_lambda_.29} parent=0 // pred_check_branch
    %13 = sbr.rel (0) target = $region9
  $region8: #{_lambda_.29} parent=0 // pred_region
    _
  $region9: #{_lambda_.29} parent=0 // pred_fallthru
    _
  // Predicated region
  $region10: #{_lambda_.29} parent=0 // pred_check
    _
  $region11: #{_lambda_.29} parent=0 // pred_check_branch
    %15 = sbr.rel (0) target = $region13
  $region12: #{_lambda_.29} parent=0 // pred_region
    _
  $region13: #{_lambda_.29} parent=0 // pred_fallthru
    _
  // Predicated region
  $region14: #{_lambda_.29} parent=0 // pred_check
    _
  $region15: #{_lambda_.29} parent=0 // pred_check_branch
    %17 = sbr.rel (0) target = $region17
  $region16: #{_lambda_.29} parent=0 // pred_region
    _
  $region17: #{_lambda_.29} parent=0 // pred_fallthru
    _
  // Predicated region
  $region18: #{_lambda_.29} parent=0 // pred_check
    _
  $region19: #{_lambda_.29} parent=0 // pred_check_branch
    %19 = sbr.rel (0) target = $region21
  $region20: #{_lambda_.29} parent=0 // pred_region
    _
  $region21: #{_lambda_.29} parent=0 // pred_fallthru
    _
  %v21 = vld [vmem:[%s1] sm:$0xf]
  %v22 = vld [vmem:[%s1 + $0x4] sm:$0xf]
  %v23 = vld [vmem:[%s1 + $0x8] sm:$0xf]
  %v24 = vld [vmem:[%s1 + $0xc] sm:$0xf]
  %v25 = vld [vmem:[%s1 + $0x10] sm:$0xf]
  %v26 = vld [vmem:[%s1 + $0x14] sm:$0xf]
  %v27 = vld [vmem:[%s1 + $0x18] sm:$0xf]
  %v28 = vld [vmem:[%s1 + $0x1c] sm:$0xf]
  %v29 = vld [vmem:[%s1 + $0x20] sm:$0xf]
  %v30 = vld [vmem:[%s1 + $0x24] sm:$0xf]
  %v31 = vld [vmem:[%s1 + $0x28] sm:$0xf]
  %v32 = vld [vmem:[%s1 + $0x2c] sm:$0xf]
  %v33 = vld [vmem:[%s1 + $0x30] sm:$0xf]
  %v34 = vld [vmem:[%s1 + $0x34] sm:$0xf]
  %v35 = vld [vmem:[%s1 + $0x38] sm:$0xf]
  %v36 = vld [vmem:[%s1 + $0x3c] sm:$0xf]
  %v37 = vld [vmem:[%s2] sm:$0x1]
  %v38 = vld [vmem:[%s0] sm:$0xf]
  %v39 = vld [vmem:[%s0 + $0x4] sm:$0xf]
  %v40 = vld [vmem:[%s0 + $0x8] sm:$0xf]
  %v41 = vld [vmem:[%s0 + $0xc] sm:$0xf]
  %v42 = vld [vmem:[%s0 + $0x10] sm:$0xf]
  %v43 = vld [vmem:[%s0 + $0x14] sm:$0xf]
  %v44 = vld [vmem:[%s0 + $0x18] sm:$0xf]
  %v46 = vlaneseq
  %v47 = vshrl.u32 %v46, 7
  %v48 = vsub.s32 0, %v47
  %v49 = vrot.slane %v37, %v48
  %v58 = vunpack.c.l.b16 %v38
  %v59 = vunpack.c.l.b16 %v39
  %v60 = vunpack.c.l.b16 %v40
  %v61 = vunpack.c.l.b16 %v41
  %v62 = vunpack.c.l.b16 %v42
  %v63 = vunpack.c.l.b16 %v43
  %v64 = vunpack.c.l.b16 %v44
  %v65 = vpack.c.b16 %v59, %v58
  %v66 = vpack.c.b16 %v61, %v60
  %v67 = vpack.c.b16 %v63, %v62
  %v68 = vpack.c.b16 %v64, %v64
  %v89 = vunpack.c.l.b16 %v21
  %v90 = vunpack.c.l.b16 %v22
  %v91 = vunpack.c.l.b16 %v23
  %v92 = vunpack.c.l.b16 %v24
  %v93 = vunpack.c.l.b16 %v25
  %v94 = vunpack.c.l.b16 %v26
  %v95 = vunpack.c.l.b16 %v27
  %v96 = vunpack.c.l.b16 %v28
  %v97 = vunpack.c.l.b16 %v29
  %v98 = vunpack.c.l.b16 %v30
  %v99 = vunpack.c.l.b16 %v31
  %v100 = vunpack.c.l.b16 %v32
  %v101 = vunpack.c.l.b16 %v33
  %v102 = vunpack.c.l.b16 %v34
  %v103 = vunpack.c.l.b16 %v35
  %v104 = vunpack.c.l.b16 %v36
  %v105 = vpack.c.b16 %v90, %v89
  %v106 = vpack.c.b16 %v92, %v91
  %v107 = vpack.c.b16 %v94, %v93
  %v108 = vpack.c.b16 %v96, %v95
  %v109 = vpack.c.b16 %v98, %v97
  %v110 = vpack.c.b16 %v100, %v99
  %v111 = vpack.c.b16 %v102, %v101
  %v112 = vpack.c.b16 %v104, %v103
  %121 = vmatprep.subr.bf16.mxu0 0
  %122 = vmatpush1.bf16.msra.mxu0 %v112
  %123 = vmatprep.subr.bf16.mxu0 0
  %124 = vmatpush1.bf16.msra.mxu0 %v111
  %125 = vmatprep.subr.bf16.mxu0 0
  %126 = vmatpush1.bf16.msra.mxu0 %v110
  %127 = vmatprep.subr.bf16.mxu0 0
  %128 = vmatpush1.bf16.msra.mxu0 %v109
  %129 = vmatprep.subr.bf16.mxu0 0
  %130 = vmatpush1.bf16.msra.mxu0 %v108
  %131 = vmatprep.subr.bf16.mxu0 0
  %132 = vmatpush1.bf16.msra.mxu0 %v107
  %133 = vmatprep.subr.bf16.mxu0 0
  %134 = vmatpush1.bf16.msra.mxu0 %v106
  %135 = vmatprep.subr.bf16.mxu0 0
  %136 = vmatpush1.bf16.msra.mxu0 %v105
  %137 = vmatprep.subr.bf16.mxu0 0
  %138 = vmatpush2.bf16.msra.mxu0 0
  %139 = vmatprep.subr.bf16.mxu0 0
  %140 = vmatpush2.bf16.msra.mxu0 0
  %141 = vmatprep.subr.bf16.mxu0 0
  %142 = vmatpush2.bf16.msra.mxu0 0
  %143 = vmatprep.subr.bf16.mxu0 0
  %144 = vmatpush2.bf16.msra.mxu0 0
  %145 = vmatprep.subr.bf16.mxu0 0
  %146 = vmatpush2.bf16.msra.mxu0 0
  %147 = vmatprep.subr.bf16.mxu0 0
  %148 = vmatpush2.bf16.msra.mxu0 0
  %149 = vmatprep.subr.bf16.mxu0 0
  %150 = vmatpush2.bf16.msra.mxu0 0
  %151 = vmatprep.subr.bf16.mxu0 0
  %152 = vmatpush2.bf16.msra.mxu0 0
  %153 = vmatprep.mubr.bf16.mxu0 0
  %154 = vmatmul.mubr.bf16.gmra.mxu0 %v65
  %v155 = vpop.f32.mrf.mxu0
  %v156 = vadd.f32 %v49, %v155
  %v157 = vpop.f32.mrf.mxu0
  %v158 = vpop.f32.mrf.mxu0
  %v159 = vadd.f32 %v49, %v158
  %v160 = vpop.f32.mrf.mxu0
  %161 = vmatprep.mubr.bf16.mxu0 0
  %162 = vmatmul.mubr.bf16.gmra.mxu0 %v66
  %v163 = vpop.f32.mrf.mxu0
  %v164 = vadd.f32 %v49, %v163
  %v165 = vpop.f32.mrf.mxu0
  %v166 = vpop.f32.mrf.mxu0
  %v167 = vadd.f32 %v49, %v166
  %v168 = vpop.f32.mrf.mxu0
  %169 = vmatprep.mubr.bf16.mxu0 0
  %170 = vmatmul.mubr.bf16.gmra.mxu0 %v67
  %v171 = vpop.f32.mrf.mxu0
  %v172 = vadd.f32 %v49, %v171
  %v173 = vpop.f32.mrf.mxu0
  %v174 = vpop.f32.mrf.mxu0
  %v175 = vadd.f32 %v49, %v174
  %v176 = vpop.f32.mrf.mxu0
  %177 = vmatprep.mubr.bf16.mxu0 0
  %178 = vmatmul.mubr.bf16.gmra.mxu0 %v68
  %v179 = vpop.f32.mrf.mxu0
  %v180 = vadd.f32 %v49, %v179
  %v181 = vpop.f32.mrf.mxu0
  %v182 = vpop.f32.mrf.mxu0
  %v183 = vpop.f32.mrf.mxu0
  %184 = vdwg.mxu0
  %vm185 = vcmp.gt.f32.partialorder %v156, 0.0
  %vm186 = vcmp.gt.f32.partialorder %v159, 0.0
  %vm187 = vcmp.gt.f32.partialorder %v164, 0.0
  %vm188 = vcmp.gt.f32.partialorder %v167, 0.0
  %vm189 = vcmp.gt.f32.partialorder %v172, 0.0
  %vm190 = vcmp.gt.f32.partialorder %v175, 0.0
  %vm191 = vcmp.gt.f32.partialorder %v180, 0.0
  %v192 = vmin.f32 %v156, 0.0
  %v193 = vmin.f32 %v159, 0.0
  %v194 = vmin.f32 %v164, 0.0
  %v195 = vmin.f32 %v167, 0.0
  %v196 = vmin.f32 %v172, 0.0
  %v197 = vmin.f32 %v175, 0.0
  %v198 = vmin.f32 %v180, 0.0
  %v199 = vmul.f32 %v192, 1.442695
  %v200 = vpow.pop %v199
  %v201 = vmul.f32 %v193, 1.442695
  %v202 = vpow.pop %v201
  %v203 = vmul.f32 %v194, 1.442695
  %v204 = vpow.pop %v203
  %v205 = vmul.f32 %v195, 1.442695
  %v206 = vpow.pop %v205
  %v207 = vmul.f32 %v196, 1.442695
  %v208 = vpow.pop %v207
  %v209 = vmul.f32 %v197, 1.442695
  %v210 = vpow.pop %v209
  %v211 = vmul.f32 %v198, 1.442695
  %v212 = vpow.pop %v211
  %v213 = vsub.f32 %v200, 1.0
  %v214 = vsub.f32 %v202, 1.0
  %v215 = vsub.f32 %v204, 1.0
  %v216 = vsub.f32 %v206, 1.0
  %v217 = vsub.f32 %v208, 1.0
  %v218 = vsub.f32 %v210, 1.0
  %v219 = vsub.f32 %v212, 1.0
  %v220 = vsel %vm185, %v156, %v213
  %v221 = vsel %vm186, %v159, %v214
  %v222 = vsel %vm187, %v164, %v215
  %v223 = vsel %vm188, %v167, %v216
  %v224 = vsel %vm189, %v172, %v217
  %v225 = vsel %vm190, %v175, %v218
  %v226 = vsel %vm191, %v180, %v219
  %v227 = vadd.f32 %v220, %v221
  %v228 = vadd.f32 %v227, %v222
  %v229 = vadd.f32 %v228, %v223
  %v230 = vadd.f32 %v229, %v224
  %v231 = vadd.f32 %v230, %v225
  %v232 = vadd.f32 %v231, %v226
  %v233 = vrot.slane %v232, 4
  %v234 = vadd.f32 %v232, %v233
  %v235 = vrot.slane %v234, 2
  %v236 = vadd.f32 %v234, %v235
  %v237 = vrot.slane %v236, 1
  %v238 = vadd.f32 %v236, %v237
  %v239 = vrcp.pop 56.0
  %v240 = vmul.f32 %v238, %v239
  %v241 = vsub.f32 %v220, %v240
  %v242 = vsub.f32 %v221, %v240
  %v243 = vsub.f32 %v222, %v240
  %v244 = vsub.f32 %v223, %v240
  %v245 = vsub.f32 %v224, %v240
  %v246 = vsub.f32 %v225, %v240
  %v247 = vsub.f32 %v226, %v240
  %v248 = vmul.f32 %v241, %v241
  %v249 = vmul.f32 %v242, %v242
  %v250 = vmul.f32 %v243, %v243
  %v251 = vmul.f32 %v244, %v244
  %v252 = vmul.f32 %v245, %v245
  %v253 = vmul.f32 %v246, %v246
  %v254 = vmul.f32 %v247, %v247
  %v255 = vadd.f32 %v248, %v249
  %v256 = vadd.f32 %v255, %v250
  %v257 = vadd.f32 %v256, %v251
  %v258 = vadd.f32 %v257, %v252
  %v259 = vadd.f32 %v258, %v253
  %v260 = vadd.f32 %v259, %v254
  %v261 = vrot.slane %v260, 4
  %v262 = vadd.f32 %v260, %v261
  %v263 = vrot.slane %v262, 2
  %v264 = vadd.f32 %v262, %v263
  %v265 = vrot.slane %v264, 1
  %v266 = vadd.f32 %v264, %v265
  %v267 = vmul.f32 %v266, %v239
  %v268 = vadd.f32 %v267, 1e-08
  %v269 = vrsqrt.pop %v268
  %v270 = vmul.f32 %v241, %v269
  %v271 = vmul.f32 %v242, %v269
  %v272 = vmul.f32 %v243, %v269
  %v273 = vmul.f32 %v244, %v269
  %v274 = vmul.f32 %v245, %v269
  %v275 = vmul.f32 %v246, %v269
  %v276 = vmul.f32 %v247, %v269
  %v277 = vld [vmem:[%s3] sm:$0x1]
  %v279 = vlaneseq
  %v280 = vshrl.u32 %v279, 7
  %v281 = vsub.s32 0, %v280
  %v282 = vrot.slane %v277, %v281
  %v284 = vmul.f32 %v270, %v282
  %v285 = vmul.f32 %v271, %v282
  %v286 = vmul.f32 %v272, %v282
  %v287 = vmul.f32 %v273, %v282
  %v288 = vmul.f32 %v274, %v282
  %v289 = vmul.f32 %v275, %v282
  %v290 = vmul.f32 %v276, %v282
  %v291 = vld [vmem:[%s4] sm:$0x1]
  %v293 = vlaneseq
  %v294 = vshrl.u32 %v293, 7
  %v295 = vsub.s32 0, %v294
  %v296 = vrot.slane %v291, %v295
  %v298 = vadd.f32 %v284, %v296
  %v299 = vadd.f32 %v285, %v296
  %v300 = vadd.f32 %v286, %v296
  %v301 = vadd.f32 %v287, %v296
  %v302 = vadd.f32 %v288, %v296
  %v303 = vadd.f32 %v289, %v296
  %v304 = vadd.f32 %v290, %v296
  %305 = vst [vmem:[%s5] sm:$0xff] %v298
  %306 = vst [vmem:[%s5 + $0x8] sm:$0xff] %v299
  %307 = vst [vmem:[%s5 + $0x10] sm:$0xff] %v300
  %308 = vst [vmem:[%s5 + $0x18] sm:$0xff] %v301
  %309 = vst [vmem:[%s5 + $0x20] sm:$0xff] %v302
  %310 = vst [vmem:[%s5 + $0x28] sm:$0xff] %v303
  %311 = vst [vmem:[%s5 + $0x30] sm:$0xff] %v304
  %s312 = scalar_lea.vmem %s0, 28
  %v313 = vld [vmem:[%s312] sm:$0xf]
  %v314 = vld [vmem:[%s312 + $0x4] sm:$0xf]
  %v315 = vld [vmem:[%s312 + $0x8] sm:$0xf]
  %v316 = vld [vmem:[%s312 + $0xc] sm:$0xf]
  %v317 = vld [vmem:[%s312 + $0x10] sm:$0xf]
  %v318 = vld [vmem:[%s312 + $0x14] sm:$0xf]
  %v319 = vld [vmem:[%s312 + $0x18] sm:$0xf]
  %v327 = vunpack.c.l.b16 %v313
  %v328 = vunpack.c.l.b16 %v314
  %v329 = vunpack.c.l.b16 %v315
  %v330 = vunpack.c.l.b16 %v316
  %v331 = vunpack.c.l.b16 %v317
  %v332 = vunpack.c.l.b16 %v318
  %v333 = vunpack.c.l.b16 %v319
  %v334 = vpack.c.b16 %v328, %v327
  %v335 = vpack.c.b16 %v330, %v329
  %v336 = vpack.c.b16 %v332, %v331
  %v337 = vpack.c.b16 %v333, %v333
  %342 = vmatprep.subr.bf16.mxu0 0
  %343 = vmatpush1.bf16.msra.mxu0 %v112
  %344 = vmatprep.subr.bf16.mxu0 0
  %345 = vmatpush1.bf16.msra.mxu0 %v111
  %346 = vmatprep.subr.bf16.mxu0 0
  %347 = vmatpush1.bf16.msra.mxu0 %v110
  %348 = vmatprep.subr.bf16.mxu0 0
  %349 = vmatpush1.bf16.msra.mxu0 %v109
  %350 = vmatprep.subr.bf16.mxu0 0
  %351 = vmatpush1.bf16.msra.mxu0 %v108
  %352 = vmatprep.subr.bf16.mxu0 0
  %353 = vmatpush1.bf16.msra.mxu0 %v107
  %354 = vmatprep.subr.bf16.mxu0 0
  %355 = vmatpush1.bf16.msra.mxu0 %v106
  %356 = vmatprep.subr.bf16.mxu0 0
  %357 = vmatpush1.bf16.msra.mxu0 %v105
  %358 = vmatprep.subr.bf16.mxu0 0
  %359 = vmatpush2.bf16.msra.mxu0 0
  %360 = vmatprep.subr.bf16.mxu0 0
  %361 = vmatpush2.bf16.msra.mxu0 0
  %362 = vmatprep.subr.bf16.mxu0 0
  %363 = vmatpush2.bf16.msra.mxu0 0
  %364 = vmatprep.subr.bf16.mxu0 0
  %365 = vmatpush2.bf16.msra.mxu0 0
  %366 = vmatprep.subr.bf16.mxu0 0
  %367 = vmatpush2.bf16.msra.mxu0 0
  %368 = vmatprep.subr.bf16.mxu0 0
  %369 = vmatpush2.bf16.msra.mxu0 0
  %370 = vmatprep.subr.bf16.mxu0 0
  %371 = vmatpush2.bf16.msra.mxu0 0
  %372 = vmatprep.subr.bf16.mxu0 0
  %373 = vmatpush2.bf16.msra.mxu0 0
  %374 = vmatprep.mubr.bf16.mxu0 0
  %375 = vmatmul.mubr.bf16.gmra.mxu0 %v334
  %v376 = vpop.f32.mrf.mxu0
  %v377 = vadd.f32 %v49, %v376
  %v378 = vpop.f32.mrf.mxu0
  %v379 = vpop.f32.mrf.mxu0
  %v380 = vadd.f32 %v49, %v379
  %v381 = vpop.f32.mrf.mxu0
  %382 = vmatprep.mubr.bf16.mxu0 0
  %383 = vmatmul.mubr.bf16.gmra.mxu0 %v335
  %v384 = vpop.f32.mrf.mxu0
  %v385 = vadd.f32 %v49, %v384
  %v386 = vpop.f32.mrf.mxu0
  %v387 = vpop.f32.mrf.mxu0
  %v388 = vadd.f32 %v49, %v387
  %v389 = vpop.f32.mrf.mxu0
  %390 = vmatprep.mubr.bf16.mxu0 0
  %391 = vmatmul.mubr.bf16.gmra.mxu0 %v336
  %v392 = vpop.f32.mrf.mxu0
  %v393 = vadd.f32 %v49, %v392
  %v394 = vpop.f32.mrf.mxu0
  %v395 = vpop.f32.mrf.mxu0
  %v396 = vadd.f32 %v49, %v395
  %v397 = vpop.f32.mrf.mxu0
  %398 = vmatprep.mubr.bf16.mxu0 0
  %399 = vmatmul.mubr.bf16.gmra.mxu0 %v337
  %v400 = vpop.f32.mrf.mxu0
  %v401 = vadd.f32 %v49, %v400
  %v402 = vpop.f32.mrf.mxu0
  %v403 = vpop.f32.mrf.mxu0
  %v404 = vpop.f32.mrf.mxu0
  %405 = vdwg.mxu0
  %vm406 = vcmp.gt.f32.partialorder %v377, 0.0
  %vm407 = vcmp.gt.f32.partialorder %v380, 0.0
  %vm408 = vcmp.gt.f32.partialorder %v385, 0.0
  %vm409 = vcmp.gt.f32.partialorder %v388, 0.0
  %vm410 = vcmp.gt.f32.partialorder %v393, 0.0
  %vm411 = vcmp.gt.f32.partialorder %v396, 0.0
  %vm412 = vcmp.gt.f32.partialorder %v401, 0.0
  %v413 = vmin.f32 %v377, 0.0
  %v414 = vmin.f32 %v380, 0.0
  %v415 = vmin.f32 %v385, 0.0
  %v416 = vmin.f32 %v388, 0.0
  %v417 = vmin.f32 %v393, 0.0
  %v418 = vmin.f32 %v396, 0.0
  %v419 = vmin.f32 %v401, 0.0
  %v420 = vmul.f32 %v413, 1.442695
  %v421 = vpow.pop %v420
  %v422 = vmul.f32 %v414, 1.442695
  %v423 = vpow.pop %v422
  %v424 = vmul.f32 %v415, 1.442695
  %v425 = vpow.pop %v424
  %v426 = vmul.f32 %v416, 1.442695
  %v427 = vpow.pop %v426
  %v428 = vmul.f32 %v417, 1.442695
  %v429 = vpow.pop %v428
  %v430 = vmul.f32 %v418, 1.442695
  %v431 = vpow.pop %v430
  %v432 = vmul.f32 %v419, 1.442695
  %v433 = vpow.pop %v432
  %v434 = vsub.f32 %v421, 1.0
  %v435 = vsub.f32 %v423, 1.0
  %v436 = vsub.f32 %v425, 1.0
  %v437 = vsub.f32 %v427, 1.0
  %v438 = vsub.f32 %v429, 1.0
  %v439 = vsub.f32 %v431, 1.0
  %v440 = vsub.f32 %v433, 1.0
  %v441 = vsel %vm406, %v377, %v434
  %v442 = vsel %vm407, %v380, %v435
  %v443 = vsel %vm408, %v385, %v436
  %v444 = vsel %vm409, %v388, %v437
  %v445 = vsel %vm410, %v393, %v438
  %v446 = vsel %vm411, %v396, %v439
  %v447 = vsel %vm412, %v401, %v440
  %v448 = vadd.f32 %v441, %v442
  %v449 = vadd.f32 %v448, %v443
  %v450 = vadd.f32 %v449, %v444
  %v451 = vadd.f32 %v450, %v445
  %v452 = vadd.f32 %v451, %v446
  %v453 = vadd.f32 %v452, %v447
  %v454 = vrot.slane %v453, 4
  %v455 = vadd.f32 %v453, %v454
  %v456 = vrot.slane %v455, 2
  %v457 = vadd.f32 %v455, %v456
  %v458 = vrot.slane %v457, 1
  %v459 = vadd.f32 %v457, %v458
  %v460 = vmul.f32 %v459, %v239
  %v461 = vsub.f32 %v441, %v460
  %v462 = vsub.f32 %v442, %v460
  %v463 = vsub.f32 %v443, %v460
  %v464 = vsub.f32 %v444, %v460
  %v465 = vsub.f32 %v445, %v460
  %v466 = vsub.f32 %v446, %v460
  %v467 = vsub.f32 %v447, %v460
  %v468 = vmul.f32 %v461, %v461
  %v469 = vmul.f32 %v462, %v462
  %v470 = vmul.f32 %v463, %v463
  %v471 = vmul.f32 %v464, %v464
  %v472 = vmul.f32 %v465, %v465
  %v473 = vmul.f32 %v466, %v466
  %v474 = vmul.f32 %v467, %v467
  %v475 = vadd.f32 %v468, %v469
  %v476 = vadd.f32 %v475, %v470
  %v477 = vadd.f32 %v476, %v471
  %v478 = vadd.f32 %v477, %v472
  %v479 = vadd.f32 %v478, %v473
  %v480 = vadd.f32 %v479, %v474
  %v481 = vrot.slane %v480, 4
  %v482 = vadd.f32 %v480, %v481
  %v483 = vrot.slane %v482, 2
  %v484 = vadd.f32 %v482, %v483
  %v485 = vrot.slane %v484, 1
  %v486 = vadd.f32 %v484, %v485
  %v487 = vmul.f32 %v486, %v239
  %v488 = vadd.f32 %v487, 1e-08
  %v489 = vrsqrt.pop %v488
  %v490 = vmul.f32 %v461, %v489
  %v491 = vmul.f32 %v462, %v489
  %v492 = vmul.f32 %v463, %v489
  %v493 = vmul.f32 %v464, %v489
  %v494 = vmul.f32 %v465, %v489
  %v495 = vmul.f32 %v466, %v489
  %v496 = vmul.f32 %v467, %v489
  %v497 = vld [vmem:[%s3] sm:$0x1]
  %v499 = vlaneseq
  %v500 = vshrl.u32 %v499, 7
  %v501 = vsub.s32 0, %v500
  %v502 = vrot.slane %v497, %v501
  %v504 = vmul.f32 %v490, %v502
  %v505 = vmul.f32 %v491, %v502
  %v506 = vmul.f32 %v492, %v502
  %v507 = vmul.f32 %v493, %v502
  %v508 = vmul.f32 %v494, %v502
  %v509 = vmul.f32 %v495, %v502
  %v510 = vmul.f32 %v496, %v502
  %v511 = vld [vmem:[%s4] sm:$0x1]
  %v513 = vlaneseq
  %v514 = vshrl.u32 %v513, 7
  %v515 = vsub.s32 0, %v514
  %v516 = vrot.slane %v511, %v515
  %v518 = vadd.f32 %v504, %v516
  %v519 = vadd.f32 %v505, %v516
  %v520 = vadd.f32 %v506, %v516
  %v521 = vadd.f32 %v507, %v516
  %v522 = vadd.f32 %v508, %v516
  %v523 = vadd.f32 %v509, %v516
  %v524 = vadd.f32 %v510, %v516
  %s525 = scalar_lea.vmem %s5, 56
  %526 = vst [vmem:[%s525] sm:$0xff] %v518
  %527 = vst [vmem:[%s525 + $0x8] sm:$0xff] %v519
  %528 = vst [vmem:[%s525 + $0x10] sm:$0xff] %v520
  %529 = vst [vmem:[%s525 + $0x18] sm:$0xff] %v521
  %530 = vst [vmem:[%s525 + $0x20] sm:$0xff] %v522
  %531 = vst [vmem:[%s525 + $0x28] sm:$0xff] %v523
  %532 = vst [vmem:[%s525 + $0x30] sm:$0xff] %v524
  // Predicated region
  $region22: #{_lambda_.29} parent=0 // pred_check
    _
  $region23: #{_lambda_.29} parent=0 // pred_check_branch
    %534 = sbr.rel (0) target = $region25
  $region24: #{_lambda_.29} parent=0 // pred_region
    _
  $region25: #{_lambda_.29} parent=0 // pred_fallthru
    _
  // Predicated region
  $region26: #{_lambda_.29} parent=0 // pred_check
    _
  $region27: #{_lambda_.29} parent=0 // pred_check_branch
    %536 = sbr.rel (0) target = $region29
  $region28: #{_lambda_.29} parent=0 // pred_region
    _
  $region29: #{_lambda_.29} parent=0 // pred_fallthru
    _

// kernel: _lambda_.30
$region0: #{_lambda_.30}
  #allocation0 [shape = 'u32[]', space=smem, size = 0x4, offset = 0x4, fixed_abs, tag = 'smem constant byte address 0x4 - core index']
  #allocation1 [shape = 'u32[144,128]{1,0:T(1,128)}', space=vmem, size = 0x12000, scoped, tag = 'internal scratch']
  %s0 = inlined_call_operand.vmem [shape: bf16[2,24,256], index: 0, kind: input, shape index: {}]
  %s1 = inlined_call_operand.vmem [shape: bf16[256,128], index: 1, kind: input, shape index: {}]
  %s2 = inlined_call_operand.vmem [shape: f32[1,128], index: 2, kind: input, shape index: {}]
  %s3 = inlined_call_operand.vmem [shape: f32[1,128], index: 3, kind: input, shape index: {}]
  %s4 = inlined_call_operand.vmem [shape: f32[1,128], index: 4, kind: input, shape index: {}]
  %s5 = inlined_call_operand.vmem [shape: f32[2,24,128], index: 5, kind: output, shape index: {}]
  %s6 = sld [smem:[#allocation0]]
  $region30: #{_lambda_.30} parent=0
    _
  %s8 = ssub.s32 1, %s6
  %s9 = scalar_select 0, %s8, %s6
  // Predicated region
  $region2: #{_lambda_.30} parent=0 // pred_check
    _
  $region3: #{_lambda_.30} parent=0 // pred_check_branch
    %11 = sbr.rel (0) target = $region5
  $region4: #{_lambda_.30} parent=0 // pred_region
    _
  $region5: #{_lambda_.30} parent=0 // pred_fallthru
    _
  // Predicated region
  $region6: #{_lambda_.30} parent=0 // pred_check
    _
  $region7: #{_lambda_.30} parent=0 // pred_check_branch
    %13 = sbr.rel (0) target = $region9
  $region8: #{_lambda_.30} parent=0 // pred_region
    _
  $region9: #{_lambda_.30} parent=0 // pred_fallthru
    _
  // Predicated region
  $region10: #{_lambda_.30} parent=0 // pred_check
    _
  $region11: #{_lambda_.30} parent=0 // pred_check_branch
    %15 = sbr.rel (0) target = $region13
  $region12: #{_lambda_.30} parent=0 // pred_region
    _
  $region13: #{_lambda_.30} parent=0 // pred_fallthru
    _
  // Predicated region
  $region14: #{_lambda_.30} parent=0 // pred_check
    _
  $region15: #{_lambda_.30} parent=0 // pred_check_branch
    %17 = sbr.rel (0) target = $region17
  $region16: #{_lambda_.30} parent=0 // pred_region
    _
  $region17: #{_lambda_.30} parent=0 // pred_fallthru
    _
  // Predicated region
  $region18: #{_lambda_.30} parent=0 // pred_check
    _
  $region19: #{_lambda_.30} parent=0 // pred_check_branch
    %19 = sbr.rel (0) target = $region21
  $region20: #{_lambda_.30} parent=0 // pred_region
    _
  $region21: #{_lambda_.30} parent=0 // pred_fallthru
    _
  %v21 = vld [vmem:[%s1] sm:$0xf]
  %v22 = vld [vmem:[%s1 + $0x4] sm:$0xf]
  %v23 = vld [vmem:[%s1 + $0x8] sm:$0xf]
  %v24 = vld [vmem:[%s1 + $0xc] sm:$0xf]
  %v25 = vld [vmem:[%s1 + $0x10] sm:$0xf]
  %v26 = vld [vmem:[%s1 + $0x14] sm:$0xf]
  %v27 = vld [vmem:[%s1 + $0x18] sm:$0xf]
  %v28 = vld [vmem:[%s1 + $0x1c] sm:$0xf]
  %v29 = vld [vmem:[%s1 + $0x20] sm:$0xf]
  %v30 = vld [vmem:[%s1 + $0x24] sm:$0xf]
  %v31 = vld [vmem:[%s1 + $0x28] sm:$0xf]
  %v32 = vld [vmem:[%s1 + $0x2c] sm:$0xf]
  %v33 = vld [vmem:[%s1 + $0x30] sm:$0xf]
  %v34 = vld [vmem:[%s1 + $0x34] sm:$0xf]
  %v35 = vld [vmem:[%s1 + $0x38] sm:$0xf]
  %v36 = vld [vmem:[%s1 + $0x3c] sm:$0xf]
  %v37 = vld [vmem:[%s1 + $0x40] sm:$0xf]
  %v38 = vld [vmem:[%s1 + $0x44] sm:$0xf]
  %v39 = vld [vmem:[%s1 + $0x48] sm:$0xf]
  %v40 = vld [vmem:[%s1 + $0x4c] sm:$0xf]
  %v41 = vld [vmem:[%s1 + $0x50] sm:$0xf]
  %v42 = vld [vmem:[%s1 + $0x54] sm:$0xf]
  %v43 = vld [vmem:[%s1 + $0x58] sm:$0xf]
  %v44 = vld [vmem:[%s1 + $0x5c] sm:$0xf]
  %v45 = vld [vmem:[%s1 + $0x60] sm:$0xf]
  %v46 = vld [vmem:[%s1 + $0x64] sm:$0xf]
  %v47 = vld [vmem:[%s1 + $0x68] sm:$0xf]
  %v48 = vld [vmem:[%s1 + $0x6c] sm:$0xf]
  %v49 = vld [vmem:[%s1 + $0x70] sm:$0xf]
  %v50 = vld [vmem:[%s1 + $0x74] sm:$0xf]
  %v51 = vld [vmem:[%s1 + $0x78] sm:$0xf]
  %v52 = vld [vmem:[%s1 + $0x7c] sm:$0xf]
  %v53 = vld [vmem:[%s2] sm:$0x1]
  %v54 = vld [vmem:[%s0] sm:$0xff]
  %v55 = vld [vmem:[%s0 + $0x8] sm:$0xff]
  %v56 = vld [vmem:[%s0 + $0x10] sm:$0xff]
  %v58 = vlaneseq
  %v59 = vshrl.u32 %v58, 7
  %v60 = vsub.s32 0, %v59
  %v61 = vrot.slane %v53, %v60
  %v66 = vunpack.c.l.b16 %v54
  %v67 = vunpack.c.h.b16 %v54
  %v68 = vunpack.c.l.b16 %v55
  %v69 = vunpack.c.h.b16 %v55
  %v70 = vunpack.c.l.b16 %v56
  %v71 = vunpack.c.h.b16 %v56
  %v72 = vpack.c.b16 %v68, %v66
  %v73 = vpack.c.b16 %v69, %v67
  %v74 = vpack.c.b16 %v70, %v70
  %v75 = vpack.c.b16 %v71, %v71
  %v112 = vunpack.c.l.b16 %v21
  %v113 = vunpack.c.l.b16 %v22
  %v114 = vunpack.c.l.b16 %v23
  %v115 = vunpack.c.l.b16 %v24
  %v116 = vunpack.c.l.b16 %v25
  %v117 = vunpack.c.l.b16 %v26
  %v118 = vunpack.c.l.b16 %v27
  %v119 = vunpack.c.l.b16 %v28
  %v120 = vunpack.c.l.b16 %v29
  %v121 = vunpack.c.l.b16 %v30
  %v122 = vunpack.c.l.b16 %v31
  %v123 = vunpack.c.l.b16 %v32
  %v124 = vunpack.c.l.b16 %v33
  %v125 = vunpack.c.l.b16 %v34
  %v126 = vunpack.c.l.b16 %v35
  %v127 = vunpack.c.l.b16 %v36
  %v128 = vunpack.c.l.b16 %v37
  %v129 = vunpack.c.l.b16 %v38
  %v130 = vunpack.c.l.b16 %v39
  %v131 = vunpack.c.l.b16 %v40
  %v132 = vunpack.c.l.b16 %v41
  %v133 = vunpack.c.l.b16 %v42
  %v134 = vunpack.c.l.b16 %v43
  %v135 = vunpack.c.l.b16 %v44
  %v136 = vunpack.c.l.b16 %v45
  %v137 = vunpack.c.l.b16 %v46
  %v138 = vunpack.c.l.b16 %v47
  %v139 = vunpack.c.l.b16 %v48
  %v140 = vunpack.c.l.b16 %v49
  %v141 = vunpack.c.l.b16 %v50
  %v142 = vunpack.c.l.b16 %v51
  %v143 = vunpack.c.l.b16 %v52
  %v144 = vpack.c.b16 %v113, %v112
  %v145 = vpack.c.b16 %v115, %v114
  %v146 = vpack.c.b16 %v117, %v116
  %v147 = vpack.c.b16 %v119, %v118
  %v148 = vpack.c.b16 %v121, %v120
  %v149 = vpack.c.b16 %v123, %v122
  %v150 = vpack.c.b16 %v125, %v124
  %v151 = vpack.c.b16 %v127, %v126
  %v152 = vpack.c.b16 %v129, %v128
  %v153 = vpack.c.b16 %v131, %v130
  %v154 = vpack.c.b16 %v133, %v132
  %v155 = vpack.c.b16 %v135, %v134
  %v156 = vpack.c.b16 %v137, %v136
  %v157 = vpack.c.b16 %v139, %v138
  %v158 = vpack.c.b16 %v141, %v140
  %v159 = vpack.c.b16 %v143, %v142
  %176 = vmatprep.subr.bf16.mxu0 0
  %177 = vmatpush1.bf16.msra.mxu0 %v151
  %178 = vmatprep.subr.bf16.mxu0 0
  %179 = vmatpush1.bf16.msra.mxu0 %v150
  %180 = vmatprep.subr.bf16.mxu0 0
  %181 = vmatpush1.bf16.msra.mxu0 %v149
  %182 = vmatprep.subr.bf16.mxu0 0
  %183 = vmatpush1.bf16.msra.mxu0 %v148
  %184 = vmatprep.subr.bf16.mxu0 0
  %185 = vmatpush1.bf16.msra.mxu0 %v147
  %186 = vmatprep.subr.bf16.mxu0 0
  %187 = vmatpush1.bf16.msra.mxu0 %v146
  %188 = vmatprep.subr.bf16.mxu0 0
  %189 = vmatpush1.bf16.msra.mxu0 %v145
  %190 = vmatprep.subr.bf16.mxu0 0
  %191 = vmatpush1.bf16.msra.mxu0 %v144
  %192 = vmatprep.subr.bf16.mxu0 0
  %193 = vmatpush2.bf16.msra.mxu0 %v159
  %194 = vmatprep.subr.bf16.mxu0 0
  %195 = vmatpush2.bf16.msra.mxu0 %v158
  %196 = vmatprep.subr.bf16.mxu0 0
  %197 = vmatpush2.bf16.msra.mxu0 %v157
  %198 = vmatprep.subr.bf16.mxu0 0
  %199 = vmatpush2.bf16.msra.mxu0 %v156
  %200 = vmatprep.subr.bf16.mxu0 0
  %201 = vmatpush2.bf16.msra.mxu0 %v155
  %202 = vmatprep.subr.bf16.mxu0 0
  %203 = vmatpush2.bf16.msra.mxu0 %v154
  %204 = vmatprep.subr.bf16.mxu0 0
  %205 = vmatpush2.bf16.msra.mxu0 %v153
  %206 = vmatprep.subr.bf16.mxu0 0
  %207 = vmatpush2.bf16.msra.mxu0 %v152
  %208 = vmatprep.mubr.bf16.mxu0 %v73
  %209 = vmatmul.mubr.bf16.gmra.mxu0 %v72
  %v210 = vpop.f32.mrf.mxu0
  %v211 = vadd.f32 %v61, %v210
  %v212 = vpop.f32.mrf.mxu0
  %v213 = vpop.f32.mrf.mxu0
  %v214 = vadd.f32 %v61, %v213
  %v215 = vpop.f32.mrf.mxu0
  %216 = vmatprep.mubr.bf16.mxu0 %v75
  %217 = vmatmul.mubr.bf16.gmra.mxu0 %v74
  %v218 = vpop.f32.mrf.mxu0
  %v219 = vadd.f32 %v61, %v218
  %v220 = vpop.f32.mrf.mxu0
  %v221 = vpop.f32.mrf.mxu0
  %v222 = vpop.f32.mrf.mxu0
  %223 = vdwg.mxu0
  %vm224 = vcmp.gt.f32.partialorder %v211, 0.0
  %vm225 = vcmp.gt.f32.partialorder %v214, 0.0
  %vm226 = vcmp.gt.f32.partialorder %v219, 0.0
  %v227 = vmin.f32 %v211, 0.0
  %v228 = vmin.f32 %v214, 0.0
  %v229 = vmin.f32 %v219, 0.0
  %v230 = vmul.f32 %v227, 1.442695
  %v231 = vpow.pop %v230
  %v232 = vmul.f32 %v228, 1.442695
  %v233 = vpow.pop %v232
  %v234 = vmul.f32 %v229, 1.442695
  %v235 = vpow.pop %v234
  %v236 = vsub.f32 %v231, 1.0
  %v237 = vsub.f32 %v233, 1.0
  %v238 = vsub.f32 %v235, 1.0
  %v239 = vsel %vm224, %v211, %v236
  %v240 = vsel %vm225, %v214, %v237
  %v241 = vsel %vm226, %v219, %v238
  %v242 = vadd.f32 %v239, %v240
  %v243 = vadd.f32 %v242, %v241
  %v244 = vrot.slane %v243, 4
  %v245 = vadd.f32 %v243, %v244
  %v246 = vrot.slane %v245, 2
  %v247 = vadd.f32 %v245, %v246
  %v248 = vrot.slane %v247, 1
  %v249 = vadd.f32 %v247, %v248
  %v250 = vrcp.pop 24.0
  %v251 = vmul.f32 %v249, %v250
  %v252 = vsub.f32 %v239, %v251
  %v253 = vsub.f32 %v240, %v251
  %v254 = vsub.f32 %v241, %v251
  %v255 = vmul.f32 %v252, %v252
  %v256 = vmul.f32 %v253, %v253
  %v257 = vmul.f32 %v254, %v254
  %v258 = vadd.f32 %v255, %v256
  %v259 = vadd.f32 %v258, %v257
  %v260 = vrot.slane %v259, 4
  %v261 = vadd.f32 %v259, %v260
  %v262 = vrot.slane %v261, 2
  %v263 = vadd.f32 %v261, %v262
  %v264 = vrot.slane %v263, 1
  %v265 = vadd.f32 %v263, %v264
  %v266 = vmul.f32 %v265, %v250
  %v267 = vadd.f32 %v266, 1e-08
  %v268 = vrsqrt.pop %v267
  %v269 = vmul.f32 %v252, %v268
  %v270 = vmul.f32 %v253, %v268
  %v271 = vmul.f32 %v254, %v268
  %v272 = vld [vmem:[%s3] sm:$0x1]
  %v274 = vlaneseq
  %v275 = vshrl.u32 %v274, 7
  %v276 = vsub.s32 0, %v275
  %v277 = vrot.slane %v272, %v276
  %v279 = vmul.f32 %v269, %v277
  %v280 = vmul.f32 %v270, %v277
  %v281 = vmul.f32 %v271, %v277
  %v282 = vld [vmem:[%s4] sm:$0x1]
  %v284 = vlaneseq
  %v285 = vshrl.u32 %v284, 7
  %v286 = vsub.s32 0, %v285
  %v287 = vrot.slane %v282, %v286
  %v289 = vadd.f32 %v279, %v287
  %v290 = vadd.f32 %v280, %v287
  %v291 = vadd.f32 %v281, %v287
  %292 = vst [vmem:[%s5] sm:$0xff] %v289
  %293 = vst [vmem:[%s5 + $0x8] sm:$0xff] %v290
  %294 = vst [vmem:[%s5 + $0x10] sm:$0xff] %v291
  %s295 = scalar_lea.vmem %s0, 24
  %v296 = vld [vmem:[%s295] sm:$0xff]
  %v297 = vld [vmem:[%s295 + $0x8] sm:$0xff]
  %v298 = vld [vmem:[%s295 + $0x10] sm:$0xff]
  %v302 = vunpack.c.l.b16 %v296
  %v303 = vunpack.c.h.b16 %v296
  %v304 = vunpack.c.l.b16 %v297
  %v305 = vunpack.c.h.b16 %v297
  %v306 = vunpack.c.l.b16 %v298
  %v307 = vunpack.c.h.b16 %v298
  %v308 = vpack.c.b16 %v304, %v302
  %v309 = vpack.c.b16 %v305, %v303
  %v310 = vpack.c.b16 %v306, %v306
  %v311 = vpack.c.b16 %v307, %v307
  %316 = vmatprep.subr.bf16.mxu0 0
  %317 = vmatpush1.bf16.msra.mxu0 %v151
  %318 = vmatprep.subr.bf16.mxu0 0
  %319 = vmatpush1.bf16.msra.mxu0 %v150
  %320 = vmatprep.subr.bf16.mxu0 0
  %321 = vmatpush1.bf16.msra.mxu0 %v149
  %322 = vmatprep.subr.bf16.mxu0 0
  %323 = vmatpush1.bf16.msra.mxu0 %v148
  %324 = vmatprep.subr.bf16.mxu0 0
  %325 = vmatpush1.bf16.msra.mxu0 %v147
  %326 = vmatprep.subr.bf16.mxu0 0
  %327 = vmatpush1.bf16.msra.mxu0 %v146
  %328 = vmatprep.subr.bf16.mxu0 0
  %329 = vmatpush1.bf16.msra.mxu0 %v145
  %330 = vmatprep.subr.bf16.mxu0 0
  %331 = vmatpush1.bf16.msra.mxu0 %v144
  %332 = vmatprep.subr.bf16.mxu0 0
  %333 = vmatpush2.bf16.msra.mxu0 %v159
  %334 = vmatprep.subr.bf16.mxu0 0
  %335 = vmatpush2.bf16.msra.mxu0 %v158
  %336 = vmatprep.subr.bf16.mxu0 0
  %337 = vmatpush2.bf16.msra.mxu0 %v157
  %338 = vmatprep.subr.bf16.mxu0 0
  %339 = vmatpush2.bf16.msra.mxu0 %v156
  %340 = vmatprep.subr.bf16.mxu0 0
  %341 = vmatpush2.bf16.msra.mxu0 %v155
  %342 = vmatprep.subr.bf16.mxu0 0
  %343 = vmatpush2.bf16.msra.mxu0 %v154
  %344 = vmatprep.subr.bf16.mxu0 0
  %345 = vmatpush2.bf16.msra.mxu0 %v153
  %346 = vmatprep.subr.bf16.mxu0 0
  %347 = vmatpush2.bf16.msra.mxu0 %v152
  %348 = vmatprep.mubr.bf16.mxu0 %v309
  %349 = vmatmul.mubr.bf16.gmra.mxu0 %v308
  %v350 = vpop.f32.mrf.mxu0
  %v351 = vadd.f32 %v61, %v350
  %v352 = vpop.f32.mrf.mxu0
  %v353 = vpop.f32.mrf.mxu0
  %v354 = vadd.f32 %v61, %v353
  %v355 = vpop.f32.mrf.mxu0
  %356 = vmatprep.mubr.bf16.mxu0 %v311
  %357 = vmatmul.mubr.bf16.gmra.mxu0 %v310
  %v358 = vpop.f32.mrf.mxu0
  %v359 = vadd.f32 %v61, %v358
  %v360 = vpop.f32.mrf.mxu0
  %v361 = vpop.f32.mrf.mxu0
  %v362 = vpop.f32.mrf.mxu0
  %363 = vdwg.mxu0
  %vm364 = vcmp.gt.f32.partialorder %v351, 0.0
  %vm365 = vcmp.gt.f32.partialorder %v354, 0.0
  %vm366 = vcmp.gt.f32.partialorder %v359, 0.0
  %v367 = vmin.f32 %v351, 0.0
  %v368 = vmin.f32 %v354, 0.0
  %v369 = vmin.f32 %v359, 0.0
  %v370 = vmul.f32 %v367, 1.442695
  %v371 = vpow.pop %v370
  %v372 = vmul.f32 %v368, 1.442695
  %v373 = vpow.pop %v372
  %v374 = vmul.f32 %v369, 1.442695
  %v375 = vpow.pop %v374
  %v376 = vsub.f32 %v371, 1.0
  %v377 = vsub.f32 %v373, 1.0
  %v378 = vsub.f32 %v375, 1.0
  %v379 = vsel %vm364, %v351, %v376
  %v380 = vsel %vm365, %v354, %v377
  %v381 = vsel %vm366, %v359, %v378
  %v382 = vadd.f32 %v379, %v380
  %v383 = vadd.f32 %v382, %v381
  %v384 = vrot.slane %v383, 4
  %v385 = vadd.f32 %v383, %v384
  %v386 = vrot.slane %v385, 2
  %v387 = vadd.f32 %v385, %v386
  %v388 = vrot.slane %v387, 1
  %v389 = vadd.f32 %v387, %v388
  %v390 = vmul.f32 %v389, %v250
  %v391 = vsub.f32 %v379, %v390
  %v392 = vsub.f32 %v380, %v390
  %v393 = vsub.f32 %v381, %v390
  %v394 = vmul.f32 %v391, %v391
  %v395 = vmul.f32 %v392, %v392
  %v396 = vmul.f32 %v393, %v393
  %v397 = vadd.f32 %v394, %v395
  %v398 = vadd.f32 %v397, %v396
  %v399 = vrot.slane %v398, 4
  %v400 = vadd.f32 %v398, %v399
  %v401 = vrot.slane %v400, 2
  %v402 = vadd.f32 %v400, %v401
  %v403 = vrot.slane %v402, 1
  %v404 = vadd.f32 %v402, %v403
  %v405 = vmul.f32 %v404, %v250
  %v406 = vadd.f32 %v405, 1e-08
  %v407 = vrsqrt.pop %v406
  %v408 = vmul.f32 %v391, %v407
  %v409 = vmul.f32 %v392, %v407
  %v410 = vmul.f32 %v393, %v407
  %v411 = vld [vmem:[%s3] sm:$0x1]
  %v413 = vlaneseq
  %v414 = vshrl.u32 %v413, 7
  %v415 = vsub.s32 0, %v414
  %v416 = vrot.slane %v411, %v415
  %v418 = vmul.f32 %v408, %v416
  %v419 = vmul.f32 %v409, %v416
  %v420 = vmul.f32 %v410, %v416
  %v421 = vld [vmem:[%s4] sm:$0x1]
  %v423 = vlaneseq
  %v424 = vshrl.u32 %v423, 7
  %v425 = vsub.s32 0, %v424
  %v426 = vrot.slane %v421, %v425
  %v428 = vadd.f32 %v418, %v426
  %v429 = vadd.f32 %v419, %v426
  %v430 = vadd.f32 %v420, %v426
  %s431 = scalar_lea.vmem %s5, 24
  %432 = vst [vmem:[%s431] sm:$0xff] %v428
  %433 = vst [vmem:[%s431 + $0x8] sm:$0xff] %v429
  %434 = vst [vmem:[%s431 + $0x10] sm:$0xff] %v430
  // Predicated region
  $region22: #{_lambda_.30} parent=0 // pred_check
    _
  $region23: #{_lambda_.30} parent=0 // pred_check_branch
    %436 = sbr.rel (0) target = $region25
  $region24: #{_lambda_.30} parent=0 // pred_region
    _
  $region25: #{_lambda_.30} parent=0 // pred_fallthru
    _
  // Predicated region
  $region26: #{_lambda_.30} parent=0 // pred_check
    _
  $region27: #{_lambda_.30} parent=0 // pred_check_branch
    %438 = sbr.rel (0) target = $region29
  $region28: #{_lambda_.30} parent=0 // pred_region
    _
  $region29: #{_lambda_.30} parent=0 // pred_fallthru
    _

// kernel: _lambda_.31
$region0: #{_lambda_.31}
  #allocation0 [shape = 'u32[]', space=smem, size = 0x4, offset = 0x4, fixed_abs, tag = 'smem constant byte address 0x4 - core index']
  #allocation1 [shape = 'u32[144,128]{1,0:T(1,128)}', space=vmem, size = 0x12000, scoped, tag = 'internal scratch']
  %s0 = inlined_call_operand.vmem [shape: bf16[2,8,384], index: 0, kind: input, shape index: {}]
  %s1 = inlined_call_operand.vmem [shape: bf16[384,128], index: 1, kind: input, shape index: {}]
  %s2 = inlined_call_operand.vmem [shape: f32[1,128], index: 2, kind: input, shape index: {}]
  %s3 = inlined_call_operand.vmem [shape: f32[1,128], index: 3, kind: input, shape index: {}]
  %s4 = inlined_call_operand.vmem [shape: f32[1,128], index: 4, kind: input, shape index: {}]
  %s5 = inlined_call_operand.vmem [shape: f32[2,8,128], index: 5, kind: output, shape index: {}]
  %s6 = sld [smem:[#allocation0]]
  $region30: #{_lambda_.31} parent=0
    _
  %s8 = ssub.s32 1, %s6
  %s9 = scalar_select 0, %s8, %s6
  // Predicated region
  $region2: #{_lambda_.31} parent=0 // pred_check
    _
  $region3: #{_lambda_.31} parent=0 // pred_check_branch
    %11 = sbr.rel (0) target = $region5
  $region4: #{_lambda_.31} parent=0 // pred_region
    _
  $region5: #{_lambda_.31} parent=0 // pred_fallthru
    _
  // Predicated region
  $region6: #{_lambda_.31} parent=0 // pred_check
    _
  $region7: #{_lambda_.31} parent=0 // pred_check_branch
    %13 = sbr.rel (0) target = $region9
  $region8: #{_lambda_.31} parent=0 // pred_region
    _
  $region9: #{_lambda_.31} parent=0 // pred_fallthru
    _
  // Predicated region
  $region10: #{_lambda_.31} parent=0 // pred_check
    _
  $region11: #{_lambda_.31} parent=0 // pred_check_branch
    %15 = sbr.rel (0) target = $region13
  $region12: #{_lambda_.31} parent=0 // pred_region
    _
  $region13: #{_lambda_.31} parent=0 // pred_fallthru
    _
  // Predicated region
  $region14: #{_lambda_.31} parent=0 // pred_check
    _
  $region15: #{_lambda_.31} parent=0 // pred_check_branch
    %17 = sbr.rel (0) target = $region17
  $region16: #{_lambda_.31} parent=0 // pred_region
    _
  $region17: #{_lambda_.31} parent=0 // pred_fallthru
    _
  // Predicated region
  $region18: #{_lambda_.31} parent=0 // pred_check
    _
  $region19: #{_lambda_.31} parent=0 // pred_check_branch
    %19 = sbr.rel (0) target = $region21
  $region20: #{_lambda_.31} parent=0 // pred_region
    _
  $region21: #{_lambda_.31} parent=0 // pred_fallthru
    _
  %v21 = vld [vmem:[%s1] sm:$0xf]
  %v22 = vld [vmem:[%s1 + $0x4] sm:$0xf]
  %v23 = vld [vmem:[%s1 + $0x8] sm:$0xf]
  %v24 = vld [vmem:[%s1 + $0xc] sm:$0xf]
  %v25 = vld [vmem:[%s1 + $0x10] sm:$0xf]
  %v26 = vld [vmem:[%s1 + $0x14] sm:$0xf]
  %v27 = vld [vmem:[%s1 + $0x18] sm:$0xf]
  %v28 = vld [vmem:[%s1 + $0x1c] sm:$0xf]
  %v29 = vld [vmem:[%s1 + $0x20] sm:$0xf]
  %v30 = vld [vmem:[%s1 + $0x24] sm:$0xf]
  %v31 = vld [vmem:[%s1 + $0x28] sm:$0xf]
  %v32 = vld [vmem:[%s1 + $0x2c] sm:$0xf]
  %v33 = vld [vmem:[%s1 + $0x30] sm:$0xf]
  %v34 = vld [vmem:[%s1 + $0x34] sm:$0xf]
  %v35 = vld [vmem:[%s1 + $0x38] sm:$0xf]
  %v36 = vld [vmem:[%s1 + $0x3c] sm:$0xf]
  %v37 = vld [vmem:[%s1 + $0x40] sm:$0xf]
  %v38 = vld [vmem:[%s1 + $0x44] sm:$0xf]
  %v39 = vld [vmem:[%s1 + $0x48] sm:$0xf]
  %v40 = vld [vmem:[%s1 + $0x4c] sm:$0xf]
  %v41 = vld [vmem:[%s1 + $0x50] sm:$0xf]
  %v42 = vld [vmem:[%s1 + $0x54] sm:$0xf]
  %v43 = vld [vmem:[%s1 + $0x58] sm:$0xf]
  %v44 = vld [vmem:[%s1 + $0x5c] sm:$0xf]
  %v45 = vld [vmem:[%s1 + $0x60] sm:$0xf]
  %v46 = vld [vmem:[%s1 + $0x64] sm:$0xf]
  %v47 = vld [vmem:[%s1 + $0x68] sm:$0xf]
  %v48 = vld [vmem:[%s1 + $0x6c] sm:$0xf]
  %v49 = vld [vmem:[%s1 + $0x70] sm:$0xf]
  %v50 = vld [vmem:[%s1 + $0x74] sm:$0xf]
  %v51 = vld [vmem:[%s1 + $0x78] sm:$0xf]
  %v52 = vld [vmem:[%s1 + $0x7c] sm:$0xf]
  %v53 = vld [vmem:[%s1 + $0x80] sm:$0xf]
  %v54 = vld [vmem:[%s1 + $0x84] sm:$0xf]
  %v55 = vld [vmem:[%s1 + $0x88] sm:$0xf]
  %v56 = vld [vmem:[%s1 + $0x8c] sm:$0xf]
  %v57 = vld [vmem:[%s1 + $0x90] sm:$0xf]
  %v58 = vld [vmem:[%s1 + $0x94] sm:$0xf]
  %v59 = vld [vmem:[%s1 + $0x98] sm:$0xf]
  %v60 = vld [vmem:[%s1 + $0x9c] sm:$0xf]
  %v61 = vld [vmem:[%s1 + $0xa0] sm:$0xf]
  %v62 = vld [vmem:[%s1 + $0xa4] sm:$0xf]
  %v63 = vld [vmem:[%s1 + $0xa8] sm:$0xf]
  %v64 = vld [vmem:[%s1 + $0xac] sm:$0xf]
  %v65 = vld [vmem:[%s1 + $0xb0] sm:$0xf]
  %v66 = vld [vmem:[%s1 + $0xb4] sm:$0xf]
  %v67 = vld [vmem:[%s1 + $0xb8] sm:$0xf]
  %v68 = vld [vmem:[%s1 + $0xbc] sm:$0xf]
  %v69 = vld [vmem:[%s2] sm:$0x1]
  %v70 = vld [vmem:[%s0] sm:$0xff]
  %v71 = vld [vmem:[%s0 + $0x8] sm:$0xf]
  %v73 = vlaneseq
  %v74 = vshrl.u32 %v73, 7
  %v75 = vsub.s32 0, %v74
  %v76 = vrot.slane %v69, %v75
  %v80 = vunpack.c.l.b16 %v70
  %v81 = vunpack.c.h.b16 %v70
  %v82 = vunpack.c.l.b16 %v71
  %v83 = vpack.c.b16 %v80, %v80
  %v84 = vpack.c.b16 %v81, %v81
  %v85 = vpack.c.b16 %v82, %v82
  %v137 = vunpack.c.l.b16 %v21
  %v138 = vunpack.c.l.b16 %v22
  %v139 = vunpack.c.l.b16 %v23
  %v140 = vunpack.c.l.b16 %v24
  %v141 = vunpack.c.l.b16 %v25
  %v142 = vunpack.c.l.b16 %v26
  %v143 = vunpack.c.l.b16 %v27
  %v144 = vunpack.c.l.b16 %v28
  %v145 = vunpack.c.l.b16 %v29
  %v146 = vunpack.c.l.b16 %v30
  %v147 = vunpack.c.l.b16 %v31
  %v148 = vunpack.c.l.b16 %v32
  %v149 = vunpack.c.l.b16 %v33
  %v150 = vunpack.c.l.b16 %v34
  %v151 = vunpack.c.l.b16 %v35
  %v152 = vunpack.c.l.b16 %v36
  %v153 = vunpack.c.l.b16 %v37
  %v154 = vunpack.c.l.b16 %v38
  %v155 = vunpack.c.l.b16 %v39
  %v156 = vunpack.c.l.b16 %v40
  %v157 = vunpack.c.l.b16 %v41
  %v158 = vunpack.c.l.b16 %v42
  %v159 = vunpack.c.l.b16 %v43
  %v160 = vunpack.c.l.b16 %v44
  %v161 = vunpack.c.l.b16 %v45
  %v162 = vunpack.c.l.b16 %v46
  %v163 = vunpack.c.l.b16 %v47
  %v164 = vunpack.c.l.b16 %v48
  %v165 = vunpack.c.l.b16 %v49
  %v166 = vunpack.c.l.b16 %v50
  %v167 = vunpack.c.l.b16 %v51
  %v168 = vunpack.c.l.b16 %v52
  %v169 = vunpack.c.l.b16 %v53
  %v170 = vunpack.c.l.b16 %v54
  %v171 = vunpack.c.l.b16 %v55
  %v172 = vunpack.c.l.b16 %v56
  %v173 = vunpack.c.l.b16 %v57
  %v174 = vunpack.c.l.b16 %v58
  %v175 = vunpack.c.l.b16 %v59
  %v176 = vunpack.c.l.b16 %v60
  %v177 = vunpack.c.l.b16 %v61
  %v178 = vunpack.c.l.b16 %v62
  %v179 = vunpack.c.l.b16 %v63
  %v180 = vunpack.c.l.b16 %v64
  %v181 = vunpack.c.l.b16 %v65
  %v182 = vunpack.c.l.b16 %v66
  %v183 = vunpack.c.l.b16 %v67
  %v184 = vunpack.c.l.b16 %v68
  %v185 = vpack.c.b16 %v138, %v137
  %v186 = vpack.c.b16 %v140, %v139
  %v187 = vpack.c.b16 %v142, %v141
  %v188 = vpack.c.b16 %v144, %v143
  %v189 = vpack.c.b16 %v146, %v145
  %v190 = vpack.c.b16 %v148, %v147
  %v191 = vpack.c.b16 %v150, %v149
  %v192 = vpack.c.b16 %v152, %v151
  %v193 = vpack.c.b16 %v154, %v153
  %v194 = vpack.c.b16 %v156, %v155
  %v195 = vpack.c.b16 %v158, %v157
  %v196 = vpack.c.b16 %v160, %v159
  %v197 = vpack.c.b16 %v162, %v161
  %v198 = vpack.c.b16 %v164, %v163
  %v199 = vpack.c.b16 %v166, %v165
  %v200 = vpack.c.b16 %v168, %v167
  %v201 = vpack.c.b16 %v170, %v169
  %v202 = vpack.c.b16 %v172, %v171
  %v203 = vpack.c.b16 %v174, %v173
  %v204 = vpack.c.b16 %v176, %v175
  %v205 = vpack.c.b16 %v178, %v177
  %v206 = vpack.c.b16 %v180, %v179
  %v207 = vpack.c.b16 %v182, %v181
  %v208 = vpack.c.b16 %v184, %v183
  %233 = vmatprep.subr.bf16.mxu0 0
  %234 = vmatpush1.bf16.msra.mxu0 %v192
  %235 = vmatprep.subr.bf16.mxu0 0
  %236 = vmatpush1.bf16.msra.mxu0 %v191
  %237 = vmatprep.subr.bf16.mxu0 0
  %238 = vmatpush1.bf16.msra.mxu0 %v190
  %239 = vmatprep.subr.bf16.mxu0 0
  %240 = vmatpush1.bf16.msra.mxu0 %v189
  %241 = vmatprep.subr.bf16.mxu0 0
  %242 = vmatpush1.bf16.msra.mxu0 %v188
  %243 = vmatprep.subr.bf16.mxu0 0
  %244 = vmatpush1.bf16.msra.mxu0 %v187
  %245 = vmatprep.subr.bf16.mxu0 0
  %246 = vmatpush1.bf16.msra.mxu0 %v186
  %247 = vmatprep.subr.bf16.mxu0 0
  %248 = vmatpush1.bf16.msra.mxu0 %v185
  %249 = vmatprep.subr.bf16.mxu0 0
  %250 = vmatpush2.bf16.msra.mxu0 %v200
  %251 = vmatprep.subr.bf16.mxu0 0
  %252 = vmatpush2.bf16.msra.mxu0 %v199
  %253 = vmatprep.subr.bf16.mxu0 0
  %254 = vmatpush2.bf16.msra.mxu0 %v198
  %255 = vmatprep.subr.bf16.mxu0 0
  %256 = vmatpush2.bf16.msra.mxu0 %v197
  %257 = vmatprep.subr.bf16.mxu0 0
  %258 = vmatpush2.bf16.msra.mxu0 %v196
  %259 = vmatprep.subr.bf16.mxu0 0
  %260 = vmatpush2.bf16.msra.mxu0 %v195
  %261 = vmatprep.subr.bf16.mxu0 0
  %262 = vmatpush2.bf16.msra.mxu0 %v194
  %263 = vmatprep.subr.bf16.mxu0 0
  %264 = vmatpush2.bf16.msra.mxu0 %v193
  %265 = vmatprep.mubr.bf16.mxu0 %v84
  %266 = vmatmul.mubr.bf16.gmra.mxu0 %v83
  %v267 = vpop.f32.mrf.mxu0
  %v268 = vadd.f32 %v76, %v267
  %v269 = vpop.f32.mrf.mxu0
  %v270 = vpop.f32.mrf.mxu0
  %v271 = vpop.f32.mrf.mxu0
  %272 = vdwg.mxu0
  %273 = vmatprep.subr.bf16.mxu0 0
  %274 = vmatpush1.bf16.msra.mxu0 %v208
  %275 = vmatprep.subr.bf16.mxu0 0
  %276 = vmatpush1.bf16.msra.mxu0 %v207
  %277 = vmatprep.subr.bf16.mxu0 0
  %278 = vmatpush1.bf16.msra.mxu0 %v206
  %279 = vmatprep.subr.bf16.mxu0 0
  %280 = vmatpush1.bf16.msra.mxu0 %v205
  %281 = vmatprep.subr.bf16.mxu0 0
  %282 = vmatpush1.bf16.msra.mxu0 %v204
  %283 = vmatprep.subr.bf16.mxu0 0
  %284 = vmatpush1.bf16.msra.mxu0 %v203
  %285 = vmatprep.subr.bf16.mxu0 0
  %286 = vmatpush1.bf16.msra.mxu0 %v202
  %287 = vmatprep.subr.bf16.mxu0 0
  %288 = vmatpush1.bf16.msra.mxu0 %v201
  %289 = vmatprep.subr.bf16.mxu0 0
  %290 = vmatpush2.bf16.msra.mxu0 0
  %291 = vmatprep.subr.bf16.mxu0 0
  %292 = vmatpush2.bf16.msra.mxu0 0
  %293 = vmatprep.subr.bf16.mxu0 0
  %294 = vmatpush2.bf16.msra.mxu0 0
  %295 = vmatprep.subr.bf16.mxu0 0
  %296 = vmatpush2.bf16.msra.mxu0 0
  %297 = vmatprep.subr.bf16.mxu0 0
  %298 = vmatpush2.bf16.msra.mxu0 0
  %299 = vmatprep.subr.bf16.mxu0 0
  %300 = vmatpush2.bf16.msra.mxu0 0
  %301 = vmatprep.subr.bf16.mxu0 0
  %302 = vmatpush2.bf16.msra.mxu0 0
  %303 = vmatprep.subr.bf16.mxu0 0
  %304 = vmatpush2.bf16.msra.mxu0 0
  %305 = vmatprep.mubr.bf16.mxu0 0
  %306 = vmatmul.mubr.bf16.gmra.mxu0 %v85
  %v307 = vpop.f32.mrf.mxu0
  %v308 = vadd.f32 %v268, %v307
  %v309 = vpop.f32.mrf.mxu0
  %v310 = vpop.f32.mrf.mxu0
  %v311 = vpop.f32.mrf.mxu0
  %312 = vdwg.mxu0
  %vm313 = vcmp.gt.f32.partialorder %v308, 0.0
  %v314 = vmin.f32 %v308, 0.0
  %v315 = vmul.f32 %v314, 1.442695
  %v316 = vpow.pop %v315
  %v317 = vsub.f32 %v316, 1.0
  %v318 = vsel %vm313, %v308, %v317
  %v319 = vrot.slane %v318, 4
  %v320 = vadd.f32 %v318, %v319
  %v321 = vrot.slane %v320, 2
  %v322 = vadd.f32 %v320, %v321
  %v323 = vrot.slane %v322, 1
  %v324 = vadd.f32 %v322, %v323
  %v325 = vrcp.pop 8.0
  %v326 = vmul.f32 %v324, %v325
  %v327 = vsub.f32 %v318, %v326
  %v328 = vmul.f32 %v327, %v327
  %v329 = vrot.slane %v328, 4
  %v330 = vadd.f32 %v328, %v329
  %v331 = vrot.slane %v330, 2
  %v332 = vadd.f32 %v330, %v331
  %v333 = vrot.slane %v332, 1
  %v334 = vadd.f32 %v332, %v333
  %v335 = vmul.f32 %v334, %v325
  %v336 = vadd.f32 %v335, 1e-08
  %v337 = vrsqrt.pop %v336
  %v338 = vmul.f32 %v327, %v337
  %v339 = vld [vmem:[%s3] sm:$0x1]
  %v341 = vlaneseq
  %v342 = vshrl.u32 %v341, 7
  %v343 = vsub.s32 0, %v342
  %v344 = vrot.slane %v339, %v343
  %v346 = vmul.f32 %v338, %v344
  %v347 = vld [vmem:[%s4] sm:$0x1]
  %v349 = vlaneseq
  %v350 = vshrl.u32 %v349, 7
  %v351 = vsub.s32 0, %v350
  %v352 = vrot.slane %v347, %v351
  %v354 = vadd.f32 %v346, %v352
  %355 = vst [vmem:[%s5] sm:$0xff] %v354
  %s356 = scalar_lea.vmem %s0, 12
  %v357 = vld [vmem:[%s356] sm:$0xff]
  %v358 = vld [vmem:[%s356 + $0x8] sm:$0xf]
  %v361 = vunpack.c.l.b16 %v357
  %v362 = vunpack.c.h.b16 %v357
  %v363 = vunpack.c.l.b16 %v358
  %v364 = vpack.c.b16 %v361, %v361
  %v365 = vpack.c.b16 %v362, %v362
  %v366 = vpack.c.b16 %v363, %v363
  %370 = vmatprep.subr.bf16.mxu0 0
  %371 = vmatpush1.bf16.msra.mxu0 %v192
  %372 = vmatprep.subr.bf16.mxu0 0
  %373 = vmatpush1.bf16.msra.mxu0 %v191
  %374 = vmatprep.subr.bf16.mxu0 0
  %375 = vmatpush1.bf16.msra.mxu0 %v190
  %376 = vmatprep.subr.bf16.mxu0 0
  %377 = vmatpush1.bf16.msra.mxu0 %v189
  %378 = vmatprep.subr.bf16.mxu0 0
  %379 = vmatpush1.bf16.msra.mxu0 %v188
  %380 = vmatprep.subr.bf16.mxu0 0
  %381 = vmatpush1.bf16.msra.mxu0 %v187
  %382 = vmatprep.subr.bf16.mxu0 0
  %383 = vmatpush1.bf16.msra.mxu0 %v186
  %384 = vmatprep.subr.bf16.mxu0 0
  %385 = vmatpush1.bf16.msra.mxu0 %v185
  %386 = vmatprep.subr.bf16.mxu0 0
  %387 = vmatpush2.bf16.msra.mxu0 %v200
  %388 = vmatprep.subr.bf16.mxu0 0
  %389 = vmatpush2.bf16.msra.mxu0 %v199
  %390 = vmatprep.subr.bf16.mxu0 0
  %391 = vmatpush2.bf16.msra.mxu0 %v198
  %392 = vmatprep.subr.bf16.mxu0 0
  %393 = vmatpush2.bf16.msra.mxu0 %v197
  %394 = vmatprep.subr.bf16.mxu0 0
  %395 = vmatpush2.bf16.msra.mxu0 %v196
  %396 = vmatprep.subr.bf16.mxu0 0
  %397 = vmatpush2.bf16.msra.mxu0 %v195
  %398 = vmatprep.subr.bf16.mxu0 0
  %399 = vmatpush2.bf16.msra.mxu0 %v194
  %400 = vmatprep.subr.bf16.mxu0 0
  %401 = vmatpush2.bf16.msra.mxu0 %v193
  %402 = vmatprep.mubr.bf16.mxu0 %v365
  %403 = vmatmul.mubr.bf16.gmra.mxu0 %v364
  %v404 = vpop.f32.mrf.mxu0
  %v405 = vadd.f32 %v76, %v404
  %v406 = vpop.f32.mrf.mxu0
  %v407 = vpop.f32.mrf.mxu0
  %v408 = vpop.f32.mrf.mxu0
  %409 = vdwg.mxu0
  %410 = vmatprep.subr.bf16.mxu0 0
  %411 = vmatpush1.bf16.msra.mxu0 %v208
  %412 = vmatprep.subr.bf16.mxu0 0
  %413 = vmatpush1.bf16.msra.mxu0 %v207
  %414 = vmatprep.subr.bf16.mxu0 0
  %415 = vmatpush1.bf16.msra.mxu0 %v206
  %416 = vmatprep.subr.bf16.mxu0 0
  %417 = vmatpush1.bf16.msra.mxu0 %v205
  %418 = vmatprep.subr.bf16.mxu0 0
  %419 = vmatpush1.bf16.msra.mxu0 %v204
  %420 = vmatprep.subr.bf16.mxu0 0
  %421 = vmatpush1.bf16.msra.mxu0 %v203
  %422 = vmatprep.subr.bf16.mxu0 0
  %423 = vmatpush1.bf16.msra.mxu0 %v202
  %424 = vmatprep.subr.bf16.mxu0 0
  %425 = vmatpush1.bf16.msra.mxu0 %v201
  %426 = vmatprep.subr.bf16.mxu0 0
  %427 = vmatpush2.bf16.msra.mxu0 0
  %428 = vmatprep.subr.bf16.mxu0 0
  %429 = vmatpush2.bf16.msra.mxu0 0
  %430 = vmatprep.subr.bf16.mxu0 0
  %431 = vmatpush2.bf16.msra.mxu0 0
  %432 = vmatprep.subr.bf16.mxu0 0
  %433 = vmatpush2.bf16.msra.mxu0 0
  %434 = vmatprep.subr.bf16.mxu0 0
  %435 = vmatpush2.bf16.msra.mxu0 0
  %436 = vmatprep.subr.bf16.mxu0 0
  %437 = vmatpush2.bf16.msra.mxu0 0
  %438 = vmatprep.subr.bf16.mxu0 0
  %439 = vmatpush2.bf16.msra.mxu0 0
  %440 = vmatprep.subr.bf16.mxu0 0
  %441 = vmatpush2.bf16.msra.mxu0 0
  %442 = vmatprep.mubr.bf16.mxu0 0
  %443 = vmatmul.mubr.bf16.gmra.mxu0 %v366
  %v444 = vpop.f32.mrf.mxu0
  %v445 = vadd.f32 %v405, %v444
  %v446 = vpop.f32.mrf.mxu0
  %v447 = vpop.f32.mrf.mxu0
  %v448 = vpop.f32.mrf.mxu0
  %449 = vdwg.mxu0
  %vm450 = vcmp.gt.f32.partialorder %v445, 0.0
  %v451 = vmin.f32 %v445, 0.0
  %v452 = vmul.f32 %v451, 1.442695
  %v453 = vpow.pop %v452
  %v454 = vsub.f32 %v453, 1.0
  %v455 = vsel %vm450, %v445, %v454
  %v456 = vrot.slane %v455, 4
  %v457 = vadd.f32 %v455, %v456
  %v458 = vrot.slane %v457, 2
  %v459 = vadd.f32 %v457, %v458
  %v460 = vrot.slane %v459, 1
  %v461 = vadd.f32 %v459, %v460
  %v462 = vmul.f32 %v461, %v325
  %v463 = vsub.f32 %v455, %v462
  %v464 = vmul.f32 %v463, %v463
  %v465 = vrot.slane %v464, 4
  %v466 = vadd.f32 %v464, %v465
  %v467 = vrot.slane %v466, 2
  %v468 = vadd.f32 %v466, %v467
  %v469 = vrot.slane %v468, 1
  %v470 = vadd.f32 %v468, %v469
  %v471 = vmul.f32 %v470, %v325
  %v472 = vadd.f32 %v471, 1e-08
  %v473 = vrsqrt.pop %v472
  %v474 = vmul.f32 %v463, %v473
  %v475 = vld [vmem:[%s3] sm:$0x1]
  %v477 = vlaneseq
  %v478 = vshrl.u32 %v477, 7
  %v479 = vsub.s32 0, %v478
  %v480 = vrot.slane %v475, %v479
  %v482 = vmul.f32 %v474, %v480
  %v483 = vld [vmem:[%s4] sm:$0x1]
  %v485 = vlaneseq
  %v486 = vshrl.u32 %v485, 7
  %v487 = vsub.s32 0, %v486
  %v488 = vrot.slane %v483, %v487
  %v490 = vadd.f32 %v482, %v488
  %s491 = scalar_lea.vmem %s5, 8
  %492 = vst [vmem:[%s491] sm:$0xff] %v490
  // Predicated region
  $region22: #{_lambda_.31} parent=0 // pred_check
    _
  $region23: #{_lambda_.31} parent=0 // pred_check_branch
    %494 = sbr.rel (0) target = $region25
  $region24: #{_lambda_.31} parent=0 // pred_region
    _
  $region25: #{_lambda_.31} parent=0 // pred_fallthru
    _
  // Predicated region
  $region26: #{_lambda_.31} parent=0 // pred_check
    _
  $region27: #{_lambda_.31} parent=0 // pred_check_branch
    %496 = sbr.rel (0) target = $region29
  $region28: #{_lambda_.31} parent=0 // pred_region
    _
  $region29: #{_lambda_.31} parent=0 // pred_fallthru
    _

// kernel: _lambda_.32
$region0: #{_lambda_.32}
  #allocation0 [shape = 'u32[]', space=smem, size = 0x4, offset = 0x4, fixed_abs, tag = 'smem constant byte address 0x4 - core index']
  #allocation1 [shape = 'u32[144,128]{1,0:T(1,128)}', space=vmem, size = 0x12000, scoped, tag = 'internal scratch']
  #allocation2 [shape = 'f32[10,128]{1,0:T(8,128)}', space=vmem, size = 0x2000, scoped, tag = 'scratch operand']
  %s0 = inlined_call_operand.vmem [shape: f32[2,8,128], index: 0, kind: input, shape index: {}]
  %s1 = inlined_call_operand.vmem [shape: f32[1,128], index: 1, kind: input, shape index: {}]
  %s2 = inlined_call_operand.vmem [shape: f32[1,128], index: 2, kind: input, shape index: {}]
  %s3 = inlined_call_operand.vmem [shape: f32[3,128], index: 3, kind: input, shape index: {}]
  %s4 = inlined_call_operand.vmem [shape: f32[1,128], index: 4, kind: input, shape index: {}]
  %s5 = inlined_call_operand.vmem [shape: bf16[128,128], index: 5, kind: input, shape index: {}]
  %s6 = inlined_call_operand.vmem [shape: f32[1,128], index: 6, kind: input, shape index: {}]
  %s7 = inlined_call_operand.vmem [shape: f32[2,8,128], index: 7, kind: output, shape index: {}]
  %s8 = sld [smem:[#allocation0]]
  $region38: #{_lambda_.32} parent=0
    _
  %s10 = ssub.s32 1, %s8
  %s11 = scalar_select 0, %s10, %s8
  // Predicated region
  $region2: #{_lambda_.32} parent=0 // pred_check
    _
  $region3: #{_lambda_.32} parent=0 // pred_check_branch
    %13 = sbr.rel (0) target = $region5
  $region4: #{_lambda_.32} parent=0 // pred_region
    _
  $region5: #{_lambda_.32} parent=0 // pred_fallthru
    _
  // Predicated region
  $region6: #{_lambda_.32} parent=0 // pred_check
    _
  $region7: #{_lambda_.32} parent=0 // pred_check_branch
    %15 = sbr.rel (0) target = $region9
  $region8: #{_lambda_.32} parent=0 // pred_region
    _
  $region9: #{_lambda_.32} parent=0 // pred_fallthru
    _
  // Predicated region
  $region10: #{_lambda_.32} parent=0 // pred_check
    _
  $region11: #{_lambda_.32} parent=0 // pred_check_branch
    %17 = sbr.rel (0) target = $region13
  $region12: #{_lambda_.32} parent=0 // pred_region
    _
  $region13: #{_lambda_.32} parent=0 // pred_fallthru
    _
  // Predicated region
  $region14: #{_lambda_.32} parent=0 // pred_check
    _
  $region15: #{_lambda_.32} parent=0 // pred_check_branch
    %19 = sbr.rel (0) target = $region17
  $region16: #{_lambda_.32} parent=0 // pred_region
    _
  $region17: #{_lambda_.32} parent=0 // pred_fallthru
    _
  // Predicated region
  $region18: #{_lambda_.32} parent=0 // pred_check
    _
  $region19: #{_lambda_.32} parent=0 // pred_check_branch
    %21 = sbr.rel (0) target = $region21
  $region20: #{_lambda_.32} parent=0 // pred_region
    _
  $region21: #{_lambda_.32} parent=0 // pred_fallthru
    _
  // Predicated region
  $region22: #{_lambda_.32} parent=0 // pred_check
    _
  $region23: #{_lambda_.32} parent=0 // pred_check_branch
    %23 = sbr.rel (0) target = $region25
  $region24: #{_lambda_.32} parent=0 // pred_region
    _
  $region25: #{_lambda_.32} parent=0 // pred_fallthru
    _
  // Predicated region
  $region26: #{_lambda_.32} parent=0 // pred_check
    _
  $region27: #{_lambda_.32} parent=0 // pred_check_branch
    %25 = sbr.rel (0) target = $region29
  $region28: #{_lambda_.32} parent=0 // pred_region
    _
  $region29: #{_lambda_.32} parent=0 // pred_fallthru
    _
  %v27 = vld [vmem:[%s1] sm:$0x1]
  %v28 = vld [vmem:[%s2] sm:$0x1]
  %v29 = vld [vmem:[%s3] sm:$0x7]
  %v30 = vld [vmem:[%s4] sm:$0x1]
  %v31 = vld [vmem:[%s5] sm:$0xf]
  %v32 = vld [vmem:[%s5 + $0x4] sm:$0xf]
  %v33 = vld [vmem:[%s5 + $0x8] sm:$0xf]
  %v34 = vld [vmem:[%s5 + $0xc] sm:$0xf]
  %v35 = vld [vmem:[%s5 + $0x10] sm:$0xf]
  %v36 = vld [vmem:[%s5 + $0x14] sm:$0xf]
  %v37 = vld [vmem:[%s5 + $0x18] sm:$0xf]
  %v38 = vld [vmem:[%s5 + $0x1c] sm:$0xf]
  %v39 = vld [vmem:[%s5 + $0x20] sm:$0xf]
  %v40 = vld [vmem:[%s5 + $0x24] sm:$0xf]
  %v41 = vld [vmem:[%s5 + $0x28] sm:$0xf]
  %v42 = vld [vmem:[%s5 + $0x2c] sm:$0xf]
  %v43 = vld [vmem:[%s5 + $0x30] sm:$0xf]
  %v44 = vld [vmem:[%s5 + $0x34] sm:$0xf]
  %v45 = vld [vmem:[%s5 + $0x38] sm:$0xf]
  %v46 = vld [vmem:[%s5 + $0x3c] sm:$0xf]
  %v47 = vld [vmem:[%s6] sm:$0x1]
  %v48 = vld [vmem:[%s0] sm:$0xff]
  %v49 = vrot.slane %v48, 4
  %v50 = vadd.f32 %v48, %v49
  %v51 = vrot.slane %v50, 2
  %v52 = vadd.f32 %v50, %v51
  %v53 = vrot.slane %v52, 1
  %v54 = vadd.f32 %v52, %v53
  %v55 = vrcp.pop 8.0
  %v56 = vmul.f32 %v54, %v55
  %v57 = vsub.f32 %v48, %v56
  %v58 = vmul.f32 %v57, %v57
  %v59 = vrot.slane %v58, 4
  %v60 = vadd.f32 %v58, %v59
  %v61 = vrot.slane %v60, 2
  %v62 = vadd.f32 %v60, %v61
  %v63 = vrot.slane %v62, 1
  %v64 = vadd.f32 %v62, %v63
  %v65 = vmul.f32 %v64, %v55
  %v66 = vadd.f32 %v65, 1e-08
  %v67 = vrsqrt.pop %v66
  %v68 = vmul.f32 %v57, %v67
  %v70 = vlaneseq
  %v71 = vshrl.u32 %v70, 7
  %v72 = vsub.s32 0, %v71
  %v73 = vrot.slane %v27, %v72
  %v75 = vmul.f32 %v68, %v73
  %v77 = vlaneseq
  %v78 = vshrl.u32 %v77, 7
  %v79 = vsub.s32 0, %v78
  %v80 = vrot.slane %v28, %v79
  %v82 = vadd.f32 %v75, %v80
  %vm83 = vcmp.gt.f32.partialorder %v82, 0.0
  %v84 = vmin.f32 %v82, 0.0
  %v85 = vmul.f32 %v84, 1.442695
  %v86 = vpow.pop %v85
  %v87 = vsub.f32 %v86, 1.0
  %v88 = vsel %vm83, %v82, %v87
  %89 = vst [vmem:[#allocation2 + $0x1] sm:$0xff] %v88
  %90 = vst [vmem:[#allocation2 - $0x1] sm:$0x2] %v88
  %91 = vst [vmem:[#allocation2 + $0x3] sm:$0x40] %v88
  %v92 = vld [vmem:[#allocation2] sm:$0xff]
  %v93 = vlaneseq
  %v94 = vshrl.u32 %v93, 7
  %v95 = vsub.s32 0, %v94
  %v96 = vrot.slane %v29, %v95
  %v97 = vmul.f32 %v96, %v92
  %v98 = vadd.f32 %v97, 0.0
  %v99 = vld [vmem:[#allocation2 + $0x1] sm:$0xff]
  %v100 = vlaneseq
  %v101 = vshrl.u32 %v100, 7
  %v102 = vsub.s32 1, %v101
  %v103 = vrot.slane %v29, %v102
  %v104 = vmul.f32 %v103, %v99
  %v105 = vadd.f32 %v98, %v104
  %v106 = vld [vmem:[#allocation2 + $0x2] sm:$0xff]
  %v107 = vlaneseq
  %v108 = vshrl.u32 %v107, 7
  %v109 = vsub.s32 2, %v108
  %v110 = vrot.slane %v29, %v109
  %v111 = vmul.f32 %v110, %v106
  %v112 = vadd.f32 %v105, %v111
  %v114 = vlaneseq
  %v115 = vshrl.u32 %v114, 7
  %v116 = vsub.s32 0, %v115
  %v117 = vrot.slane %v30, %v116
  %v119 = vadd.f32 %v112, %v117
  %v120 = vpack.c.bf16 %v119, %v119
  %v122 = vlaneseq
  %v123 = vshrl.u32 %v122, 7
  %v124 = vsub.s32 0, %v123
  %v125 = vrot.slane %v47, %v124
  %v143 = vunpack.c.l.b16 %v31
  %v144 = vunpack.c.l.b16 %v32
  %v145 = vunpack.c.l.b16 %v33
  %v146 = vunpack.c.l.b16 %v34
  %v147 = vunpack.c.l.b16 %v35
  %v148 = vunpack.c.l.b16 %v36
  %v149 = vunpack.c.l.b16 %v37
  %v150 = vunpack.c.l.b16 %v38
  %v151 = vunpack.c.l.b16 %v39
  %v152 = vunpack.c.l.b16 %v40
  %v153 = vunpack.c.l.b16 %v41
  %v154 = vunpack.c.l.b16 %v42
  %v155 = vunpack.c.l.b16 %v43
  %v156 = vunpack.c.l.b16 %v44
  %v157 = vunpack.c.l.b16 %v45
  %v158 = vunpack.c.l.b16 %v46
  %v159 = vpack.c.b16 %v144, %v143
  %v160 = vpack.c.b16 %v146, %v145
  %v161 = vpack.c.b16 %v148, %v147
  %v162 = vpack.c.b16 %v150, %v149
  %v163 = vpack.c.b16 %v152, %v151
  %v164 = vpack.c.b16 %v154, %v153
  %v165 = vpack.c.b16 %v156, %v155
  %v166 = vpack.c.b16 %v158, %v157
  %175 = vmatprep.subr.bf16.mxu0 0
  %176 = vmatpush1.bf16.msra.mxu0 %v166
  %177 = vmatprep.subr.bf16.mxu0 0
  %178 = vmatpush1.bf16.msra.mxu0 %v165
  %179 = vmatprep.subr.bf16.mxu0 0
  %180 = vmatpush1.bf16.msra.mxu0 %v164
  %181 = vmatprep.subr.bf16.mxu0 0
  %182 = vmatpush1.bf16.msra.mxu0 %v163
  %183 = vmatprep.subr.bf16.mxu0 0
  %184 = vmatpush1.bf16.msra.mxu0 %v162
  %185 = vmatprep.subr.bf16.mxu0 0
  %186 = vmatpush1.bf16.msra.mxu0 %v161
  %187 = vmatprep.subr.bf16.mxu0 0
  %188 = vmatpush1.bf16.msra.mxu0 %v160
  %189 = vmatprep.subr.bf16.mxu0 0
  %190 = vmatpush1.bf16.msra.mxu0 %v159
  %191 = vmatprep.subr.bf16.mxu0 0
  %192 = vmatpush2.bf16.msra.mxu0 0
  %193 = vmatprep.subr.bf16.mxu0 0
  %194 = vmatpush2.bf16.msra.mxu0 0
  %195 = vmatprep.subr.bf16.mxu0 0
  %196 = vmatpush2.bf16.msra.mxu0 0
  %197 = vmatprep.subr.bf16.mxu0 0
  %198 = vmatpush2.bf16.msra.mxu0 0
  %199 = vmatprep.subr.bf16.mxu0 0
  %200 = vmatpush2.bf16.msra.mxu0 0
  %201 = vmatprep.subr.bf16.mxu0 0
  %202 = vmatpush2.bf16.msra.mxu0 0
  %203 = vmatprep.subr.bf16.mxu0 0
  %204 = vmatpush2.bf16.msra.mxu0 0
  %205 = vmatprep.subr.bf16.mxu0 0
  %206 = vmatpush2.bf16.msra.mxu0 0
  %207 = vmatprep.mubr.bf16.mxu0 0
  %208 = vmatmul.mubr.bf16.gmra.mxu0 %v120
  %v209 = vpop.f32.mrf.mxu0
  %v210 = vadd.f32 %v125, %v209
  %v211 = vpop.f32.mrf.mxu0
  %v212 = vpop.f32.mrf.mxu0
  %v213 = vpop.f32.mrf.mxu0
  %214 = vdwg.mxu0
  %v215 = vadd.f32 %v210, %v48
  %216 = vst [vmem:[%s7] sm:$0xff] %v215
  %s217 = scalar_lea.vmem %s0, 8
  %v218 = vld [vmem:[%s217] sm:$0xff]
  %v219 = vrot.slane %v218, 4
  %v220 = vadd.f32 %v218, %v219
  %v221 = vrot.slane %v220, 2
  %v222 = vadd.f32 %v220, %v221
  %v223 = vrot.slane %v222, 1
  %v224 = vadd.f32 %v222, %v223
  %v225 = vmul.f32 %v224, %v55
  %v226 = vsub.f32 %v218, %v225
  %v227 = vmul.f32 %v226, %v226
  %v228 = vrot.slane %v227, 4
  %v229 = vadd.f32 %v227, %v228
  %v230 = vrot.slane %v229, 2
  %v231 = vadd.f32 %v229, %v230
  %v232 = vrot.slane %v231, 1
  %v233 = vadd.f32 %v231, %v232
  %v234 = vmul.f32 %v233, %v55
  %v235 = vadd.f32 %v234, 1e-08
  %v236 = vrsqrt.pop %v235
  %v237 = vmul.f32 %v226, %v236
  %v238 = vmul.f32 %v237, %v73
  %v239 = vadd.f32 %v238, %v80
  %vm240 = vcmp.gt.f32.partialorder %v239, 0.0
  %v241 = vmin.f32 %v239, 0.0
  %v242 = vmul.f32 %v241, 1.442695
  %v243 = vpow.pop %v242
  %v244 = vsub.f32 %v243, 1.0
  %v245 = vsel %vm240, %v239, %v244
  %246 = vst [vmem:[#allocation2 + $0x1] sm:$0xff] %v245
  %247 = vst [vmem:[#allocation2 - $0x1] sm:$0x2] %v245
  %248 = vst [vmem:[#allocation2 + $0x3] sm:$0x40] %v245
  %v249 = vld [vmem:[#allocation2] sm:$0xff]
  %v250 = vmul.f32 %v96, %v249
  %v251 = vadd.f32 %v250, 0.0
  %v252 = vld [vmem:[#allocation2 + $0x1] sm:$0xff]
  %v253 = vmul.f32 %v103, %v252
  %v254 = vadd.f32 %v251, %v253
  %v255 = vld [vmem:[#allocation2 + $0x2] sm:$0xff]
  %v256 = vmul.f32 %v110, %v255
  %v257 = vadd.f32 %v254, %v256
  %v258 = vadd.f32 %v257, %v117
  %v259 = vpack.c.bf16 %v258, %v258
  %260 = vmatprep.subr.bf16.mxu0 0
  %261 = vmatpush1.bf16.msra.mxu0 %v166
  %262 = vmatprep.subr.bf16.mxu0 0
  %263 = vmatpush1.bf16.msra.mxu0 %v165
  %264 = vmatprep.subr.bf16.mxu0 0
  %265 = vmatpush1.bf16.msra.mxu0 %v164
  %266 = vmatprep.subr.bf16.mxu0 0
  %267 = vmatpush1.bf16.msra.mxu0 %v163
  %268 = vmatprep.subr.bf16.mxu0 0
  %269 = vmatpush1.bf16.msra.mxu0 %v162
  %270 = vmatprep.subr.bf16.mxu0 0
  %271 = vmatpush1.bf16.msra.mxu0 %v161
  %272 = vmatprep.subr.bf16.mxu0 0
  %273 = vmatpush1.bf16.msra.mxu0 %v160
  %274 = vmatprep.subr.bf16.mxu0 0
  %275 = vmatpush1.bf16.msra.mxu0 %v159
  %276 = vmatprep.subr.bf16.mxu0 0
  %277 = vmatpush2.bf16.msra.mxu0 0
  %278 = vmatprep.subr.bf16.mxu0 0
  %279 = vmatpush2.bf16.msra.mxu0 0
  %280 = vmatprep.subr.bf16.mxu0 0
  %281 = vmatpush2.bf16.msra.mxu0 0
  %282 = vmatprep.subr.bf16.mxu0 0
  %283 = vmatpush2.bf16.msra.mxu0 0
  %284 = vmatprep.subr.bf16.mxu0 0
  %285 = vmatpush2.bf16.msra.mxu0 0
  %286 = vmatprep.subr.bf16.mxu0 0
  %287 = vmatpush2.bf16.msra.mxu0 0
  %288 = vmatprep.subr.bf16.mxu0 0
  %289 = vmatpush2.bf16.msra.mxu0 0
  %290 = vmatprep.subr.bf16.mxu0 0
  %291 = vmatpush2.bf16.msra.mxu0 0
  %292 = vmatprep.mubr.bf16.mxu0 0
  %293 = vmatmul.mubr.bf16.gmra.mxu0 %v259
  %v294 = vpop.f32.mrf.mxu0
  %v295 = vadd.f32 %v125, %v294
  %v296 = vpop.f32.mrf.mxu0
  %v297 = vpop.f32.mrf.mxu0
  %v298 = vpop.f32.mrf.mxu0
  %299 = vdwg.mxu0
  %v300 = vadd.f32 %v295, %v218
  %s301 = scalar_lea.vmem %s7, 8
  %302 = vst [vmem:[%s301] sm:$0xff] %v300
  // Predicated region
  $region30: #{_lambda_.32} parent=0 // pred_check
    _
  $region31: #{_lambda_.32} parent=0 // pred_check_branch
    %304 = sbr.rel (0) target = $region33
  $region32: #{_lambda_.32} parent=0 // pred_region
    _
  $region33: #{_lambda_.32} parent=0 // pred_fallthru
    _
  // Predicated region
  $region34: #{_lambda_.32} parent=0 // pred_check
    _
  $region35: #{_lambda_.32} parent=0 // pred_check_branch
    %306 = sbr.rel (0) target = $region37
  $region36: #{_lambda_.32} parent=0 // pred_region
    _
  $region37: #{_lambda_.32} parent=0 // pred_fallthru
    _

// kernel: _lambda_.33
$region0: #{_lambda_.33}
  #allocation0 [shape = 'u32[]', space=smem, size = 0x4, offset = 0x4, fixed_abs, tag = 'smem constant byte address 0x4 - core index']
  #allocation1 [shape = 'u32[144,128]{1,0:T(1,128)}', space=vmem, size = 0x12000, scoped, tag = 'internal scratch']
  #allocation2 [shape = 'f32[12,128]{1,0:T(8,128)}', space=vmem, size = 0x2000, scoped, tag = 'scratch operand']
  %s0 = inlined_call_operand.vmem [shape: f32[2,8,128], index: 0, kind: input, shape index: {}]
  %s1 = inlined_call_operand.vmem [shape: f32[1,128], index: 1, kind: input, shape index: {}]
  %s2 = inlined_call_operand.vmem [shape: f32[1,128], index: 2, kind: input, shape index: {}]
  %s3 = inlined_call_operand.vmem [shape: f32[3,128], index: 3, kind: input, shape index: {}]
  %s4 = inlined_call_operand.vmem [shape: f32[1,128], index: 4, kind: input, shape index: {}]
  %s5 = inlined_call_operand.vmem [shape: bf16[128,128], index: 5, kind: input, shape index: {}]
  %s6 = inlined_call_operand.vmem [shape: f32[1,128], index: 6, kind: input, shape index: {}]
  %s7 = inlined_call_operand.vmem [shape: f32[2,8,128], index: 7, kind: output, shape index: {}]
  %s8 = sld [smem:[#allocation0]]
  $region38: #{_lambda_.33} parent=0
    _
  %s10 = ssub.s32 1, %s8
  %s11 = scalar_select 0, %s10, %s8
  // Predicated region
  $region2: #{_lambda_.33} parent=0 // pred_check
    _
  $region3: #{_lambda_.33} parent=0 // pred_check_branch
    %13 = sbr.rel (0) target = $region5
  $region4: #{_lambda_.33} parent=0 // pred_region
    _
  $region5: #{_lambda_.33} parent=0 // pred_fallthru
    _
  // Predicated region
  $region6: #{_lambda_.33} parent=0 // pred_check
    _
  $region7: #{_lambda_.33} parent=0 // pred_check_branch
    %15 = sbr.rel (0) target = $region9
  $region8: #{_lambda_.33} parent=0 // pred_region
    _
  $region9: #{_lambda_.33} parent=0 // pred_fallthru
    _
  // Predicated region
  $region10: #{_lambda_.33} parent=0 // pred_check
    _
  $region11: #{_lambda_.33} parent=0 // pred_check_branch
    %17 = sbr.rel (0) target = $region13
  $region12: #{_lambda_.33} parent=0 // pred_region
    _
  $region13: #{_lambda_.33} parent=0 // pred_fallthru
    _
  // Predicated region
  $region14: #{_lambda_.33} parent=0 // pred_check
    _
  $region15: #{_lambda_.33} parent=0 // pred_check_branch
    %19 = sbr.rel (0) target = $region17
  $region16: #{_lambda_.33} parent=0 // pred_region
    _
  $region17: #{_lambda_.33} parent=0 // pred_fallthru
    _
  // Predicated region
  $region18: #{_lambda_.33} parent=0 // pred_check
    _
  $region19: #{_lambda_.33} parent=0 // pred_check_branch
    %21 = sbr.rel (0) target = $region21
  $region20: #{_lambda_.33} parent=0 // pred_region
    _
  $region21: #{_lambda_.33} parent=0 // pred_fallthru
    _
  // Predicated region
  $region22: #{_lambda_.33} parent=0 // pred_check
    _
  $region23: #{_lambda_.33} parent=0 // pred_check_branch
    %23 = sbr.rel (0) target = $region25
  $region24: #{_lambda_.33} parent=0 // pred_region
    _
  $region25: #{_lambda_.33} parent=0 // pred_fallthru
    _
  // Predicated region
  $region26: #{_lambda_.33} parent=0 // pred_check
    _
  $region27: #{_lambda_.33} parent=0 // pred_check_branch
    %25 = sbr.rel (0) target = $region29
  $region28: #{_lambda_.33} parent=0 // pred_region
    _
  $region29: #{_lambda_.33} parent=0 // pred_fallthru
    _
  %v27 = vld [vmem:[%s1] sm:$0x1]
  %v28 = vld [vmem:[%s2] sm:$0x1]
  %v29 = vld [vmem:[%s3] sm:$0x7]
  %v30 = vld [vmem:[%s4] sm:$0x1]
  %v31 = vld [vmem:[%s5] sm:$0xf]
  %v32 = vld [vmem:[%s5 + $0x4] sm:$0xf]
  %v33 = vld [vmem:[%s5 + $0x8] sm:$0xf]
  %v34 = vld [vmem:[%s5 + $0xc] sm:$0xf]
  %v35 = vld [vmem:[%s5 + $0x10] sm:$0xf]
  %v36 = vld [vmem:[%s5 + $0x14] sm:$0xf]
  %v37 = vld [vmem:[%s5 + $0x18] sm:$0xf]
  %v38 = vld [vmem:[%s5 + $0x1c] sm:$0xf]
  %v39 = vld [vmem:[%s5 + $0x20] sm:$0xf]
  %v40 = vld [vmem:[%s5 + $0x24] sm:$0xf]
  %v41 = vld [vmem:[%s5 + $0x28] sm:$0xf]
  %v42 = vld [vmem:[%s5 + $0x2c] sm:$0xf]
  %v43 = vld [vmem:[%s5 + $0x30] sm:$0xf]
  %v44 = vld [vmem:[%s5 + $0x34] sm:$0xf]
  %v45 = vld [vmem:[%s5 + $0x38] sm:$0xf]
  %v46 = vld [vmem:[%s5 + $0x3c] sm:$0xf]
  %v47 = vld [vmem:[%s6] sm:$0x1]
  %v48 = vld [vmem:[%s0] sm:$0xff]
  %v49 = vrot.slane %v48, 4
  %v50 = vadd.f32 %v48, %v49
  %v51 = vrot.slane %v50, 2
  %v52 = vadd.f32 %v50, %v51
  %v53 = vrot.slane %v52, 1
  %v54 = vadd.f32 %v52, %v53
  %v55 = vrcp.pop 8.0
  %v56 = vmul.f32 %v54, %v55
  %v57 = vsub.f32 %v48, %v56
  %v58 = vmul.f32 %v57, %v57
  %v59 = vrot.slane %v58, 4
  %v60 = vadd.f32 %v58, %v59
  %v61 = vrot.slane %v60, 2
  %v62 = vadd.f32 %v60, %v61
  %v63 = vrot.slane %v62, 1
  %v64 = vadd.f32 %v62, %v63
  %v65 = vmul.f32 %v64, %v55
  %v66 = vadd.f32 %v65, 1e-08
  %v67 = vrsqrt.pop %v66
  %v68 = vmul.f32 %v57, %v67
  %v70 = vlaneseq
  %v71 = vshrl.u32 %v70, 7
  %v72 = vsub.s32 0, %v71
  %v73 = vrot.slane %v27, %v72
  %v75 = vmul.f32 %v68, %v73
  %v77 = vlaneseq
  %v78 = vshrl.u32 %v77, 7
  %v79 = vsub.s32 0, %v78
  %v80 = vrot.slane %v28, %v79
  %v82 = vadd.f32 %v75, %v80
  %vm83 = vcmp.gt.f32.partialorder %v82, 0.0
  %v84 = vmin.f32 %v82, 0.0
  %v85 = vmul.f32 %v84, 1.442695
  %v86 = vpow.pop %v85
  %v87 = vsub.f32 %v86, 1.0
  %v88 = vsel %vm83, %v82, %v87
  %89 = vst [vmem:[#allocation2 + $0x2] sm:$0xff] %v88
  %90 = vst [vmem:[#allocation2] sm:$0x2] %v88
  %91 = vst [vmem:[#allocation2 + $0x4] sm:$0x40] %v88
  %92 = vst [vmem:[#allocation2 - $0x2] sm:$0x4] %v88
  %93 = vst [vmem:[#allocation2 + $0x6] sm:$0x20] %v88
  %v94 = vld [vmem:[#allocation2] sm:$0xff]
  %v95 = vlaneseq
  %v96 = vshrl.u32 %v95, 7
  %v97 = vsub.s32 0, %v96
  %v98 = vrot.slane %v29, %v97
  %v99 = vmul.f32 %v98, %v94
  %v100 = vadd.f32 %v99, 0.0
  %v101 = vld [vmem:[#allocation2 + $0x2] sm:$0xff]
  %v102 = vlaneseq
  %v103 = vshrl.u32 %v102, 7
  %v104 = vsub.s32 1, %v103
  %v105 = vrot.slane %v29, %v104
  %v106 = vmul.f32 %v105, %v101
  %v107 = vadd.f32 %v100, %v106
  %v108 = vld [vmem:[#allocation2 + $0x4] sm:$0xff]
  %v109 = vlaneseq
  %v110 = vshrl.u32 %v109, 7
  %v111 = vsub.s32 2, %v110
  %v112 = vrot.slane %v29, %v111
  %v113 = vmul.f32 %v112, %v108
  %v114 = vadd.f32 %v107, %v113
  %v116 = vlaneseq
  %v117 = vshrl.u32 %v116, 7
  %v118 = vsub.s32 0, %v117
  %v119 = vrot.slane %v30, %v118
  %v121 = vadd.f32 %v114, %v119
  %v122 = vpack.c.bf16 %v121, %v121
  %v124 = vlaneseq
  %v125 = vshrl.u32 %v124, 7
  %v126 = vsub.s32 0, %v125
  %v127 = vrot.slane %v47, %v126
  %v145 = vunpack.c.l.b16 %v31
  %v146 = vunpack.c.l.b16 %v32
  %v147 = vunpack.c.l.b16 %v33
  %v148 = vunpack.c.l.b16 %v34
  %v149 = vunpack.c.l.b16 %v35
  %v150 = vunpack.c.l.b16 %v36
  %v151 = vunpack.c.l.b16 %v37
  %v152 = vunpack.c.l.b16 %v38
  %v153 = vunpack.c.l.b16 %v39
  %v154 = vunpack.c.l.b16 %v40
  %v155 = vunpack.c.l.b16 %v41
  %v156 = vunpack.c.l.b16 %v42
  %v157 = vunpack.c.l.b16 %v43
  %v158 = vunpack.c.l.b16 %v44
  %v159 = vunpack.c.l.b16 %v45
  %v160 = vunpack.c.l.b16 %v46
  %v161 = vpack.c.b16 %v146, %v145
  %v162 = vpack.c.b16 %v148, %v147
  %v163 = vpack.c.b16 %v150, %v149
  %v164 = vpack.c.b16 %v152, %v151
  %v165 = vpack.c.b16 %v154, %v153
  %v166 = vpack.c.b16 %v156, %v155
  %v167 = vpack.c.b16 %v158, %v157
  %v168 = vpack.c.b16 %v160, %v159
  %177 = vmatprep.subr.bf16.mxu0 0
  %178 = vmatpush1.bf16.msra.mxu0 %v168
  %179 = vmatprep.subr.bf16.mxu0 0
  %180 = vmatpush1.bf16.msra.mxu0 %v167
  %181 = vmatprep.subr.bf16.mxu0 0
  %182 = vmatpush1.bf16.msra.mxu0 %v166
  %183 = vmatprep.subr.bf16.mxu0 0
  %184 = vmatpush1.bf16.msra.mxu0 %v165
  %185 = vmatprep.subr.bf16.mxu0 0
  %186 = vmatpush1.bf16.msra.mxu0 %v164
  %187 = vmatprep.subr.bf16.mxu0 0
  %188 = vmatpush1.bf16.msra.mxu0 %v163
  %189 = vmatprep.subr.bf16.mxu0 0
  %190 = vmatpush1.bf16.msra.mxu0 %v162
  %191 = vmatprep.subr.bf16.mxu0 0
  %192 = vmatpush1.bf16.msra.mxu0 %v161
  %193 = vmatprep.subr.bf16.mxu0 0
  %194 = vmatpush2.bf16.msra.mxu0 0
  %195 = vmatprep.subr.bf16.mxu0 0
  %196 = vmatpush2.bf16.msra.mxu0 0
  %197 = vmatprep.subr.bf16.mxu0 0
  %198 = vmatpush2.bf16.msra.mxu0 0
  %199 = vmatprep.subr.bf16.mxu0 0
  %200 = vmatpush2.bf16.msra.mxu0 0
  %201 = vmatprep.subr.bf16.mxu0 0
  %202 = vmatpush2.bf16.msra.mxu0 0
  %203 = vmatprep.subr.bf16.mxu0 0
  %204 = vmatpush2.bf16.msra.mxu0 0
  %205 = vmatprep.subr.bf16.mxu0 0
  %206 = vmatpush2.bf16.msra.mxu0 0
  %207 = vmatprep.subr.bf16.mxu0 0
  %208 = vmatpush2.bf16.msra.mxu0 0
  %209 = vmatprep.mubr.bf16.mxu0 0
  %210 = vmatmul.mubr.bf16.gmra.mxu0 %v122
  %v211 = vpop.f32.mrf.mxu0
  %v212 = vadd.f32 %v127, %v211
  %v213 = vpop.f32.mrf.mxu0
  %v214 = vpop.f32.mrf.mxu0
  %v215 = vpop.f32.mrf.mxu0
  %216 = vdwg.mxu0
  %v217 = vadd.f32 %v212, %v48
  %218 = vst [vmem:[%s7] sm:$0xff] %v217
  %s219 = scalar_lea.vmem %s0, 8
  %v220 = vld [vmem:[%s219] sm:$0xff]
  %v221 = vrot.slane %v220, 4
  %v222 = vadd.f32 %v220, %v221
  %v223 = vrot.slane %v222, 2
  %v224 = vadd.f32 %v222, %v223
  %v225 = vrot.slane %v224, 1
  %v226 = vadd.f32 %v224, %v225
  %v227 = vmul.f32 %v226, %v55
  %v228 = vsub.f32 %v220, %v227
  %v229 = vmul.f32 %v228, %v228
  %v230 = vrot.slane %v229, 4
  %v231 = vadd.f32 %v229, %v230
  %v232 = vrot.slane %v231, 2
  %v233 = vadd.f32 %v231, %v232
  %v234 = vrot.slane %v233, 1
  %v235 = vadd.f32 %v233, %v234
  %v236 = vmul.f32 %v235, %v55
  %v237 = vadd.f32 %v236, 1e-08
  %v238 = vrsqrt.pop %v237
  %v239 = vmul.f32 %v228, %v238
  %v240 = vmul.f32 %v239, %v73
  %v241 = vadd.f32 %v240, %v80
  %vm242 = vcmp.gt.f32.partialorder %v241, 0.0
  %v243 = vmin.f32 %v241, 0.0
  %v244 = vmul.f32 %v243, 1.442695
  %v245 = vpow.pop %v244
  %v246 = vsub.f32 %v245, 1.0
  %v247 = vsel %vm242, %v241, %v246
  %248 = vst [vmem:[#allocation2 + $0x2] sm:$0xff] %v247
  %249 = vst [vmem:[#allocation2] sm:$0x2] %v247
  %250 = vst [vmem:[#allocation2 + $0x4] sm:$0x40] %v247
  %251 = vst [vmem:[#allocation2 - $0x2] sm:$0x4] %v247
  %252 = vst [vmem:[#allocation2 + $0x6] sm:$0x20] %v247
  %v253 = vld [vmem:[#allocation2] sm:$0xff]
  %v254 = vmul.f32 %v98, %v253
  %v255 = vadd.f32 %v254, 0.0
  %v256 = vld [vmem:[#allocation2 + $0x2] sm:$0xff]
  %v257 = vmul.f32 %v105, %v256
  %v258 = vadd.f32 %v255, %v257
  %v259 = vld [vmem:[#allocation2 + $0x4] sm:$0xff]
  %v260 = vmul.f32 %v112, %v259
  %v261 = vadd.f32 %v258, %v260
  %v262 = vadd.f32 %v261, %v119
  %v263 = vpack.c.bf16 %v262, %v262
  %264 = vmatprep.subr.bf16.mxu0 0
  %265 = vmatpush1.bf16.msra.mxu0 %v168
  %266 = vmatprep.subr.bf16.mxu0 0
  %267 = vmatpush1.bf16.msra.mxu0 %v167
  %268 = vmatprep.subr.bf16.mxu0 0
  %269 = vmatpush1.bf16.msra.mxu0 %v166
  %270 = vmatprep.subr.bf16.mxu0 0
  %271 = vmatpush1.bf16.msra.mxu0 %v165
  %272 = vmatprep.subr.bf16.mxu0 0
  %273 = vmatpush1.bf16.msra.mxu0 %v164
  %274 = vmatprep.subr.bf16.mxu0 0
  %275 = vmatpush1.bf16.msra.mxu0 %v163
  %276 = vmatprep.subr.bf16.mxu0 0
  %277 = vmatpush1.bf16.msra.mxu0 %v162
  %278 = vmatprep.subr.bf16.mxu0 0
  %279 = vmatpush1.bf16.msra.mxu0 %v161
  %280 = vmatprep.subr.bf16.mxu0 0
  %281 = vmatpush2.bf16.msra.mxu0 0
  %282 = vmatprep.subr.bf16.mxu0 0
  %283 = vmatpush2.bf16.msra.mxu0 0
  %284 = vmatprep.subr.bf16.mxu0 0
  %285 = vmatpush2.bf16.msra.mxu0 0
  %286 = vmatprep.subr.bf16.mxu0 0
  %287 = vmatpush2.bf16.msra.mxu0 0
  %288 = vmatprep.subr.bf16.mxu0 0
  %289 = vmatpush2.bf16.msra.mxu0 0
  %290 = vmatprep.subr.bf16.mxu0 0
  %291 = vmatpush2.bf16.msra.mxu0 0
  %292 = vmatprep.subr.bf16.mxu0 0
  %293 = vmatpush2.bf16.msra.mxu0 0
  %294 = vmatprep.subr.bf16.mxu0 0
  %295 = vmatpush2.bf16.msra.mxu0 0
  %296 = vmatprep.mubr.bf16.mxu0 0
  %297 = vmatmul.mubr.bf16.gmra.mxu0 %v263
  %v298 = vpop.f32.mrf.mxu0
  %v299 = vadd.f32 %v127, %v298
  %v300 = vpop.f32.mrf.mxu0
  %v301 = vpop.f32.mrf.mxu0
  %v302 = vpop.f32.mrf.mxu0
  %303 = vdwg.mxu0
  %v304 = vadd.f32 %v299, %v220
  %s305 = scalar_lea.vmem %s7, 8
  %306 = vst [vmem:[%s305] sm:$0xff] %v304
  // Predicated region
  $region30: #{_lambda_.33} parent=0 // pred_check
    _
  $region31: #{_lambda_.33} parent=0 // pred_check_branch
    %308 = sbr.rel (0) target = $region33
  $region32: #{_lambda_.33} parent=0 // pred_region
    _
  $region33: #{_lambda_.33} parent=0 // pred_fallthru
    _
  // Predicated region
  $region34: #{_lambda_.33} parent=0 // pred_check
    _
  $region35: #{_lambda_.33} parent=0 // pred_check_branch
    %310 = sbr.rel (0) target = $region37
  $region36: #{_lambda_.33} parent=0 // pred_region
    _
  $region37: #{_lambda_.33} parent=0 // pred_fallthru
    _

// kernel: _lambda_.34
$region0: #{_lambda_.34}
  #allocation0 [shape = 'u32[]', space=smem, size = 0x4, offset = 0x4, fixed_abs, tag = 'smem constant byte address 0x4 - core index']
  #allocation1 [shape = 'u32[144,128]{1,0:T(1,128)}', space=vmem, size = 0x12000, scoped, tag = 'internal scratch']
  %s0 = inlined_call_operand.vmem [shape: bf16[2,24,640], index: 0, kind: input, shape index: {}]
  %s1 = inlined_call_operand.vmem [shape: bf16[640,128], index: 1, kind: input, shape index: {}]
  %s2 = inlined_call_operand.vmem [shape: f32[1,128], index: 2, kind: input, shape index: {}]
  %s3 = inlined_call_operand.vmem [shape: f32[1,128], index: 3, kind: input, shape index: {}]
  %s4 = inlined_call_operand.vmem [shape: f32[1,128], index: 4, kind: input, shape index: {}]
  %s5 = inlined_call_operand.vmem [shape: f32[2,24,128], index: 5, kind: output, shape index: {}]
  %s6 = sld [smem:[#allocation0]]
  $region30: #{_lambda_.34} parent=0
    _
  %s8 = ssub.s32 1, %s6
  %s9 = scalar_select 0, %s8, %s6
  // Predicated region
  $region2: #{_lambda_.34} parent=0 // pred_check
    _
  $region3: #{_lambda_.34} parent=0 // pred_check_branch
    %11 = sbr.rel (0) target = $region5
  $region4: #{_lambda_.34} parent=0 // pred_region
    _
  $region5: #{_lambda_.34} parent=0 // pred_fallthru
    _
  // Predicated region
  $region6: #{_lambda_.34} parent=0 // pred_check
    _
  $region7: #{_lambda_.34} parent=0 // pred_check_branch
    %13 = sbr.rel (0) target = $region9
  $region8: #{_lambda_.34} parent=0 // pred_region
    _
  $region9: #{_lambda_.34} parent=0 // pred_fallthru
    _
  // Predicated region
  $region10: #{_lambda_.34} parent=0 // pred_check
    _
  $region11: #{_lambda_.34} parent=0 // pred_check_branch
    %15 = sbr.rel (0) target = $region13
  $region12: #{_lambda_.34} parent=0 // pred_region
    _
  $region13: #{_lambda_.34} parent=0 // pred_fallthru
    _
  // Predicated region
  $region14: #{_lambda_.34} parent=0 // pred_check
    _
  $region15: #{_lambda_.34} parent=0 // pred_check_branch
    %17 = sbr.rel (0) target = $region17
  $region16: #{_lambda_.34} parent=0 // pred_region
    _
  $region17: #{_lambda_.34} parent=0 // pred_fallthru
    _
  // Predicated region
  $region18: #{_lambda_.34} parent=0 // pred_check
    _
  $region19: #{_lambda_.34} parent=0 // pred_check_branch
    %19 = sbr.rel (0) target = $region21
  $region20: #{_lambda_.34} parent=0 // pred_region
    _
  $region21: #{_lambda_.34} parent=0 // pred_fallthru
    _
  %v21 = vld [vmem:[%s1] sm:$0xf]
  %v22 = vld [vmem:[%s1 + $0x4] sm:$0xf]
  %v23 = vld [vmem:[%s1 + $0x8] sm:$0xf]
  %v24 = vld [vmem:[%s1 + $0xc] sm:$0xf]
  %v25 = vld [vmem:[%s1 + $0x10] sm:$0xf]
  %v26 = vld [vmem:[%s1 + $0x14] sm:$0xf]
  %v27 = vld [vmem:[%s1 + $0x18] sm:$0xf]
  %v28 = vld [vmem:[%s1 + $0x1c] sm:$0xf]
  %v29 = vld [vmem:[%s1 + $0x20] sm:$0xf]
  %v30 = vld [vmem:[%s1 + $0x24] sm:$0xf]
  %v31 = vld [vmem:[%s1 + $0x28] sm:$0xf]
  %v32 = vld [vmem:[%s1 + $0x2c] sm:$0xf]
  %v33 = vld [vmem:[%s1 + $0x30] sm:$0xf]
  %v34 = vld [vmem:[%s1 + $0x34] sm:$0xf]
  %v35 = vld [vmem:[%s1 + $0x38] sm:$0xf]
  %v36 = vld [vmem:[%s1 + $0x3c] sm:$0xf]
  %v37 = vld [vmem:[%s1 + $0x40] sm:$0xf]
  %v38 = vld [vmem:[%s1 + $0x44] sm:$0xf]
  %v39 = vld [vmem:[%s1 + $0x48] sm:$0xf]
  %v40 = vld [vmem:[%s1 + $0x4c] sm:$0xf]
  %v41 = vld [vmem:[%s1 + $0x50] sm:$0xf]
  %v42 = vld [vmem:[%s1 + $0x54] sm:$0xf]
  %v43 = vld [vmem:[%s1 + $0x58] sm:$0xf]
  %v44 = vld [vmem:[%s1 + $0x5c] sm:$0xf]
  %v45 = vld [vmem:[%s1 + $0x60] sm:$0xf]
  %v46 = vld [vmem:[%s1 + $0x64] sm:$0xf]
  %v47 = vld [vmem:[%s1 + $0x68] sm:$0xf]
  %v48 = vld [vmem:[%s1 + $0x6c] sm:$0xf]
  %v49 = vld [vmem:[%s1 + $0x70] sm:$0xf]
  %v50 = vld [vmem:[%s1 + $0x74] sm:$0xf]
  %v51 = vld [vmem:[%s1 + $0x78] sm:$0xf]
  %v52 = vld [vmem:[%s1 + $0x7c] sm:$0xf]
  %v53 = vld [vmem:[%s1 + $0x80] sm:$0xf]
  %v54 = vld [vmem:[%s1 + $0x84] sm:$0xf]
  %v55 = vld [vmem:[%s1 + $0x88] sm:$0xf]
  %v56 = vld [vmem:[%s1 + $0x8c] sm:$0xf]
  %v57 = vld [vmem:[%s1 + $0x90] sm:$0xf]
  %v58 = vld [vmem:[%s1 + $0x94] sm:$0xf]
  %v59 = vld [vmem:[%s1 + $0x98] sm:$0xf]
  %v60 = vld [vmem:[%s1 + $0x9c] sm:$0xf]
  %v61 = vld [vmem:[%s1 + $0xa0] sm:$0xf]
  %v62 = vld [vmem:[%s1 + $0xa4] sm:$0xf]
  %v63 = vld [vmem:[%s1 + $0xa8] sm:$0xf]
  %v64 = vld [vmem:[%s1 + $0xac] sm:$0xf]
  %v65 = vld [vmem:[%s1 + $0xb0] sm:$0xf]
  %v66 = vld [vmem:[%s1 + $0xb4] sm:$0xf]
  %v67 = vld [vmem:[%s1 + $0xb8] sm:$0xf]
  %v68 = vld [vmem:[%s1 + $0xbc] sm:$0xf]
  %v69 = vld [vmem:[%s1 + $0xc0] sm:$0xf]
  %v70 = vld [vmem:[%s1 + $0xc4] sm:$0xf]
  %v71 = vld [vmem:[%s1 + $0xc8] sm:$0xf]
  %v72 = vld [vmem:[%s1 + $0xcc] sm:$0xf]
  %v73 = vld [vmem:[%s1 + $0xd0] sm:$0xf]
  %v74 = vld [vmem:[%s1 + $0xd4] sm:$0xf]
  %v75 = vld [vmem:[%s1 + $0xd8] sm:$0xf]
  %v76 = vld [vmem:[%s1 + $0xdc] sm:$0xf]
  %v77 = vld [vmem:[%s1 + $0xe0] sm:$0xf]
  %v78 = vld [vmem:[%s1 + $0xe4] sm:$0xf]
  %v79 = vld [vmem:[%s1 + $0xe8] sm:$0xf]
  %v80 = vld [vmem:[%s1 + $0xec] sm:$0xf]
  %v81 = vld [vmem:[%s1 + $0xf0] sm:$0xf]
  %v82 = vld [vmem:[%s1 + $0xf4] sm:$0xf]
  %v83 = vld [vmem:[%s1 + $0xf8] sm:$0xf]
  %v84 = vld [vmem:[%s1 + $0xfc] sm:$0xf]
  %v85 = vld [vmem:[%s1 + $0x100] sm:$0xf]
  %v86 = vld [vmem:[%s1 + $0x104] sm:$0xf]
  %v87 = vld [vmem:[%s1 + $0x108] sm:$0xf]
  %v88 = vld [vmem:[%s1 + $0x10c] sm:$0xf]
  %v89 = vld [vmem:[%s1 + $0x110] sm:$0xf]
  %v90 = vld [vmem:[%s1 + $0x114] sm:$0xf]
  %v91 = vld [vmem:[%s1 + $0x118] sm:$0xf]
  %v92 = vld [vmem:[%s1 + $0x11c] sm:$0xf]
  %v93 = vld [vmem:[%s1 + $0x120] sm:$0xf]
  %v94 = vld [vmem:[%s1 + $0x124] sm:$0xf]
  %v95 = vld [vmem:[%s1 + $0x128] sm:$0xf]
  %v96 = vld [vmem:[%s1 + $0x12c] sm:$0xf]
  %v97 = vld [vmem:[%s1 + $0x130] sm:$0xf]
  %v98 = vld [vmem:[%s1 + $0x134] sm:$0xf]
  %v99 = vld [vmem:[%s1 + $0x138] sm:$0xf]
  %v100 = vld [vmem:[%s1 + $0x13c] sm:$0xf]
  %v101 = vld [vmem:[%s2] sm:$0x1]
  %v102 = vld [vmem:[%s0] sm:$0xff]
  %v103 = vld [vmem:[%s0 + $0x8] sm:$0xff]
  %v104 = vld [vmem:[%s0 + $0x10] sm:$0xf]
  %v105 = vld [vmem:[%s0 + $0x14] sm:$0xff]
  %v106 = vld [vmem:[%s0 + $0x1c] sm:$0xff]
  %v107 = vld [vmem:[%s0 + $0x24] sm:$0xf]
  %v108 = vld [vmem:[%s0 + $0x28] sm:$0xff]
  %v109 = vld [vmem:[%s0 + $0x30] sm:$0xff]
  %v110 = vld [vmem:[%s0 + $0x38] sm:$0xf]
  %v112 = vlaneseq
  %v113 = vshrl.u32 %v112, 7
  %v114 = vsub.s32 0, %v113
  %v115 = vrot.slane %v101, %v114
  %v126 = vunpack.c.l.b16 %v102
  %v127 = vunpack.c.h.b16 %v102
  %v128 = vunpack.c.l.b16 %v103
  %v129 = vunpack.c.h.b16 %v103
  %v130 = vunpack.c.l.b16 %v104
  %v131 = vunpack.c.l.b16 %v105
  %v132 = vunpack.c.h.b16 %v105
  %v133 = vunpack.c.l.b16 %v106
  %v134 = vunpack.c.h.b16 %v106
  %v135 = vunpack.c.l.b16 %v107
  %v136 = vunpack.c.l.b16 %v108
  %v137 = vunpack.c.h.b16 %v108
  %v138 = vunpack.c.l.b16 %v109
  %v139 = vunpack.c.h.b16 %v109
  %v140 = vunpack.c.l.b16 %v110
  %v141 = vpack.c.b16 %v131, %v126
  %v142 = vpack.c.b16 %v132, %v127
  %v143 = vpack.c.b16 %v133, %v128
  %v144 = vpack.c.b16 %v134, %v129
  %v145 = vpack.c.b16 %v135, %v130
  %v146 = vpack.c.b16 %v136, %v136
  %v147 = vpack.c.b16 %v137, %v137
  %v148 = vpack.c.b16 %v138, %v138
  %v149 = vpack.c.b16 %v139, %v139
  %v150 = vpack.c.b16 %v140, %v140
  %v241 = vunpack.c.l.b16 %v21
  %v242 = vunpack.c.l.b16 %v22
  %v243 = vunpack.c.l.b16 %v23
  %v244 = vunpack.c.l.b16 %v24
  %v245 = vunpack.c.l.b16 %v25
  %v246 = vunpack.c.l.b16 %v26
  %v247 = vunpack.c.l.b16 %v27
  %v248 = vunpack.c.l.b16 %v28
  %v249 = vunpack.c.l.b16 %v29
  %v250 = vunpack.c.l.b16 %v30
  %v251 = vunpack.c.l.b16 %v31
  %v252 = vunpack.c.l.b16 %v32
  %v253 = vunpack.c.l.b16 %v33
  %v254 = vunpack.c.l.b16 %v34
  %v255 = vunpack.c.l.b16 %v35
  %v256 = vunpack.c.l.b16 %v36
  %v257 = vunpack.c.l.b16 %v37
  %v258 = vunpack.c.l.b16 %v38
  %v259 = vunpack.c.l.b16 %v39
  %v260 = vunpack.c.l.b16 %v40
  %v261 = vunpack.c.l.b16 %v41
  %v262 = vunpack.c.l.b16 %v42
  %v263 = vunpack.c.l.b16 %v43
  %v264 = vunpack.c.l.b16 %v44
  %v265 = vunpack.c.l.b16 %v45
  %v266 = vunpack.c.l.b16 %v46
  %v267 = vunpack.c.l.b16 %v47
  %v268 = vunpack.c.l.b16 %v48
  %v269 = vunpack.c.l.b16 %v49
  %v270 = vunpack.c.l.b16 %v50
  %v271 = vunpack.c.l.b16 %v51
  %v272 = vunpack.c.l.b16 %v52
  %v273 = vunpack.c.l.b16 %v53
  %v274 = vunpack.c.l.b16 %v54
  %v275 = vunpack.c.l.b16 %v55
  %v276 = vunpack.c.l.b16 %v56
  %v277 = vunpack.c.l.b16 %v57
  %v278 = vunpack.c.l.b16 %v58
  %v279 = vunpack.c.l.b16 %v59
  %v280 = vunpack.c.l.b16 %v60
  %v281 = vunpack.c.l.b16 %v61
  %v282 = vunpack.c.l.b16 %v62
  %v283 = vunpack.c.l.b16 %v63
  %v284 = vunpack.c.l.b16 %v64
  %v285 = vunpack.c.l.b16 %v65
  %v286 = vunpack.c.l.b16 %v66
  %v287 = vunpack.c.l.b16 %v67
  %v288 = vunpack.c.l.b16 %v68
  %v289 = vunpack.c.l.b16 %v69
  %v290 = vunpack.c.l.b16 %v70
  %v291 = vunpack.c.l.b16 %v71
  %v292 = vunpack.c.l.b16 %v72
  %v293 = vunpack.c.l.b16 %v73
  %v294 = vunpack.c.l.b16 %v74
  %v295 = vunpack.c.l.b16 %v75
  %v296 = vunpack.c.l.b16 %v76
  %v297 = vunpack.c.l.b16 %v77
  %v298 = vunpack.c.l.b16 %v78
  %v299 = vunpack.c.l.b16 %v79
  %v300 = vunpack.c.l.b16 %v80
  %v301 = vunpack.c.l.b16 %v81
  %v302 = vunpack.c.l.b16 %v82
  %v303 = vunpack.c.l.b16 %v83
  %v304 = vunpack.c.l.b16 %v84
  %v305 = vunpack.c.l.b16 %v85
  %v306 = vunpack.c.l.b16 %v86
  %v307 = vunpack.c.l.b16 %v87
  %v308 = vunpack.c.l.b16 %v88
  %v309 = vunpack.c.l.b16 %v89
  %v310 = vunpack.c.l.b16 %v90
  %v311 = vunpack.c.l.b16 %v91
  %v312 = vunpack.c.l.b16 %v92
  %v313 = vunpack.c.l.b16 %v93
  %v314 = vunpack.c.l.b16 %v94
  %v315 = vunpack.c.l.b16 %v95
  %v316 = vunpack.c.l.b16 %v96
  %v317 = vunpack.c.l.b16 %v97
  %v318 = vunpack.c.l.b16 %v98
  %v319 = vunpack.c.l.b16 %v99
  %v320 = vunpack.c.l.b16 %v100
  %v321 = vpack.c.b16 %v242, %v241
  %v322 = vpack.c.b16 %v244, %v243
  %v323 = vpack.c.b16 %v246, %v245
  %v324 = vpack.c.b16 %v248, %v247
  %v325 = vpack.c.b16 %v250, %v249
  %v326 = vpack.c.b16 %v252, %v251
  %v327 = vpack.c.b16 %v254, %v253
  %v328 = vpack.c.b16 %v256, %v255
  %v329 = vpack.c.b16 %v258, %v257
  %v330 = vpack.c.b16 %v260, %v259
  %v331 = vpack.c.b16 %v262, %v261
  %v332 = vpack.c.b16 %v264, %v263
  %v333 = vpack.c.b16 %v266, %v265
  %v334 = vpack.c.b16 %v268, %v267
  %v335 = vpack.c.b16 %v270, %v269
  %v336 = vpack.c.b16 %v272, %v271
  %v337 = vpack.c.b16 %v274, %v273
  %v338 = vpack.c.b16 %v276, %v275
  %v339 = vpack.c.b16 %v278, %v277
  %v340 = vpack.c.b16 %v280, %v279
  %v341 = vpack.c.b16 %v282, %v281
  %v342 = vpack.c.b16 %v284, %v283
  %v343 = vpack.c.b16 %v286, %v285
  %v344 = vpack.c.b16 %v288, %v287
  %v345 = vpack.c.b16 %v290, %v289
  %v346 = vpack.c.b16 %v292, %v291
  %v347 = vpack.c.b16 %v294, %v293
  %v348 = vpack.c.b16 %v296, %v295
  %v349 = vpack.c.b16 %v298, %v297
  %v350 = vpack.c.b16 %v300, %v299
  %v351 = vpack.c.b16 %v302, %v301
  %v352 = vpack.c.b16 %v304, %v303
  %v353 = vpack.c.b16 %v306, %v305
  %v354 = vpack.c.b16 %v308, %v307
  %v355 = vpack.c.b16 %v310, %v309
  %v356 = vpack.c.b16 %v312, %v311
  %v357 = vpack.c.b16 %v314, %v313
  %v358 = vpack.c.b16 %v316, %v315
  %v359 = vpack.c.b16 %v318, %v317
  %v360 = vpack.c.b16 %v320, %v319
  %401 = vmatprep.subr.bf16.mxu0 0
  %402 = vmatpush1.bf16.msra.mxu0 %v328
  %403 = vmatprep.subr.bf16.mxu0 0
  %404 = vmatpush1.bf16.msra.mxu0 %v327
  %405 = vmatprep.subr.bf16.mxu0 0
  %406 = vmatpush1.bf16.msra.mxu0 %v326
  %407 = vmatprep.subr.bf16.mxu0 0
  %408 = vmatpush1.bf16.msra.mxu0 %v325
  %409 = vmatprep.subr.bf16.mxu0 0
  %410 = vmatpush1.bf16.msra.mxu0 %v324
  %411 = vmatprep.subr.bf16.mxu0 0
  %412 = vmatpush1.bf16.msra.mxu0 %v323
  %413 = vmatprep.subr.bf16.mxu0 0
  %414 = vmatpush1.bf16.msra.mxu0 %v322
  %415 = vmatprep.subr.bf16.mxu0 0
  %416 = vmatpush1.bf16.msra.mxu0 %v321
  %417 = vmatprep.subr.bf16.mxu0 0
  %418 = vmatpush2.bf16.msra.mxu0 %v336
  %419 = vmatprep.subr.bf16.mxu0 0
  %420 = vmatpush2.bf16.msra.mxu0 %v335
  %421 = vmatprep.subr.bf16.mxu0 0
  %422 = vmatpush2.bf16.msra.mxu0 %v334
  %423 = vmatprep.subr.bf16.mxu0 0
  %424 = vmatpush2.bf16.msra.mxu0 %v333
  %425 = vmatprep.subr.bf16.mxu0 0
  %426 = vmatpush2.bf16.msra.mxu0 %v332
  %427 = vmatprep.subr.bf16.mxu0 0
  %428 = vmatpush2.bf16.msra.mxu0 %v331
  %429 = vmatprep.subr.bf16.mxu0 0
  %430 = vmatpush2.bf16.msra.mxu0 %v330
  %431 = vmatprep.subr.bf16.mxu0 0
  %432 = vmatpush2.bf16.msra.mxu0 %v329
  %433 = vmatprep.mubr.bf16.mxu0 %v142
  %434 = vmatmul.mubr.bf16.gmra.mxu0 %v141
  %v435 = vpop.f32.mrf.mxu0
  %v436 = vadd.f32 %v115, %v435
  %v437 = vpop.f32.mrf.mxu0
  %v438 = vpop.f32.mrf.mxu0
  %v439 = vadd.f32 %v115, %v438
  %v440 = vpop.f32.mrf.mxu0
  %441 = vmatprep.mubr.bf16.mxu0 %v147
  %442 = vmatmul.mubr.bf16.gmra.mxu0 %v146
  %v443 = vpop.f32.mrf.mxu0
  %v444 = vadd.f32 %v115, %v443
  %v445 = vpop.f32.mrf.mxu0
  %v446 = vpop.f32.mrf.mxu0
  %v447 = vpop.f32.mrf.mxu0
  %448 = vdwg.mxu0
  %449 = vmatprep.subr.bf16.mxu0 0
  %450 = vmatpush1.bf16.msra.mxu0 %v344
  %451 = vmatprep.subr.bf16.mxu0 0
  %452 = vmatpush1.bf16.msra.mxu0 %v343
  %453 = vmatprep.subr.bf16.mxu0 0
  %454 = vmatpush1.bf16.msra.mxu0 %v342
  %455 = vmatprep.subr.bf16.mxu0 0
  %456 = vmatpush1.bf16.msra.mxu0 %v341
  %457 = vmatprep.subr.bf16.mxu0 0
  %458 = vmatpush1.bf16.msra.mxu0 %v340
  %459 = vmatprep.subr.bf16.mxu0 0
  %460 = vmatpush1.bf16.msra.mxu0 %v339
  %461 = vmatprep.subr.bf16.mxu0 0
  %462 = vmatpush1.bf16.msra.mxu0 %v338
  %463 = vmatprep.subr.bf16.mxu0 0
  %464 = vmatpush1.bf16.msra.mxu0 %v337
  %465 = vmatprep.subr.bf16.mxu0 0
  %466 = vmatpush2.bf16.msra.mxu0 %v352
  %467 = vmatprep.subr.bf16.mxu0 0
  %468 = vmatpush2.bf16.msra.mxu0 %v351
  %469 = vmatprep.subr.bf16.mxu0 0
  %470 = vmatpush2.bf16.msra.mxu0 %v350
  %471 = vmatprep.subr.bf16.mxu0 0
  %472 = vmatpush2.bf16.msra.mxu0 %v349
  %473 = vmatprep.subr.bf16.mxu0 0
  %474 = vmatpush2.bf16.msra.mxu0 %v348
  %475 = vmatprep.subr.bf16.mxu0 0
  %476 = vmatpush2.bf16.msra.mxu0 %v347
  %477 = vmatprep.subr.bf16.mxu0 0
  %478 = vmatpush2.bf16.msra.mxu0 %v346
  %479 = vmatprep.subr.bf16.mxu0 0
  %480 = vmatpush2.bf16.msra.mxu0 %v345
  %481 = vmatprep.mubr.bf16.mxu0 %v144
  %482 = vmatmul.mubr.bf16.gmra.mxu0 %v143
  %v483 = vpop.f32.mrf.mxu0
  %v484 = vadd.f32 %v436, %v483
  %v485 = vpop.f32.mrf.mxu0
  %v486 = vpop.f32.mrf.mxu0
  %v487 = vadd.f32 %v439, %v486
  %v488 = vpop.f32.mrf.mxu0
  %489 = vmatprep.mubr.bf16.mxu0 %v149
  %490 = vmatmul.mubr.bf16.gmra.mxu0 %v148
  %v491 = vpop.f32.mrf.mxu0
  %v492 = vadd.f32 %v444, %v491
  %v493 = vpop.f32.mrf.mxu0
  %v494 = vpop.f32.mrf.mxu0
  %v495 = vpop.f32.mrf.mxu0
  %496 = vdwg.mxu0
  %497 = vmatprep.subr.bf16.mxu0 0
  %498 = vmatpush1.bf16.msra.mxu0 %v360
  %499 = vmatprep.subr.bf16.mxu0 0
  %500 = vmatpush1.bf16.msra.mxu0 %v359
  %501 = vmatprep.subr.bf16.mxu0 0
  %502 = vmatpush1.bf16.msra.mxu0 %v358
  %503 = vmatprep.subr.bf16.mxu0 0
  %504 = vmatpush1.bf16.msra.mxu0 %v357
  %505 = vmatprep.subr.bf16.mxu0 0
  %506 = vmatpush1.bf16.msra.mxu0 %v356
  %507 = vmatprep.subr.bf16.mxu0 0
  %508 = vmatpush1.bf16.msra.mxu0 %v355
  %509 = vmatprep.subr.bf16.mxu0 0
  %510 = vmatpush1.bf16.msra.mxu0 %v354
  %511 = vmatprep.subr.bf16.mxu0 0
  %512 = vmatpush1.bf16.msra.mxu0 %v353
  %513 = vmatprep.subr.bf16.mxu0 0
  %514 = vmatpush2.bf16.msra.mxu0 0
  %515 = vmatprep.subr.bf16.mxu0 0
  %516 = vmatpush2.bf16.msra.mxu0 0
  %517 = vmatprep.subr.bf16.mxu0 0
  %518 = vmatpush2.bf16.msra.mxu0 0
  %519 = vmatprep.subr.bf16.mxu0 0
  %520 = vmatpush2.bf16.msra.mxu0 0
  %521 = vmatprep.subr.bf16.mxu0 0
  %522 = vmatpush2.bf16.msra.mxu0 0
  %523 = vmatprep.subr.bf16.mxu0 0
  %524 = vmatpush2.bf16.msra.mxu0 0
  %525 = vmatprep.subr.bf16.mxu0 0
  %526 = vmatpush2.bf16.msra.mxu0 0
  %527 = vmatprep.subr.bf16.mxu0 0
  %528 = vmatpush2.bf16.msra.mxu0 0
  %529 = vmatprep.mubr.bf16.mxu0 0
  %530 = vmatmul.mubr.bf16.gmra.mxu0 %v145
  %v531 = vpop.f32.mrf.mxu0
  %v532 = vadd.f32 %v484, %v531
  %v533 = vpop.f32.mrf.mxu0
  %v534 = vpop.f32.mrf.mxu0
  %v535 = vadd.f32 %v487, %v534
  %v536 = vpop.f32.mrf.mxu0
  %537 = vmatprep.mubr.bf16.mxu0 0
  %538 = vmatmul.mubr.bf16.gmra.mxu0 %v150
  %v539 = vpop.f32.mrf.mxu0
  %v540 = vadd.f32 %v492, %v539
  %v541 = vpop.f32.mrf.mxu0
  %v542 = vpop.f32.mrf.mxu0
  %v543 = vpop.f32.mrf.mxu0
  %544 = vdwg.mxu0
  %vm545 = vcmp.gt.f32.partialorder %v532, 0.0
  %vm546 = vcmp.gt.f32.partialorder %v535, 0.0
  %vm547 = vcmp.gt.f32.partialorder %v540, 0.0
  %v548 = vmin.f32 %v532, 0.0
  %v549 = vmin.f32 %v535, 0.0
  %v550 = vmin.f32 %v540, 0.0
  %v551 = vmul.f32 %v548, 1.442695
  %v552 = vpow.pop %v551
  %v553 = vmul.f32 %v549, 1.442695
  %v554 = vpow.pop %v553
  %v555 = vmul.f32 %v550, 1.442695
  %v556 = vpow.pop %v555
  %v557 = vsub.f32 %v552, 1.0
  %v558 = vsub.f32 %v554, 1.0
  %v559 = vsub.f32 %v556, 1.0
  %v560 = vsel %vm545, %v532, %v557
  %v561 = vsel %vm546, %v535, %v558
  %v562 = vsel %vm547, %v540, %v559
  %v563 = vadd.f32 %v560, %v561
  %v564 = vadd.f32 %v563, %v562
  %v565 = vrot.slane %v564, 4
  %v566 = vadd.f32 %v564, %v565
  %v567 = vrot.slane %v566, 2
  %v568 = vadd.f32 %v566, %v567
  %v569 = vrot.slane %v568, 1
  %v570 = vadd.f32 %v568, %v569
  %v571 = vrcp.pop 24.0
  %v572 = vmul.f32 %v570, %v571
  %v573 = vsub.f32 %v560, %v572
  %v574 = vsub.f32 %v561, %v572
  %v575 = vsub.f32 %v562, %v572
  %v576 = vmul.f32 %v573, %v573
  %v577 = vmul.f32 %v574, %v574
  %v578 = vmul.f32 %v575, %v575
  %v579 = vadd.f32 %v576, %v577
  %v580 = vadd.f32 %v579, %v578
  %v581 = vrot.slane %v580, 4
  %v582 = vadd.f32 %v580, %v581
  %v583 = vrot.slane %v582, 2
  %v584 = vadd.f32 %v582, %v583
  %v585 = vrot.slane %v584, 1
  %v586 = vadd.f32 %v584, %v585
  %v587 = vmul.f32 %v586, %v571
  %v588 = vadd.f32 %v587, 1e-08
  %v589 = vrsqrt.pop %v588
  %v590 = vmul.f32 %v573, %v589
  %v591 = vmul.f32 %v574, %v589
  %v592 = vmul.f32 %v575, %v589
  %v593 = vld [vmem:[%s3] sm:$0x1]
  %v595 = vlaneseq
  %v596 = vshrl.u32 %v595, 7
  %v597 = vsub.s32 0, %v596
  %v598 = vrot.slane %v593, %v597
  %v600 = vmul.f32 %v590, %v598
  %v601 = vmul.f32 %v591, %v598
  %v602 = vmul.f32 %v592, %v598
  %v603 = vld [vmem:[%s4] sm:$0x1]
  %v605 = vlaneseq
  %v606 = vshrl.u32 %v605, 7
  %v607 = vsub.s32 0, %v606
  %v608 = vrot.slane %v603, %v607
  %v610 = vadd.f32 %v600, %v608
  %v611 = vadd.f32 %v601, %v608
  %v612 = vadd.f32 %v602, %v608
  %613 = vst [vmem:[%s5] sm:$0xff] %v610
  %614 = vst [vmem:[%s5 + $0x8] sm:$0xff] %v611
  %615 = vst [vmem:[%s5 + $0x10] sm:$0xff] %v612
  %s616 = scalar_lea.vmem %s0, 60
  %v617 = vld [vmem:[%s616] sm:$0xff]
  %v618 = vld [vmem:[%s616 + $0x8] sm:$0xff]
  %v619 = vld [vmem:[%s616 + $0x10] sm:$0xf]
  %v620 = vld [vmem:[%s616 + $0x14] sm:$0xff]
  %v621 = vld [vmem:[%s616 + $0x1c] sm:$0xff]
  %v622 = vld [vmem:[%s616 + $0x24] sm:$0xf]
  %v623 = vld [vmem:[%s616 + $0x28] sm:$0xff]
  %v624 = vld [vmem:[%s616 + $0x30] sm:$0xff]
  %v625 = vld [vmem:[%s616 + $0x38] sm:$0xf]
  %v635 = vunpack.c.l.b16 %v617
  %v636 = vunpack.c.h.b16 %v617
  %v637 = vunpack.c.l.b16 %v618
  %v638 = vunpack.c.h.b16 %v618
  %v639 = vunpack.c.l.b16 %v619
  %v640 = vunpack.c.l.b16 %v620
  %v641 = vunpack.c.h.b16 %v620
  %v642 = vunpack.c.l.b16 %v621
  %v643 = vunpack.c.h.b16 %v621
  %v644 = vunpack.c.l.b16 %v622
  %v645 = vunpack.c.l.b16 %v623
  %v646 = vunpack.c.h.b16 %v623
  %v647 = vunpack.c.l.b16 %v624
  %v648 = vunpack.c.h.b16 %v624
  %v649 = vunpack.c.l.b16 %v625
  %v650 = vpack.c.b16 %v640, %v635
  %v651 = vpack.c.b16 %v641, %v636
  %v652 = vpack.c.b16 %v642, %v637
  %v653 = vpack.c.b16 %v643, %v638
  %v654 = vpack.c.b16 %v644, %v639
  %v655 = vpack.c.b16 %v645, %v645
  %v656 = vpack.c.b16 %v646, %v646
  %v657 = vpack.c.b16 %v647, %v647
  %v658 = vpack.c.b16 %v648, %v648
  %v659 = vpack.c.b16 %v649, %v649
  %670 = vmatprep.subr.bf16.mxu0 0
  %671 = vmatpush1.bf16.msra.mxu0 %v328
  %672 = vmatprep.subr.bf16.mxu0 0
  %673 = vmatpush1.bf16.msra.mxu0 %v327
  %674 = vmatprep.subr.bf16.mxu0 0
  %675 = vmatpush1.bf16.msra.mxu0 %v326
  %676 = vmatprep.subr.bf16.mxu0 0
  %677 = vmatpush1.bf16.msra.mxu0 %v325
  %678 = vmatprep.subr.bf16.mxu0 0
  %679 = vmatpush1.bf16.msra.mxu0 %v324
  %680 = vmatprep.subr.bf16.mxu0 0
  %681 = vmatpush1.bf16.msra.mxu0 %v323
  %682 = vmatprep.subr.bf16.mxu0 0
  %683 = vmatpush1.bf16.msra.mxu0 %v322
  %684 = vmatprep.subr.bf16.mxu0 0
  %685 = vmatpush1.bf16.msra.mxu0 %v321
  %686 = vmatprep.subr.bf16.mxu0 0
  %687 = vmatpush2.bf16.msra.mxu0 %v336
  %688 = vmatprep.subr.bf16.mxu0 0
  %689 = vmatpush2.bf16.msra.mxu0 %v335
  %690 = vmatprep.subr.bf16.mxu0 0
  %691 = vmatpush2.bf16.msra.mxu0 %v334
  %692 = vmatprep.subr.bf16.mxu0 0
  %693 = vmatpush2.bf16.msra.mxu0 %v333
  %694 = vmatprep.subr.bf16.mxu0 0
  %695 = vmatpush2.bf16.msra.mxu0 %v332
  %696 = vmatprep.subr.bf16.mxu0 0
  %697 = vmatpush2.bf16.msra.mxu0 %v331
  %698 = vmatprep.subr.bf16.mxu0 0
  %699 = vmatpush2.bf16.msra.mxu0 %v330
  %700 = vmatprep.subr.bf16.mxu0 0
  %701 = vmatpush2.bf16.msra.mxu0 %v329
  %702 = vmatprep.mubr.bf16.mxu0 %v651
  %703 = vmatmul.mubr.bf16.gmra.mxu0 %v650
  %v704 = vpop.f32.mrf.mxu0
  %v705 = vadd.f32 %v115, %v704
  %v706 = vpop.f32.mrf.mxu0
  %v707 = vpop.f32.mrf.mxu0
  %v708 = vadd.f32 %v115, %v707
  %v709 = vpop.f32.mrf.mxu0
  %710 = vmatprep.mubr.bf16.mxu0 %v656
  %711 = vmatmul.mubr.bf16.gmra.mxu0 %v655
  %v712 = vpop.f32.mrf.mxu0
  %v713 = vadd.f32 %v115, %v712
  %v714 = vpop.f32.mrf.mxu0
  %v715 = vpop.f32.mrf.mxu0
  %v716 = vpop.f32.mrf.mxu0
  %717 = vdwg.mxu0
  %718 = vmatprep.subr.bf16.mxu0 0
  %719 = vmatpush1.bf16.msra.mxu0 %v344
  %720 = vmatprep.subr.bf16.mxu0 0
  %721 = vmatpush1.bf16.msra.mxu0 %v343
  %722 = vmatprep.subr.bf16.mxu0 0
  %723 = vmatpush1.bf16.msra.mxu0 %v342
  %724 = vmatprep.subr.bf16.mxu0 0
  %725 = vmatpush1.bf16.msra.mxu0 %v341
  %726 = vmatprep.subr.bf16.mxu0 0
  %727 = vmatpush1.bf16.msra.mxu0 %v340
  %728 = vmatprep.subr.bf16.mxu0 0
  %729 = vmatpush1.bf16.msra.mxu0 %v339
  %730 = vmatprep.subr.bf16.mxu0 0
  %731 = vmatpush1.bf16.msra.mxu0 %v338
  %732 = vmatprep.subr.bf16.mxu0 0
  %733 = vmatpush1.bf16.msra.mxu0 %v337
  %734 = vmatprep.subr.bf16.mxu0 0
  %735 = vmatpush2.bf16.msra.mxu0 %v352
  %736 = vmatprep.subr.bf16.mxu0 0
  %737 = vmatpush2.bf16.msra.mxu0 %v351
  %738 = vmatprep.subr.bf16.mxu0 0
  %739 = vmatpush2.bf16.msra.mxu0 %v350
  %740 = vmatprep.subr.bf16.mxu0 0
  %741 = vmatpush2.bf16.msra.mxu0 %v349
  %742 = vmatprep.subr.bf16.mxu0 0
  %743 = vmatpush2.bf16.msra.mxu0 %v348
  %744 = vmatprep.subr.bf16.mxu0 0
  %745 = vmatpush2.bf16.msra.mxu0 %v347
  %746 = vmatprep.subr.bf16.mxu0 0
  %747 = vmatpush2.bf16.msra.mxu0 %v346
  %748 = vmatprep.subr.bf16.mxu0 0
  %749 = vmatpush2.bf16.msra.mxu0 %v345
  %750 = vmatprep.mubr.bf16.mxu0 %v653
  %751 = vmatmul.mubr.bf16.gmra.mxu0 %v652
  %v752 = vpop.f32.mrf.mxu0
  %v753 = vadd.f32 %v705, %v752
  %v754 = vpop.f32.mrf.mxu0
  %v755 = vpop.f32.mrf.mxu0
  %v756 = vadd.f32 %v708, %v755
  %v757 = vpop.f32.mrf.mxu0
  %758 = vmatprep.mubr.bf16.mxu0 %v658
  %759 = vmatmul.mubr.bf16.gmra.mxu0 %v657
  %v760 = vpop.f32.mrf.mxu0
  %v761 = vadd.f32 %v713, %v760
  %v762 = vpop.f32.mrf.mxu0
  %v763 = vpop.f32.mrf.mxu0
  %v764 = vpop.f32.mrf.mxu0
  %765 = vdwg.mxu0
  %766 = vmatprep.subr.bf16.mxu0 0
  %767 = vmatpush1.bf16.msra.mxu0 %v360
  %768 = vmatprep.subr.bf16.mxu0 0
  %769 = vmatpush1.bf16.msra.mxu0 %v359
  %770 = vmatprep.subr.bf16.mxu0 0
  %771 = vmatpush1.bf16.msra.mxu0 %v358
  %772 = vmatprep.subr.bf16.mxu0 0
  %773 = vmatpush1.bf16.msra.mxu0 %v357
  %774 = vmatprep.subr.bf16.mxu0 0
  %775 = vmatpush1.bf16.msra.mxu0 %v356
  %776 = vmatprep.subr.bf16.mxu0 0
  %777 = vmatpush1.bf16.msra.mxu0 %v355
  %778 = vmatprep.subr.bf16.mxu0 0
  %779 = vmatpush1.bf16.msra.mxu0 %v354
  %780 = vmatprep.subr.bf16.mxu0 0
  %781 = vmatpush1.bf16.msra.mxu0 %v353
  %782 = vmatprep.subr.bf16.mxu0 0
  %783 = vmatpush2.bf16.msra.mxu0 0
  %784 = vmatprep.subr.bf16.mxu0 0
  %785 = vmatpush2.bf16.msra.mxu0 0
  %786 = vmatprep.subr.bf16.mxu0 0
  %787 = vmatpush2.bf16.msra.mxu0 0
  %788 = vmatprep.subr.bf16.mxu0 0
  %789 = vmatpush2.bf16.msra.mxu0 0
  %790 = vmatprep.subr.bf16.mxu0 0
  %791 = vmatpush2.bf16.msra.mxu0 0
  %792 = vmatprep.subr.bf16.mxu0 0
  %793 = vmatpush2.bf16.msra.mxu0 0
  %794 = vmatprep.subr.bf16.mxu0 0
  %795 = vmatpush2.bf16.msra.mxu0 0
  %796 = vmatprep.subr.bf16.mxu0 0
  %797 = vmatpush2.bf16.msra.mxu0 0
  %798 = vmatprep.mubr.bf16.mxu0 0
  %799 = vmatmul.mubr.bf16.gmra.mxu0 %v654
  %v800 = vpop.f32.mrf.mxu0
  %v801 = vadd.f32 %v753, %v800
  %v802 = vpop.f32.mrf.mxu0
  %v803 = vpop.f32.mrf.mxu0
  %v804 = vadd.f32 %v756, %v803
  %v805 = vpop.f32.mrf.mxu0
  %806 = vmatprep.mubr.bf16.mxu0 0
  %807 = vmatmul.mubr.bf16.gmra.mxu0 %v659
  %v808 = vpop.f32.mrf.mxu0
  %v809 = vadd.f32 %v761, %v808
  %v810 = vpop.f32.mrf.mxu0
  %v811 = vpop.f32.mrf.mxu0
  %v812 = vpop.f32.mrf.mxu0
  %813 = vdwg.mxu0
  %vm814 = vcmp.gt.f32.partialorder %v801, 0.0
  %vm815 = vcmp.gt.f32.partialorder %v804, 0.0
  %vm816 = vcmp.gt.f32.partialorder %v809, 0.0
  %v817 = vmin.f32 %v801, 0.0
  %v818 = vmin.f32 %v804, 0.0
  %v819 = vmin.f32 %v809, 0.0
  %v820 = vmul.f32 %v817, 1.442695
  %v821 = vpow.pop %v820
  %v822 = vmul.f32 %v818, 1.442695
  %v823 = vpow.pop %v822
  %v824 = vmul.f32 %v819, 1.442695
  %v825 = vpow.pop %v824
  %v826 = vsub.f32 %v821, 1.0
  %v827 = vsub.f32 %v823, 1.0
  %v828 = vsub.f32 %v825, 1.0
  %v829 = vsel %vm814, %v801, %v826
  %v830 = vsel %vm815, %v804, %v827
  %v831 = vsel %vm816, %v809, %v828
  %v832 = vadd.f32 %v829, %v830
  %v833 = vadd.f32 %v832, %v831
  %v834 = vrot.slane %v833, 4
  %v835 = vadd.f32 %v833, %v834
  %v836 = vrot.slane %v835, 2
  %v837 = vadd.f32 %v835, %v836
  %v838 = vrot.slane %v837, 1
  %v839 = vadd.f32 %v837, %v838
  %v840 = vmul.f32 %v839, %v571
  %v841 = vsub.f32 %v829, %v840
  %v842 = vsub.f32 %v830, %v840
  %v843 = vsub.f32 %v831, %v840
  %v844 = vmul.f32 %v841, %v841
  %v845 = vmul.f32 %v842, %v842
  %v846 = vmul.f32 %v843, %v843
  %v847 = vadd.f32 %v844, %v845
  %v848 = vadd.f32 %v847, %v846
  %v849 = vrot.slane %v848, 4
  %v850 = vadd.f32 %v848, %v849
  %v851 = vrot.slane %v850, 2
  %v852 = vadd.f32 %v850, %v851
  %v853 = vrot.slane %v852, 1
  %v854 = vadd.f32 %v852, %v853
  %v855 = vmul.f32 %v854, %v571
  %v856 = vadd.f32 %v855, 1e-08
  %v857 = vrsqrt.pop %v856
  %v858 = vmul.f32 %v841, %v857
  %v859 = vmul.f32 %v842, %v857
  %v860 = vmul.f32 %v843, %v857
  %v861 = vld [vmem:[%s3] sm:$0x1]
  %v863 = vlaneseq
  %v864 = vshrl.u32 %v863, 7
  %v865 = vsub.s32 0, %v864
  %v866 = vrot.slane %v861, %v865
  %v868 = vmul.f32 %v858, %v866
  %v869 = vmul.f32 %v859, %v866
  %v870 = vmul.f32 %v860, %v866
  %v871 = vld [vmem:[%s4] sm:$0x1]
  %v873 = vlaneseq
  %v874 = vshrl.u32 %v873, 7
  %v875 = vsub.s32 0, %v874
  %v876 = vrot.slane %v871, %v875
  %v878 = vadd.f32 %v868, %v876
  %v879 = vadd.f32 %v869, %v876
  %v880 = vadd.f32 %v870, %v876
  %s881 = scalar_lea.vmem %s5, 24
  %882 = vst [vmem:[%s881] sm:$0xff] %v878
  %883 = vst [vmem:[%s881 + $0x8] sm:$0xff] %v879
  %884 = vst [vmem:[%s881 + $0x10] sm:$0xff] %v880
  // Predicated region
  $region22: #{_lambda_.34} parent=0 // pred_check
    _
  $region23: #{_lambda_.34} parent=0 // pred_check_branch
    %886 = sbr.rel (0) target = $region25
  $region24: #{_lambda_.34} parent=0 // pred_region
    _
  $region25: #{_lambda_.34} parent=0 // pred_fallthru
    _
  // Predicated region
  $region26: #{_lambda_.34} parent=0 // pred_check
    _
  $region27: #{_lambda_.34} parent=0 // pred_check_branch
    %888 = sbr.rel (0) target = $region29
  $region28: #{_lambda_.34} parent=0 // pred_region
    _
  $region29: #{_lambda_.34} parent=0 // pred_fallthru
    _

// kernel: _lambda_.35
$region0: #{_lambda_.35}
  #allocation0 [shape = 'u32[]', space=smem, size = 0x4, offset = 0x4, fixed_abs, tag = 'smem constant byte address 0x4 - core index']
  #allocation1 [shape = 'u32[144,128]{1,0:T(1,128)}', space=vmem, size = 0x12000, scoped, tag = 'internal scratch']
  %s0 = inlined_call_operand.vmem [shape: bf16[2,56,640], index: 0, kind: input, shape index: {}]
  %s1 = inlined_call_operand.vmem [shape: bf16[640,128], index: 1, kind: input, shape index: {}]
  %s2 = inlined_call_operand.vmem [shape: f32[1,128], index: 2, kind: input, shape index: {}]
  %s3 = inlined_call_operand.vmem [shape: f32[1,128], index: 3, kind: input, shape index: {}]
  %s4 = inlined_call_operand.vmem [shape: f32[1,128], index: 4, kind: input, shape index: {}]
  %s5 = inlined_call_operand.vmem [shape: f32[2,56,128], index: 5, kind: output, shape index: {}]
  %s6 = sld [smem:[#allocation0]]
  $region30: #{_lambda_.35} parent=0
    _
  %s8 = ssub.s32 1, %s6
  %s9 = scalar_select 0, %s8, %s6
  // Predicated region
  $region2: #{_lambda_.35} parent=0 // pred_check
    _
  $region3: #{_lambda_.35} parent=0 // pred_check_branch
    %11 = sbr.rel (0) target = $region5
  $region4: #{_lambda_.35} parent=0 // pred_region
    _
  $region5: #{_lambda_.35} parent=0 // pred_fallthru
    _
  // Predicated region
  $region6: #{_lambda_.35} parent=0 // pred_check
    _
  $region7: #{_lambda_.35} parent=0 // pred_check_branch
    %13 = sbr.rel (0) target = $region9
  $region8: #{_lambda_.35} parent=0 // pred_region
    _
  $region9: #{_lambda_.35} parent=0 // pred_fallthru
    _
  // Predicated region
  $region10: #{_lambda_.35} parent=0 // pred_check
    _
  $region11: #{_lambda_.35} parent=0 // pred_check_branch
    %15 = sbr.rel (0) target = $region13
  $region12: #{_lambda_.35} parent=0 // pred_region
    _
  $region13: #{_lambda_.35} parent=0 // pred_fallthru
    _
  // Predicated region
  $region14: #{_lambda_.35} parent=0 // pred_check
    _
  $region15: #{_lambda_.35} parent=0 // pred_check_branch
    %17 = sbr.rel (0) target = $region17
  $region16: #{_lambda_.35} parent=0 // pred_region
    _
  $region17: #{_lambda_.35} parent=0 // pred_fallthru
    _
  // Predicated region
  $region18: #{_lambda_.35} parent=0 // pred_check
    _
  $region19: #{_lambda_.35} parent=0 // pred_check_branch
    %19 = sbr.rel (0) target = $region21
  $region20: #{_lambda_.35} parent=0 // pred_region
    _
  $region21: #{_lambda_.35} parent=0 // pred_fallthru
    _
  %v21 = vld [vmem:[%s1] sm:$0xf]
  %v22 = vld [vmem:[%s1 + $0x4] sm:$0xf]
  %v23 = vld [vmem:[%s1 + $0x8] sm:$0xf]
  %v24 = vld [vmem:[%s1 + $0xc] sm:$0xf]
  %v25 = vld [vmem:[%s1 + $0x10] sm:$0xf]
  %v26 = vld [vmem:[%s1 + $0x14] sm:$0xf]
  %v27 = vld [vmem:[%s1 + $0x18] sm:$0xf]
  %v28 = vld [vmem:[%s1 + $0x1c] sm:$0xf]
  %v29 = vld [vmem:[%s1 + $0x20] sm:$0xf]
  %v30 = vld [vmem:[%s1 + $0x24] sm:$0xf]
  %v31 = vld [vmem:[%s1 + $0x28] sm:$0xf]
  %v32 = vld [vmem:[%s1 + $0x2c] sm:$0xf]
  %v33 = vld [vmem:[%s1 + $0x30] sm:$0xf]
  %v34 = vld [vmem:[%s1 + $0x34] sm:$0xf]
  %v35 = vld [vmem:[%s1 + $0x38] sm:$0xf]
  %v36 = vld [vmem:[%s1 + $0x3c] sm:$0xf]
  %v37 = vld [vmem:[%s1 + $0x40] sm:$0xf]
  %v38 = vld [vmem:[%s1 + $0x44] sm:$0xf]
  %v39 = vld [vmem:[%s1 + $0x48] sm:$0xf]
  %v40 = vld [vmem:[%s1 + $0x4c] sm:$0xf]
  %v41 = vld [vmem:[%s1 + $0x50] sm:$0xf]
  %v42 = vld [vmem:[%s1 + $0x54] sm:$0xf]
  %v43 = vld [vmem:[%s1 + $0x58] sm:$0xf]
  %v44 = vld [vmem:[%s1 + $0x5c] sm:$0xf]
  %v45 = vld [vmem:[%s1 + $0x60] sm:$0xf]
  %v46 = vld [vmem:[%s1 + $0x64] sm:$0xf]
  %v47 = vld [vmem:[%s1 + $0x68] sm:$0xf]
  %v48 = vld [vmem:[%s1 + $0x6c] sm:$0xf]
  %v49 = vld [vmem:[%s1 + $0x70] sm:$0xf]
  %v50 = vld [vmem:[%s1 + $0x74] sm:$0xf]
  %v51 = vld [vmem:[%s1 + $0x78] sm:$0xf]
  %v52 = vld [vmem:[%s1 + $0x7c] sm:$0xf]
  %v53 = vld [vmem:[%s1 + $0x80] sm:$0xf]
  %v54 = vld [vmem:[%s1 + $0x84] sm:$0xf]
  %v55 = vld [vmem:[%s1 + $0x88] sm:$0xf]
  %v56 = vld [vmem:[%s1 + $0x8c] sm:$0xf]
  %v57 = vld [vmem:[%s1 + $0x90] sm:$0xf]
  %v58 = vld [vmem:[%s1 + $0x94] sm:$0xf]
  %v59 = vld [vmem:[%s1 + $0x98] sm:$0xf]
  %v60 = vld [vmem:[%s1 + $0x9c] sm:$0xf]
  %v61 = vld [vmem:[%s1 + $0xa0] sm:$0xf]
  %v62 = vld [vmem:[%s1 + $0xa4] sm:$0xf]
  %v63 = vld [vmem:[%s1 + $0xa8] sm:$0xf]
  %v64 = vld [vmem:[%s1 + $0xac] sm:$0xf]
  %v65 = vld [vmem:[%s1 + $0xb0] sm:$0xf]
  %v66 = vld [vmem:[%s1 + $0xb4] sm:$0xf]
  %v67 = vld [vmem:[%s1 + $0xb8] sm:$0xf]
  %v68 = vld [vmem:[%s1 + $0xbc] sm:$0xf]
  %v69 = vld [vmem:[%s1 + $0xc0] sm:$0xf]
  %v70 = vld [vmem:[%s1 + $0xc4] sm:$0xf]
  %v71 = vld [vmem:[%s1 + $0xc8] sm:$0xf]
  %v72 = vld [vmem:[%s1 + $0xcc] sm:$0xf]
  %v73 = vld [vmem:[%s1 + $0xd0] sm:$0xf]
  %v74 = vld [vmem:[%s1 + $0xd4] sm:$0xf]
  %v75 = vld [vmem:[%s1 + $0xd8] sm:$0xf]
  %v76 = vld [vmem:[%s1 + $0xdc] sm:$0xf]
  %v77 = vld [vmem:[%s1 + $0xe0] sm:$0xf]
  %v78 = vld [vmem:[%s1 + $0xe4] sm:$0xf]
  %v79 = vld [vmem:[%s1 + $0xe8] sm:$0xf]
  %v80 = vld [vmem:[%s1 + $0xec] sm:$0xf]
  %v81 = vld [vmem:[%s1 + $0xf0] sm:$0xf]
  %v82 = vld [vmem:[%s1 + $0xf4] sm:$0xf]
  %v83 = vld [vmem:[%s1 + $0xf8] sm:$0xf]
  %v84 = vld [vmem:[%s1 + $0xfc] sm:$0xf]
  %v85 = vld [vmem:[%s1 + $0x100] sm:$0xf]
  %v86 = vld [vmem:[%s1 + $0x104] sm:$0xf]
  %v87 = vld [vmem:[%s1 + $0x108] sm:$0xf]
  %v88 = vld [vmem:[%s1 + $0x10c] sm:$0xf]
  %v89 = vld [vmem:[%s1 + $0x110] sm:$0xf]
  %v90 = vld [vmem:[%s1 + $0x114] sm:$0xf]
  %v91 = vld [vmem:[%s1 + $0x118] sm:$0xf]
  %v92 = vld [vmem:[%s1 + $0x11c] sm:$0xf]
  %v93 = vld [vmem:[%s1 + $0x120] sm:$0xf]
  %v94 = vld [vmem:[%s1 + $0x124] sm:$0xf]
  %v95 = vld [vmem:[%s1 + $0x128] sm:$0xf]
  %v96 = vld [vmem:[%s1 + $0x12c] sm:$0xf]
  %v97 = vld [vmem:[%s1 + $0x130] sm:$0xf]
  %v98 = vld [vmem:[%s1 + $0x134] sm:$0xf]
  %v99 = vld [vmem:[%s1 + $0x138] sm:$0xf]
  %v100 = vld [vmem:[%s1 + $0x13c] sm:$0xf]
  %v101 = vld [vmem:[%s2] sm:$0x1]
  %v102 = vld [vmem:[%s0] sm:$0xff]
  %v103 = vld [vmem:[%s0 + $0x8] sm:$0xff]
  %v104 = vld [vmem:[%s0 + $0x10] sm:$0xf]
  %v105 = vld [vmem:[%s0 + $0x14] sm:$0xff]
  %v106 = vld [vmem:[%s0 + $0x1c] sm:$0xff]
  %v107 = vld [vmem:[%s0 + $0x24] sm:$0xf]
  %v108 = vld [vmem:[%s0 + $0x28] sm:$0xff]
  %v109 = vld [vmem:[%s0 + $0x30] sm:$0xff]
  %v110 = vld [vmem:[%s0 + $0x38] sm:$0xf]
  %v111 = vld [vmem:[%s0 + $0x3c] sm:$0xff]
  %v112 = vld [vmem:[%s0 + $0x44] sm:$0xff]
  %v113 = vld [vmem:[%s0 + $0x4c] sm:$0xf]
  %v114 = vld [vmem:[%s0 + $0x50] sm:$0xff]
  %v115 = vld [vmem:[%s0 + $0x58] sm:$0xff]
  %v116 = vld [vmem:[%s0 + $0x60] sm:$0xf]
  %v117 = vld [vmem:[%s0 + $0x64] sm:$0xff]
  %v118 = vld [vmem:[%s0 + $0x6c] sm:$0xff]
  %v119 = vld [vmem:[%s0 + $0x74] sm:$0xf]
  %v120 = vld [vmem:[%s0 + $0x78] sm:$0xff]
  %v121 = vld [vmem:[%s0 + $0x80] sm:$0xff]
  %v122 = vld [vmem:[%s0 + $0x88] sm:$0xf]
  %v124 = vlaneseq
  %v125 = vshrl.u32 %v124, 7
  %v126 = vsub.s32 0, %v125
  %v127 = vrot.slane %v101, %v126
  %v150 = vunpack.c.l.b16 %v102
  %v151 = vunpack.c.h.b16 %v102
  %v152 = vunpack.c.l.b16 %v103
  %v153 = vunpack.c.h.b16 %v103
  %v154 = vunpack.c.l.b16 %v104
  %v155 = vunpack.c.l.b16 %v105
  %v156 = vunpack.c.h.b16 %v105
  %v157 = vunpack.c.l.b16 %v106
  %v158 = vunpack.c.h.b16 %v106
  %v159 = vunpack.c.l.b16 %v107
  %v160 = vunpack.c.l.b16 %v108
  %v161 = vunpack.c.h.b16 %v108
  %v162 = vunpack.c.l.b16 %v109
  %v163 = vunpack.c.h.b16 %v109
  %v164 = vunpack.c.l.b16 %v110
  %v165 = vunpack.c.l.b16 %v111
  %v166 = vunpack.c.h.b16 %v111
  %v167 = vunpack.c.l.b16 %v112
  %v168 = vunpack.c.h.b16 %v112
  %v169 = vunpack.c.l.b16 %v113
  %v170 = vunpack.c.l.b16 %v114
  %v171 = vunpack.c.h.b16 %v114
  %v172 = vunpack.c.l.b16 %v115
  %v173 = vunpack.c.h.b16 %v115
  %v174 = vunpack.c.l.b16 %v116
  %v175 = vunpack.c.l.b16 %v117
  %v176 = vunpack.c.h.b16 %v117
  %v177 = vunpack.c.l.b16 %v118
  %v178 = vunpack.c.h.b16 %v118
  %v179 = vunpack.c.l.b16 %v119
  %v180 = vunpack.c.l.b16 %v120
  %v181 = vunpack.c.h.b16 %v120
  %v182 = vunpack.c.l.b16 %v121
  %v183 = vunpack.c.h.b16 %v121
  %v184 = vunpack.c.l.b16 %v122
  %v185 = vpack.c.b16 %v155, %v150
  %v186 = vpack.c.b16 %v156, %v151
  %v187 = vpack.c.b16 %v157, %v152
  %v188 = vpack.c.b16 %v158, %v153
  %v189 = vpack.c.b16 %v159, %v154
  %v190 = vpack.c.b16 %v165, %v160
  %v191 = vpack.c.b16 %v166, %v161
  %v192 = vpack.c.b16 %v167, %v162
  %v193 = vpack.c.b16 %v168, %v163
  %v194 = vpack.c.b16 %v169, %v164
  %v195 = vpack.c.b16 %v175, %v170
  %v196 = vpack.c.b16 %v176, %v171
  %v197 = vpack.c.b16 %v177, %v172
  %v198 = vpack.c.b16 %v178, %v173
  %v199 = vpack.c.b16 %v179, %v174
  %v200 = vpack.c.b16 %v180, %v180
  %v201 = vpack.c.b16 %v181, %v181
  %v202 = vpack.c.b16 %v182, %v182
  %v203 = vpack.c.b16 %v183, %v183
  %v204 = vpack.c.b16 %v184, %v184
  %v305 = vunpack.c.l.b16 %v21
  %v306 = vunpack.c.l.b16 %v22
  %v307 = vunpack.c.l.b16 %v23
  %v308 = vunpack.c.l.b16 %v24
  %v309 = vunpack.c.l.b16 %v25
  %v310 = vunpack.c.l.b16 %v26
  %v311 = vunpack.c.l.b16 %v27
  %v312 = vunpack.c.l.b16 %v28
  %v313 = vunpack.c.l.b16 %v29
  %v314 = vunpack.c.l.b16 %v30
  %v315 = vunpack.c.l.b16 %v31
  %v316 = vunpack.c.l.b16 %v32
  %v317 = vunpack.c.l.b16 %v33
  %v318 = vunpack.c.l.b16 %v34
  %v319 = vunpack.c.l.b16 %v35
  %v320 = vunpack.c.l.b16 %v36
  %v321 = vunpack.c.l.b16 %v37
  %v322 = vunpack.c.l.b16 %v38
  %v323 = vunpack.c.l.b16 %v39
  %v324 = vunpack.c.l.b16 %v40
  %v325 = vunpack.c.l.b16 %v41
  %v326 = vunpack.c.l.b16 %v42
  %v327 = vunpack.c.l.b16 %v43
  %v328 = vunpack.c.l.b16 %v44
  %v329 = vunpack.c.l.b16 %v45
  %v330 = vunpack.c.l.b16 %v46
  %v331 = vunpack.c.l.b16 %v47
  %v332 = vunpack.c.l.b16 %v48
  %v333 = vunpack.c.l.b16 %v49
  %v334 = vunpack.c.l.b16 %v50
  %v335 = vunpack.c.l.b16 %v51
  %v336 = vunpack.c.l.b16 %v52
  %v337 = vunpack.c.l.b16 %v53
  %v338 = vunpack.c.l.b16 %v54
  %v339 = vunpack.c.l.b16 %v55
  %v340 = vunpack.c.l.b16 %v56
  %v341 = vunpack.c.l.b16 %v57
  %v342 = vunpack.c.l.b16 %v58
  %v343 = vunpack.c.l.b16 %v59
  %v344 = vunpack.c.l.b16 %v60
  %v345 = vunpack.c.l.b16 %v61
  %v346 = vunpack.c.l.b16 %v62
  %v347 = vunpack.c.l.b16 %v63
  %v348 = vunpack.c.l.b16 %v64
  %v349 = vunpack.c.l.b16 %v65
  %v350 = vunpack.c.l.b16 %v66
  %v351 = vunpack.c.l.b16 %v67
  %v352 = vunpack.c.l.b16 %v68
  %v353 = vunpack.c.l.b16 %v69
  %v354 = vunpack.c.l.b16 %v70
  %v355 = vunpack.c.l.b16 %v71
  %v356 = vunpack.c.l.b16 %v72
  %v357 = vunpack.c.l.b16 %v73
  %v358 = vunpack.c.l.b16 %v74
  %v359 = vunpack.c.l.b16 %v75
  %v360 = vunpack.c.l.b16 %v76
  %v361 = vunpack.c.l.b16 %v77
  %v362 = vunpack.c.l.b16 %v78
  %v363 = vunpack.c.l.b16 %v79
  %v364 = vunpack.c.l.b16 %v80
  %v365 = vunpack.c.l.b16 %v81
  %v366 = vunpack.c.l.b16 %v82
  %v367 = vunpack.c.l.b16 %v83
  %v368 = vunpack.c.l.b16 %v84
  %v369 = vunpack.c.l.b16 %v85
  %v370 = vunpack.c.l.b16 %v86
  %v371 = vunpack.c.l.b16 %v87
  %v372 = vunpack.c.l.b16 %v88
  %v373 = vunpack.c.l.b16 %v89
  %v374 = vunpack.c.l.b16 %v90
  %v375 = vunpack.c.l.b16 %v91
  %v376 = vunpack.c.l.b16 %v92
  %v377 = vunpack.c.l.b16 %v93
  %v378 = vunpack.c.l.b16 %v94
  %v379 = vunpack.c.l.b16 %v95
  %v380 = vunpack.c.l.b16 %v96
  %v381 = vunpack.c.l.b16 %v97
  %v382 = vunpack.c.l.b16 %v98
  %v383 = vunpack.c.l.b16 %v99
  %v384 = vunpack.c.l.b16 %v100
  %v385 = vpack.c.b16 %v306, %v305
  %v386 = vpack.c.b16 %v308, %v307
  %v387 = vpack.c.b16 %v310, %v309
  %v388 = vpack.c.b16 %v312, %v311
  %v389 = vpack.c.b16 %v314, %v313
  %v390 = vpack.c.b16 %v316, %v315
  %v391 = vpack.c.b16 %v318, %v317
  %v392 = vpack.c.b16 %v320, %v319
  %v393 = vpack.c.b16 %v322, %v321
  %v394 = vpack.c.b16 %v324, %v323
  %v395 = vpack.c.b16 %v326, %v325
  %v396 = vpack.c.b16 %v328, %v327
  %v397 = vpack.c.b16 %v330, %v329
  %v398 = vpack.c.b16 %v332, %v331
  %v399 = vpack.c.b16 %v334, %v333
  %v400 = vpack.c.b16 %v336, %v335
  %v401 = vpack.c.b16 %v338, %v337
  %v402 = vpack.c.b16 %v340, %v339
  %v403 = vpack.c.b16 %v342, %v341
  %v404 = vpack.c.b16 %v344, %v343
  %v405 = vpack.c.b16 %v346, %v345
  %v406 = vpack.c.b16 %v348, %v347
  %v407 = vpack.c.b16 %v350, %v349
  %v408 = vpack.c.b16 %v352, %v351
  %v409 = vpack.c.b16 %v354, %v353
  %v410 = vpack.c.b16 %v356, %v355
  %v411 = vpack.c.b16 %v358, %v357
  %v412 = vpack.c.b16 %v360, %v359
  %v413 = vpack.c.b16 %v362, %v361
  %v414 = vpack.c.b16 %v364, %v363
  %v415 = vpack.c.b16 %v366, %v365
  %v416 = vpack.c.b16 %v368, %v367
  %v417 = vpack.c.b16 %v370, %v369
  %v418 = vpack.c.b16 %v372, %v371
  %v419 = vpack.c.b16 %v374, %v373
  %v420 = vpack.c.b16 %v376, %v375
  %v421 = vpack.c.b16 %v378, %v377
  %v422 = vpack.c.b16 %v380, %v379
  %v423 = vpack.c.b16 %v382, %v381
  %v424 = vpack.c.b16 %v384, %v383
  %465 = vmatprep.subr.bf16.mxu0 0
  %466 = vmatpush1.bf16.msra.mxu0 %v392
  %467 = vmatprep.subr.bf16.mxu0 0
  %468 = vmatpush1.bf16.msra.mxu0 %v391
  %469 = vmatprep.subr.bf16.mxu0 0
  %470 = vmatpush1.bf16.msra.mxu0 %v390
  %471 = vmatprep.subr.bf16.mxu0 0
  %472 = vmatpush1.bf16.msra.mxu0 %v389
  %473 = vmatprep.subr.bf16.mxu0 0
  %474 = vmatpush1.bf16.msra.mxu0 %v388
  %475 = vmatprep.subr.bf16.mxu0 0
  %476 = vmatpush1.bf16.msra.mxu0 %v387
  %477 = vmatprep.subr.bf16.mxu0 0
  %478 = vmatpush1.bf16.msra.mxu0 %v386
  %479 = vmatprep.subr.bf16.mxu0 0
  %480 = vmatpush1.bf16.msra.mxu0 %v385
  %481 = vmatprep.subr.bf16.mxu0 0
  %482 = vmatpush2.bf16.msra.mxu0 %v400
  %483 = vmatprep.subr.bf16.mxu0 0
  %484 = vmatpush2.bf16.msra.mxu0 %v399
  %485 = vmatprep.subr.bf16.mxu0 0
  %486 = vmatpush2.bf16.msra.mxu0 %v398
  %487 = vmatprep.subr.bf16.mxu0 0
  %488 = vmatpush2.bf16.msra.mxu0 %v397
  %489 = vmatprep.subr.bf16.mxu0 0
  %490 = vmatpush2.bf16.msra.mxu0 %v396
  %491 = vmatprep.subr.bf16.mxu0 0
  %492 = vmatpush2.bf16.msra.mxu0 %v395
  %493 = vmatprep.subr.bf16.mxu0 0
  %494 = vmatpush2.bf16.msra.mxu0 %v394
  %495 = vmatprep.subr.bf16.mxu0 0
  %496 = vmatpush2.bf16.msra.mxu0 %v393
  %497 = vmatprep.mubr.bf16.mxu0 %v186
  %498 = vmatmul.mubr.bf16.gmra.mxu0 %v185
  %v499 = vpop.f32.mrf.mxu0
  %v500 = vadd.f32 %v127, %v499
  %v501 = vpop.f32.mrf.mxu0
  %v502 = vpop.f32.mrf.mxu0
  %v503 = vadd.f32 %v127, %v502
  %v504 = vpop.f32.mrf.mxu0
  %505 = vmatprep.mubr.bf16.mxu0 %v191
  %506 = vmatmul.mubr.bf16.gmra.mxu0 %v190
  %v507 = vpop.f32.mrf.mxu0
  %v508 = vadd.f32 %v127, %v507
  %v509 = vpop.f32.mrf.mxu0
  %v510 = vpop.f32.mrf.mxu0
  %v511 = vadd.f32 %v127, %v510
  %v512 = vpop.f32.mrf.mxu0
  %513 = vmatprep.mubr.bf16.mxu0 %v196
  %514 = vmatmul.mubr.bf16.gmra.mxu0 %v195
  %v515 = vpop.f32.mrf.mxu0
  %v516 = vadd.f32 %v127, %v515
  %v517 = vpop.f32.mrf.mxu0
  %v518 = vpop.f32.mrf.mxu0
  %v519 = vadd.f32 %v127, %v518
  %v520 = vpop.f32.mrf.mxu0
  %521 = vmatprep.mubr.bf16.mxu0 %v201
  %522 = vmatmul.mubr.bf16.gmra.mxu0 %v200
  %v523 = vpop.f32.mrf.mxu0
  %v524 = vadd.f32 %v127, %v523
  %v525 = vpop.f32.mrf.mxu0
  %v526 = vpop.f32.mrf.mxu0
  %v527 = vpop.f32.mrf.mxu0
  %528 = vdwg.mxu0
  %529 = vmatprep.subr.bf16.mxu0 0
  %530 = vmatpush1.bf16.msra.mxu0 %v408
  %531 = vmatprep.subr.bf16.mxu0 0
  %532 = vmatpush1.bf16.msra.mxu0 %v407
  %533 = vmatprep.subr.bf16.mxu0 0
  %534 = vmatpush1.bf16.msra.mxu0 %v406
  %535 = vmatprep.subr.bf16.mxu0 0
  %536 = vmatpush1.bf16.msra.mxu0 %v405
  %537 = vmatprep.subr.bf16.mxu0 0
  %538 = vmatpush1.bf16.msra.mxu0 %v404
  %539 = vmatprep.subr.bf16.mxu0 0
  %540 = vmatpush1.bf16.msra.mxu0 %v403
  %541 = vmatprep.subr.bf16.mxu0 0
  %542 = vmatpush1.bf16.msra.mxu0 %v402
  %543 = vmatprep.subr.bf16.mxu0 0
  %544 = vmatpush1.bf16.msra.mxu0 %v401
  %545 = vmatprep.subr.bf16.mxu0 0
  %546 = vmatpush2.bf16.msra.mxu0 %v416
  %547 = vmatprep.subr.bf16.mxu0 0
  %548 = vmatpush2.bf16.msra.mxu0 %v415
  %549 = vmatprep.subr.bf16.mxu0 0
  %550 = vmatpush2.bf16.msra.mxu0 %v414
  %551 = vmatprep.subr.bf16.mxu0 0
  %552 = vmatpush2.bf16.msra.mxu0 %v413
  %553 = vmatprep.subr.bf16.mxu0 0
  %554 = vmatpush2.bf16.msra.mxu0 %v412
  %555 = vmatprep.subr.bf16.mxu0 0
  %556 = vmatpush2.bf16.msra.mxu0 %v411
  %557 = vmatprep.subr.bf16.mxu0 0
  %558 = vmatpush2.bf16.msra.mxu0 %v410
  %559 = vmatprep.subr.bf16.mxu0 0
  %560 = vmatpush2.bf16.msra.mxu0 %v409
  %561 = vmatprep.mubr.bf16.mxu0 %v188
  %562 = vmatmul.mubr.bf16.gmra.mxu0 %v187
  %v563 = vpop.f32.mrf.mxu0
  %v564 = vadd.f32 %v500, %v563
  %v565 = vpop.f32.mrf.mxu0
  %v566 = vpop.f32.mrf.mxu0
  %v567 = vadd.f32 %v503, %v566
  %v568 = vpop.f32.mrf.mxu0
  %569 = vmatprep.mubr.bf16.mxu0 %v193
  %570 = vmatmul.mubr.bf16.gmra.mxu0 %v192
  %v571 = vpop.f32.mrf.mxu0
  %v572 = vadd.f32 %v508, %v571
  %v573 = vpop.f32.mrf.mxu0
  %v574 = vpop.f32.mrf.mxu0
  %v575 = vadd.f32 %v511, %v574
  %v576 = vpop.f32.mrf.mxu0
  %577 = vmatprep.mubr.bf16.mxu0 %v198
  %578 = vmatmul.mubr.bf16.gmra.mxu0 %v197
  %v579 = vpop.f32.mrf.mxu0
  %v580 = vadd.f32 %v516, %v579
  %v581 = vpop.f32.mrf.mxu0
  %v582 = vpop.f32.mrf.mxu0
  %v583 = vadd.f32 %v519, %v582
  %v584 = vpop.f32.mrf.mxu0
  %585 = vmatprep.mubr.bf16.mxu0 %v203
  %586 = vmatmul.mubr.bf16.gmra.mxu0 %v202
  %v587 = vpop.f32.mrf.mxu0
  %v588 = vadd.f32 %v524, %v587
  %v589 = vpop.f32.mrf.mxu0
  %v590 = vpop.f32.mrf.mxu0
  %v591 = vpop.f32.mrf.mxu0
  %592 = vdwg.mxu0
  %593 = vmatprep.subr.bf16.mxu0 0
  %594 = vmatpush1.bf16.msra.mxu0 %v424
  %595 = vmatprep.subr.bf16.mxu0 0
  %596 = vmatpush1.bf16.msra.mxu0 %v423
  %597 = vmatprep.subr.bf16.mxu0 0
  %598 = vmatpush1.bf16.msra.mxu0 %v422
  %599 = vmatprep.subr.bf16.mxu0 0
  %600 = vmatpush1.bf16.msra.mxu0 %v421
  %601 = vmatprep.subr.bf16.mxu0 0
  %602 = vmatpush1.bf16.msra.mxu0 %v420
  %603 = vmatprep.subr.bf16.mxu0 0
  %604 = vmatpush1.bf16.msra.mxu0 %v419
  %605 = vmatprep.subr.bf16.mxu0 0
  %606 = vmatpush1.bf16.msra.mxu0 %v418
  %607 = vmatprep.subr.bf16.mxu0 0
  %608 = vmatpush1.bf16.msra.mxu0 %v417
  %609 = vmatprep.subr.bf16.mxu0 0
  %610 = vmatpush2.bf16.msra.mxu0 0
  %611 = vmatprep.subr.bf16.mxu0 0
  %612 = vmatpush2.bf16.msra.mxu0 0
  %613 = vmatprep.subr.bf16.mxu0 0
  %614 = vmatpush2.bf16.msra.mxu0 0
  %615 = vmatprep.subr.bf16.mxu0 0
  %616 = vmatpush2.bf16.msra.mxu0 0
  %617 = vmatprep.subr.bf16.mxu0 0
  %618 = vmatpush2.bf16.msra.mxu0 0
  %619 = vmatprep.subr.bf16.mxu0 0
  %620 = vmatpush2.bf16.msra.mxu0 0
  %621 = vmatprep.subr.bf16.mxu0 0
  %622 = vmatpush2.bf16.msra.mxu0 0
  %623 = vmatprep.subr.bf16.mxu0 0
  %624 = vmatpush2.bf16.msra.mxu0 0
  %625 = vmatprep.mubr.bf16.mxu0 0
  %626 = vmatmul.mubr.bf16.gmra.mxu0 %v189
  %v627 = vpop.f32.mrf.mxu0
  %v628 = vadd.f32 %v564, %v627
  %v629 = vpop.f32.mrf.mxu0
  %v630 = vpop.f32.mrf.mxu0
  %v631 = vadd.f32 %v567, %v630
  %v632 = vpop.f32.mrf.mxu0
  %633 = vmatprep.mubr.bf16.mxu0 0
  %634 = vmatmul.mubr.bf16.gmra.mxu0 %v194
  %v635 = vpop.f32.mrf.mxu0
  %v636 = vadd.f32 %v572, %v635
  %v637 = vpop.f32.mrf.mxu0
  %v638 = vpop.f32.mrf.mxu0
  %v639 = vadd.f32 %v575, %v638
  %v640 = vpop.f32.mrf.mxu0
  %641 = vmatprep.mubr.bf16.mxu0 0
  %642 = vmatmul.mubr.bf16.gmra.mxu0 %v199
  %v643 = vpop.f32.mrf.mxu0
  %v644 = vadd.f32 %v580, %v643
  %v645 = vpop.f32.mrf.mxu0
  %v646 = vpop.f32.mrf.mxu0
  %v647 = vadd.f32 %v583, %v646
  %v648 = vpop.f32.mrf.mxu0
  %649 = vmatprep.mubr.bf16.mxu0 0
  %650 = vmatmul.mubr.bf16.gmra.mxu0 %v204
  %v651 = vpop.f32.mrf.mxu0
  %v652 = vadd.f32 %v588, %v651
  %v653 = vpop.f32.mrf.mxu0
  %v654 = vpop.f32.mrf.mxu0
  %v655 = vpop.f32.mrf.mxu0
  %656 = vdwg.mxu0
  %vm657 = vcmp.gt.f32.partialorder %v628, 0.0
  %vm658 = vcmp.gt.f32.partialorder %v631, 0.0
  %vm659 = vcmp.gt.f32.partialorder %v636, 0.0
  %vm660 = vcmp.gt.f32.partialorder %v639, 0.0
  %vm661 = vcmp.gt.f32.partialorder %v644, 0.0
  %vm662 = vcmp.gt.f32.partialorder %v647, 0.0
  %vm663 = vcmp.gt.f32.partialorder %v652, 0.0
  %v664 = vmin.f32 %v628, 0.0
  %v665 = vmin.f32 %v631, 0.0
  %v666 = vmin.f32 %v636, 0.0
  %v667 = vmin.f32 %v639, 0.0
  %v668 = vmin.f32 %v644, 0.0
  %v669 = vmin.f32 %v647, 0.0
  %v670 = vmin.f32 %v652, 0.0
  %v671 = vmul.f32 %v664, 1.442695
  %v672 = vpow.pop %v671
  %v673 = vmul.f32 %v665, 1.442695
  %v674 = vpow.pop %v673
  %v675 = vmul.f32 %v666, 1.442695
  %v676 = vpow.pop %v675
  %v677 = vmul.f32 %v667, 1.442695
  %v678 = vpow.pop %v677
  %v679 = vmul.f32 %v668, 1.442695
  %v680 = vpow.pop %v679
  %v681 = vmul.f32 %v669, 1.442695
  %v682 = vpow.pop %v681
  %v683 = vmul.f32 %v670, 1.442695
  %v684 = vpow.pop %v683
  %v685 = vsub.f32 %v672, 1.0
  %v686 = vsub.f32 %v674, 1.0
  %v687 = vsub.f32 %v676, 1.0
  %v688 = vsub.f32 %v678, 1.0
  %v689 = vsub.f32 %v680, 1.0
  %v690 = vsub.f32 %v682, 1.0
  %v691 = vsub.f32 %v684, 1.0
  %v692 = vsel %vm657, %v628, %v685
  %v693 = vsel %vm658, %v631, %v686
  %v694 = vsel %vm659, %v636, %v687
  %v695 = vsel %vm660, %v639, %v688
  %v696 = vsel %vm661, %v644, %v689
  %v697 = vsel %vm662, %v647, %v690
  %v698 = vsel %vm663, %v652, %v691
  %v699 = vadd.f32 %v692, %v693
  %v700 = vadd.f32 %v699, %v694
  %v701 = vadd.f32 %v700, %v695
  %v702 = vadd.f32 %v701, %v696
  %v703 = vadd.f32 %v702, %v697
  %v704 = vadd.f32 %v703, %v698
  %v705 = vrot.slane %v704, 4
  %v706 = vadd.f32 %v704, %v705
  %v707 = vrot.slane %v706, 2
  %v708 = vadd.f32 %v706, %v707
  %v709 = vrot.slane %v708, 1
  %v710 = vadd.f32 %v708, %v709
  %v711 = vrcp.pop 56.0
  %v712 = vmul.f32 %v710, %v711
  %v713 = vsub.f32 %v692, %v712
  %v714 = vsub.f32 %v693, %v712
  %v715 = vsub.f32 %v694, %v712
  %v716 = vsub.f32 %v695, %v712
  %v717 = vsub.f32 %v696, %v712
  %v718 = vsub.f32 %v697, %v712
  %v719 = vsub.f32 %v698, %v712
  %v720 = vmul.f32 %v713, %v713
  %v721 = vmul.f32 %v714, %v714
  %v722 = vmul.f32 %v715, %v715
  %v723 = vmul.f32 %v716, %v716
  %v724 = vmul.f32 %v717, %v717
  %v725 = vmul.f32 %v718, %v718
  %v726 = vmul.f32 %v719, %v719
  %v727 = vadd.f32 %v720, %v721
  %v728 = vadd.f32 %v727, %v722
  %v729 = vadd.f32 %v728, %v723
  %v730 = vadd.f32 %v729, %v724
  %v731 = vadd.f32 %v730, %v725
  %v732 = vadd.f32 %v731, %v726
  %v733 = vrot.slane %v732, 4
  %v734 = vadd.f32 %v732, %v733
  %v735 = vrot.slane %v734, 2
  %v736 = vadd.f32 %v734, %v735
  %v737 = vrot.slane %v736, 1
  %v738 = vadd.f32 %v736, %v737
  %v739 = vmul.f32 %v738, %v711
  %v740 = vadd.f32 %v739, 1e-08
  %v741 = vrsqrt.pop %v740
  %v742 = vmul.f32 %v713, %v741
  %v743 = vmul.f32 %v714, %v741
  %v744 = vmul.f32 %v715, %v741
  %v745 = vmul.f32 %v716, %v741
  %v746 = vmul.f32 %v717, %v741
  %v747 = vmul.f32 %v718, %v741
  %v748 = vmul.f32 %v719, %v741
  %v749 = vld [vmem:[%s3] sm:$0x1]
  %v751 = vlaneseq
  %v752 = vshrl.u32 %v751, 7
  %v753 = vsub.s32 0, %v752
  %v754 = vrot.slane %v749, %v753
  %v756 = vmul.f32 %v742, %v754
  %v757 = vmul.f32 %v743, %v754
  %v758 = vmul.f32 %v744, %v754
  %v759 = vmul.f32 %v745, %v754
  %v760 = vmul.f32 %v746, %v754
  %v761 = vmul.f32 %v747, %v754
  %v762 = vmul.f32 %v748, %v754
  %v763 = vld [vmem:[%s4] sm:$0x1]
  %v765 = vlaneseq
  %v766 = vshrl.u32 %v765, 7
  %v767 = vsub.s32 0, %v766
  %v768 = vrot.slane %v763, %v767
  %v770 = vadd.f32 %v756, %v768
  %v771 = vadd.f32 %v757, %v768
  %v772 = vadd.f32 %v758, %v768
  %v773 = vadd.f32 %v759, %v768
  %v774 = vadd.f32 %v760, %v768
  %v775 = vadd.f32 %v761, %v768
  %v776 = vadd.f32 %v762, %v768
  %777 = vst [vmem:[%s5] sm:$0xff] %v770
  %778 = vst [vmem:[%s5 + $0x8] sm:$0xff] %v771
  %779 = vst [vmem:[%s5 + $0x10] sm:$0xff] %v772
  %780 = vst [vmem:[%s5 + $0x18] sm:$0xff] %v773
  %781 = vst [vmem:[%s5 + $0x20] sm:$0xff] %v774
  %782 = vst [vmem:[%s5 + $0x28] sm:$0xff] %v775
  %783 = vst [vmem:[%s5 + $0x30] sm:$0xff] %v776
  %s784 = scalar_lea.vmem %s0, 140
  %v785 = vld [vmem:[%s784] sm:$0xff]
  %v786 = vld [vmem:[%s784 + $0x8] sm:$0xff]
  %v787 = vld [vmem:[%s784 + $0x10] sm:$0xf]
  %v788 = vld [vmem:[%s784 + $0x14] sm:$0xff]
  %v789 = vld [vmem:[%s784 + $0x1c] sm:$0xff]
  %v790 = vld [vmem:[%s784 + $0x24] sm:$0xf]
  %v791 = vld [vmem:[%s784 + $0x28] sm:$0xff]
  %v792 = vld [vmem:[%s784 + $0x30] sm:$0xff]
  %v793 = vld [vmem:[%s784 + $0x38] sm:$0xf]
  %v794 = vld [vmem:[%s784 + $0x3c] sm:$0xff]
  %v795 = vld [vmem:[%s784 + $0x44] sm:$0xff]
  %v796 = vld [vmem:[%s784 + $0x4c] sm:$0xf]
  %v797 = vld [vmem:[%s784 + $0x50] sm:$0xff]
  %v798 = vld [vmem:[%s784 + $0x58] sm:$0xff]
  %v799 = vld [vmem:[%s784 + $0x60] sm:$0xf]
  %v800 = vld [vmem:[%s784 + $0x64] sm:$0xff]
  %v801 = vld [vmem:[%s784 + $0x6c] sm:$0xff]
  %v802 = vld [vmem:[%s784 + $0x74] sm:$0xf]
  %v803 = vld [vmem:[%s784 + $0x78] sm:$0xff]
  %v804 = vld [vmem:[%s784 + $0x80] sm:$0xff]
  %v805 = vld [vmem:[%s784 + $0x88] sm:$0xf]
  %v827 = vunpack.c.l.b16 %v785
  %v828 = vunpack.c.h.b16 %v785
  %v829 = vunpack.c.l.b16 %v786
  %v830 = vunpack.c.h.b16 %v786
  %v831 = vunpack.c.l.b16 %v787
  %v832 = vunpack.c.l.b16 %v788
  %v833 = vunpack.c.h.b16 %v788
  %v834 = vunpack.c.l.b16 %v789
  %v835 = vunpack.c.h.b16 %v789
  %v836 = vunpack.c.l.b16 %v790
  %v837 = vunpack.c.l.b16 %v791
  %v838 = vunpack.c.h.b16 %v791
  %v839 = vunpack.c.l.b16 %v792
  %v840 = vunpack.c.h.b16 %v792
  %v841 = vunpack.c.l.b16 %v793
  %v842 = vunpack.c.l.b16 %v794
  %v843 = vunpack.c.h.b16 %v794
  %v844 = vunpack.c.l.b16 %v795
  %v845 = vunpack.c.h.b16 %v795
  %v846 = vunpack.c.l.b16 %v796
  %v847 = vunpack.c.l.b16 %v797
  %v848 = vunpack.c.h.b16 %v797
  %v849 = vunpack.c.l.b16 %v798
  %v850 = vunpack.c.h.b16 %v798
  %v851 = vunpack.c.l.b16 %v799
  %v852 = vunpack.c.l.b16 %v800
  %v853 = vunpack.c.h.b16 %v800
  %v854 = vunpack.c.l.b16 %v801
  %v855 = vunpack.c.h.b16 %v801
  %v856 = vunpack.c.l.b16 %v802
  %v857 = vunpack.c.l.b16 %v803
  %v858 = vunpack.c.h.b16 %v803
  %v859 = vunpack.c.l.b16 %v804
  %v860 = vunpack.c.h.b16 %v804
  %v861 = vunpack.c.l.b16 %v805
  %v862 = vpack.c.b16 %v832, %v827
  %v863 = vpack.c.b16 %v833, %v828
  %v864 = vpack.c.b16 %v834, %v829
  %v865 = vpack.c.b16 %v835, %v830
  %v866 = vpack.c.b16 %v836, %v831
  %v867 = vpack.c.b16 %v842, %v837
  %v868 = vpack.c.b16 %v843, %v838
  %v869 = vpack.c.b16 %v844, %v839
  %v870 = vpack.c.b16 %v845, %v840
  %v871 = vpack.c.b16 %v846, %v841
  %v872 = vpack.c.b16 %v852, %v847
  %v873 = vpack.c.b16 %v853, %v848
  %v874 = vpack.c.b16 %v854, %v849
  %v875 = vpack.c.b16 %v855, %v850
  %v876 = vpack.c.b16 %v856, %v851
  %v877 = vpack.c.b16 %v857, %v857
  %v878 = vpack.c.b16 %v858, %v858
  %v879 = vpack.c.b16 %v859, %v859
  %v880 = vpack.c.b16 %v860, %v860
  %v881 = vpack.c.b16 %v861, %v861
  %902 = vmatprep.subr.bf16.mxu0 0
  %903 = vmatpush1.bf16.msra.mxu0 %v392
  %904 = vmatprep.subr.bf16.mxu0 0
  %905 = vmatpush1.bf16.msra.mxu0 %v391
  %906 = vmatprep.subr.bf16.mxu0 0
  %907 = vmatpush1.bf16.msra.mxu0 %v390
  %908 = vmatprep.subr.bf16.mxu0 0
  %909 = vmatpush1.bf16.msra.mxu0 %v389
  %910 = vmatprep.subr.bf16.mxu0 0
  %911 = vmatpush1.bf16.msra.mxu0 %v388
  %912 = vmatprep.subr.bf16.mxu0 0
  %913 = vmatpush1.bf16.msra.mxu0 %v387
  %914 = vmatprep.subr.bf16.mxu0 0
  %915 = vmatpush1.bf16.msra.mxu0 %v386
  %916 = vmatprep.subr.bf16.mxu0 0
  %917 = vmatpush1.bf16.msra.mxu0 %v385
  %918 = vmatprep.subr.bf16.mxu0 0
  %919 = vmatpush2.bf16.msra.mxu0 %v400
  %920 = vmatprep.subr.bf16.mxu0 0
  %921 = vmatpush2.bf16.msra.mxu0 %v399
  %922 = vmatprep.subr.bf16.mxu0 0
  %923 = vmatpush2.bf16.msra.mxu0 %v398
  %924 = vmatprep.subr.bf16.mxu0 0
  %925 = vmatpush2.bf16.msra.mxu0 %v397
  %926 = vmatprep.subr.bf16.mxu0 0
  %927 = vmatpush2.bf16.msra.mxu0 %v396
  %928 = vmatprep.subr.bf16.mxu0 0
  %929 = vmatpush2.bf16.msra.mxu0 %v395
  %930 = vmatprep.subr.bf16.mxu0 0
  %931 = vmatpush2.bf16.msra.mxu0 %v394
  %932 = vmatprep.subr.bf16.mxu0 0
  %933 = vmatpush2.bf16.msra.mxu0 %v393
  %934 = vmatprep.mubr.bf16.mxu0 %v863
  %935 = vmatmul.mubr.bf16.gmra.mxu0 %v862
  %v936 = vpop.f32.mrf.mxu0
  %v937 = vadd.f32 %v127, %v936
  %v938 = vpop.f32.mrf.mxu0
  %v939 = vpop.f32.mrf.mxu0
  %v940 = vadd.f32 %v127, %v939
  %v941 = vpop.f32.mrf.mxu0
  %942 = vmatprep.mubr.bf16.mxu0 %v868
  %943 = vmatmul.mubr.bf16.gmra.mxu0 %v867
  %v944 = vpop.f32.mrf.mxu0
  %v945 = vadd.f32 %v127, %v944
  %v946 = vpop.f32.mrf.mxu0
  %v947 = vpop.f32.mrf.mxu0
  %v948 = vadd.f32 %v127, %v947
  %v949 = vpop.f32.mrf.mxu0
  %950 = vmatprep.mubr.bf16.mxu0 %v873
  %951 = vmatmul.mubr.bf16.gmra.mxu0 %v872
  %v952 = vpop.f32.mrf.mxu0
  %v953 = vadd.f32 %v127, %v952
  %v954 = vpop.f32.mrf.mxu0
  %v955 = vpop.f32.mrf.mxu0
  %v956 = vadd.f32 %v127, %v955
  %v957 = vpop.f32.mrf.mxu0
  %958 = vmatprep.mubr.bf16.mxu0 %v878
  %959 = vmatmul.mubr.bf16.gmra.mxu0 %v877
  %v960 = vpop.f32.mrf.mxu0
  %v961 = vadd.f32 %v127, %v960
  %v962 = vpop.f32.mrf.mxu0
  %v963 = vpop.f32.mrf.mxu0
  %v964 = vpop.f32.mrf.mxu0
  %965 = vdwg.mxu0
  %966 = vmatprep.subr.bf16.mxu0 0
  %967 = vmatpush1.bf16.msra.mxu0 %v408
  %968 = vmatprep.subr.bf16.mxu0 0
  %969 = vmatpush1.bf16.msra.mxu0 %v407
  %970 = vmatprep.subr.bf16.mxu0 0
  %971 = vmatpush1.bf16.msra.mxu0 %v406
  %972 = vmatprep.subr.bf16.mxu0 0
  %973 = vmatpush1.bf16.msra.mxu0 %v405
  %974 = vmatprep.subr.bf16.mxu0 0
  %975 = vmatpush1.bf16.msra.mxu0 %v404
  %976 = vmatprep.subr.bf16.mxu0 0
  %977 = vmatpush1.bf16.msra.mxu0 %v403
  %978 = vmatprep.subr.bf16.mxu0 0
  %979 = vmatpush1.bf16.msra.mxu0 %v402
  %980 = vmatprep.subr.bf16.mxu0 0
  %981 = vmatpush1.bf16.msra.mxu0 %v401
  %982 = vmatprep.subr.bf16.mxu0 0
  %983 = vmatpush2.bf16.msra.mxu0 %v416
  %984 = vmatprep.subr.bf16.mxu0 0
  %985 = vmatpush2.bf16.msra.mxu0 %v415
  %986 = vmatprep.subr.bf16.mxu0 0
  %987 = vmatpush2.bf16.msra.mxu0 %v414
  %988 = vmatprep.subr.bf16.mxu0 0
  %989 = vmatpush2.bf16.msra.mxu0 %v413
  %990 = vmatprep.subr.bf16.mxu0 0
  %991 = vmatpush2.bf16.msra.mxu0 %v412
  %992 = vmatprep.subr.bf16.mxu0 0
  %993 = vmatpush2.bf16.msra.mxu0 %v411
  %994 = vmatprep.subr.bf16.mxu0 0
  %995 = vmatpush2.bf16.msra.mxu0 %v410
  %996 = vmatprep.subr.bf16.mxu0 0
  %997 = vmatpush2.bf16.msra.mxu0 %v409
  %998 = vmatprep.mubr.bf16.mxu0 %v865
  %999 = vmatmul.mubr.bf16.gmra.mxu0 %v864
  %v1000 = vpop.f32.mrf.mxu0
  %v1001 = vadd.f32 %v937, %v1000
  %v1002 = vpop.f32.mrf.mxu0
  %v1003 = vpop.f32.mrf.mxu0
  %v1004 = vadd.f32 %v940, %v1003
  %v1005 = vpop.f32.mrf.mxu0
  %1006 = vmatprep.mubr.bf16.mxu0 %v870
  %1007 = vmatmul.mubr.bf16.gmra.mxu0 %v869
  %v1008 = vpop.f32.mrf.mxu0
  %v1009 = vadd.f32 %v945, %v1008
  %v1010 = vpop.f32.mrf.mxu0
  %v1011 = vpop.f32.mrf.mxu0
  %v1012 = vadd.f32 %v948, %v1011
  %v1013 = vpop.f32.mrf.mxu0
  %1014 = vmatprep.mubr.bf16.mxu0 %v875
  %1015 = vmatmul.mubr.bf16.gmra.mxu0 %v874
  %v1016 = vpop.f32.mrf.mxu0
  %v1017 = vadd.f32 %v953, %v1016
  %v1018 = vpop.f32.mrf.mxu0
  %v1019 = vpop.f32.mrf.mxu0
  %v1020 = vadd.f32 %v956, %v1019
  %v1021 = vpop.f32.mrf.mxu0
  %1022 = vmatprep.mubr.bf16.mxu0 %v880
  %1023 = vmatmul.mubr.bf16.gmra.mxu0 %v879
  %v1024 = vpop.f32.mrf.mxu0
  %v1025 = vadd.f32 %v961, %v1024
  %v1026 = vpop.f32.mrf.mxu0
  %v1027 = vpop.f32.mrf.mxu0
  %v1028 = vpop.f32.mrf.mxu0
  %1029 = vdwg.mxu0
  %1030 = vmatprep.subr.bf16.mxu0 0
  %1031 = vmatpush1.bf16.msra.mxu0 %v424
  %1032 = vmatprep.subr.bf16.mxu0 0
  %1033 = vmatpush1.bf16.msra.mxu0 %v423
  %1034 = vmatprep.subr.bf16.mxu0 0
  %1035 = vmatpush1.bf16.msra.mxu0 %v422
  %1036 = vmatprep.subr.bf16.mxu0 0
  %1037 = vmatpush1.bf16.msra.mxu0 %v421
  %1038 = vmatprep.subr.bf16.mxu0 0
  %1039 = vmatpush1.bf16.msra.mxu0 %v420
  %1040 = vmatprep.subr.bf16.mxu0 0
  %1041 = vmatpush1.bf16.msra.mxu0 %v419
  %1042 = vmatprep.subr.bf16.mxu0 0
  %1043 = vmatpush1.bf16.msra.mxu0 %v418
  %1044 = vmatprep.subr.bf16.mxu0 0
  %1045 = vmatpush1.bf16.msra.mxu0 %v417
  %1046 = vmatprep.subr.bf16.mxu0 0
  %1047 = vmatpush2.bf16.msra.mxu0 0
  %1048 = vmatprep.subr.bf16.mxu0 0
  %1049 = vmatpush2.bf16.msra.mxu0 0
  %1050 = vmatprep.subr.bf16.mxu0 0
  %1051 = vmatpush2.bf16.msra.mxu0 0
  %1052 = vmatprep.subr.bf16.mxu0 0
  %1053 = vmatpush2.bf16.msra.mxu0 0
  %1054 = vmatprep.subr.bf16.mxu0 0
  %1055 = vmatpush2.bf16.msra.mxu0 0
  %1056 = vmatprep.subr.bf16.mxu0 0
  %1057 = vmatpush2.bf16.msra.mxu0 0
  %1058 = vmatprep.subr.bf16.mxu0 0
  %1059 = vmatpush2.bf16.msra.mxu0 0
  %1060 = vmatprep.subr.bf16.mxu0 0
  %1061 = vmatpush2.bf16.msra.mxu0 0
  %1062 = vmatprep.mubr.bf16.mxu0 0
  %1063 = vmatmul.mubr.bf16.gmra.mxu0 %v866
  %v1064 = vpop.f32.mrf.mxu0
  %v1065 = vadd.f32 %v1001, %v1064
  %v1066 = vpop.f32.mrf.mxu0
  %v1067 = vpop.f32.mrf.mxu0
  %v1068 = vadd.f32 %v1004, %v1067
  %v1069 = vpop.f32.mrf.mxu0
  %1070 = vmatprep.mubr.bf16.mxu0 0
  %1071 = vmatmul.mubr.bf16.gmra.mxu0 %v871
  %v1072 = vpop.f32.mrf.mxu0
  %v1073 = vadd.f32 %v1009, %v1072
  %v1074 = vpop.f32.mrf.mxu0
  %v1075 = vpop.f32.mrf.mxu0
  %v1076 = vadd.f32 %v1012, %v1075
  %v1077 = vpop.f32.mrf.mxu0
  %1078 = vmatprep.mubr.bf16.mxu0 0
  %1079 = vmatmul.mubr.bf16.gmra.mxu0 %v876
  %v1080 = vpop.f32.mrf.mxu0
  %v1081 = vadd.f32 %v1017, %v1080
  %v1082 = vpop.f32.mrf.mxu0
  %v1083 = vpop.f32.mrf.mxu0
  %v1084 = vadd.f32 %v1020, %v1083
  %v1085 = vpop.f32.mrf.mxu0
  %1086 = vmatprep.mubr.bf16.mxu0 0
  %1087 = vmatmul.mubr.bf16.gmra.mxu0 %v881
  %v1088 = vpop.f32.mrf.mxu0
  %v1089 = vadd.f32 %v1025, %v1088
  %v1090 = vpop.f32.mrf.mxu0
  %v1091 = vpop.f32.mrf.mxu0
  %v1092 = vpop.f32.mrf.mxu0
  %1093 = vdwg.mxu0
  %vm1094 = vcmp.gt.f32.partialorder %v1065, 0.0
  %vm1095 = vcmp.gt.f32.partialorder %v1068, 0.0
  %vm1096 = vcmp.gt.f32.partialorder %v1073, 0.0
  %vm1097 = vcmp.gt.f32.partialorder %v1076, 0.0
  %vm1098 = vcmp.gt.f32.partialorder %v1081, 0.0
  %vm1099 = vcmp.gt.f32.partialorder %v1084, 0.0
  %vm1100 = vcmp.gt.f32.partialorder %v1089, 0.0
  %v1101 = vmin.f32 %v1065, 0.0
  %v1102 = vmin.f32 %v1068, 0.0
  %v1103 = vmin.f32 %v1073, 0.0
  %v1104 = vmin.f32 %v1076, 0.0
  %v1105 = vmin.f32 %v1081, 0.0
  %v1106 = vmin.f32 %v1084, 0.0
  %v1107 = vmin.f32 %v1089, 0.0
  %v1108 = vmul.f32 %v1101, 1.442695
  %v1109 = vpow.pop %v1108
  %v1110 = vmul.f32 %v1102, 1.442695
  %v1111 = vpow.pop %v1110
  %v1112 = vmul.f32 %v1103, 1.442695
  %v1113 = vpow.pop %v1112
  %v1114 = vmul.f32 %v1104, 1.442695
  %v1115 = vpow.pop %v1114
  %v1116 = vmul.f32 %v1105, 1.442695
  %v1117 = vpow.pop %v1116
  %v1118 = vmul.f32 %v1106, 1.442695
  %v1119 = vpow.pop %v1118
  %v1120 = vmul.f32 %v1107, 1.442695
  %v1121 = vpow.pop %v1120
  %v1122 = vsub.f32 %v1109, 1.0
  %v1123 = vsub.f32 %v1111, 1.0
  %v1124 = vsub.f32 %v1113, 1.0
  %v1125 = vsub.f32 %v1115, 1.0
  %v1126 = vsub.f32 %v1117, 1.0
  %v1127 = vsub.f32 %v1119, 1.0
  %v1128 = vsub.f32 %v1121, 1.0
  %v1129 = vsel %vm1094, %v1065, %v1122
  %v1130 = vsel %vm1095, %v1068, %v1123
  %v1131 = vsel %vm1096, %v1073, %v1124
  %v1132 = vsel %vm1097, %v1076, %v1125
  %v1133 = vsel %vm1098, %v1081, %v1126
  %v1134 = vsel %vm1099, %v1084, %v1127
  %v1135 = vsel %vm1100, %v1089, %v1128
  %v1136 = vadd.f32 %v1129, %v1130
  %v1137 = vadd.f32 %v1136, %v1131
  %v1138 = vadd.f32 %v1137, %v1132
  %v1139 = vadd.f32 %v1138, %v1133
  %v1140 = vadd.f32 %v1139, %v1134
  %v1141 = vadd.f32 %v1140, %v1135
  %v1142 = vrot.slane %v1141, 4
  %v1143 = vadd.f32 %v1141, %v1142
  %v1144 = vrot.slane %v1143, 2
  %v1145 = vadd.f32 %v1143, %v1144
  %v1146 = vrot.slane %v1145, 1
  %v1147 = vadd.f32 %v1145, %v1146
  %v1148 = vmul.f32 %v1147, %v711
  %v1149 = vsub.f32 %v1129, %v1148
  %v1150 = vsub.f32 %v1130, %v1148
  %v1151 = vsub.f32 %v1131, %v1148
  %v1152 = vsub.f32 %v1132, %v1148
  %v1153 = vsub.f32 %v1133, %v1148
  %v1154 = vsub.f32 %v1134, %v1148
  %v1155 = vsub.f32 %v1135, %v1148
  %v1156 = vmul.f32 %v1149, %v1149
  %v1157 = vmul.f32 %v1150, %v1150
  %v1158 = vmul.f32 %v1151, %v1151
  %v1159 = vmul.f32 %v1152, %v1152
  %v1160 = vmul.f32 %v1153, %v1153
  %v1161 = vmul.f32 %v1154, %v1154
  %v1162 = vmul.f32 %v1155, %v1155
  %v1163 = vadd.f32 %v1156, %v1157
  %v1164 = vadd.f32 %v1163, %v1158
  %v1165 = vadd.f32 %v1164, %v1159
  %v1166 = vadd.f32 %v1165, %v1160
  %v1167 = vadd.f32 %v1166, %v1161
  %v1168 = vadd.f32 %v1167, %v1162
  %v1169 = vrot.slane %v1168, 4
  %v1170 = vadd.f32 %v1168, %v1169
  %v1171 = vrot.slane %v1170, 2
  %v1172 = vadd.f32 %v1170, %v1171
  %v1173 = vrot.slane %v1172, 1
  %v1174 = vadd.f32 %v1172, %v1173
  %v1175 = vmul.f32 %v1174, %v711
  %v1176 = vadd.f32 %v1175, 1e-08
  %v1177 = vrsqrt.pop %v1176
  %v1178 = vmul.f32 %v1149, %v1177
  %v1179 = vmul.f32 %v1150, %v1177
  %v1180 = vmul.f32 %v1151, %v1177
  %v1181 = vmul.f32 %v1152, %v1177
  %v1182 = vmul.f32 %v1153, %v1177
  %v1183 = vmul.f32 %v1154, %v1177
  %v1184 = vmul.f32 %v1155, %v1177
  %v1185 = vld [vmem:[%s3] sm:$0x1]
  %v1187 = vlaneseq
  %v1188 = vshrl.u32 %v1187, 7
  %v1189 = vsub.s32 0, %v1188
  %v1190 = vrot.slane %v1185, %v1189
  %v1192 = vmul.f32 %v1178, %v1190
  %v1193 = vmul.f32 %v1179, %v1190
  %v1194 = vmul.f32 %v1180, %v1190
  %v1195 = vmul.f32 %v1181, %v1190
  %v1196 = vmul.f32 %v1182, %v1190
  %v1197 = vmul.f32 %v1183, %v1190
  %v1198 = vmul.f32 %v1184, %v1190
  %v1199 = vld [vmem:[%s4] sm:$0x1]
  %v1201 = vlaneseq
  %v1202 = vshrl.u32 %v1201, 7
  %v1203 = vsub.s32 0, %v1202
  %v1204 = vrot.slane %v1199, %v1203
  %v1206 = vadd.f32 %v1192, %v1204
  %v1207 = vadd.f32 %v1193, %v1204
  %v1208 = vadd.f32 %v1194, %v1204
  %v1209 = vadd.f32 %v1195, %v1204
  %v1210 = vadd.f32 %v1196, %v1204
  %v1211 = vadd.f32 %v1197, %v1204
  %v1212 = vadd.f32 %v1198, %v1204
  %s1213 = scalar_lea.vmem %s5, 56
  %1214 = vst [vmem:[%s1213] sm:$0xff] %v1206
  %1215 = vst [vmem:[%s1213 + $0x8] sm:$0xff] %v1207
  %1216 = vst [vmem:[%s1213 + $0x10] sm:$0xff] %v1208
  %1217 = vst [vmem:[%s1213 + $0x18] sm:$0xff] %v1209
  %1218 = vst [vmem:[%s1213 + $0x20] sm:$0xff] %v1210
  %1219 = vst [vmem:[%s1213 + $0x28] sm:$0xff] %v1211
  %1220 = vst [vmem:[%s1213 + $0x30] sm:$0xff] %v1212
  // Predicated region
  $region22: #{_lambda_.35} parent=0 // pred_check
    _
  $region23: #{_lambda_.35} parent=0 // pred_check_branch
    %1222 = sbr.rel (0) target = $region25
  $region24: #{_lambda_.35} parent=0 // pred_region
    _
  $region25: #{_lambda_.35} parent=0 // pred_fallthru
    _
  // Predicated region
  $region26: #{_lambda_.35} parent=0 // pred_check
    _
  $region27: #{_lambda_.35} parent=0 // pred_check_branch
    %1224 = sbr.rel (0) target = $region29
  $region28: #{_lambda_.35} parent=0 // pred_region
    _
  $region29: #{_lambda_.35} parent=0 // pred_fallthru
    _

// kernel: _lambda_.36
$region0: #{_lambda_.36}
  #allocation0 [shape = 'u32[]', space=smem, size = 0x4, offset = 0x4, fixed_abs, tag = 'smem constant byte address 0x4 - core index']
  #allocation1 [shape = 'u32[144,128]{1,0:T(1,128)}', space=vmem, size = 0x12000, scoped, tag = 'internal scratch']
  %s0 = inlined_call_operand.vmem [shape: bf16[2,120,384], index: 0, kind: input, shape index: {}]
  %s1 = inlined_call_operand.vmem [shape: bf16[384,128], index: 1, kind: input, shape index: {}]
  %s2 = inlined_call_operand.vmem [shape: f32[1,128], index: 2, kind: input, shape index: {}]
  %s3 = inlined_call_operand.vmem [shape: f32[1,128], index: 3, kind: input, shape index: {}]
  %s4 = inlined_call_operand.vmem [shape: f32[1,128], index: 4, kind: input, shape index: {}]
  %s5 = inlined_call_operand.vmem [shape: f32[2,120,128], index: 5, kind: output, shape index: {}]
  %s6 = sld [smem:[#allocation0]]
  $region30: #{_lambda_.36} parent=0
    _
  %s8 = ssub.s32 1, %s6
  %s9 = scalar_select 0, %s8, %s6
  // Predicated region
  $region2: #{_lambda_.36} parent=0 // pred_check
    _
  $region3: #{_lambda_.36} parent=0 // pred_check_branch
    %11 = sbr.rel (0) target = $region5
  $region4: #{_lambda_.36} parent=0 // pred_region
    _
  $region5: #{_lambda_.36} parent=0 // pred_fallthru
    _
  // Predicated region
  $region6: #{_lambda_.36} parent=0 // pred_check
    _
  $region7: #{_lambda_.36} parent=0 // pred_check_branch
    %13 = sbr.rel (0) target = $region9
  $region8: #{_lambda_.36} parent=0 // pred_region
    _
  $region9: #{_lambda_.36} parent=0 // pred_fallthru
    _
  // Predicated region
  $region10: #{_lambda_.36} parent=0 // pred_check
    _
  $region11: #{_lambda_.36} parent=0 // pred_check_branch
    %15 = sbr.rel (0) target = $region13
  $region12: #{_lambda_.36} parent=0 // pred_region
    _
  $region13: #{_lambda_.36} parent=0 // pred_fallthru
    _
  // Predicated region
  $region14: #{_lambda_.36} parent=0 // pred_check
    _
  $region15: #{_lambda_.36} parent=0 // pred_check_branch
    %17 = sbr.rel (0) target = $region17
  $region16: #{_lambda_.36} parent=0 // pred_region
    _
  $region17: #{_lambda_.36} parent=0 // pred_fallthru
    _
  // Predicated region
  $region18: #{_lambda_.36} parent=0 // pred_check
    _
  $region19: #{_lambda_.36} parent=0 // pred_check_branch
    %19 = sbr.rel (0) target = $region21
  $region20: #{_lambda_.36} parent=0 // pred_region
    _
  $region21: #{_lambda_.36} parent=0 // pred_fallthru
    _
  %v21 = vld [vmem:[%s1] sm:$0xf]
  %v22 = vld [vmem:[%s1 + $0x4] sm:$0xf]
  %v23 = vld [vmem:[%s1 + $0x8] sm:$0xf]
  %v24 = vld [vmem:[%s1 + $0xc] sm:$0xf]
  %v25 = vld [vmem:[%s1 + $0x10] sm:$0xf]
  %v26 = vld [vmem:[%s1 + $0x14] sm:$0xf]
  %v27 = vld [vmem:[%s1 + $0x18] sm:$0xf]
  %v28 = vld [vmem:[%s1 + $0x1c] sm:$0xf]
  %v29 = vld [vmem:[%s1 + $0x20] sm:$0xf]
  %v30 = vld [vmem:[%s1 + $0x24] sm:$0xf]
  %v31 = vld [vmem:[%s1 + $0x28] sm:$0xf]
  %v32 = vld [vmem:[%s1 + $0x2c] sm:$0xf]
  %v33 = vld [vmem:[%s1 + $0x30] sm:$0xf]
  %v34 = vld [vmem:[%s1 + $0x34] sm:$0xf]
  %v35 = vld [vmem:[%s1 + $0x38] sm:$0xf]
  %v36 = vld [vmem:[%s1 + $0x3c] sm:$0xf]
  %v37 = vld [vmem:[%s1 + $0x40] sm:$0xf]
  %v38 = vld [vmem:[%s1 + $0x44] sm:$0xf]
  %v39 = vld [vmem:[%s1 + $0x48] sm:$0xf]
  %v40 = vld [vmem:[%s1 + $0x4c] sm:$0xf]
  %v41 = vld [vmem:[%s1 + $0x50] sm:$0xf]
  %v42 = vld [vmem:[%s1 + $0x54] sm:$0xf]
  %v43 = vld [vmem:[%s1 + $0x58] sm:$0xf]
  %v44 = vld [vmem:[%s1 + $0x5c] sm:$0xf]
  %v45 = vld [vmem:[%s1 + $0x60] sm:$0xf]
  %v46 = vld [vmem:[%s1 + $0x64] sm:$0xf]
  %v47 = vld [vmem:[%s1 + $0x68] sm:$0xf]
  %v48 = vld [vmem:[%s1 + $0x6c] sm:$0xf]
  %v49 = vld [vmem:[%s1 + $0x70] sm:$0xf]
  %v50 = vld [vmem:[%s1 + $0x74] sm:$0xf]
  %v51 = vld [vmem:[%s1 + $0x78] sm:$0xf]
  %v52 = vld [vmem:[%s1 + $0x7c] sm:$0xf]
  %v53 = vld [vmem:[%s1 + $0x80] sm:$0xf]
  %v54 = vld [vmem:[%s1 + $0x84] sm:$0xf]
  %v55 = vld [vmem:[%s1 + $0x88] sm:$0xf]
  %v56 = vld [vmem:[%s1 + $0x8c] sm:$0xf]
  %v57 = vld [vmem:[%s1 + $0x90] sm:$0xf]
  %v58 = vld [vmem:[%s1 + $0x94] sm:$0xf]
  %v59 = vld [vmem:[%s1 + $0x98] sm:$0xf]
  %v60 = vld [vmem:[%s1 + $0x9c] sm:$0xf]
  %v61 = vld [vmem:[%s1 + $0xa0] sm:$0xf]
  %v62 = vld [vmem:[%s1 + $0xa4] sm:$0xf]
  %v63 = vld [vmem:[%s1 + $0xa8] sm:$0xf]
  %v64 = vld [vmem:[%s1 + $0xac] sm:$0xf]
  %v65 = vld [vmem:[%s1 + $0xb0] sm:$0xf]
  %v66 = vld [vmem:[%s1 + $0xb4] sm:$0xf]
  %v67 = vld [vmem:[%s1 + $0xb8] sm:$0xf]
  %v68 = vld [vmem:[%s1 + $0xbc] sm:$0xf]
  %v69 = vld [vmem:[%s2] sm:$0x1]
  %v70 = vld [vmem:[%s0] sm:$0xff]
  %v71 = vld [vmem:[%s0 + $0x8] sm:$0xf]
  %v72 = vld [vmem:[%s0 + $0xc] sm:$0xff]
  %v73 = vld [vmem:[%s0 + $0x14] sm:$0xf]
  %v74 = vld [vmem:[%s0 + $0x18] sm:$0xff]
  %v75 = vld [vmem:[%s0 + $0x20] sm:$0xf]
  %v76 = vld [vmem:[%s0 + $0x24] sm:$0xff]
  %v77 = vld [vmem:[%s0 + $0x2c] sm:$0xf]
  %v78 = vld [vmem:[%s0 + $0x30] sm:$0xff]
  %v79 = vld [vmem:[%s0 + $0x38] sm:$0xf]
  %v80 = vld [vmem:[%s0 + $0x3c] sm:$0xff]
  %v81 = vld [vmem:[%s0 + $0x44] sm:$0xf]
  %v82 = vld [vmem:[%s0 + $0x48] sm:$0xff]
  %v83 = vld [vmem:[%s0 + $0x50] sm:$0xf]
  %v84 = vld [vmem:[%s0 + $0x54] sm:$0xff]
  %v85 = vld [vmem:[%s0 + $0x5c] sm:$0xf]
  %v86 = vld [vmem:[%s0 + $0x60] sm:$0xff]
  %v87 = vld [vmem:[%s0 + $0x68] sm:$0xf]
  %v88 = vld [vmem:[%s0 + $0x6c] sm:$0xff]
  %v89 = vld [vmem:[%s0 + $0x74] sm:$0xf]
  %v90 = vld [vmem:[%s0 + $0x78] sm:$0xff]
  %v91 = vld [vmem:[%s0 + $0x80] sm:$0xf]
  %v92 = vld [vmem:[%s0 + $0x84] sm:$0xff]
  %v93 = vld [vmem:[%s0 + $0x8c] sm:$0xf]
  %v94 = vld [vmem:[%s0 + $0x90] sm:$0xff]
  %v95 = vld [vmem:[%s0 + $0x98] sm:$0xf]
  %v96 = vld [vmem:[%s0 + $0x9c] sm:$0xff]
  %v97 = vld [vmem:[%s0 + $0xa4] sm:$0xf]
  %v98 = vld [vmem:[%s0 + $0xa8] sm:$0xff]
  %v99 = vld [vmem:[%s0 + $0xb0] sm:$0xf]
  %v101 = vlaneseq
  %v102 = vshrl.u32 %v101, 7
  %v103 = vsub.s32 0, %v102
  %v104 = vrot.slane %v69, %v103
  %v136 = vunpack.c.l.b16 %v70
  %v137 = vunpack.c.h.b16 %v70
  %v138 = vunpack.c.l.b16 %v71
  %v139 = vunpack.c.l.b16 %v72
  %v140 = vunpack.c.h.b16 %v72
  %v141 = vunpack.c.l.b16 %v73
  %v142 = vunpack.c.l.b16 %v74
  %v143 = vunpack.c.h.b16 %v74
  %v144 = vunpack.c.l.b16 %v75
  %v145 = vunpack.c.l.b16 %v76
  %v146 = vunpack.c.h.b16 %v76
  %v147 = vunpack.c.l.b16 %v77
  %v148 = vunpack.c.l.b16 %v78
  %v149 = vunpack.c.h.b16 %v78
  %v150 = vunpack.c.l.b16 %v79
  %v151 = vunpack.c.l.b16 %v80
  %v152 = vunpack.c.h.b16 %v80
  %v153 = vunpack.c.l.b16 %v81
  %v154 = vunpack.c.l.b16 %v82
  %v155 = vunpack.c.h.b16 %v82
  %v156 = vunpack.c.l.b16 %v83
  %v157 = vunpack.c.l.b16 %v84
  %v158 = vunpack.c.h.b16 %v84
  %v159 = vunpack.c.l.b16 %v85
  %v160 = vunpack.c.l.b16 %v86
  %v161 = vunpack.c.h.b16 %v86
  %v162 = vunpack.c.l.b16 %v87
  %v163 = vunpack.c.l.b16 %v88
  %v164 = vunpack.c.h.b16 %v88
  %v165 = vunpack.c.l.b16 %v89
  %v166 = vunpack.c.l.b16 %v90
  %v167 = vunpack.c.h.b16 %v90
  %v168 = vunpack.c.l.b16 %v91
  %v169 = vunpack.c.l.b16 %v92
  %v170 = vunpack.c.h.b16 %v92
  %v171 = vunpack.c.l.b16 %v93
  %v172 = vunpack.c.l.b16 %v94
  %v173 = vunpack.c.h.b16 %v94
  %v174 = vunpack.c.l.b16 %v95
  %v175 = vunpack.c.l.b16 %v96
  %v176 = vunpack.c.h.b16 %v96
  %v177 = vunpack.c.l.b16 %v97
  %v178 = vunpack.c.l.b16 %v98
  %v179 = vunpack.c.h.b16 %v98
  %v180 = vunpack.c.l.b16 %v99
  %v181 = vpack.c.b16 %v139, %v136
  %v182 = vpack.c.b16 %v140, %v137
  %v183 = vpack.c.b16 %v141, %v138
  %v184 = vpack.c.b16 %v145, %v142
  %v185 = vpack.c.b16 %v146, %v143
  %v186 = vpack.c.b16 %v147, %v144
  %v187 = vpack.c.b16 %v151, %v148
  %v188 = vpack.c.b16 %v152, %v149
  %v189 = vpack.c.b16 %v153, %v150
  %v190 = vpack.c.b16 %v157, %v154
  %v191 = vpack.c.b16 %v158, %v155
  %v192 = vpack.c.b16 %v159, %v156
  %v193 = vpack.c.b16 %v163, %v160
  %v194 = vpack.c.b16 %v164, %v161
  %v195 = vpack.c.b16 %v165, %v162
  %v196 = vpack.c.b16 %v169, %v166
  %v197 = vpack.c.b16 %v170, %v167
  %v198 = vpack.c.b16 %v171, %v168
  %v199 = vpack.c.b16 %v175, %v172
  %v200 = vpack.c.b16 %v176, %v173
  %v201 = vpack.c.b16 %v177, %v174
  %v202 = vpack.c.b16 %v178, %v178
  %v203 = vpack.c.b16 %v179, %v179
  %v204 = vpack.c.b16 %v180, %v180
  %v277 = vunpack.c.l.b16 %v21
  %v278 = vunpack.c.l.b16 %v22
  %v279 = vunpack.c.l.b16 %v23
  %v280 = vunpack.c.l.b16 %v24
  %v281 = vunpack.c.l.b16 %v25
  %v282 = vunpack.c.l.b16 %v26
  %v283 = vunpack.c.l.b16 %v27
  %v284 = vunpack.c.l.b16 %v28
  %v285 = vunpack.c.l.b16 %v29
  %v286 = vunpack.c.l.b16 %v30
  %v287 = vunpack.c.l.b16 %v31
  %v288 = vunpack.c.l.b16 %v32
  %v289 = vunpack.c.l.b16 %v33
  %v290 = vunpack.c.l.b16 %v34
  %v291 = vunpack.c.l.b16 %v35
  %v292 = vunpack.c.l.b16 %v36
  %v293 = vunpack.c.l.b16 %v37
  %v294 = vunpack.c.l.b16 %v38
  %v295 = vunpack.c.l.b16 %v39
  %v296 = vunpack.c.l.b16 %v40
  %v297 = vunpack.c.l.b16 %v41
  %v298 = vunpack.c.l.b16 %v42
  %v299 = vunpack.c.l.b16 %v43
  %v300 = vunpack.c.l.b16 %v44
  %v301 = vunpack.c.l.b16 %v45
  %v302 = vunpack.c.l.b16 %v46
  %v303 = vunpack.c.l.b16 %v47
  %v304 = vunpack.c.l.b16 %v48
  %v305 = vunpack.c.l.b16 %v49
  %v306 = vunpack.c.l.b16 %v50
  %v307 = vunpack.c.l.b16 %v51
  %v308 = vunpack.c.l.b16 %v52
  %v309 = vunpack.c.l.b16 %v53
  %v310 = vunpack.c.l.b16 %v54
  %v311 = vunpack.c.l.b16 %v55
  %v312 = vunpack.c.l.b16 %v56
  %v313 = vunpack.c.l.b16 %v57
  %v314 = vunpack.c.l.b16 %v58
  %v315 = vunpack.c.l.b16 %v59
  %v316 = vunpack.c.l.b16 %v60
  %v317 = vunpack.c.l.b16 %v61
  %v318 = vunpack.c.l.b16 %v62
  %v319 = vunpack.c.l.b16 %v63
  %v320 = vunpack.c.l.b16 %v64
  %v321 = vunpack.c.l.b16 %v65
  %v322 = vunpack.c.l.b16 %v66
  %v323 = vunpack.c.l.b16 %v67
  %v324 = vunpack.c.l.b16 %v68
  %v325 = vpack.c.b16 %v278, %v277
  %v326 = vpack.c.b16 %v280, %v279
  %v327 = vpack.c.b16 %v282, %v281
  %v328 = vpack.c.b16 %v284, %v283
  %v329 = vpack.c.b16 %v286, %v285
  %v330 = vpack.c.b16 %v288, %v287
  %v331 = vpack.c.b16 %v290, %v289
  %v332 = vpack.c.b16 %v292, %v291
  %v333 = vpack.c.b16 %v294, %v293
  %v334 = vpack.c.b16 %v296, %v295
  %v335 = vpack.c.b16 %v298, %v297
  %v336 = vpack.c.b16 %v300, %v299
  %v337 = vpack.c.b16 %v302, %v301
  %v338 = vpack.c.b16 %v304, %v303
  %v339 = vpack.c.b16 %v306, %v305
  %v340 = vpack.c.b16 %v308, %v307
  %v341 = vpack.c.b16 %v310, %v309
  %v342 = vpack.c.b16 %v312, %v311
  %v343 = vpack.c.b16 %v314, %v313
  %v344 = vpack.c.b16 %v316, %v315
  %v345 = vpack.c.b16 %v318, %v317
  %v346 = vpack.c.b16 %v320, %v319
  %v347 = vpack.c.b16 %v322, %v321
  %v348 = vpack.c.b16 %v324, %v323
  %373 = vmatprep.subr.bf16.mxu0 0
  %374 = vmatpush1.bf16.msra.mxu0 %v332
  %375 = vmatprep.subr.bf16.mxu0 0
  %376 = vmatpush1.bf16.msra.mxu0 %v331
  %377 = vmatprep.subr.bf16.mxu0 0
  %378 = vmatpush1.bf16.msra.mxu0 %v330
  %379 = vmatprep.subr.bf16.mxu0 0
  %380 = vmatpush1.bf16.msra.mxu0 %v329
  %381 = vmatprep.subr.bf16.mxu0 0
  %382 = vmatpush1.bf16.msra.mxu0 %v328
  %383 = vmatprep.subr.bf16.mxu0 0
  %384 = vmatpush1.bf16.msra.mxu0 %v327
  %385 = vmatprep.subr.bf16.mxu0 0
  %386 = vmatpush1.bf16.msra.mxu0 %v326
  %387 = vmatprep.subr.bf16.mxu0 0
  %388 = vmatpush1.bf16.msra.mxu0 %v325
  %389 = vmatprep.subr.bf16.mxu0 0
  %390 = vmatpush2.bf16.msra.mxu0 %v340
  %391 = vmatprep.subr.bf16.mxu0 0
  %392 = vmatpush2.bf16.msra.mxu0 %v339
  %393 = vmatprep.subr.bf16.mxu0 0
  %394 = vmatpush2.bf16.msra.mxu0 %v338
  %395 = vmatprep.subr.bf16.mxu0 0
  %396 = vmatpush2.bf16.msra.mxu0 %v337
  %397 = vmatprep.subr.bf16.mxu0 0
  %398 = vmatpush2.bf16.msra.mxu0 %v336
  %399 = vmatprep.subr.bf16.mxu0 0
  %400 = vmatpush2.bf16.msra.mxu0 %v335
  %401 = vmatprep.subr.bf16.mxu0 0
  %402 = vmatpush2.bf16.msra.mxu0 %v334
  %403 = vmatprep.subr.bf16.mxu0 0
  %404 = vmatpush2.bf16.msra.mxu0 %v333
  %405 = vmatprep.mubr.bf16.mxu0 %v182
  %406 = vmatmul.mubr.bf16.gmra.mxu0 %v181
  %v407 = vpop.f32.mrf.mxu0
  %v408 = vadd.f32 %v104, %v407
  %v409 = vpop.f32.mrf.mxu0
  %v410 = vpop.f32.mrf.mxu0
  %v411 = vadd.f32 %v104, %v410
  %v412 = vpop.f32.mrf.mxu0
  %413 = vmatprep.mubr.bf16.mxu0 %v185
  %414 = vmatmul.mubr.bf16.gmra.mxu0 %v184
  %v415 = vpop.f32.mrf.mxu0
  %v416 = vadd.f32 %v104, %v415
  %v417 = vpop.f32.mrf.mxu0
  %v418 = vpop.f32.mrf.mxu0
  %v419 = vadd.f32 %v104, %v418
  %v420 = vpop.f32.mrf.mxu0
  %421 = vmatprep.mubr.bf16.mxu0 %v188
  %422 = vmatmul.mubr.bf16.gmra.mxu0 %v187
  %v423 = vpop.f32.mrf.mxu0
  %v424 = vadd.f32 %v104, %v423
  %v425 = vpop.f32.mrf.mxu0
  %v426 = vpop.f32.mrf.mxu0
  %v427 = vadd.f32 %v104, %v426
  %v428 = vpop.f32.mrf.mxu0
  %429 = vmatprep.mubr.bf16.mxu0 %v191
  %430 = vmatmul.mubr.bf16.gmra.mxu0 %v190
  %v431 = vpop.f32.mrf.mxu0
  %v432 = vadd.f32 %v104, %v431
  %v433 = vpop.f32.mrf.mxu0
  %v434 = vpop.f32.mrf.mxu0
  %v435 = vadd.f32 %v104, %v434
  %v436 = vpop.f32.mrf.mxu0
  %437 = vmatprep.mubr.bf16.mxu0 %v194
  %438 = vmatmul.mubr.bf16.gmra.mxu0 %v193
  %v439 = vpop.f32.mrf.mxu0
  %v440 = vadd.f32 %v104, %v439
  %v441 = vpop.f32.mrf.mxu0
  %v442 = vpop.f32.mrf.mxu0
  %v443 = vadd.f32 %v104, %v442
  %v444 = vpop.f32.mrf.mxu0
  %445 = vmatprep.mubr.bf16.mxu0 %v197
  %446 = vmatmul.mubr.bf16.gmra.mxu0 %v196
  %v447 = vpop.f32.mrf.mxu0
  %v448 = vadd.f32 %v104, %v447
  %v449 = vpop.f32.mrf.mxu0
  %v450 = vpop.f32.mrf.mxu0
  %v451 = vadd.f32 %v104, %v450
  %v452 = vpop.f32.mrf.mxu0
  %453 = vmatprep.mubr.bf16.mxu0 %v200
  %454 = vmatmul.mubr.bf16.gmra.mxu0 %v199
  %v455 = vpop.f32.mrf.mxu0
  %v456 = vadd.f32 %v104, %v455
  %v457 = vpop.f32.mrf.mxu0
  %v458 = vpop.f32.mrf.mxu0
  %v459 = vadd.f32 %v104, %v458
  %v460 = vpop.f32.mrf.mxu0
  %461 = vmatprep.mubr.bf16.mxu0 %v203
  %462 = vmatmul.mubr.bf16.gmra.mxu0 %v202
  %v463 = vpop.f32.mrf.mxu0
  %v464 = vadd.f32 %v104, %v463
  %v465 = vpop.f32.mrf.mxu0
  %v466 = vpop.f32.mrf.mxu0
  %v467 = vpop.f32.mrf.mxu0
  %468 = vdwg.mxu0
  %469 = vmatprep.subr.bf16.mxu0 0
  %470 = vmatpush1.bf16.msra.mxu0 %v348
  %471 = vmatprep.subr.bf16.mxu0 0
  %472 = vmatpush1.bf16.msra.mxu0 %v347
  %473 = vmatprep.subr.bf16.mxu0 0
  %474 = vmatpush1.bf16.msra.mxu0 %v346
  %475 = vmatprep.subr.bf16.mxu0 0
  %476 = vmatpush1.bf16.msra.mxu0 %v345
  %477 = vmatprep.subr.bf16.mxu0 0
  %478 = vmatpush1.bf16.msra.mxu0 %v344
  %479 = vmatprep.subr.bf16.mxu0 0
  %480 = vmatpush1.bf16.msra.mxu0 %v343
  %481 = vmatprep.subr.bf16.mxu0 0
  %482 = vmatpush1.bf16.msra.mxu0 %v342
  %483 = vmatprep.subr.bf16.mxu0 0
  %484 = vmatpush1.bf16.msra.mxu0 %v341
  %485 = vmatprep.subr.bf16.mxu0 0
  %486 = vmatpush2.bf16.msra.mxu0 0
  %487 = vmatprep.subr.bf16.mxu0 0
  %488 = vmatpush2.bf16.msra.mxu0 0
  %489 = vmatprep.subr.bf16.mxu0 0
  %490 = vmatpush2.bf16.msra.mxu0 0
  %491 = vmatprep.subr.bf16.mxu0 0
  %492 = vmatpush2.bf16.msra.mxu0 0
  %493 = vmatprep.subr.bf16.mxu0 0
  %494 = vmatpush2.bf16.msra.mxu0 0
  %495 = vmatprep.subr.bf16.mxu0 0
  %496 = vmatpush2.bf16.msra.mxu0 0
  %497 = vmatprep.subr.bf16.mxu0 0
  %498 = vmatpush2.bf16.msra.mxu0 0
  %499 = vmatprep.subr.bf16.mxu0 0
  %500 = vmatpush2.bf16.msra.mxu0 0
  %501 = vmatprep.mubr.bf16.mxu0 0
  %502 = vmatmul.mubr.bf16.gmra.mxu0 %v183
  %v503 = vpop.f32.mrf.mxu0
  %v504 = vadd.f32 %v408, %v503
  %v505 = vpop.f32.mrf.mxu0
  %v506 = vpop.f32.mrf.mxu0
  %v507 = vadd.f32 %v411, %v506
  %v508 = vpop.f32.mrf.mxu0
  %509 = vmatprep.mubr.bf16.mxu0 0
  %510 = vmatmul.mubr.bf16.gmra.mxu0 %v186
  %v511 = vpop.f32.mrf.mxu0
  %v512 = vadd.f32 %v416, %v511
  %v513 = vpop.f32.mrf.mxu0
  %v514 = vpop.f32.mrf.mxu0
  %v515 = vadd.f32 %v419, %v514
  %v516 = vpop.f32.mrf.mxu0
  %517 = vmatprep.mubr.bf16.mxu0 0
  %518 = vmatmul.mubr.bf16.gmra.mxu0 %v189
  %v519 = vpop.f32.mrf.mxu0
  %v520 = vadd.f32 %v424, %v519
  %v521 = vpop.f32.mrf.mxu0
  %v522 = vpop.f32.mrf.mxu0
  %v523 = vadd.f32 %v427, %v522
  %v524 = vpop.f32.mrf.mxu0
  %525 = vmatprep.mubr.bf16.mxu0 0
  %526 = vmatmul.mubr.bf16.gmra.mxu0 %v192
  %v527 = vpop.f32.mrf.mxu0
  %v528 = vadd.f32 %v432, %v527
  %v529 = vpop.f32.mrf.mxu0
  %v530 = vpop.f32.mrf.mxu0
  %v531 = vadd.f32 %v435, %v530
  %v532 = vpop.f32.mrf.mxu0
  %533 = vmatprep.mubr.bf16.mxu0 0
  %534 = vmatmul.mubr.bf16.gmra.mxu0 %v195
  %v535 = vpop.f32.mrf.mxu0
  %v536 = vadd.f32 %v440, %v535
  %v537 = vpop.f32.mrf.mxu0
  %v538 = vpop.f32.mrf.mxu0
  %v539 = vadd.f32 %v443, %v538
  %v540 = vpop.f32.mrf.mxu0
  %541 = vmatprep.mubr.bf16.mxu0 0
  %542 = vmatmul.mubr.bf16.gmra.mxu0 %v198
  %v543 = vpop.f32.mrf.mxu0
  %v544 = vadd.f32 %v448, %v543
  %v545 = vpop.f32.mrf.mxu0
  %v546 = vpop.f32.mrf.mxu0
  %v547 = vadd.f32 %v451, %v546
  %v548 = vpop.f32.mrf.mxu0
  %549 = vmatprep.mubr.bf16.mxu0 0
  %550 = vmatmul.mubr.bf16.gmra.mxu0 %v201
  %v551 = vpop.f32.mrf.mxu0
  %v552 = vadd.f32 %v456, %v551
  %v553 = vpop.f32.mrf.mxu0
  %v554 = vpop.f32.mrf.mxu0
  %v555 = vadd.f32 %v459, %v554
  %v556 = vpop.f32.mrf.mxu0
  %557 = vmatprep.mubr.bf16.mxu0 0
  %558 = vmatmul.mubr.bf16.gmra.mxu0 %v204
  %v559 = vpop.f32.mrf.mxu0
  %v560 = vadd.f32 %v464, %v559
  %v561 = vpop.f32.mrf.mxu0
  %v562 = vpop.f32.mrf.mxu0
  %v563 = vpop.f32.mrf.mxu0
  %564 = vdwg.mxu0
  %vm565 = vcmp.gt.f32.partialorder %v504, 0.0
  %vm566 = vcmp.gt.f32.partialorder %v507, 0.0
  %vm567 = vcmp.gt.f32.partialorder %v512, 0.0
  %vm568 = vcmp.gt.f32.partialorder %v515, 0.0
  %vm569 = vcmp.gt.f32.partialorder %v520, 0.0
  %vm570 = vcmp.gt.f32.partialorder %v523, 0.0
  %vm571 = vcmp.gt.f32.partialorder %v528, 0.0
  %vm572 = vcmp.gt.f32.partialorder %v531, 0.0
  %vm573 = vcmp.gt.f32.partialorder %v536, 0.0
  %vm574 = vcmp.gt.f32.partialorder %v539, 0.0
  %vm575 = vcmp.gt.f32.partialorder %v544, 0.0
  %vm576 = vcmp.gt.f32.partialorder %v547, 0.0
  %vm577 = vcmp.gt.f32.partialorder %v552, 0.0
  %vm578 = vcmp.gt.f32.partialorder %v555, 0.0
  %vm579 = vcmp.gt.f32.partialorder %v560, 0.0
  %v580 = vmin.f32 %v504, 0.0
  %v581 = vmin.f32 %v507, 0.0
  %v582 = vmin.f32 %v512, 0.0
  %v583 = vmin.f32 %v515, 0.0
  %v584 = vmin.f32 %v520, 0.0
  %v585 = vmin.f32 %v523, 0.0
  %v586 = vmin.f32 %v528, 0.0
  %v587 = vmin.f32 %v531, 0.0
  %v588 = vmin.f32 %v536, 0.0
  %v589 = vmin.f32 %v539, 0.0
  %v590 = vmin.f32 %v544, 0.0
  %v591 = vmin.f32 %v547, 0.0
  %v592 = vmin.f32 %v552, 0.0
  %v593 = vmin.f32 %v555, 0.0
  %v594 = vmin.f32 %v560, 0.0
  %v595 = vmul.f32 %v580, 1.442695
  %v596 = vpow.pop %v595
  %v597 = vmul.f32 %v581, 1.442695
  %v598 = vpow.pop %v597
  %v599 = vmul.f32 %v582, 1.442695
  %v600 = vpow.pop %v599
  %v601 = vmul.f32 %v583, 1.442695
  %v602 = vpow.pop %v601
  %v603 = vmul.f32 %v584, 1.442695
  %v604 = vpow.pop %v603
  %v605 = vmul.f32 %v585, 1.442695
  %v606 = vpow.pop %v605
  %v607 = vmul.f32 %v586, 1.442695
  %v608 = vpow.pop %v607
  %v609 = vmul.f32 %v587, 1.442695
  %v610 = vpow.pop %v609
  %v611 = vmul.f32 %v588, 1.442695
  %v612 = vpow.pop %v611
  %v613 = vmul.f32 %v589, 1.442695
  %v614 = vpow.pop %v613
  %v615 = vmul.f32 %v590, 1.442695
  %v616 = vpow.pop %v615
  %v617 = vmul.f32 %v591, 1.442695
  %v618 = vpow.pop %v617
  %v619 = vmul.f32 %v592, 1.442695
  %v620 = vpow.pop %v619
  %v621 = vmul.f32 %v593, 1.442695
  %v622 = vpow.pop %v621
  %v623 = vmul.f32 %v594, 1.442695
  %v624 = vpow.pop %v623
  %v625 = vsub.f32 %v596, 1.0
  %v626 = vsub.f32 %v598, 1.0
  %v627 = vsub.f32 %v600, 1.0
  %v628 = vsub.f32 %v602, 1.0
  %v629 = vsub.f32 %v604, 1.0
  %v630 = vsub.f32 %v606, 1.0
  %v631 = vsub.f32 %v608, 1.0
  %v632 = vsub.f32 %v610, 1.0
  %v633 = vsub.f32 %v612, 1.0
  %v634 = vsub.f32 %v614, 1.0
  %v635 = vsub.f32 %v616, 1.0
  %v636 = vsub.f32 %v618, 1.0
  %v637 = vsub.f32 %v620, 1.0
  %v638 = vsub.f32 %v622, 1.0
  %v639 = vsub.f32 %v624, 1.0
  %v640 = vsel %vm565, %v504, %v625
  %v641 = vsel %vm566, %v507, %v626
  %v642 = vsel %vm567, %v512, %v627
  %v643 = vsel %vm568, %v515, %v628
  %v644 = vsel %vm569, %v520, %v629
  %v645 = vsel %vm570, %v523, %v630
  %v646 = vsel %vm571, %v528, %v631
  %v647 = vsel %vm572, %v531, %v632
  %v648 = vsel %vm573, %v536, %v633
  %v649 = vsel %vm574, %v539, %v634
  %v650 = vsel %vm575, %v544, %v635
  %v651 = vsel %vm576, %v547, %v636
  %v652 = vsel %vm577, %v552, %v637
  %v653 = vsel %vm578, %v555, %v638
  %v654 = vsel %vm579, %v560, %v639
  %v655 = vadd.f32 %v640, %v641
  %v656 = vadd.f32 %v655, %v642
  %v657 = vadd.f32 %v656, %v643
  %v658 = vadd.f32 %v657, %v644
  %v659 = vadd.f32 %v658, %v645
  %v660 = vadd.f32 %v659, %v646
  %v661 = vadd.f32 %v660, %v647
  %v662 = vadd.f32 %v661, %v648
  %v663 = vadd.f32 %v662, %v649
  %v664 = vadd.f32 %v663, %v650
  %v665 = vadd.f32 %v664, %v651
  %v666 = vadd.f32 %v665, %v652
  %v667 = vadd.f32 %v666, %v653
  %v668 = vadd.f32 %v667, %v654
  %v669 = vrot.slane %v668, 4
  %v670 = vadd.f32 %v668, %v669
  %v671 = vrot.slane %v670, 2
  %v672 = vadd.f32 %v670, %v671
  %v673 = vrot.slane %v672, 1
  %v674 = vadd.f32 %v672, %v673
  %v675 = vrcp.pop 120.0
  %v676 = vmul.f32 %v674, %v675
  %v677 = vsub.f32 %v640, %v676
  %v678 = vsub.f32 %v641, %v676
  %v679 = vsub.f32 %v642, %v676
  %v680 = vsub.f32 %v643, %v676
  %v681 = vsub.f32 %v644, %v676
  %v682 = vsub.f32 %v645, %v676
  %v683 = vsub.f32 %v646, %v676
  %v684 = vsub.f32 %v647, %v676
  %v685 = vsub.f32 %v648, %v676
  %v686 = vsub.f32 %v649, %v676
  %v687 = vsub.f32 %v650, %v676
  %v688 = vsub.f32 %v651, %v676
  %v689 = vsub.f32 %v652, %v676
  %v690 = vsub.f32 %v653, %v676
  %v691 = vsub.f32 %v654, %v676
  %v692 = vmul.f32 %v677, %v677
  %v693 = vmul.f32 %v678, %v678
  %v694 = vmul.f32 %v679, %v679
  %v695 = vmul.f32 %v680, %v680
  %v696 = vmul.f32 %v681, %v681
  %v697 = vmul.f32 %v682, %v682
  %v698 = vmul.f32 %v683, %v683
  %v699 = vmul.f32 %v684, %v684
  %v700 = vmul.f32 %v685, %v685
  %v701 = vmul.f32 %v686, %v686
  %v702 = vmul.f32 %v687, %v687
  %v703 = vmul.f32 %v688, %v688
  %v704 = vmul.f32 %v689, %v689
  %v705 = vmul.f32 %v690, %v690
  %v706 = vmul.f32 %v691, %v691
  %v707 = vadd.f32 %v692, %v693
  %v708 = vadd.f32 %v707, %v694
  %v709 = vadd.f32 %v708, %v695
  %v710 = vadd.f32 %v709, %v696
  %v711 = vadd.f32 %v710, %v697
  %v712 = vadd.f32 %v711, %v698
  %v713 = vadd.f32 %v712, %v699
  %v714 = vadd.f32 %v713, %v700
  %v715 = vadd.f32 %v714, %v701
  %v716 = vadd.f32 %v715, %v702
  %v717 = vadd.f32 %v716, %v703
  %v718 = vadd.f32 %v717, %v704
  %v719 = vadd.f32 %v718, %v705
  %v720 = vadd.f32 %v719, %v706
  %v721 = vrot.slane %v720, 4
  %v722 = vadd.f32 %v720, %v721
  %v723 = vrot.slane %v722, 2
  %v724 = vadd.f32 %v722, %v723
  %v725 = vrot.slane %v724, 1
  %v726 = vadd.f32 %v724, %v725
  %v727 = vmul.f32 %v726, %v675
  %v728 = vadd.f32 %v727, 1e-08
  %v729 = vrsqrt.pop %v728
  %v730 = vmul.f32 %v677, %v729
  %v731 = vmul.f32 %v678, %v729
  %v732 = vmul.f32 %v679, %v729
  %v733 = vmul.f32 %v680, %v729
  %v734 = vmul.f32 %v681, %v729
  %v735 = vmul.f32 %v682, %v729
  %v736 = vmul.f32 %v683, %v729
  %v737 = vmul.f32 %v684, %v729
  %v738 = vmul.f32 %v685, %v729
  %v739 = vmul.f32 %v686, %v729
  %v740 = vmul.f32 %v687, %v729
  %v741 = vmul.f32 %v688, %v729
  %v742 = vmul.f32 %v689, %v729
  %v743 = vmul.f32 %v690, %v729
  %v744 = vmul.f32 %v691, %v729
  %v745 = vld [vmem:[%s3] sm:$0x1]
  %v747 = vlaneseq
  %v748 = vshrl.u32 %v747, 7
  %v749 = vsub.s32 0, %v748
  %v750 = vrot.slane %v745, %v749
  %v752 = vmul.f32 %v730, %v750
  %v753 = vmul.f32 %v731, %v750
  %v754 = vmul.f32 %v732, %v750
  %v755 = vmul.f32 %v733, %v750
  %v756 = vmul.f32 %v734, %v750
  %v757 = vmul.f32 %v735, %v750
  %v758 = vmul.f32 %v736, %v750
  %v759 = vmul.f32 %v737, %v750
  %v760 = vmul.f32 %v738, %v750
  %v761 = vmul.f32 %v739, %v750
  %v762 = vmul.f32 %v740, %v750
  %v763 = vmul.f32 %v741, %v750
  %v764 = vmul.f32 %v742, %v750
  %v765 = vmul.f32 %v743, %v750
  %v766 = vmul.f32 %v744, %v750
  %v767 = vld [vmem:[%s4] sm:$0x1]
  %v769 = vlaneseq
  %v770 = vshrl.u32 %v769, 7
  %v771 = vsub.s32 0, %v770
  %v772 = vrot.slane %v767, %v771
  %v774 = vadd.f32 %v752, %v772
  %v775 = vadd.f32 %v753, %v772
  %v776 = vadd.f32 %v754, %v772
  %v777 = vadd.f32 %v755, %v772
  %v778 = vadd.f32 %v756, %v772
  %v779 = vadd.f32 %v757, %v772
  %v780 = vadd.f32 %v758, %v772
  %v781 = vadd.f32 %v759, %v772
  %v782 = vadd.f32 %v760, %v772
  %v783 = vadd.f32 %v761, %v772
  %v784 = vadd.f32 %v762, %v772
  %v785 = vadd.f32 %v763, %v772
  %v786 = vadd.f32 %v764, %v772
  %v787 = vadd.f32 %v765, %v772
  %v788 = vadd.f32 %v766, %v772
  %789 = vst [vmem:[%s5] sm:$0xff] %v774
  %790 = vst [vmem:[%s5 + $0x8] sm:$0xff] %v775
  %791 = vst [vmem:[%s5 + $0x10] sm:$0xff] %v776
  %792 = vst [vmem:[%s5 + $0x18] sm:$0xff] %v777
  %793 = vst [vmem:[%s5 + $0x20] sm:$0xff] %v778
  %794 = vst [vmem:[%s5 + $0x28] sm:$0xff] %v779
  %795 = vst [vmem:[%s5 + $0x30] sm:$0xff] %v780
  %796 = vst [vmem:[%s5 + $0x38] sm:$0xff] %v781
  %797 = vst [vmem:[%s5 + $0x40] sm:$0xff] %v782
  %798 = vst [vmem:[%s5 + $0x48] sm:$0xff] %v783
  %799 = vst [vmem:[%s5 + $0x50] sm:$0xff] %v784
  %800 = vst [vmem:[%s5 + $0x58] sm:$0xff] %v785
  %801 = vst [vmem:[%s5 + $0x60] sm:$0xff] %v786
  %802 = vst [vmem:[%s5 + $0x68] sm:$0xff] %v787
  %803 = vst [vmem:[%s5 + $0x70] sm:$0xff] %v788
  %s804 = scalar_lea.vmem %s0, 180
  %v805 = vld [vmem:[%s804] sm:$0xff]
  %v806 = vld [vmem:[%s804 + $0x8] sm:$0xf]
  %v807 = vld [vmem:[%s804 + $0xc] sm:$0xff]
  %v808 = vld [vmem:[%s804 + $0x14] sm:$0xf]
  %v809 = vld [vmem:[%s804 + $0x18] sm:$0xff]
  %v810 = vld [vmem:[%s804 + $0x20] sm:$0xf]
  %v811 = vld [vmem:[%s804 + $0x24] sm:$0xff]
  %v812 = vld [vmem:[%s804 + $0x2c] sm:$0xf]
  %v813 = vld [vmem:[%s804 + $0x30] sm:$0xff]
  %v814 = vld [vmem:[%s804 + $0x38] sm:$0xf]
  %v815 = vld [vmem:[%s804 + $0x3c] sm:$0xff]
  %v816 = vld [vmem:[%s804 + $0x44] sm:$0xf]
  %v817 = vld [vmem:[%s804 + $0x48] sm:$0xff]
  %v818 = vld [vmem:[%s804 + $0x50] sm:$0xf]
  %v819 = vld [vmem:[%s804 + $0x54] sm:$0xff]
  %v820 = vld [vmem:[%s804 + $0x5c] sm:$0xf]
  %v821 = vld [vmem:[%s804 + $0x60] sm:$0xff]
  %v822 = vld [vmem:[%s804 + $0x68] sm:$0xf]
  %v823 = vld [vmem:[%s804 + $0x6c] sm:$0xff]
  %v824 = vld [vmem:[%s804 + $0x74] sm:$0xf]
  %v825 = vld [vmem:[%s804 + $0x78] sm:$0xff]
  %v826 = vld [vmem:[%s804 + $0x80] sm:$0xf]
  %v827 = vld [vmem:[%s804 + $0x84] sm:$0xff]
  %v828 = vld [vmem:[%s804 + $0x8c] sm:$0xf]
  %v829 = vld [vmem:[%s804 + $0x90] sm:$0xff]
  %v830 = vld [vmem:[%s804 + $0x98] sm:$0xf]
  %v831 = vld [vmem:[%s804 + $0x9c] sm:$0xff]
  %v832 = vld [vmem:[%s804 + $0xa4] sm:$0xf]
  %v833 = vld [vmem:[%s804 + $0xa8] sm:$0xff]
  %v834 = vld [vmem:[%s804 + $0xb0] sm:$0xf]
  %v865 = vunpack.c.l.b16 %v805
  %v866 = vunpack.c.h.b16 %v805
  %v867 = vunpack.c.l.b16 %v806
  %v868 = vunpack.c.l.b16 %v807
  %v869 = vunpack.c.h.b16 %v807
  %v870 = vunpack.c.l.b16 %v808
  %v871 = vunpack.c.l.b16 %v809
  %v872 = vunpack.c.h.b16 %v809
  %v873 = vunpack.c.l.b16 %v810
  %v874 = vunpack.c.l.b16 %v811
  %v875 = vunpack.c.h.b16 %v811
  %v876 = vunpack.c.l.b16 %v812
  %v877 = vunpack.c.l.b16 %v813
  %v878 = vunpack.c.h.b16 %v813
  %v879 = vunpack.c.l.b16 %v814
  %v880 = vunpack.c.l.b16 %v815
  %v881 = vunpack.c.h.b16 %v815
  %v882 = vunpack.c.l.b16 %v816
  %v883 = vunpack.c.l.b16 %v817
  %v884 = vunpack.c.h.b16 %v817
  %v885 = vunpack.c.l.b16 %v818
  %v886 = vunpack.c.l.b16 %v819
  %v887 = vunpack.c.h.b16 %v819
  %v888 = vunpack.c.l.b16 %v820
  %v889 = vunpack.c.l.b16 %v821
  %v890 = vunpack.c.h.b16 %v821
  %v891 = vunpack.c.l.b16 %v822
  %v892 = vunpack.c.l.b16 %v823
  %v893 = vunpack.c.h.b16 %v823
  %v894 = vunpack.c.l.b16 %v824
  %v895 = vunpack.c.l.b16 %v825
  %v896 = vunpack.c.h.b16 %v825
  %v897 = vunpack.c.l.b16 %v826
  %v898 = vunpack.c.l.b16 %v827
  %v899 = vunpack.c.h.b16 %v827
  %v900 = vunpack.c.l.b16 %v828
  %v901 = vunpack.c.l.b16 %v829
  %v902 = vunpack.c.h.b16 %v829
  %v903 = vunpack.c.l.b16 %v830
  %v904 = vunpack.c.l.b16 %v831
  %v905 = vunpack.c.h.b16 %v831
  %v906 = vunpack.c.l.b16 %v832
  %v907 = vunpack.c.l.b16 %v833
  %v908 = vunpack.c.h.b16 %v833
  %v909 = vunpack.c.l.b16 %v834
  %v910 = vpack.c.b16 %v868, %v865
  %v911 = vpack.c.b16 %v869, %v866
  %v912 = vpack.c.b16 %v870, %v867
  %v913 = vpack.c.b16 %v874, %v871
  %v914 = vpack.c.b16 %v875, %v872
  %v915 = vpack.c.b16 %v876, %v873
  %v916 = vpack.c.b16 %v880, %v877
  %v917 = vpack.c.b16 %v881, %v878
  %v918 = vpack.c.b16 %v882, %v879
  %v919 = vpack.c.b16 %v886, %v883
  %v920 = vpack.c.b16 %v887, %v884
  %v921 = vpack.c.b16 %v888, %v885
  %v922 = vpack.c.b16 %v892, %v889
  %v923 = vpack.c.b16 %v893, %v890
  %v924 = vpack.c.b16 %v894, %v891
  %v925 = vpack.c.b16 %v898, %v895
  %v926 = vpack.c.b16 %v899, %v896
  %v927 = vpack.c.b16 %v900, %v897
  %v928 = vpack.c.b16 %v904, %v901
  %v929 = vpack.c.b16 %v905, %v902
  %v930 = vpack.c.b16 %v906, %v903
  %v931 = vpack.c.b16 %v907, %v907
  %v932 = vpack.c.b16 %v908, %v908
  %v933 = vpack.c.b16 %v909, %v909
  %958 = vmatprep.subr.bf16.mxu0 0
  %959 = vmatpush1.bf16.msra.mxu0 %v332
  %960 = vmatprep.subr.bf16.mxu0 0
  %961 = vmatpush1.bf16.msra.mxu0 %v331
  %962 = vmatprep.subr.bf16.mxu0 0
  %963 = vmatpush1.bf16.msra.mxu0 %v330
  %964 = vmatprep.subr.bf16.mxu0 0
  %965 = vmatpush1.bf16.msra.mxu0 %v329
  %966 = vmatprep.subr.bf16.mxu0 0
  %967 = vmatpush1.bf16.msra.mxu0 %v328
  %968 = vmatprep.subr.bf16.mxu0 0
  %969 = vmatpush1.bf16.msra.mxu0 %v327
  %970 = vmatprep.subr.bf16.mxu0 0
  %971 = vmatpush1.bf16.msra.mxu0 %v326
  %972 = vmatprep.subr.bf16.mxu0 0
  %973 = vmatpush1.bf16.msra.mxu0 %v325
  %974 = vmatprep.subr.bf16.mxu0 0
  %975 = vmatpush2.bf16.msra.mxu0 %v340
  %976 = vmatprep.subr.bf16.mxu0 0
  %977 = vmatpush2.bf16.msra.mxu0 %v339
  %978 = vmatprep.subr.bf16.mxu0 0
  %979 = vmatpush2.bf16.msra.mxu0 %v338
  %980 = vmatprep.subr.bf16.mxu0 0
  %981 = vmatpush2.bf16.msra.mxu0 %v337
  %982 = vmatprep.subr.bf16.mxu0 0
  %983 = vmatpush2.bf16.msra.mxu0 %v336
  %984 = vmatprep.subr.bf16.mxu0 0
  %985 = vmatpush2.bf16.msra.mxu0 %v335
  %986 = vmatprep.subr.bf16.mxu0 0
  %987 = vmatpush2.bf16.msra.mxu0 %v334
  %988 = vmatprep.subr.bf16.mxu0 0
  %989 = vmatpush2.bf16.msra.mxu0 %v333
  %990 = vmatprep.mubr.bf16.mxu0 %v911
  %991 = vmatmul.mubr.bf16.gmra.mxu0 %v910
  %v992 = vpop.f32.mrf.mxu0
  %v993 = vadd.f32 %v104, %v992
  %v994 = vpop.f32.mrf.mxu0
  %v995 = vpop.f32.mrf.mxu0
  %v996 = vadd.f32 %v104, %v995
  %v997 = vpop.f32.mrf.mxu0
  %998 = vmatprep.mubr.bf16.mxu0 %v914
  %999 = vmatmul.mubr.bf16.gmra.mxu0 %v913
  %v1000 = vpop.f32.mrf.mxu0
  %v1001 = vadd.f32 %v104, %v1000
  %v1002 = vpop.f32.mrf.mxu0
  %v1003 = vpop.f32.mrf.mxu0
  %v1004 = vadd.f32 %v104, %v1003
  %v1005 = vpop.f32.mrf.mxu0
  %1006 = vmatprep.mubr.bf16.mxu0 %v917
  %1007 = vmatmul.mubr.bf16.gmra.mxu0 %v916
  %v1008 = vpop.f32.mrf.mxu0
  %v1009 = vadd.f32 %v104, %v1008
  %v1010 = vpop.f32.mrf.mxu0
  %v1011 = vpop.f32.mrf.mxu0
  %v1012 = vadd.f32 %v104, %v1011
  %v1013 = vpop.f32.mrf.mxu0
  %1014 = vmatprep.mubr.bf16.mxu0 %v920
  %1015 = vmatmul.mubr.bf16.gmra.mxu0 %v919
  %v1016 = vpop.f32.mrf.mxu0
  %v1017 = vadd.f32 %v104, %v1016
  %v1018 = vpop.f32.mrf.mxu0
  %v1019 = vpop.f32.mrf.mxu0
  %v1020 = vadd.f32 %v104, %v1019
  %v1021 = vpop.f32.mrf.mxu0
  %1022 = vmatprep.mubr.bf16.mxu0 %v923
  %1023 = vmatmul.mubr.bf16.gmra.mxu0 %v922
  %v1024 = vpop.f32.mrf.mxu0
  %v1025 = vadd.f32 %v104, %v1024
  %v1026 = vpop.f32.mrf.mxu0
  %v1027 = vpop.f32.mrf.mxu0
  %v1028 = vadd.f32 %v104, %v1027
  %v1029 = vpop.f32.mrf.mxu0
  %1030 = vmatprep.mubr.bf16.mxu0 %v926
  %1031 = vmatmul.mubr.bf16.gmra.mxu0 %v925
  %v1032 = vpop.f32.mrf.mxu0
  %v1033 = vadd.f32 %v104, %v1032
  %v1034 = vpop.f32.mrf.mxu0
  %v1035 = vpop.f32.mrf.mxu0
  %v1036 = vadd.f32 %v104, %v1035
  %v1037 = vpop.f32.mrf.mxu0
  %1038 = vmatprep.mubr.bf16.mxu0 %v929
  %1039 = vmatmul.mubr.bf16.gmra.mxu0 %v928
  %v1040 = vpop.f32.mrf.mxu0
  %v1041 = vadd.f32 %v104, %v1040
  %v1042 = vpop.f32.mrf.mxu0
  %v1043 = vpop.f32.mrf.mxu0
  %v1044 = vadd.f32 %v104, %v1043
  %v1045 = vpop.f32.mrf.mxu0
  %1046 = vmatprep.mubr.bf16.mxu0 %v932
  %1047 = vmatmul.mubr.bf16.gmra.mxu0 %v931
  %v1048 = vpop.f32.mrf.mxu0
  %v1049 = vadd.f32 %v104, %v1048
  %v1050 = vpop.f32.mrf.mxu0
  %v1051 = vpop.f32.mrf.mxu0
  %v1052 = vpop.f32.mrf.mxu0
  %1053 = vdwg.mxu0
  %1054 = vmatprep.subr.bf16.mxu0 0
  %1055 = vmatpush1.bf16.msra.mxu0 %v348
  %1056 = vmatprep.subr.bf16.mxu0 0
  %1057 = vmatpush1.bf16.msra.mxu0 %v347
  %1058 = vmatprep.subr.bf16.mxu0 0
  %1059 = vmatpush1.bf16.msra.mxu0 %v346
  %1060 = vmatprep.subr.bf16.mxu0 0
  %1061 = vmatpush1.bf16.msra.mxu0 %v345
  %1062 = vmatprep.subr.bf16.mxu0 0
  %1063 = vmatpush1.bf16.msra.mxu0 %v344
  %1064 = vmatprep.subr.bf16.mxu0 0
  %1065 = vmatpush1.bf16.msra.mxu0 %v343
  %1066 = vmatprep.subr.bf16.mxu0 0
  %1067 = vmatpush1.bf16.msra.mxu0 %v342
  %1068 = vmatprep.subr.bf16.mxu0 0
  %1069 = vmatpush1.bf16.msra.mxu0 %v341
  %1070 = vmatprep.subr.bf16.mxu0 0
  %1071 = vmatpush2.bf16.msra.mxu0 0
  %1072 = vmatprep.subr.bf16.mxu0 0
  %1073 = vmatpush2.bf16.msra.mxu0 0
  %1074 = vmatprep.subr.bf16.mxu0 0
  %1075 = vmatpush2.bf16.msra.mxu0 0
  %1076 = vmatprep.subr.bf16.mxu0 0
  %1077 = vmatpush2.bf16.msra.mxu0 0
  %1078 = vmatprep.subr.bf16.mxu0 0
  %1079 = vmatpush2.bf16.msra.mxu0 0
  %1080 = vmatprep.subr.bf16.mxu0 0
  %1081 = vmatpush2.bf16.msra.mxu0 0
  %1082 = vmatprep.subr.bf16.mxu0 0
  %1083 = vmatpush2.bf16.msra.mxu0 0
  %1084 = vmatprep.subr.bf16.mxu0 0
  %1085 = vmatpush2.bf16.msra.mxu0 0
  %1086 = vmatprep.mubr.bf16.mxu0 0
  %1087 = vmatmul.mubr.bf16.gmra.mxu0 %v912
  %v1088 = vpop.f32.mrf.mxu0
  %v1089 = vadd.f32 %v993, %v1088
  %v1090 = vpop.f32.mrf.mxu0
  %v1091 = vpop.f32.mrf.mxu0
  %v1092 = vadd.f32 %v996, %v1091
  %v1093 = vpop.f32.mrf.mxu0
  %1094 = vmatprep.mubr.bf16.mxu0 0
  %1095 = vmatmul.mubr.bf16.gmra.mxu0 %v915
  %v1096 = vpop.f32.mrf.mxu0
  %v1097 = vadd.f32 %v1001, %v1096
  %v1098 = vpop.f32.mrf.mxu0
  %v1099 = vpop.f32.mrf.mxu0
  %v1100 = vadd.f32 %v1004, %v1099
  %v1101 = vpop.f32.mrf.mxu0
  %1102 = vmatprep.mubr.bf16.mxu0 0
  %1103 = vmatmul.mubr.bf16.gmra.mxu0 %v918
  %v1104 = vpop.f32.mrf.mxu0
  %v1105 = vadd.f32 %v1009, %v1104
  %v1106 = vpop.f32.mrf.mxu0
  %v1107 = vpop.f32.mrf.mxu0
  %v1108 = vadd.f32 %v1012, %v1107
  %v1109 = vpop.f32.mrf.mxu0
  %1110 = vmatprep.mubr.bf16.mxu0 0
  %1111 = vmatmul.mubr.bf16.gmra.mxu0 %v921
  %v1112 = vpop.f32.mrf.mxu0
  %v1113 = vadd.f32 %v1017, %v1112
  %v1114 = vpop.f32.mrf.mxu0
  %v1115 = vpop.f32.mrf.mxu0
  %v1116 = vadd.f32 %v1020, %v1115
  %v1117 = vpop.f32.mrf.mxu0
  %1118 = vmatprep.mubr.bf16.mxu0 0
  %1119 = vmatmul.mubr.bf16.gmra.mxu0 %v924
  %v1120 = vpop.f32.mrf.mxu0
  %v1121 = vadd.f32 %v1025, %v1120
  %v1122 = vpop.f32.mrf.mxu0
  %v1123 = vpop.f32.mrf.mxu0
  %v1124 = vadd.f32 %v1028, %v1123
  %v1125 = vpop.f32.mrf.mxu0
  %1126 = vmatprep.mubr.bf16.mxu0 0
  %1127 = vmatmul.mubr.bf16.gmra.mxu0 %v927
  %v1128 = vpop.f32.mrf.mxu0
  %v1129 = vadd.f32 %v1033, %v1128
  %v1130 = vpop.f32.mrf.mxu0
  %v1131 = vpop.f32.mrf.mxu0
  %v1132 = vadd.f32 %v1036, %v1131
  %v1133 = vpop.f32.mrf.mxu0
  %1134 = vmatprep.mubr.bf16.mxu0 0
  %1135 = vmatmul.mubr.bf16.gmra.mxu0 %v930
  %v1136 = vpop.f32.mrf.mxu0
  %v1137 = vadd.f32 %v1041, %v1136
  %v1138 = vpop.f32.mrf.mxu0
  %v1139 = vpop.f32.mrf.mxu0
  %v1140 = vadd.f32 %v1044, %v1139
  %v1141 = vpop.f32.mrf.mxu0
  %1142 = vmatprep.mubr.bf16.mxu0 0
  %1143 = vmatmul.mubr.bf16.gmra.mxu0 %v933
  %v1144 = vpop.f32.mrf.mxu0
  %v1145 = vadd.f32 %v1049, %v1144
  %v1146 = vpop.f32.mrf.mxu0
  %v1147 = vpop.f32.mrf.mxu0
  %v1148 = vpop.f32.mrf.mxu0
  %1149 = vdwg.mxu0
  %vm1150 = vcmp.gt.f32.partialorder %v1089, 0.0
  %vm1151 = vcmp.gt.f32.partialorder %v1092, 0.0
  %vm1152 = vcmp.gt.f32.partialorder %v1097, 0.0
  %vm1153 = vcmp.gt.f32.partialorder %v1100, 0.0
  %vm1154 = vcmp.gt.f32.partialorder %v1105, 0.0
  %vm1155 = vcmp.gt.f32.partialorder %v1108, 0.0
  %vm1156 = vcmp.gt.f32.partialorder %v1113, 0.0
  %vm1157 = vcmp.gt.f32.partialorder %v1116, 0.0
  %vm1158 = vcmp.gt.f32.partialorder %v1121, 0.0
  %vm1159 = vcmp.gt.f32.partialorder %v1124, 0.0
  %vm1160 = vcmp.gt.f32.partialorder %v1129, 0.0
  %vm1161 = vcmp.gt.f32.partialorder %v1132, 0.0
  %vm1162 = vcmp.gt.f32.partialorder %v1137, 0.0
  %vm1163 = vcmp.gt.f32.partialorder %v1140, 0.0
  %vm1164 = vcmp.gt.f32.partialorder %v1145, 0.0
  %v1165 = vmin.f32 %v1089, 0.0
  %v1166 = vmin.f32 %v1092, 0.0
  %v1167 = vmin.f32 %v1097, 0.0
  %v1168 = vmin.f32 %v1100, 0.0
  %v1169 = vmin.f32 %v1105, 0.0
  %v1170 = vmin.f32 %v1108, 0.0
  %v1171 = vmin.f32 %v1113, 0.0
  %v1172 = vmin.f32 %v1116, 0.0
  %v1173 = vmin.f32 %v1121, 0.0
  %v1174 = vmin.f32 %v1124, 0.0
  %v1175 = vmin.f32 %v1129, 0.0
  %v1176 = vmin.f32 %v1132, 0.0
  %v1177 = vmin.f32 %v1137, 0.0
  %v1178 = vmin.f32 %v1140, 0.0
  %v1179 = vmin.f32 %v1145, 0.0
  %v1180 = vmul.f32 %v1165, 1.442695
  %v1181 = vpow.pop %v1180
  %v1182 = vmul.f32 %v1166, 1.442695
  %v1183 = vpow.pop %v1182
  %v1184 = vmul.f32 %v1167, 1.442695
  %v1185 = vpow.pop %v1184
  %v1186 = vmul.f32 %v1168, 1.442695
  %v1187 = vpow.pop %v1186
  %v1188 = vmul.f32 %v1169, 1.442695
  %v1189 = vpow.pop %v1188
  %v1190 = vmul.f32 %v1170, 1.442695
  %v1191 = vpow.pop %v1190
  %v1192 = vmul.f32 %v1171, 1.442695
  %v1193 = vpow.pop %v1192
  %v1194 = vmul.f32 %v1172, 1.442695
  %v1195 = vpow.pop %v1194
  %v1196 = vmul.f32 %v1173, 1.442695
  %v1197 = vpow.pop %v1196
  %v1198 = vmul.f32 %v1174, 1.442695
  %v1199 = vpow.pop %v1198
  %v1200 = vmul.f32 %v1175, 1.442695
  %v1201 = vpow.pop %v1200
  %v1202 = vmul.f32 %v1176, 1.442695
  %v1203 = vpow.pop %v1202
  %v1204 = vmul.f32 %v1177, 1.442695
  %v1205 = vpow.pop %v1204
  %v1206 = vmul.f32 %v1178, 1.442695
  %v1207 = vpow.pop %v1206
  %v1208 = vmul.f32 %v1179, 1.442695
  %v1209 = vpow.pop %v1208
  %v1210 = vsub.f32 %v1181, 1.0
  %v1211 = vsub.f32 %v1183, 1.0
  %v1212 = vsub.f32 %v1185, 1.0
  %v1213 = vsub.f32 %v1187, 1.0
  %v1214 = vsub.f32 %v1189, 1.0
  %v1215 = vsub.f32 %v1191, 1.0
  %v1216 = vsub.f32 %v1193, 1.0
  %v1217 = vsub.f32 %v1195, 1.0
  %v1218 = vsub.f32 %v1197, 1.0
  %v1219 = vsub.f32 %v1199, 1.0
  %v1220 = vsub.f32 %v1201, 1.0
  %v1221 = vsub.f32 %v1203, 1.0
  %v1222 = vsub.f32 %v1205, 1.0
  %v1223 = vsub.f32 %v1207, 1.0
  %v1224 = vsub.f32 %v1209, 1.0
  %v1225 = vsel %vm1150, %v1089, %v1210
  %v1226 = vsel %vm1151, %v1092, %v1211
  %v1227 = vsel %vm1152, %v1097, %v1212
  %v1228 = vsel %vm1153, %v1100, %v1213
  %v1229 = vsel %vm1154, %v1105, %v1214
  %v1230 = vsel %vm1155, %v1108, %v1215
  %v1231 = vsel %vm1156, %v1113, %v1216
  %v1232 = vsel %vm1157, %v1116, %v1217
  %v1233 = vsel %vm1158, %v1121, %v1218
  %v1234 = vsel %vm1159, %v1124, %v1219
  %v1235 = vsel %vm1160, %v1129, %v1220
  %v1236 = vsel %vm1161, %v1132, %v1221
  %v1237 = vsel %vm1162, %v1137, %v1222
  %v1238 = vsel %vm1163, %v1140, %v1223
  %v1239 = vsel %vm1164, %v1145, %v1224
  %v1240 = vadd.f32 %v1225, %v1226
  %v1241 = vadd.f32 %v1240, %v1227
  %v1242 = vadd.f32 %v1241, %v1228
  %v1243 = vadd.f32 %v1242, %v1229
  %v1244 = vadd.f32 %v1243, %v1230
  %v1245 = vadd.f32 %v1244, %v1231
  %v1246 = vadd.f32 %v1245, %v1232
  %v1247 = vadd.f32 %v1246, %v1233
  %v1248 = vadd.f32 %v1247, %v1234
  %v1249 = vadd.f32 %v1248, %v1235
  %v1250 = vadd.f32 %v1249, %v1236
  %v1251 = vadd.f32 %v1250, %v1237
  %v1252 = vadd.f32 %v1251, %v1238
  %v1253 = vadd.f32 %v1252, %v1239
  %v1254 = vrot.slane %v1253, 4
  %v1255 = vadd.f32 %v1253, %v1254
  %v1256 = vrot.slane %v1255, 2
  %v1257 = vadd.f32 %v1255, %v1256
  %v1258 = vrot.slane %v1257, 1
  %v1259 = vadd.f32 %v1257, %v1258
  %v1260 = vmul.f32 %v1259, %v675
  %v1261 = vsub.f32 %v1225, %v1260
  %v1262 = vsub.f32 %v1226, %v1260
  %v1263 = vsub.f32 %v1227, %v1260
  %v1264 = vsub.f32 %v1228, %v1260
  %v1265 = vsub.f32 %v1229, %v1260
  %v1266 = vsub.f32 %v1230, %v1260
  %v1267 = vsub.f32 %v1231, %v1260
  %v1268 = vsub.f32 %v1232, %v1260
  %v1269 = vsub.f32 %v1233, %v1260
  %v1270 = vsub.f32 %v1234, %v1260
  %v1271 = vsub.f32 %v1235, %v1260
  %v1272 = vsub.f32 %v1236, %v1260
  %v1273 = vsub.f32 %v1237, %v1260
  %v1274 = vsub.f32 %v1238, %v1260
  %v1275 = vsub.f32 %v1239, %v1260
  %v1276 = vmul.f32 %v1261, %v1261
  %v1277 = vmul.f32 %v1262, %v1262
  %v1278 = vmul.f32 %v1263, %v1263
  %v1279 = vmul.f32 %v1264, %v1264
  %v1280 = vmul.f32 %v1265, %v1265
  %v1281 = vmul.f32 %v1266, %v1266
  %v1282 = vmul.f32 %v1267, %v1267
  %v1283 = vmul.f32 %v1268, %v1268
  %v1284 = vmul.f32 %v1269, %v1269
  %v1285 = vmul.f32 %v1270, %v1270
  %v1286 = vmul.f32 %v1271, %v1271
  %v1287 = vmul.f32 %v1272, %v1272
  %v1288 = vmul.f32 %v1273, %v1273
  %v1289 = vmul.f32 %v1274, %v1274
  %v1290 = vmul.f32 %v1275, %v1275
  %v1291 = vadd.f32 %v1276, %v1277
  %v1292 = vadd.f32 %v1291, %v1278
  %v1293 = vadd.f32 %v1292, %v1279
  %v1294 = vadd.f32 %v1293, %v1280
  %v1295 = vadd.f32 %v1294, %v1281
  %v1296 = vadd.f32 %v1295, %v1282
  %v1297 = vadd.f32 %v1296, %v1283
  %v1298 = vadd.f32 %v1297, %v1284
  %v1299 = vadd.f32 %v1298, %v1285
  %v1300 = vadd.f32 %v1299, %v1286
  %v1301 = vadd.f32 %v1300, %v1287
  %v1302 = vadd.f32 %v1301, %v1288
  %v1303 = vadd.f32 %v1302, %v1289
  %v1304 = vadd.f32 %v1303, %v1290
  %v1305 = vrot.slane %v1304, 4
  %v1306 = vadd.f32 %v1304, %v1305
  %v1307 = vrot.slane %v1306, 2
  %v1308 = vadd.f32 %v1306, %v1307
  %v1309 = vrot.slane %v1308, 1
  %v1310 = vadd.f32 %v1308, %v1309
  %v1311 = vmul.f32 %v1310, %v675
  %v1312 = vadd.f32 %v1311, 1e-08
  %v1313 = vrsqrt.pop %v1312
  %v1314 = vmul.f32 %v1261, %v1313
  %v1315 = vmul.f32 %v1262, %v1313
  %v1316 = vmul.f32 %v1263, %v1313
  %v1317 = vmul.f32 %v1264, %v1313
  %v1318 = vmul.f32 %v1265, %v1313
  %v1319 = vmul.f32 %v1266, %v1313
  %v1320 = vmul.f32 %v1267, %v1313
  %v1321 = vmul.f32 %v1268, %v1313
  %v1322 = vmul.f32 %v1269, %v1313
  %v1323 = vmul.f32 %v1270, %v1313
  %v1324 = vmul.f32 %v1271, %v1313
  %v1325 = vmul.f32 %v1272, %v1313
  %v1326 = vmul.f32 %v1273, %v1313
  %v1327 = vmul.f32 %v1274, %v1313
  %v1328 = vmul.f32 %v1275, %v1313
  %v1329 = vld [vmem:[%s3] sm:$0x1]
  %v1331 = vlaneseq
  %v1332 = vshrl.u32 %v1331, 7
  %v1333 = vsub.s32 0, %v1332
  %v1334 = vrot.slane %v1329, %v1333
  %v1336 = vmul.f32 %v1314, %v1334
  %v1337 = vmul.f32 %v1315, %v1334
  %v1338 = vmul.f32 %v1316, %v1334
  %v1339 = vmul.f32 %v1317, %v1334
  %v1340 = vmul.f32 %v1318, %v1334
  %v1341 = vmul.f32 %v1319, %v1334
  %v1342 = vmul.f32 %v1320, %v1334
  %v1343 = vmul.f32 %v1321, %v1334
  %v1344 = vmul.f32 %v1322, %v1334
  %v1345 = vmul.f32 %v1323, %v1334
  %v1346 = vmul.f32 %v1324, %v1334
  %v1347 = vmul.f32 %v1325, %v1334
  %v1348 = vmul.f32 %v1326, %v1334
  %v1349 = vmul.f32 %v1327, %v1334
  %v1350 = vmul.f32 %v1328, %v1334
  %v1351 = vld [vmem:[%s4] sm:$0x1]
  %v1353 = vlaneseq
  %v1354 = vshrl.u32 %v1353, 7
  %v1355 = vsub.s32 0, %v1354
  %v1356 = vrot.slane %v1351, %v1355
  %v1358 = vadd.f32 %v1336, %v1356
  %v1359 = vadd.f32 %v1337, %v1356
  %v1360 = vadd.f32 %v1338, %v1356
  %v1361 = vadd.f32 %v1339, %v1356
  %v1362 = vadd.f32 %v1340, %v1356
  %v1363 = vadd.f32 %v1341, %v1356
  %v1364 = vadd.f32 %v1342, %v1356
  %v1365 = vadd.f32 %v1343, %v1356
  %v1366 = vadd.f32 %v1344, %v1356
  %v1367 = vadd.f32 %v1345, %v1356
  %v1368 = vadd.f32 %v1346, %v1356
  %v1369 = vadd.f32 %v1347, %v1356
  %v1370 = vadd.f32 %v1348, %v1356
  %v1371 = vadd.f32 %v1349, %v1356
  %v1372 = vadd.f32 %v1350, %v1356
  %s1373 = scalar_lea.vmem %s5, 120
  %1374 = vst [vmem:[%s1373] sm:$0xff] %v1358
  %1375 = vst [vmem:[%s1373 + $0x8] sm:$0xff] %v1359
  %1376 = vst [vmem:[%s1373 + $0x10] sm:$0xff] %v1360
  %1377 = vst [vmem:[%s1373 + $0x18] sm:$0xff] %v1361
  %1378 = vst [vmem:[%s1373 + $0x20] sm:$0xff] %v1362
  %1379 = vst [vmem:[%s1373 + $0x28] sm:$0xff] %v1363
  %1380 = vst [vmem:[%s1373 + $0x30] sm:$0xff] %v1364
  %1381 = vst [vmem:[%s1373 + $0x38] sm:$0xff] %v1365
  %1382 = vst [vmem:[%s1373 + $0x40] sm:$0xff] %v1366
  %1383 = vst [vmem:[%s1373 + $0x48] sm:$0xff] %v1367
  %1384 = vst [vmem:[%s1373 + $0x50] sm:$0xff] %v1368
  %1385 = vst [vmem:[%s1373 + $0x58] sm:$0xff] %v1369
  %1386 = vst [vmem:[%s1373 + $0x60] sm:$0xff] %v1370
  %1387 = vst [vmem:[%s1373 + $0x68] sm:$0xff] %v1371
  %1388 = vst [vmem:[%s1373 + $0x70] sm:$0xff] %v1372
  // Predicated region
  $region22: #{_lambda_.36} parent=0 // pred_check
    _
  $region23: #{_lambda_.36} parent=0 // pred_check_branch
    %1390 = sbr.rel (0) target = $region25
  $region24: #{_lambda_.36} parent=0 // pred_region
    _
  $region25: #{_lambda_.36} parent=0 // pred_fallthru
    _
  // Predicated region
  $region26: #{_lambda_.36} parent=0 // pred_check
    _
  $region27: #{_lambda_.36} parent=0 // pred_check_branch
    %1392 = sbr.rel (0) target = $region29
  $region28: #{_lambda_.36} parent=0 // pred_region
    _
  $region29: #{_lambda_.36} parent=0 // pred_fallthru
    _

// kernel: custom-call.2
$region0: #{custom-call.2}
  %s0 = inlined_call_operand.vmem [shape: f32[2,1,8,17], index: 0, kind: input, shape index: {}]
  %s1 = inlined_call_operand.vmem [shape: f32[2,1,8,17], index: 1, kind: input, shape index: {}]
  %s2 = inlined_call_operand.hbm [shape: c64[2,1,8,17], index: 2, kind: output, shape index: {}]
  %s3 = scalar_lea.hbm %s2, 256
  $region1: #{custom-call.2} parent=0
    #allocation0 [shape = 's32[1]{0}', space=sflag, size = 0x4, scoped, tag = 'scoped memory for custom-call.2']
    %4 = vsyncpa [#allocation0], 0
    %s5 = sshll.u32 %s0, 4
    %s6 = int_to_ptr.vmem [resolvable:$true] %s5
    %8 = dma.vmem_to_hbm [thread:$0]  %s6, 256, %s2, [#allocation0]
    %9 = dma.done [#allocation0], 256
    %10 = vsyncpa [#allocation0], 1
  $region2: #{custom-call.2} parent=0
    #allocation1 [shape = 's32[1]{0}', space=sflag, size = 0x4, scoped, tag = 'scoped memory for custom-call.2']
    %11 = vsyncpa [#allocation1], 0
    %s12 = sshll.u32 %s1, 4
    %s13 = int_to_ptr.vmem [resolvable:$true] %s12
    %15 = dma.vmem_to_hbm [thread:$0]  %s13, 256, %s3, [#allocation1]
    %16 = dma.done [#allocation1], 256
    %17 = vsyncpa [#allocation1], 1

// kernel: _lambda_.43
$region0: #{_lambda_.43}
  #allocation0 [shape = 'u32[]', space=smem, size = 0x4, offset = 0x4, fixed_abs, tag = 'smem constant byte address 0x4 - core index']
  #allocation1 [shape = 'u32[144,128]{1,0:T(1,128)}', space=vmem, size = 0x12000, scoped, tag = 'internal scratch']
  %s0 = inlined_call_operand.vmem [shape: bf16[2,136,256], index: 0, kind: input, shape index: {}]
  %s1 = inlined_call_operand.vmem [shape: bf16[256,128], index: 1, kind: input, shape index: {}]
  %s2 = inlined_call_operand.vmem [shape: f32[1,128], index: 2, kind: input, shape index: {}]
  %s3 = inlined_call_operand.vmem [shape: f32[1,128], index: 3, kind: input, shape index: {}]
  %s4 = inlined_call_operand.vmem [shape: f32[1,128], index: 4, kind: input, shape index: {}]
  %s5 = inlined_call_operand.vmem [shape: f32[2,136,128], index: 5, kind: output, shape index: {}]
  %s6 = sld [smem:[#allocation0]]
  $region30: #{_lambda_.43} parent=0
    _
  %s8 = ssub.s32 1, %s6
  %s9 = scalar_select 0, %s8, %s6
  // Predicated region
  $region2: #{_lambda_.43} parent=0 // pred_check
    _
  $region3: #{_lambda_.43} parent=0 // pred_check_branch
    %11 = sbr.rel (0) target = $region5
  $region4: #{_lambda_.43} parent=0 // pred_region
    _
  $region5: #{_lambda_.43} parent=0 // pred_fallthru
    _
  // Predicated region
  $region6: #{_lambda_.43} parent=0 // pred_check
    _
  $region7: #{_lambda_.43} parent=0 // pred_check_branch
    %13 = sbr.rel (0) target = $region9
  $region8: #{_lambda_.43} parent=0 // pred_region
    _
  $region9: #{_lambda_.43} parent=0 // pred_fallthru
    _
  // Predicated region
  $region10: #{_lambda_.43} parent=0 // pred_check
    _
  $region11: #{_lambda_.43} parent=0 // pred_check_branch
    %15 = sbr.rel (0) target = $region13
  $region12: #{_lambda_.43} parent=0 // pred_region
    _
  $region13: #{_lambda_.43} parent=0 // pred_fallthru
    _
  // Predicated region
  $region14: #{_lambda_.43} parent=0 // pred_check
    _
  $region15: #{_lambda_.43} parent=0 // pred_check_branch
    %17 = sbr.rel (0) target = $region17
  $region16: #{_lambda_.43} parent=0 // pred_region
    _
  $region17: #{_lambda_.43} parent=0 // pred_fallthru
    _
  // Predicated region
  $region18: #{_lambda_.43} parent=0 // pred_check
    _
  $region19: #{_lambda_.43} parent=0 // pred_check_branch
    %19 = sbr.rel (0) target = $region21
  $region20: #{_lambda_.43} parent=0 // pred_region
    _
  $region21: #{_lambda_.43} parent=0 // pred_fallthru
    _
  %v21 = vld [vmem:[%s1] sm:$0xf]
  %v22 = vld [vmem:[%s1 + $0x4] sm:$0xf]
  %v23 = vld [vmem:[%s1 + $0x8] sm:$0xf]
  %v24 = vld [vmem:[%s1 + $0xc] sm:$0xf]
  %v25 = vld [vmem:[%s1 + $0x10] sm:$0xf]
  %v26 = vld [vmem:[%s1 + $0x14] sm:$0xf]
  %v27 = vld [vmem:[%s1 + $0x18] sm:$0xf]
  %v28 = vld [vmem:[%s1 + $0x1c] sm:$0xf]
  %v29 = vld [vmem:[%s1 + $0x20] sm:$0xf]
  %v30 = vld [vmem:[%s1 + $0x24] sm:$0xf]
  %v31 = vld [vmem:[%s1 + $0x28] sm:$0xf]
  %v32 = vld [vmem:[%s1 + $0x2c] sm:$0xf]
  %v33 = vld [vmem:[%s1 + $0x30] sm:$0xf]
  %v34 = vld [vmem:[%s1 + $0x34] sm:$0xf]
  %v35 = vld [vmem:[%s1 + $0x38] sm:$0xf]
  %v36 = vld [vmem:[%s1 + $0x3c] sm:$0xf]
  %v37 = vld [vmem:[%s1 + $0x40] sm:$0xf]
  %v38 = vld [vmem:[%s1 + $0x44] sm:$0xf]
  %v39 = vld [vmem:[%s1 + $0x48] sm:$0xf]
  %v40 = vld [vmem:[%s1 + $0x4c] sm:$0xf]
  %v41 = vld [vmem:[%s1 + $0x50] sm:$0xf]
  %v42 = vld [vmem:[%s1 + $0x54] sm:$0xf]
  %v43 = vld [vmem:[%s1 + $0x58] sm:$0xf]
  %v44 = vld [vmem:[%s1 + $0x5c] sm:$0xf]
  %v45 = vld [vmem:[%s1 + $0x60] sm:$0xf]
  %v46 = vld [vmem:[%s1 + $0x64] sm:$0xf]
  %v47 = vld [vmem:[%s1 + $0x68] sm:$0xf]
  %v48 = vld [vmem:[%s1 + $0x6c] sm:$0xf]
  %v49 = vld [vmem:[%s1 + $0x70] sm:$0xf]
  %v50 = vld [vmem:[%s1 + $0x74] sm:$0xf]
  %v51 = vld [vmem:[%s1 + $0x78] sm:$0xf]
  %v52 = vld [vmem:[%s1 + $0x7c] sm:$0xf]
  %v53 = vld [vmem:[%s2] sm:$0x1]
  %v54 = vld [vmem:[%s0] sm:$0xff]
  %v55 = vld [vmem:[%s0 + $0x8] sm:$0xff]
  %v56 = vld [vmem:[%s0 + $0x10] sm:$0xff]
  %v57 = vld [vmem:[%s0 + $0x18] sm:$0xff]
  %v58 = vld [vmem:[%s0 + $0x20] sm:$0xff]
  %v59 = vld [vmem:[%s0 + $0x28] sm:$0xff]
  %v60 = vld [vmem:[%s0 + $0x30] sm:$0xff]
  %v61 = vld [vmem:[%s0 + $0x38] sm:$0xff]
  %v62 = vld [vmem:[%s0 + $0x40] sm:$0xff]
  %v63 = vld [vmem:[%s0 + $0x48] sm:$0xff]
  %v64 = vld [vmem:[%s0 + $0x50] sm:$0xff]
  %v65 = vld [vmem:[%s0 + $0x58] sm:$0xff]
  %v66 = vld [vmem:[%s0 + $0x60] sm:$0xff]
  %v67 = vld [vmem:[%s0 + $0x68] sm:$0xff]
  %v68 = vld [vmem:[%s0 + $0x70] sm:$0xff]
  %v69 = vld [vmem:[%s0 + $0x78] sm:$0xff]
  %v70 = vld [vmem:[%s0 + $0x80] sm:$0xff]
  %v72 = vlaneseq
  %v73 = vshrl.u32 %v72, 7
  %v74 = vsub.s32 0, %v73
  %v75 = vrot.slane %v53, %v74
  %v94 = vunpack.c.l.b16 %v54
  %v95 = vunpack.c.h.b16 %v54
  %v96 = vunpack.c.l.b16 %v55
  %v97 = vunpack.c.h.b16 %v55
  %v98 = vunpack.c.l.b16 %v56
  %v99 = vunpack.c.h.b16 %v56
  %v100 = vunpack.c.l.b16 %v57
  %v101 = vunpack.c.h.b16 %v57
  %v102 = vunpack.c.l.b16 %v58
  %v103 = vunpack.c.h.b16 %v58
  %v104 = vunpack.c.l.b16 %v59
  %v105 = vunpack.c.h.b16 %v59
  %v106 = vunpack.c.l.b16 %v60
  %v107 = vunpack.c.h.b16 %v60
  %v108 = vunpack.c.l.b16 %v61
  %v109 = vunpack.c.h.b16 %v61
  %v110 = vunpack.c.l.b16 %v62
  %v111 = vunpack.c.h.b16 %v62
  %v112 = vunpack.c.l.b16 %v63
  %v113 = vunpack.c.h.b16 %v63
  %v114 = vunpack.c.l.b16 %v64
  %v115 = vunpack.c.h.b16 %v64
  %v116 = vunpack.c.l.b16 %v65
  %v117 = vunpack.c.h.b16 %v65
  %v118 = vunpack.c.l.b16 %v66
  %v119 = vunpack.c.h.b16 %v66
  %v120 = vunpack.c.l.b16 %v67
  %v121 = vunpack.c.h.b16 %v67
  %v122 = vunpack.c.l.b16 %v68
  %v123 = vunpack.c.h.b16 %v68
  %v124 = vunpack.c.l.b16 %v69
  %v125 = vunpack.c.h.b16 %v69
  %v126 = vunpack.c.l.b16 %v70
  %v127 = vunpack.c.h.b16 %v70
  %v128 = vpack.c.b16 %v96, %v94
  %v129 = vpack.c.b16 %v97, %v95
  %v130 = vpack.c.b16 %v100, %v98
  %v131 = vpack.c.b16 %v101, %v99
  %v132 = vpack.c.b16 %v104, %v102
  %v133 = vpack.c.b16 %v105, %v103
  %v134 = vpack.c.b16 %v108, %v106
  %v135 = vpack.c.b16 %v109, %v107
  %v136 = vpack.c.b16 %v112, %v110
  %v137 = vpack.c.b16 %v113, %v111
  %v138 = vpack.c.b16 %v116, %v114
  %v139 = vpack.c.b16 %v117, %v115
  %v140 = vpack.c.b16 %v120, %v118
  %v141 = vpack.c.b16 %v121, %v119
  %v142 = vpack.c.b16 %v124, %v122
  %v143 = vpack.c.b16 %v125, %v123
  %v144 = vpack.c.b16 %v126, %v126
  %v145 = vpack.c.b16 %v127, %v127
  %v196 = vunpack.c.l.b16 %v21
  %v197 = vunpack.c.l.b16 %v22
  %v198 = vunpack.c.l.b16 %v23
  %v199 = vunpack.c.l.b16 %v24
  %v200 = vunpack.c.l.b16 %v25
  %v201 = vunpack.c.l.b16 %v26
  %v202 = vunpack.c.l.b16 %v27
  %v203 = vunpack.c.l.b16 %v28
  %v204 = vunpack.c.l.b16 %v29
  %v205 = vunpack.c.l.b16 %v30
  %v206 = vunpack.c.l.b16 %v31
  %v207 = vunpack.c.l.b16 %v32
  %v208 = vunpack.c.l.b16 %v33
  %v209 = vunpack.c.l.b16 %v34
  %v210 = vunpack.c.l.b16 %v35
  %v211 = vunpack.c.l.b16 %v36
  %v212 = vunpack.c.l.b16 %v37
  %v213 = vunpack.c.l.b16 %v38
  %v214 = vunpack.c.l.b16 %v39
  %v215 = vunpack.c.l.b16 %v40
  %v216 = vunpack.c.l.b16 %v41
  %v217 = vunpack.c.l.b16 %v42
  %v218 = vunpack.c.l.b16 %v43
  %v219 = vunpack.c.l.b16 %v44
  %v220 = vunpack.c.l.b16 %v45
  %v221 = vunpack.c.l.b16 %v46
  %v222 = vunpack.c.l.b16 %v47
  %v223 = vunpack.c.l.b16 %v48
  %v224 = vunpack.c.l.b16 %v49
  %v225 = vunpack.c.l.b16 %v50
  %v226 = vunpack.c.l.b16 %v51
  %v227 = vunpack.c.l.b16 %v52
  %v228 = vpack.c.b16 %v197, %v196
  %v229 = vpack.c.b16 %v199, %v198
  %v230 = vpack.c.b16 %v201, %v200
  %v231 = vpack.c.b16 %v203, %v202
  %v232 = vpack.c.b16 %v205, %v204
  %v233 = vpack.c.b16 %v207, %v206
  %v234 = vpack.c.b16 %v209, %v208
  %v235 = vpack.c.b16 %v211, %v210
  %v236 = vpack.c.b16 %v213, %v212
  %v237 = vpack.c.b16 %v215, %v214
  %v238 = vpack.c.b16 %v217, %v216
  %v239 = vpack.c.b16 %v219, %v218
  %v240 = vpack.c.b16 %v221, %v220
  %v241 = vpack.c.b16 %v223, %v222
  %v242 = vpack.c.b16 %v225, %v224
  %v243 = vpack.c.b16 %v227, %v226
  %260 = vmatprep.subr.bf16.mxu0 0
  %261 = vmatpush1.bf16.msra.mxu0 %v235
  %262 = vmatprep.subr.bf16.mxu0 0
  %263 = vmatpush1.bf16.msra.mxu0 %v234
  %264 = vmatprep.subr.bf16.mxu0 0
  %265 = vmatpush1.bf16.msra.mxu0 %v233
  %266 = vmatprep.subr.bf16.mxu0 0
  %267 = vmatpush1.bf16.msra.mxu0 %v232
  %268 = vmatprep.subr.bf16.mxu0 0
  %269 = vmatpush1.bf16.msra.mxu0 %v231
  %270 = vmatprep.subr.bf16.mxu0 0
  %271 = vmatpush1.bf16.msra.mxu0 %v230
  %272 = vmatprep.subr.bf16.mxu0 0
  %273 = vmatpush1.bf16.msra.mxu0 %v229
  %274 = vmatprep.subr.bf16.mxu0 0
  %275 = vmatpush1.bf16.msra.mxu0 %v228
  %276 = vmatprep.subr.bf16.mxu0 0
  %277 = vmatpush2.bf16.msra.mxu0 %v243
  %278 = vmatprep.subr.bf16.mxu0 0
  %279 = vmatpush2.bf16.msra.mxu0 %v242
  %280 = vmatprep.subr.bf16.mxu0 0
  %281 = vmatpush2.bf16.msra.mxu0 %v241
  %282 = vmatprep.subr.bf16.mxu0 0
  %283 = vmatpush2.bf16.msra.mxu0 %v240
  %284 = vmatprep.subr.bf16.mxu0 0
  %285 = vmatpush2.bf16.msra.mxu0 %v239
  %286 = vmatprep.subr.bf16.mxu0 0
  %287 = vmatpush2.bf16.msra.mxu0 %v238
  %288 = vmatprep.subr.bf16.mxu0 0
  %289 = vmatpush2.bf16.msra.mxu0 %v237
  %290 = vmatprep.subr.bf16.mxu0 0
  %291 = vmatpush2.bf16.msra.mxu0 %v236
  %292 = vmatprep.mubr.bf16.mxu0 %v129
  %293 = vmatmul.mubr.bf16.gmra.mxu0 %v128
  %v294 = vpop.f32.mrf.mxu0
  %v295 = vadd.f32 %v75, %v294
  %v296 = vpop.f32.mrf.mxu0
  %v297 = vpop.f32.mrf.mxu0
  %v298 = vadd.f32 %v75, %v297
  %v299 = vpop.f32.mrf.mxu0
  %300 = vmatprep.mubr.bf16.mxu0 %v131
  %301 = vmatmul.mubr.bf16.gmra.mxu0 %v130
  %v302 = vpop.f32.mrf.mxu0
  %v303 = vadd.f32 %v75, %v302
  %v304 = vpop.f32.mrf.mxu0
  %v305 = vpop.f32.mrf.mxu0
  %v306 = vadd.f32 %v75, %v305
  %v307 = vpop.f32.mrf.mxu0
  %308 = vmatprep.mubr.bf16.mxu0 %v133
  %309 = vmatmul.mubr.bf16.gmra.mxu0 %v132
  %v310 = vpop.f32.mrf.mxu0
  %v311 = vadd.f32 %v75, %v310
  %v312 = vpop.f32.mrf.mxu0
  %v313 = vpop.f32.mrf.mxu0
  %v314 = vadd.f32 %v75, %v313
  %v315 = vpop.f32.mrf.mxu0
  %316 = vmatprep.mubr.bf16.mxu0 %v135
  %317 = vmatmul.mubr.bf16.gmra.mxu0 %v134
  %v318 = vpop.f32.mrf.mxu0
  %v319 = vadd.f32 %v75, %v318
  %v320 = vpop.f32.mrf.mxu0
  %v321 = vpop.f32.mrf.mxu0
  %v322 = vadd.f32 %v75, %v321
  %v323 = vpop.f32.mrf.mxu0
  %324 = vmatprep.mubr.bf16.mxu0 %v137
  %325 = vmatmul.mubr.bf16.gmra.mxu0 %v136
  %v326 = vpop.f32.mrf.mxu0
  %v327 = vadd.f32 %v75, %v326
  %v328 = vpop.f32.mrf.mxu0
  %v329 = vpop.f32.mrf.mxu0
  %v330 = vadd.f32 %v75, %v329
  %v331 = vpop.f32.mrf.mxu0
  %332 = vmatprep.mubr.bf16.mxu0 %v139
  %333 = vmatmul.mubr.bf16.gmra.mxu0 %v138
  %v334 = vpop.f32.mrf.mxu0
  %v335 = vadd.f32 %v75, %v334
  %v336 = vpop.f32.mrf.mxu0
  %v337 = vpop.f32.mrf.mxu0
  %v338 = vadd.f32 %v75, %v337
  %v339 = vpop.f32.mrf.mxu0
  %340 = vmatprep.mubr.bf16.mxu0 %v141
  %341 = vmatmul.mubr.bf16.gmra.mxu0 %v140
  %v342 = vpop.f32.mrf.mxu0
  %v343 = vadd.f32 %v75, %v342
  %v344 = vpop.f32.mrf.mxu0
  %v345 = vpop.f32.mrf.mxu0
  %v346 = vadd.f32 %v75, %v345
  %v347 = vpop.f32.mrf.mxu0
  %348 = vmatprep.mubr.bf16.mxu0 %v143
  %349 = vmatmul.mubr.bf16.gmra.mxu0 %v142
  %v350 = vpop.f32.mrf.mxu0
  %v351 = vadd.f32 %v75, %v350
  %v352 = vpop.f32.mrf.mxu0
  %v353 = vpop.f32.mrf.mxu0
  %v354 = vadd.f32 %v75, %v353
  %v355 = vpop.f32.mrf.mxu0
  %356 = vmatprep.mubr.bf16.mxu0 %v145
  %357 = vmatmul.mubr.bf16.gmra.mxu0 %v144
  %v358 = vpop.f32.mrf.mxu0
  %v359 = vadd.f32 %v75, %v358
  %v360 = vpop.f32.mrf.mxu0
  %v361 = vpop.f32.mrf.mxu0
  %v362 = vpop.f32.mrf.mxu0
  %363 = vdwg.mxu0
  %364 = vst [vmem:[%s5] sm:$0xff] %v295
  %365 = vst [vmem:[%s5 + $0x8] sm:$0xff] %v298
  %366 = vst [vmem:[%s5 + $0x10] sm:$0xff] %v303
  %367 = vst [vmem:[%s5 + $0x18] sm:$0xff] %v306
  %368 = vst [vmem:[%s5 + $0x20] sm:$0xff] %v311
  %369 = vst [vmem:[%s5 + $0x28] sm:$0xff] %v314
  %370 = vst [vmem:[%s5 + $0x30] sm:$0xff] %v319
  %371 = vst [vmem:[%s5 + $0x38] sm:$0xff] %v322
  %372 = vst [vmem:[%s5 + $0x40] sm:$0xff] %v327
  %373 = vst [vmem:[%s5 + $0x48] sm:$0xff] %v330
  %374 = vst [vmem:[%s5 + $0x50] sm:$0xff] %v335
  %375 = vst [vmem:[%s5 + $0x58] sm:$0xff] %v338
  %376 = vst [vmem:[%s5 + $0x60] sm:$0xff] %v343
  %377 = vst [vmem:[%s5 + $0x68] sm:$0xff] %v346
  %378 = vst [vmem:[%s5 + $0x70] sm:$0xff] %v351
  %379 = vst [vmem:[%s5 + $0x78] sm:$0xff] %v354
  %380 = vst [vmem:[%s5 + $0x80] sm:$0xff] %v359
  %s381 = scalar_lea.vmem %s0, 136
  %v382 = vld [vmem:[%s381] sm:$0xff]
  %v383 = vld [vmem:[%s381 + $0x8] sm:$0xff]
  %v384 = vld [vmem:[%s381 + $0x10] sm:$0xff]
  %v385 = vld [vmem:[%s381 + $0x18] sm:$0xff]
  %v386 = vld [vmem:[%s381 + $0x20] sm:$0xff]
  %v387 = vld [vmem:[%s381 + $0x28] sm:$0xff]
  %v388 = vld [vmem:[%s381 + $0x30] sm:$0xff]
  %v389 = vld [vmem:[%s381 + $0x38] sm:$0xff]
  %v390 = vld [vmem:[%s381 + $0x40] sm:$0xff]
  %v391 = vld [vmem:[%s381 + $0x48] sm:$0xff]
  %v392 = vld [vmem:[%s381 + $0x50] sm:$0xff]
  %v393 = vld [vmem:[%s381 + $0x58] sm:$0xff]
  %v394 = vld [vmem:[%s381 + $0x60] sm:$0xff]
  %v395 = vld [vmem:[%s381 + $0x68] sm:$0xff]
  %v396 = vld [vmem:[%s381 + $0x70] sm:$0xff]
  %v397 = vld [vmem:[%s381 + $0x78] sm:$0xff]
  %v398 = vld [vmem:[%s381 + $0x80] sm:$0xff]
  %v416 = vunpack.c.l.b16 %v382
  %v417 = vunpack.c.h.b16 %v382
  %v418 = vunpack.c.l.b16 %v383
  %v419 = vunpack.c.h.b16 %v383
  %v420 = vunpack.c.l.b16 %v384
  %v421 = vunpack.c.h.b16 %v384
  %v422 = vunpack.c.l.b16 %v385
  %v423 = vunpack.c.h.b16 %v385
  %v424 = vunpack.c.l.b16 %v386
  %v425 = vunpack.c.h.b16 %v386
  %v426 = vunpack.c.l.b16 %v387
  %v427 = vunpack.c.h.b16 %v387
  %v428 = vunpack.c.l.b16 %v388
  %v429 = vunpack.c.h.b16 %v388
  %v430 = vunpack.c.l.b16 %v389
  %v431 = vunpack.c.h.b16 %v389
  %v432 = vunpack.c.l.b16 %v390
  %v433 = vunpack.c.h.b16 %v390
  %v434 = vunpack.c.l.b16 %v391
  %v435 = vunpack.c.h.b16 %v391
  %v436 = vunpack.c.l.b16 %v392
  %v437 = vunpack.c.h.b16 %v392
  %v438 = vunpack.c.l.b16 %v393
  %v439 = vunpack.c.h.b16 %v393
  %v440 = vunpack.c.l.b16 %v394
  %v441 = vunpack.c.h.b16 %v394
  %v442 = vunpack.c.l.b16 %v395
  %v443 = vunpack.c.h.b16 %v395
  %v444 = vunpack.c.l.b16 %v396
  %v445 = vunpack.c.h.b16 %v396
  %v446 = vunpack.c.l.b16 %v397
  %v447 = vunpack.c.h.b16 %v397
  %v448 = vunpack.c.l.b16 %v398
  %v449 = vunpack.c.h.b16 %v398
  %v450 = vpack.c.b16 %v418, %v416
  %v451 = vpack.c.b16 %v419, %v417
  %v452 = vpack.c.b16 %v422, %v420
  %v453 = vpack.c.b16 %v423, %v421
  %v454 = vpack.c.b16 %v426, %v424
  %v455 = vpack.c.b16 %v427, %v425
  %v456 = vpack.c.b16 %v430, %v428
  %v457 = vpack.c.b16 %v431, %v429
  %v458 = vpack.c.b16 %v434, %v432
  %v459 = vpack.c.b16 %v435, %v433
  %v460 = vpack.c.b16 %v438, %v436
  %v461 = vpack.c.b16 %v439, %v437
  %v462 = vpack.c.b16 %v442, %v440
  %v463 = vpack.c.b16 %v443, %v441
  %v464 = vpack.c.b16 %v446, %v444
  %v465 = vpack.c.b16 %v447, %v445
  %v466 = vpack.c.b16 %v448, %v448
  %v467 = vpack.c.b16 %v449, %v449
  %486 = vmatprep.subr.bf16.mxu0 0
  %487 = vmatpush1.bf16.msra.mxu0 %v235
  %488 = vmatprep.subr.bf16.mxu0 0
  %489 = vmatpush1.bf16.msra.mxu0 %v234
  %490 = vmatprep.subr.bf16.mxu0 0
  %491 = vmatpush1.bf16.msra.mxu0 %v233
  %492 = vmatprep.subr.bf16.mxu0 0
  %493 = vmatpush1.bf16.msra.mxu0 %v232
  %494 = vmatprep.subr.bf16.mxu0 0
  %495 = vmatpush1.bf16.msra.mxu0 %v231
  %496 = vmatprep.subr.bf16.mxu0 0
  %497 = vmatpush1.bf16.msra.mxu0 %v230
  %498 = vmatprep.subr.bf16.mxu0 0
  %499 = vmatpush1.bf16.msra.mxu0 %v229
  %500 = vmatprep.subr.bf16.mxu0 0
  %501 = vmatpush1.bf16.msra.mxu0 %v228
  %502 = vmatprep.subr.bf16.mxu0 0
  %503 = vmatpush2.bf16.msra.mxu0 %v243
  %504 = vmatprep.subr.bf16.mxu0 0
  %505 = vmatpush2.bf16.msra.mxu0 %v242
  %506 = vmatprep.subr.bf16.mxu0 0
  %507 = vmatpush2.bf16.msra.mxu0 %v241
  %508 = vmatprep.subr.bf16.mxu0 0
  %509 = vmatpush2.bf16.msra.mxu0 %v240
  %510 = vmatprep.subr.bf16.mxu0 0
  %511 = vmatpush2.bf16.msra.mxu0 %v239
  %512 = vmatprep.subr.bf16.mxu0 0
  %513 = vmatpush2.bf16.msra.mxu0 %v238
  %514 = vmatprep.subr.bf16.mxu0 0
  %515 = vmatpush2.bf16.msra.mxu0 %v237
  %516 = vmatprep.subr.bf16.mxu0 0
  %517 = vmatpush2.bf16.msra.mxu0 %v236
  %518 = vmatprep.mubr.bf16.mxu0 %v451
  %519 = vmatmul.mubr.bf16.gmra.mxu0 %v450
  %v520 = vpop.f32.mrf.mxu0
  %v521 = vadd.f32 %v75, %v520
  %v522 = vpop.f32.mrf.mxu0
  %v523 = vpop.f32.mrf.mxu0
  %v524 = vadd.f32 %v75, %v523
  %v525 = vpop.f32.mrf.mxu0
  %526 = vmatprep.mubr.bf16.mxu0 %v453
  %527 = vmatmul.mubr.bf16.gmra.mxu0 %v452
  %v528 = vpop.f32.mrf.mxu0
  %v529 = vadd.f32 %v75, %v528
  %v530 = vpop.f32.mrf.mxu0
  %v531 = vpop.f32.mrf.mxu0
  %v532 = vadd.f32 %v75, %v531
  %v533 = vpop.f32.mrf.mxu0
  %534 = vmatprep.mubr.bf16.mxu0 %v455
  %535 = vmatmul.mubr.bf16.gmra.mxu0 %v454
  %v536 = vpop.f32.mrf.mxu0
  %v537 = vadd.f32 %v75, %v536
  %v538 = vpop.f32.mrf.mxu0
  %v539 = vpop.f32.mrf.mxu0
  %v540 = vadd.f32 %v75, %v539
  %v541 = vpop.f32.mrf.mxu0
  %542 = vmatprep.mubr.bf16.mxu0 %v457
  %543 = vmatmul.mubr.bf16.gmra.mxu0 %v456
  %v544 = vpop.f32.mrf.mxu0
  %v545 = vadd.f32 %v75, %v544
  %v546 = vpop.f32.mrf.mxu0
  %v547 = vpop.f32.mrf.mxu0
  %v548 = vadd.f32 %v75, %v547
  %v549 = vpop.f32.mrf.mxu0
  %550 = vmatprep.mubr.bf16.mxu0 %v459
  %551 = vmatmul.mubr.bf16.gmra.mxu0 %v458
  %v552 = vpop.f32.mrf.mxu0
  %v553 = vadd.f32 %v75, %v552
  %v554 = vpop.f32.mrf.mxu0
  %v555 = vpop.f32.mrf.mxu0
  %v556 = vadd.f32 %v75, %v555
  %v557 = vpop.f32.mrf.mxu0
  %558 = vmatprep.mubr.bf16.mxu0 %v461
  %559 = vmatmul.mubr.bf16.gmra.mxu0 %v460
  %v560 = vpop.f32.mrf.mxu0
  %v561 = vadd.f32 %v75, %v560
  %v562 = vpop.f32.mrf.mxu0
  %v563 = vpop.f32.mrf.mxu0
  %v564 = vadd.f32 %v75, %v563
  %v565 = vpop.f32.mrf.mxu0
  %566 = vmatprep.mubr.bf16.mxu0 %v463
  %567 = vmatmul.mubr.bf16.gmra.mxu0 %v462
  %v568 = vpop.f32.mrf.mxu0
  %v569 = vadd.f32 %v75, %v568
  %v570 = vpop.f32.mrf.mxu0
  %v571 = vpop.f32.mrf.mxu0
  %v572 = vadd.f32 %v75, %v571
  %v573 = vpop.f32.mrf.mxu0
  %574 = vmatprep.mubr.bf16.mxu0 %v465
  %575 = vmatmul.mubr.bf16.gmra.mxu0 %v464
  %v576 = vpop.f32.mrf.mxu0
  %v577 = vadd.f32 %v75, %v576
  %v578 = vpop.f32.mrf.mxu0
  %v579 = vpop.f32.mrf.mxu0
  %v580 = vadd.f32 %v75, %v579
  %v581 = vpop.f32.mrf.mxu0
  %582 = vmatprep.mubr.bf16.mxu0 %v467
  %583 = vmatmul.mubr.bf16.gmra.mxu0 %v466
  %v584 = vpop.f32.mrf.mxu0
  %v585 = vadd.f32 %v75, %v584
  %v586 = vpop.f32.mrf.mxu0
  %v587 = vpop.f32.mrf.mxu0
  %v588 = vpop.f32.mrf.mxu0
  %589 = vdwg.mxu0
  %s590 = scalar_lea.vmem %s5, 136
  %591 = vst [vmem:[%s590] sm:$0xff] %v521
  %592 = vst [vmem:[%s590 + $0x8] sm:$0xff] %v524
  %593 = vst [vmem:[%s590 + $0x10] sm:$0xff] %v529
  %594 = vst [vmem:[%s590 + $0x18] sm:$0xff] %v532
  %595 = vst [vmem:[%s590 + $0x20] sm:$0xff] %v537
  %596 = vst [vmem:[%s590 + $0x28] sm:$0xff] %v540
  %597 = vst [vmem:[%s590 + $0x30] sm:$0xff] %v545
  %598 = vst [vmem:[%s590 + $0x38] sm:$0xff] %v548
  %599 = vst [vmem:[%s590 + $0x40] sm:$0xff] %v553
  %600 = vst [vmem:[%s590 + $0x48] sm:$0xff] %v556
  %601 = vst [vmem:[%s590 + $0x50] sm:$0xff] %v561
  %602 = vst [vmem:[%s590 + $0x58] sm:$0xff] %v564
  %603 = vst [vmem:[%s590 + $0x60] sm:$0xff] %v569
  %604 = vst [vmem:[%s590 + $0x68] sm:$0xff] %v572
  %605 = vst [vmem:[%s590 + $0x70] sm:$0xff] %v577
  %606 = vst [vmem:[%s590 + $0x78] sm:$0xff] %v580
  %607 = vst [vmem:[%s590 + $0x80] sm:$0xff] %v585
  // Predicated region
  $region22: #{_lambda_.43} parent=0 // pred_check
    _
  $region23: #{_lambda_.43} parent=0 // pred_check_branch
    %609 = sbr.rel (0) target = $region25
  $region24: #{_lambda_.43} parent=0 // pred_region
    _
  $region25: #{_lambda_.43} parent=0 // pred_fallthru
    _
  // Predicated region
  $region26: #{_lambda_.43} parent=0 // pred_check
    _
  $region27: #{_lambda_.43} parent=0 // pred_check_branch
    %611 = sbr.rel (0) target = $region29
  $region28: #{_lambda_.43} parent=0 // pred_region
    _
  $region29: #{_lambda_.43} parent=0 // pred_fallthru
    _

</llo_original>
